<compile_context>
chip_gen: v6e
topology: v6e:2x2x1
jax: 0.10.0
libtpu: 0.0.40
codegen_flags: <defaults>
</compile_context>

<pallas_src>
import math

import jax
import jax.numpy as jnp
import numpy as np
from jax import lax
from jax.experimental import pallas as pl
from jax.experimental.pallas import tpu as pltpu


# --------------------------------------------------------------------------
# helpers
# --------------------------------------------------------------------------
def _round_up(x, m):
    return ((x + m - 1) // m) * m


def _pick_tile(dim):
    # dim is always a multiple of 256 here; pick the largest friendly tile.
    for t in (512, 256):
        if dim % t == 0:
            return t
    return 128


# 48 MiB scoped VMEM: raises the 16/32 MiB defaults on v5e/v6e, stays under the
# 64 MiB physical VMEM of v7x. Actual per-step working sets here are only a few MiB.
_VMEM_LIMIT = 48 * 1024 * 1024


# --------------------------------------------------------------------------
# Fused node-layer kernel:
#   out[i] = bias + sum_j [ diag-patched((alpha*(A_d[i] @ A^T[:,j]) + beta) * adj[i,j]) ] @ HW[j]
# grid = (i rows [parallel], j adjacency cols [arbitrary], k incidence [arbitrary])
# The (tm, tn) f32 scratch holds A.D.A^T for the current (i, j); the (tm, Fop)
# output block stays resident across j and k and is accumulated in-place (f32).
# --------------------------------------------------------------------------
def _fused_node_kernel(dot_dtype):
    def kernel(ab_ref, arow_ref, acolT_ref, adj_ref, hw_ref, bias_ref,
               out_ref, acc_ref):
        i = pl.program_id(0)
        j = pl.program_id(1)
        k = pl.program_id(2)
        nk = pl.num_programs(2)

        @pl.when(jnp.logical_and(j == 0, k == 0))
        def _():
            out_ref[...] = jnp.broadcast_to(bias_ref[...], out_ref.shape)

        @pl.when(k == 0)
        def _():
            acc_ref[...] = jnp.zeros_like(acc_ref)

        # (tm, tk) @ (tk, tn): A rows pre-scaled by d, column stream pre-transposed.
        acc_ref[...] += jnp.dot(arow_ref[...], acolT_ref[...],
                                preferred_element_type=jnp.float32)

        @pl.when(k == nk - 1)
        def _():
            alpha = ab_ref[0]
            beta = ab_ref[1]
            adj = adj_ref[...].astype(jnp.float32)
            blended = (alpha * acc_ref[...] + beta) * adj
            # Diagonal of the blended matrix is exactly adj[d, d] (M1 has ones on the
            # diagonal and alpha + beta == 1). Patch only on diagonal tiles.
            r = lax.broadcasted_iota(jnp.int32, blended.shape, 0)
            c = lax.broadcasted_iota(jnp.int32, blended.shape, 1)
            comb = jnp.where(jnp.logical_and(i == j, r == c), adj, blended)
            out_ref[...] += jnp.dot(comb.astype(dot_dtype), hw_ref[...],
                                    preferred_element_type=jnp.float32)

    return kernel


# --------------------------------------------------------------------------
# Edge layer, kernel 1: build the diag-patched adjacency ("combined") and the
# per-column max (over rows) used for normalization (applied in the wrapper).
# grid = (j cols [parallel], i rows [arbitrary], k incidence [arbitrary])
# --------------------------------------------------------------------------
def _edge_combined_kernel():
    def kernel(arow_ref, acolT_ref, adj_ref, comb_ref, cmax_ref, acc_ref):
        j = pl.program_id(0)
        i = pl.program_id(1)
        k = pl.program_id(2)
        nk = pl.num_programs(2)

        @pl.when(k == 0)
        def _():
            acc_ref[...] = jnp.zeros_like(acc_ref)

        acc_ref[...] += jnp.dot(arow_ref[...], acolT_ref[...],
                                preferred_element_type=jnp.float32)

        @pl.when(k == nk - 1)
        def _():
            adj = adj_ref[...].astype(jnp.float32)
            comb = acc_ref[...] * adj                      # alpha = 1, beta = 0
            r = lax.broadcasted_iota(jnp.int32, comb.shape, 0)
            c = lax.broadcasted_iota(jnp.int32, comb.shape, 1)
            comb = jnp.where(jnp.logical_and(i == j, r == c), adj, comb)
            comb_ref[...] = comb.astype(comb_ref.dtype)

            # Running per-column max across row tiles (f32, before the storage cast).
            blk_max = jnp.max(comb, axis=0, keepdims=True)

            @pl.when(i == 0)
            def _():
                cmax_ref[...] = blk_max

            @pl.when(i > 0)
            def _():
                cmax_ref[...] = jnp.maximum(cmax_ref[...], blk_max)

    return kernel


# --------------------------------------------------------------------------
# Edge layer, kernel 2: out = combined @ HW_scaled + bias.
# HW_scaled already carries W, the bias init happens at k == 0, and the output
# block (tm, Fop) is accumulated in-place in f32 (no scratch needed).
# --------------------------------------------------------------------------
def _edge_contract_kernel():
    def kernel(comb_ref, hw_ref, bias_ref, out_ref):
        k = pl.program_id(1)

        @pl.when(k == 0)
        def _():
            out_ref[...] = jnp.broadcast_to(bias_ref[...], out_ref.shape)

        out_ref[...] += jnp.dot(comb_ref[...], hw_ref[...],
                                preferred_element_type=jnp.float32)

    return kernel


# --------------------------------------------------------------------------
# Wrapper (mirrors GraphConvolution.forward)
# --------------------------------------------------------------------------
def graph_convolution_forward(H_v, H_e, adj_e, adj_v, T, params, *, a,
                              node_layer, dot_dtype=jnp.bfloat16):
    """Returns (H_v_out, H_e_out) exactly like the PyTorch module.

    dot_dtype: operand dtype for the MXU matmuls (bf16 default for throughput /
    v7x compatibility, f32 for exact verification); accumulation stays f32.
    """
    f32 = jnp.float32
    weight = params["weight"].astype(f32)
    p = params["p"].astype(f32)
    bias = params["bias"].astype(f32)

    if node_layer:
        A, adj, H_d, H_w = T, adj_v, H_e, H_v
        alpha, beta = float(a), float(1.0 - a)
    else:
        A, adj, H_d, H_w = T.T, adj_e, H_v, H_e
        alpha, beta = 1.0, 0.0

    N, K = A.shape
    Fout = weight.shape[1]

    Np = _round_up(N, 256)
    Kp = _round_up(K, 256)
    Fop = _round_up(Fout, 128)          # lane-dense padded output features

    tm = tn = _pick_tile(Np)            # tm == tn so diagonal tiles are exactly i == j
    tk = _pick_tile(Kp)

    # Precompute (cheap XLA ops, amortized over the Np^2 Kp adjacency contraction):
    #   d = H_d @ p.T, folded into the A row stream; A^T for the column stream;
    #   HW = H_w @ W (lane-dense (Np, Fop)).
    A32 = A.astype(f32)
    d = (H_d.astype(f32) @ p.T)[:, 0]                                       # (K,)
    A_scaled = jnp.pad(A32 * d[None, :], ((0, Np - N), (0, Kp - K))).astype(dot_dtype)
    AT_p = jnp.pad(A32.T, ((0, Kp - K), (0, Np - N))).astype(dot_dtype)     # (Kp, Np)
    adj_p = jnp.pad(adj.astype(f32), ((0, Np - N), (0, Np - N))).astype(dot_dtype)
    HW = jnp.pad(H_w.astype(f32) @ weight, ((0, Np - N), (0, Fop - Fout)))  # (Np, Fop) f32
    b_p = jnp.pad(bias.reshape(1, -1), ((0, 0), (0, Fop - Fout)))           # (1, Fop) f32

    esize = jnp.dtype(dot_dtype).itemsize

    if node_layer:
        ab = jnp.array([alpha, beta], dtype=f32)        # SMEM scalars (no recompile per a)
        hw_d = HW.astype(dot_dtype)

        cost = pl.CostEstimate(
            flops=int(2 * Np * Np * Kp + 2 * Np * Np * Fop),
            transcendentals=0,
            bytes_accessed=int(esize * ((Np // tn) * Np * Kp + (Np // tm) * Np * Kp
                                        + Np * Np + (Np // tm) * Np * Fop)
                               + 4 * (Np * Fop + Fop)),
        )

        out_p = pl.pallas_call(
            _fused_node_kernel(dot_dtype),
            out_shape=jax.ShapeDtypeStruct((Np, Fop), f32),
            grid=(Np // tm, Np // tn, Kp // tk),
            in_specs=[
                pl.BlockSpec(memory_space=pltpu.MemorySpace.SMEM),       # [alpha, beta]
                pl.BlockSpec((tm, tk), lambda i, j, k: (i, k)),          # A * d   (rows)
                pl.BlockSpec((tk, tn), lambda i, j, k: (k, j)),          # A^T     (cols)
                pl.BlockSpec((tm, tn), lambda i, j, k: (i, j)),          # adj
                pl.BlockSpec((tn, Fop), lambda i, j, k: (j, 0)),         # HW
                pl.BlockSpec((1, Fop), lambda i, j, k: (0, 0)),          # bias
            ],
            out_specs=pl.BlockSpec((tm, Fop), lambda i, j, k: (i, 0)),
            scratch_shapes=[pltpu.VMEM((tm, tn), jnp.float32)],
            compiler_params=pltpu.CompilerParams(
                dimension_semantics=("parallel", "arbitrary", "arbitrary"),
                vmem_limit_bytes=_VMEM_LIMIT),
            cost_estimate=cost,
        )(ab, A_scaled, AT_p, adj_p, hw_d, b_p)

        out = out_p[:N, :Fout]
        return out, H_e

    # ---------------- edge layer ----------------
    cost1 = pl.CostEstimate(
        flops=int(2 * Np * Np * Kp),
        transcendentals=0,
        bytes_accessed=int(esize * ((Np // tn) * Np * Kp + (Np // tm) * Np * Kp
                                    + 2 * Np * Np) + 4 * Np),
    )

    combined, colmax = pl.pallas_call(
        _edge_combined_kernel(),
        out_shape=(jax.ShapeDtypeStruct((Np, Np), dot_dtype),
                   jax.ShapeDtypeStruct((1, Np), f32)),
        grid=(Np // tn, Np // tm, Kp // tk),
        in_specs=[
            pl.BlockSpec((tm, tk), lambda j, i, k: (i, k)),              # A * d (rows)
            pl.BlockSpec((tk, tn), lambda j, i, k: (k, j)),              # A^T   (cols)
            pl.BlockSpec((tm, tn), lambda j, i, k: (i, j)),              # adj
        ],
        out_specs=(pl.BlockSpec((tm, tn), lambda j, i, k: (i, j)),       # combined
                   pl.BlockSpec((1, tn), lambda j, i, k: (0, j))),       # colmax
        scratch_shapes=[pltpu.VMEM((tm, tn), jnp.float32)],
        compiler_params=pltpu.CompilerParams(
            dimension_semantics=("parallel", "arbitrary", "arbitrary"),
            vmem_limit_bytes=_VMEM_LIMIT),
        cost_estimate=cost1,
    )(A_scaled, AT_p, adj_p)

    # Exact column normalization folded into HW rows (per contracted index, so
    # (combined / colmax) @ HW == combined @ (HW / colmax_rows)). Padded columns
    # have colmax 0 -> clamp 1e-6, but the matching HW rows are zero, so no effect.
    HW_scaled = (HW / jnp.maximum(colmax.reshape(-1, 1), 1e-6)).astype(dot_dtype)

    cost2 = pl.CostEstimate(
        flops=int(2 * Np * Np * Fop),
        transcendentals=0,
        bytes_accessed=int(esize * (Np * Np + (Np // tm) * Np * Fop)
                           + 4 * (Np * Fop + Fop)),
    )

    out_p = pl.pallas_call(
        _edge_contract_kernel(),
        out_shape=jax.ShapeDtypeStruct((Np, Fop), f32),
        grid=(Np // tm, Np // tn),
        in_specs=[
            pl.BlockSpec((tm, tn), lambda i, k: (i, k)),                 # combined
            pl.BlockSpec((tn, Fop), lambda i, k: (k, 0)),                # HW / colmax
            pl.BlockSpec((1, Fop), lambda i, k: (0, 0)),                 # bias
        ],
        out_specs=pl.BlockSpec((tm, Fop), lambda i, k: (i, 0)),
        compiler_params=pltpu.CompilerParams(
            dimension_semantics=("parallel", "arbitrary"),
            vmem_limit_bytes=_VMEM_LIMIT),
        cost_estimate=cost2,
    )(combined, HW_scaled, b_p)

    out = out_p[:N, :Fout]
    return H_v, out


# --------------------------------------------------------------------------
# Pure-JAX reference (for verification)
# --------------------------------------------------------------------------
def _reference_forward(H_v, H_e, adj_e, adj_v, T, params, *, a, node_layer):
    weight, p, bias = params["weight"], params["p"], params["bias"]
    b = 1.0 - a
    if node_layer:
        d = (H_e @ p.T)[:, 0]
        mult = (T * d[None, :]) @ T.T
        eye = jnp.eye(mult.shape[0], dtype=mult.dtype)
        M1 = eye + (1.0 - eye) * mult
        adjA = M1 * adj_v
        Hw = H_v @ weight
        out = a * (adjA @ Hw) + b * (adj_v @ Hw) + bias
        return out, H_e
    else:
        d = (H_v @ p.T)[:, 0]
        mult = (T.T * d[None, :]) @ T
        eye = jnp.eye(mult.shape[0], dtype=mult.dtype)
        M3 = eye + (1.0 - eye) * mult
        adjA = M3 * adj_e
        adjA = adjA / jnp.maximum(jnp.max(adjA, axis=0, keepdims=True), 1e-6)
        out = adjA @ (H_e @ weight) + bias
        return H_v, out


# --------------------------------------------------------------------------
# Main
# --------------------------------------------------------------------------
if __name__ == "__main__":
    # Exact f32 matmuls outside the kernels (reference + HW precompute).
    jax.config.update("jax_default_matmul_precision", "highest")

    key = jax.random.PRNGKey(0)

    # Small synthetic graph, sized so the padded dims (768) give multi-tile grids
    # along rows, columns and the incidence axis (exercises diag/off-diag tiles,
    # the j/k accumulation and the cross-row-tile colmax reduction).
    Nv, Ne = 520, 600
    in_v, out_v = 8, 16
    in_e, out_e = 8, 16
    a = 0.6

    keys = jax.random.split(key, 12)
    H_v = jax.random.normal(keys[0], (Nv, in_v), jnp.float32)
    H_e = jax.random.normal(keys[1], (Ne, in_e), jnp.float32)
    adj_v = jax.random.uniform(keys[2], (Nv, Nv), jnp.float32)
    adj_e = jax.random.uniform(keys[3], (Ne, Ne), jnp.float32)
    # Dense incidence-like matrix (torch.spmm(T, ...) realized densely).
    T = (jax.random.uniform(keys[4], (Nv, Ne), jnp.float32) > 0.7).astype(jnp.float32)

    # Deterministic parameter init mimicking reset_parameters().
    stdv_v = 1.0 / math.sqrt(out_v)
    node_params = {
        "weight": jax.random.uniform(keys[5], (in_v, out_v), jnp.float32, -stdv_v, stdv_v),
        "p": jax.random.normal(keys[6], (1, in_e), jnp.float32),
        "bias": jax.random.uniform(keys[7], (out_v,), jnp.float32, -stdv_v, stdv_v),
    }
    stdv_e = 1.0 / math.sqrt(out_e)
    edge_params = {
        "weight": jax.random.uniform(keys[8], (in_e, out_e), jnp.float32, -stdv_e, stdv_e),
        "p": jax.random.normal(keys[9], (1, in_v), jnp.float32),
        "bias": jax.random.uniform(keys[10], (out_e,), jnp.float32, -stdv_e, stdv_e),
    }

    ref_v, _ = _reference_forward(H_v, H_e, adj_e, adj_v, T, node_params, a=a, node_layer=True)
    _, ref_e = _reference_forward(H_v, H_e, adj_e, adj_v, T, edge_params, a=a, node_layer=False)

    def _relerr(x, r):
        x = np.asarray(x, np.float64)
        r = np.asarray(r, np.float64)
        return float(np.linalg.norm(x - r) / max(np.linalg.norm(r), 1e-12))

    # -------- f32 MXU path (exact) --------
    hv_out, he_out = graph_convolution_forward(
        H_v, H_e, adj_e, adj_v, T, node_params, a=a, node_layer=True,
        dot_dtype=jnp.float32)
    hv_out2, he_out2 = graph_convolution_forward(
        H_v, H_e, adj_e, adj_v, T, edge_params, a=a, node_layer=False,
        dot_dtype=jnp.float32)
    jax.block_until_ready((hv_out, he_out2))

    assert _relerr(hv_out, ref_v) < 2e-3
    assert _relerr(he_out2, ref_e) < 2e-3
    assert he_out is H_e and hv_out2 is H_v  # pass-through outputs, as in PyTorch

    # -------- bf16 MXU operands, f32 accumulation (default throughput mode) --------
    hv_bf, _ = graph_convolution_forward(
        H_v, H_e, adj_e, adj_v, T, node_params, a=a, node_layer=True)
    _, he_bf = graph_convolution_forward(
        H_v, H_e, adj_e, adj_v, T, edge_params, a=a, node_layer=False)
    jax.block_until_ready((hv_bf, he_bf))

    assert _relerr(hv_bf, ref_v) < 3e-2
    assert _relerr(he_bf, ref_e) < 3e-2

    print("KERNEL_OK")
</pallas_src>

<mosaic_0001>
module attributes {stable_mosaic.version = 11 : i64} {
  func.func @kernel(%arg0: i32, %arg1: i32, %arg2: i32, %arg3: memref<2xf32, #tpu.memory_space<smem>>, %arg4: memref<256x256xf32, #tpu.memory_space<vmem>>, %arg5: memref<256x256xf32, #tpu.memory_space<vmem>>, %arg6: memref<256x256xf32, #tpu.memory_space<vmem>>, %arg7: memref<256x128xf32, #tpu.memory_space<vmem>>, %arg8: memref<1x128xf32, #tpu.memory_space<vmem>>, %arg9: memref<256x128xf32, #tpu.memory_space<vmem>>, %arg10: memref<256x256xf32, #tpu.memory_space<vmem>>) attributes {dimension_semantics = [#tpu.dimension_semantics<parallel>, #tpu.dimension_semantics<arbitrary>, #tpu.dimension_semantics<arbitrary>], iteration_bounds = array<i64: 3, 3, 3>, scalar_prefetch = 0 : i64, scratch_operands = 1 : i64, tpu.core_type = #tpu.core_type<tc>, window_params = [{transform_indices = @transform_0, window_bounds = array<i64: 2>}, {transform_indices = @transform_1, window_bounds = array<i64: 256, 256>}, {transform_indices = @transform_2, window_bounds = array<i64: 256, 256>}, {transform_indices = @transform_3, window_bounds = array<i64: 256, 256>}, {transform_indices = @transform_4, window_bounds = array<i64: 256, 128>}, {pipeline_mode = #tpu.pipeline_mode<synchronous>, transform_indices = @transform_5, window_bounds = array<i64: 1, 128>}, {transform_indices = @transform_6, window_bounds = array<i64: 256, 128>}]} {
    %c0_i32 = arith.constant 0 : i32
    %0 = arith.cmpi eq, %arg1, %c0_i32 : i32
    %c0_i32_0 = arith.constant 0 : i32
    %1 = arith.cmpi eq, %arg2, %c0_i32_0 : i32
    %2 = arith.andi %0, %1 : i1
    %3 = arith.extui %2 : i1 to i32
    %c0_i32_1 = arith.constant 0 : i32
    %4 = arith.cmpi ne, %3, %c0_i32_1 : i32
    scf.if %4 {
      %c0_12 = arith.constant 0 : index
      %c0_13 = arith.constant 0 : index
      %17 = vector.load %arg8[%c0_12, %c0_13] : memref<1x128xf32, #tpu.memory_space<vmem>>, vector<1x128xf32>
      %18 = vector.shape_cast %17 : vector<1x128xf32> to vector<1x128xf32>
      %19 = vector.broadcast %18 : vector<1x128xf32> to vector<256x128xf32>
      %c0_14 = arith.constant 0 : index
      %c0_15 = arith.constant 0 : index
      %20 = vector.load %arg9[%c0_14, %c0_15] : memref<256x128xf32, #tpu.memory_space<vmem>>, vector<256x128xf32>
      tpu.vector_store %arg9[%c0_14, %c0_15], %19 {strides = array<i32>} : memref<256x128xf32, #tpu.memory_space<vmem>>, vector<256x128xf32>,
    } else {
    }
    %c0_i32_2 = arith.constant 0 : i32
    %5 = arith.cmpi eq, %arg2, %c0_i32_2 : i32
    %6 = arith.extui %5 : i1 to i32
    %c0_i32_3 = arith.constant 0 : i32
    %7 = arith.cmpi ne, %6, %c0_i32_3 : i32
    scf.if %7 {
      %cst_12 = arith.constant 0.000000e+00 : f32
      %17 = vector.broadcast %cst_12 : f32 to vector<256x256xf32>
      %c0_13 = arith.constant 0 : index
      %c0_14 = arith.constant 0 : index
      %18 = vector.load %arg10[%c0_13, %c0_14] : memref<256x256xf32, #tpu.memory_space<vmem>>, vector<256x256xf32>
      tpu.vector_store %arg10[%c0_13, %c0_14], %17 {strides = array<i32>} : memref<256x256xf32, #tpu.memory_space<vmem>>, vector<256x256xf32>,
    } else {
    }
    %c0 = arith.constant 0 : index
    %c0_4 = arith.constant 0 : index
    %8 = vector.load %arg10[%c0, %c0_4] : memref<256x256xf32, #tpu.memory_space<vmem>>, vector<256x256xf32>
    %c0_5 = arith.constant 0 : index
    %c0_6 = arith.constant 0 : index
    %9 = vector.load %arg4[%c0_5, %c0_6] : memref<256x256xf32, #tpu.memory_space<vmem>>, vector<256x256xf32>
    %c0_7 = arith.constant 0 : index
    %c0_8 = arith.constant 0 : index
    %10 = vector.load %arg5[%c0_7, %c0_8] : memref<256x256xf32, #tpu.memory_space<vmem>>, vector<256x256xf32>
    %cst = arith.constant dense<0.000000e+00> : vector<256x256xf32>
    %11 = tpu.matmul %9, %10, %cst {dimension_numbers = #tpu.dot_dimension_numbers<[1], [0], [0], [1], [0, 0, 1, 1], [], []>, precision = #tpu.contract_precision<fp32>} : vector<256x256xf32>, vector<256x256xf32>, vector<256x256xf32> -> vector<256x256xf32>
    %12 = arith.addf %8, %11 : vector<256x256xf32>
    %c0_9 = arith.constant 0 : index
    %c0_10 = arith.constant 0 : index
    %13 = vector.load %arg10[%c0_9, %c0_10] : memref<256x256xf32, #tpu.memory_space<vmem>>, vector<256x256xf32>
    tpu.vector_store %arg10[%c0_9, %c0_10], %12 {strides = array<i32>} : memref<256x256xf32, #tpu.memory_space<vmem>>, vector<256x256xf32>,
    %c2_i32 = arith.constant 2 : i32
    %14 = arith.cmpi eq, %arg2, %c2_i32 : i32
    %15 = arith.extui %14 : i1 to i32
    %c0_i32_11 = arith.constant 0 : i32
    %16 = arith.cmpi ne, %15, %c0_i32_11 : i32
    scf.if %16 {
      %c0_12 = arith.constant 0 : index
      %17 = memref.load %arg3[%c0_12] : memref<2xf32, #tpu.memory_space<smem>>
      %c1 = arith.constant 1 : index
      %18 = memref.load %arg3[%c1] : memref<2xf32, #tpu.memory_space<smem>>
      %c0_13 = arith.constant 0 : index
      %c0_14 = arith.constant 0 : index
      %19 = vector.load %arg6[%c0_13, %c0_14] : memref<256x256xf32, #tpu.memory_space<vmem>>, vector<256x256xf32>
      %c0_15 = arith.constant 0 : index
      %c0_16 = arith.constant 0 : index
      %20 = vector.load %arg10[%c0_15, %c0_16] : memref<256x256xf32, #tpu.memory_space<vmem>>, vector<256x256xf32>
      %21 = vector.broadcast %17 : f32 to vector<256x256xf32>
      %22 = arith.mulf %21, %20 : vector<256x256xf32>
      %23 = vector.broadcast %18 : f32 to vector<256x256xf32>
      %24 = arith.addf %22, %23 : vector<256x256xf32>
      %25 = arith.mulf %24, %19 : vector<256x256xf32>
      %26 = tpu.iota {dimensions = array<i32: 0>} : vector<256x256xi32>
      %27 = tpu.iota {dimensions = array<i32: 1>} : vector<256x256xi32>
      %28 = arith.cmpi eq, %arg0, %arg1 : i32
      %29 = arith.cmpi eq, %26, %27 : vector<256x256xi32>
      %30 = vector.broadcast %28 : i1 to vector<256x256xi1>
      %31 = arith.andi %30, %29 : vector<256x256xi1>
      %32 = arith.select %31, %19, %25 : vector<256x256xi1>, vector<256x256xf32>
      %c0_17 = arith.constant 0 : index
      %c0_18 = arith.constant 0 : index
      %33 = vector.load %arg9[%c0_17, %c0_18] : memref<256x128xf32, #tpu.memory_space<vmem>>, vector<256x128xf32>
      %c0_19 = arith.constant 0 : index
      %c0_20 = arith.constant 0 : index
      %34 = vector.load %arg7[%c0_19, %c0_20] : memref<256x128xf32, #tpu.memory_space<vmem>>, vector<256x128xf32>
      %cst_21 = arith.constant dense<0.000000e+00> : vector<256x128xf32>
      %35 = tpu.matmul %32, %34, %cst_21 {dimension_numbers = #tpu.dot_dimension_numbers<[1], [0], [0], [1], [0, 0, 1, 1], [], []>, precision = #tpu.contract_precision<fp32>} : vector<256x256xf32>, vector<256x128xf32>, vector<256x128xf32> -> vector<256x128xf32>
      %36 = arith.addf %33, %35 : vector<256x128xf32>
      %c0_22 = arith.constant 0 : index
      %c0_23 = arith.constant 0 : index
      %37 = vector.load %arg9[%c0_22, %c0_23] : memref<256x128xf32, #tpu.memory_space<vmem>>, vector<256x128xf32>
      tpu.vector_store %arg9[%c0_22, %c0_23], %36 {strides = array<i32>} : memref<256x128xf32, #tpu.memory_space<vmem>>, vector<256x128xf32>,
    } else {
    }
    return
  }
  func.func @transform_0(%arg0: i32, %arg1: i32, %arg2: i32) -> i32 {
    %c0_i32 = arith.constant 0 : i32
    %c0_i32_0 = arith.constant 0 : i32
    return %c0_i32 : i32
  }
  func.func @transform_1(%arg0: i32, %arg1: i32, %arg2: i32) -> (i32, i32) {
    %c0_i32 = arith.constant 0 : i32
    return %arg0, %arg2 : i32, i32
  }
  func.func @transform_2(%arg0: i32, %arg1: i32, %arg2: i32) -> (i32, i32) {
    %c0_i32 = arith.constant 0 : i32
    return %arg2, %arg1 : i32, i32
  }
  func.func @transform_3(%arg0: i32, %arg1: i32, %arg2: i32) -> (i32, i32) {
    %c0_i32 = arith.constant 0 : i32
    return %arg0, %arg1 : i32, i32
  }
  func.func @transform_4(%arg0: i32, %arg1: i32, %arg2: i32) -> (i32, i32) {
    %c0_i32 = arith.constant 0 : i32
    %c0_i32_0 = arith.constant 0 : i32
    return %arg1, %c0_i32 : i32, i32
  }
  func.func @transform_5(%arg0: i32, %arg1: i32, %arg2: i32) -> (i32, i32) {
    %c0_i32 = arith.constant 0 : i32
    %c0_i32_0 = arith.constant 0 : i32
    %c0_i32_1 = arith.constant 0 : i32
    return %c0_i32, %c0_i32_0 : i32, i32
  }
  func.func @transform_6(%arg0: i32, %arg1: i32, %arg2: i32) -> (i32, i32) {
    %c0_i32 = arith.constant 0 : i32
    %c0_i32_0 = arith.constant 0 : i32
    return %arg0, %c0_i32 : i32, i32
  }
}

</mosaic_0001>

<llo_original>
// kernel: tpu_custom_call.1
$region0: #{tpu_custom_call.1}
  #allocation0 [shape = 'u32[]', space=smem, size = 0x4, offset = 0x4, fixed_abs, tag = 'smem constant byte address 0x4 - core index']
  #allocation1 [shape = 'u32[144,128]{1,0:T(1,128)}', space=vmem, size = 0x12000, scoped, tag = 'internal scratch']
  #allocation2 [shape = 'f32[256,256]{1,0:T(8,128)}', space=vmem, size = 0x40000, scoped, tag = 'scratch operand']
  %s0 = inlined_call_operand.hbm [shape: f32[2], index: 0, kind: input, shape index: {}]
  %s1 = inlined_call_operand.hbm [shape: f32[768,768], index: 1, kind: input, shape index: {}]
  %s2 = inlined_call_operand.hbm [shape: f32[768,768], index: 2, kind: input, shape index: {}]
  %s3 = inlined_call_operand.hbm [shape: f32[768,768], index: 3, kind: input, shape index: {}]
  %s4 = inlined_call_operand.hbm [shape: f32[768,128], index: 4, kind: input, shape index: {}]
  %s5 = inlined_call_operand.hbm [shape: f32[1,128], index: 5, kind: input, shape index: {}]
  %s6 = inlined_call_operand.hbm [shape: f32[768,128], index: 6, kind: output, shape index: {}]
  %s7 = sld [smem:[#allocation0]]
  $region93: #{tpu_custom_call.1} parent=0
    _
  %s9 = ssub.s32 1, %s7
  %s10 = scalar_select 0, %s9, %s7
  $region1: #{tpu_custom_call.1} parent=0
    #allocation3 [shape = 'u8[512]{0}', space=smem, size = 0x200, scoped, tag = 'input window, operand 0, single buffered']
    #allocation4 [shape = 's32[2]{0}', space=sflag, size = 0x8, scoped, tag = 'scoped memory for tpu_custom_call.1']
    #allocation5 [shape = 's32[2]{0}', space=sflag, size = 0x8, scoped, tag = 'scoped memory for tpu_custom_call.1']
    #allocation6 [shape = 's32[2]{0}', space=sflag, size = 0x8, scoped, tag = 'scoped memory for tpu_custom_call.1']
    #allocation7 [shape = 'u8[524288]{0}', space=vmem, size = 0x80000, scoped, tag = 'input window, operand 1']
    #allocation8 [shape = 'u8[524288]{0}', space=vmem, size = 0x80000, scoped, tag = 'input window, operand 2']
    #allocation9 [shape = 's32[2]{0}', space=sflag, size = 0x8, scoped, tag = 'scoped memory for tpu_custom_call.1']
    #allocation10 [shape = 'u8[524288]{0}', space=vmem, size = 0x80000, scoped, tag = 'input window, operand 3']
    #allocation11 [shape = 'u8[262144]{0}', space=vmem, size = 0x40000, scoped, tag = 'input window, operand 4']
    #allocation12 [shape = 's32[2]{0}', space=sflag, size = 0x8, scoped, tag = 'scoped memory for tpu_custom_call.1']
    #allocation13 [shape = 'u8[512]{0}', space=vmem, size = 0x400, scoped, tag = 'input window, operand 5, single buffered']
    #allocation14 [shape = 'u8[262144]{0}', space=vmem, size = 0x40000, scoped, tag = 'output window, operand 0']
    %11 = vsyncpa [#allocation6], 0
    %12 = vsyncpa [#allocation4], 0
    %s13 = scalar_lea.sflag [#allocation4], 1
    %14 = vsyncpa %s13, 0
    %15 = vsyncpa [#allocation9], 0
    %s16 = scalar_lea.sflag [#allocation9], 1
    %17 = vsyncpa %s16, 0
    %18 = vsyncpa [#allocation12], 0
    %s19 = scalar_lea.sflag [#allocation12], 1
    %20 = vsyncpa %s19, 0
    %21 = vsyncpa [#allocation5], 0
    %s22 = scalar_lea.sflag [#allocation5], 1
    %23 = vsyncpa %s22, 0
    loop: start=0, step=1, limit=29
    $region2: #{tpu_custom_call.1} parent=1 // loop_pre_header
      _
    $region3: #{tpu_custom_call.1} parent=1 // loop_header
      %s25 = sphi 0, %s29
      %p26 = scmp.ge.s32.totalorder %s25, 29
      %s32 = sphi 0, %s51
      %s33 = sphi 0, %s47
      %s34 = sphi 0, %s43
      %s35 = sphi 0, %s32
      %s36 = sphi 0, %s33
      %s37 = sphi 0, %s34
      %s38 = sphi 0, %s35
      %s39 = sphi 0, %s36
      %s40 = sphi 0, %s37
      %s52 = sphi 0, %s52
      %s54 = sphi 0, %s52
      %s55 = sphi 0, %s54
      %s69 = sphi 0, %s55
      %s77 = sphi 0, %s79
      %s80 = sphi 0, %s77
      %s81 = sphi 0, %s80
      %s97 = sphi 0, %s81
      %s105 = sphi 0, %s107
      %s108 = sphi 0, %s105
      %s109 = sphi 0, %s108
      %s125 = sphi 0, %s109
      %s133 = sphi 0, %s135
      %s136 = sphi 0, %s133
      %s137 = sphi 0, %s136
      %s153 = sphi 0, %s137
      %s159 = sphi 0, %s161
      %s162 = sphi 0, %s159
      %s163 = sphi 0, %s162
      %s179 = sphi 0, %s163
      %s183 = sphi 0, %s183
      %s185 = sphi 0, %s183
      %s186 = sphi 0, %s185
      %s200 = sphi 0, %s186
      %s206 = sphi 0, %s208
      %s209 = sphi 0, %s206
      %s210 = sphi 0, %s209
      %s226 = sphi 0, %s210
    $region4: #{tpu_custom_call.1} parent=1 // loop_header_branch
      %28 = sbr.rel (%p26) target = $region8
    $region5: #{tpu_custom_call.1} parent=1 // loop_body
      %s30 = ssub.s32 %s25, 1
      %s31 = ssub.s32 %s25, 2
      %s41 = sadd.s32 1, %s34
      %p42 = scmp.ge.s32.totalorder %s41, 3
      %s43 = scalar_select %p42, 0, %s41
      %s44 = sadd.s32 1, %s33
      %s45 = scalar_select %p42, %s44, %s33
      %p46 = scmp.ge.s32.totalorder %s45, 3
      %s47 = scalar_select %p46, 0, %s45
      %s48 = sadd.s32 1, %s32
      %s49 = scalar_select %p46, %s48, %s32
      %p50 = scmp.ge.s32.totalorder %s49, 3
      %s51 = scalar_select %p50, 0, %s49
      %s53 = sadd.s32 %s52, 1
      %p56 = scmp.eq.s32.totalorder %s25, 26
      %p57 = scmp.ne.s32.totalorder %s52, %s54
      %p58 = scmp.eq.s32.totalorder %s25, 0
      %p59 = por %p57, %p58
      %p60 = scmp.ne.s32.totalorder %s52, %s54
      %p61 = scmp.eq.s32.totalorder %s30, 26
      %p62 = por %p60, %p61
      %p63 = scmp.ne.s32.totalorder %s54, %s55
      %p64 = scmp.eq.s32.totalorder %s30, 0
      %p65 = por %p63, %p64
      %p66 = scmp.ne.s32.totalorder %s54, %s55
      %p67 = scmp.eq.s32.totalorder %s31, 26
      %p68 = por %p66, %p67
      %p70 = scmp.ne.s32.totalorder %s55, %s69
      %p71 = scmp.eq.s32.totalorder %s31, 0
      %p72 = por %p70, %p71
      %s73 = ssub.s32 %s32, %s51
      %s74 = ssub.s32 %s34, %s43
      %s75 = sor.u32 %s73, %s74
      %p76 = scmp.eq.s32.totalorder %s75, 0
      %s78 = sadd.s32 %s77, 1
      %s79 = scalar_select %p76, %s77, %s78
      %p82 = pneg %p76
      %p83 = scmp.eq.s32.totalorder %s25, 26
      %p84 = por %p82, %p83
      %p85 = scmp.ne.s32.totalorder %s77, %s80
      %p86 = scmp.eq.s32.totalorder %s25, 0
      %p87 = por %p85, %p86
      %p88 = scmp.ne.s32.totalorder %s77, %s80
      %p89 = scmp.eq.s32.totalorder %s30, 26
      %p90 = por %p88, %p89
      %p91 = scmp.ne.s32.totalorder %s80, %s81
      %p92 = scmp.eq.s32.totalorder %s30, 0
      %p93 = por %p91, %p92
      %p94 = scmp.ne.s32.totalorder %s80, %s81
      %p95 = scmp.eq.s32.totalorder %s31, 26
      %p96 = por %p94, %p95
      %p98 = scmp.ne.s32.totalorder %s81, %s97
      %p99 = scmp.eq.s32.totalorder %s31, 0
      %p100 = por %p98, %p99
      %s101 = ssub.s32 %s34, %s43
      %s102 = ssub.s32 %s33, %s47
      %s103 = sor.u32 %s101, %s102
      %p104 = scmp.eq.s32.totalorder %s103, 0
      %s106 = sadd.s32 %s105, 1
      %s107 = scalar_select %p104, %s105, %s106
      %p110 = pneg %p104
      %p111 = scmp.eq.s32.totalorder %s25, 26
      %p112 = por %p110, %p111
      %p113 = scmp.ne.s32.totalorder %s105, %s108
      %p114 = scmp.eq.s32.totalorder %s25, 0
      %p115 = por %p113, %p114
      %p116 = scmp.ne.s32.totalorder %s105, %s108
      %p117 = scmp.eq.s32.totalorder %s30, 26
      %p118 = por %p116, %p117
      %p119 = scmp.ne.s32.totalorder %s108, %s109
      %p120 = scmp.eq.s32.totalorder %s30, 0
      %p121 = por %p119, %p120
      %p122 = scmp.ne.s32.totalorder %s108, %s109
      %p123 = scmp.eq.s32.totalorder %s31, 26
      %p124 = por %p122, %p123
      %p126 = scmp.ne.s32.totalorder %s109, %s125
      %p127 = scmp.eq.s32.totalorder %s31, 0
      %p128 = por %p126, %p127
      %s129 = ssub.s32 %s32, %s51
      %s130 = ssub.s32 %s33, %s47
      %s131 = sor.u32 %s129, %s130
      %p132 = scmp.eq.s32.totalorder %s131, 0
      %s134 = sadd.s32 %s133, 1
      %s135 = scalar_select %p132, %s133, %s134
      %p138 = pneg %p132
      %p139 = scmp.eq.s32.totalorder %s25, 26
      %p140 = por %p138, %p139
      %p141 = scmp.ne.s32.totalorder %s133, %s136
      %p142 = scmp.eq.s32.totalorder %s25, 0
      %p143 = por %p141, %p142
      %p144 = scmp.ne.s32.totalorder %s133, %s136
      %p145 = scmp.eq.s32.totalorder %s30, 26
      %p146 = por %p144, %p145
      %p147 = scmp.ne.s32.totalorder %s136, %s137
      %p148 = scmp.eq.s32.totalorder %s30, 0
      %p149 = por %p147, %p148
      %p150 = scmp.ne.s32.totalorder %s136, %s137
      %p151 = scmp.eq.s32.totalorder %s31, 26
      %p152 = por %p150, %p151
      %p154 = scmp.ne.s32.totalorder %s137, %s153
      %p155 = scmp.eq.s32.totalorder %s31, 0
      %p156 = por %p154, %p155
      %s157 = ssub.s32 %s33, %s47
      %p158 = scmp.eq.s32.totalorder %s157, 0
      %s160 = sadd.s32 %s159, 1
      %s161 = scalar_select %p158, %s159, %s160
      %p164 = pneg %p158
      %p165 = scmp.eq.s32.totalorder %s25, 26
      %p166 = por %p164, %p165
      %p167 = scmp.ne.s32.totalorder %s159, %s162
      %p168 = scmp.eq.s32.totalorder %s25, 0
      %p169 = por %p167, %p168
      %p170 = scmp.ne.s32.totalorder %s159, %s162
      %p171 = scmp.eq.s32.totalorder %s30, 26
      %p172 = por %p170, %p171
      %p173 = scmp.ne.s32.totalorder %s162, %s163
      %p174 = scmp.eq.s32.totalorder %s30, 0
      %p175 = por %p173, %p174
      %p176 = scmp.ne.s32.totalorder %s162, %s163
      %p177 = scmp.eq.s32.totalorder %s31, 26
      %p178 = por %p176, %p177
      %p180 = scmp.ne.s32.totalorder %s163, %s179
      %p181 = scmp.eq.s32.totalorder %s31, 0
      %p182 = por %p180, %p181
      %s184 = sadd.s32 %s183, 1
      %p187 = scmp.eq.s32.totalorder %s25, 26
      %p188 = scmp.ne.s32.totalorder %s183, %s185
      %p189 = scmp.eq.s32.totalorder %s25, 0
      %p190 = por %p188, %p189
      %p191 = scmp.ne.s32.totalorder %s183, %s185
      %p192 = scmp.eq.s32.totalorder %s30, 26
      %p193 = por %p191, %p192
      %p194 = scmp.ne.s32.totalorder %s185, %s186
      %p195 = scmp.eq.s32.totalorder %s30, 0
      %p196 = por %p194, %p195
      %p197 = scmp.ne.s32.totalorder %s185, %s186
      %p198 = scmp.eq.s32.totalorder %s31, 26
      %p199 = por %p197, %p198
      %p201 = scmp.ne.s32.totalorder %s186, %s200
      %p202 = scmp.eq.s32.totalorder %s31, 0
      %p203 = por %p201, %p202
      %s204 = ssub.s32 %s32, %s51
      %p205 = scmp.eq.s32.totalorder %s204, 0
      %s207 = sadd.s32 %s206, 1
      %s208 = scalar_select %p205, %s206, %s207
      %p211 = pneg %p205
      %p212 = scmp.eq.s32.totalorder %s25, 26
      %p213 = por %p211, %p212
      %p214 = scmp.ne.s32.totalorder %s206, %s209
      %p215 = scmp.eq.s32.totalorder %s25, 0
      %p216 = por %p214, %p215
      %p217 = scmp.ne.s32.totalorder %s206, %s209
      %p218 = scmp.eq.s32.totalorder %s30, 26
      %p219 = por %p217, %p218
      %p220 = scmp.ne.s32.totalorder %s209, %s210
      %p221 = scmp.eq.s32.totalorder %s30, 0
      %p222 = por %p220, %p221
      %p223 = scmp.ne.s32.totalorder %s209, %s210
      %p224 = scmp.eq.s32.totalorder %s31, 26
      %p225 = por %p223, %p224
      %p227 = scmp.ne.s32.totalorder %s210, %s226
      %p228 = scmp.eq.s32.totalorder %s31, 0
      %p229 = por %p227, %p228
      %p230 = scmp.le.s32.totalorder 1, %s25
      %p231 = scmp.lt.s32.totalorder %s25, 28
      %p232 = pnand %p230, %p231
      %p233 = pneg %p232
      // Predicated region
      $region9: #{tpu_custom_call.1} parent=5 // pred_check
        _
      $region10: #{tpu_custom_call.1} parent=5 // pred_check_branch
        %235 = sbr.rel (%p232) target = $region12
      $region11: #{tpu_custom_call.1} parent=5 // pred_region
        %s236 = ssub.s32 %s25, 1
        // Predicated region
        $region13: #{tpu_custom_call.1} parent=11 // pred_check
          %p237 = pneg %p65
        $region14: #{tpu_custom_call.1} parent=11 // pred_check_branch
          %239 = sbr.rel (%p237) target = $region16
        $region15: #{tpu_custom_call.1} parent=11 // pred_region
          %s241 = ssub.s32 16, 16
          %242 = vsyncadd [#allocation6], %s241
          %245 = dma.hbm_to_smem %s0, 16, [#allocation3], [#allocation6]
        $region16: #{tpu_custom_call.1} parent=11 // pred_fallthru
          _
        // Predicated region
        $region17: #{tpu_custom_call.1} parent=11 // pred_check
          %p246 = pneg %p196
        $region18: #{tpu_custom_call.1} parent=11 // pred_check_branch
          %248 = sbr.rel (%p246) target = $region20
        $region19: #{tpu_custom_call.1} parent=11 // pred_region
          %s250 = ssub.s32 16, 16
          %251 = vsyncadd [#allocation12], %s250
          %s253 = sshll.u32 [#allocation13], 4
          %s254 = int_to_ptr.vmem [resolvable:$true] %s253
          %256 = dma.hbm_to_vmem [thread:$0]  %s5, 16, %s254, [#allocation12]
        $region20: #{tpu_custom_call.1} parent=11 // pred_fallthru
          _
      $region12: #{tpu_custom_call.1} parent=5 // pred_fallthru
        _
      %p257 = scmp.lt.s32.totalorder %s25, 27
      // Predicated region
      $region21: #{tpu_custom_call.1} parent=5 // pred_check
        %p258 = pneg %p257
      $region22: #{tpu_custom_call.1} parent=5 // pred_check_branch
        %260 = sbr.rel (%p258) target = $region24
      $region23: #{tpu_custom_call.1} parent=5 // pred_region
        // Predicated region
        $region25: #{tpu_custom_call.1} parent=23 // pred_check
          %p261 = pneg %p87
        $region26: #{tpu_custom_call.1} parent=23 // pred_check_branch
          %263 = sbr.rel (%p261) target = $region28
        $region27: #{tpu_custom_call.1} parent=23 // pred_region
          %s264 = sand.u32 %s77, 1
          %s265 = scalar_lea.sflag [#allocation4], %s264
          %s266 = sand.u32 %s77, 1
          %s267 = smul.addr %s266, 512
          %s268 = scalar_lea.vmem [#allocation7], %s267
          %s269 = smul.u32 32, %s32
          %s270 = smul.u32 2, %s34
          %s272 = ssub.s32 8192, 8192
          %273 = vsyncadd %s265, %s272
          %s274 = smul.addr %s269, 6
          %s275 = sadd.s32 %s270, %s274
          %s276 = smul.addr %s275, 128
          %s277 = scalar_lea.hbm %s1, %s276
          %s278 = sshll.u32 %s268, 4
          %s279 = int_to_ptr.vmem [resolvable:$true] %s278
          %284 = dma.hbm_to_vmem [thread:$0]  %s277, 8192, %s279, %s265, 768, 256, 16
        $region28: #{tpu_custom_call.1} parent=23 // pred_fallthru
          _
        // Predicated region
        $region29: #{tpu_custom_call.1} parent=23 // pred_check
          %p285 = pneg %p115
        $region30: #{tpu_custom_call.1} parent=23 // pred_check_branch
          %287 = sbr.rel (%p285) target = $region32
        $region31: #{tpu_custom_call.1} parent=23 // pred_region
          %s288 = sand.u32 %s25, 1
          %s289 = scalar_lea.sflag [#allocation9], %s288
          %s290 = sand.u32 %s105, 1
          %s291 = smul.addr %s290, 512
          %s292 = scalar_lea.vmem [#allocation8], %s291
          %s293 = smul.u32 32, %s34
          %s294 = smul.u32 2, %s33
          %s296 = ssub.s32 8192, 8192
          %297 = vsyncadd %s289, %s296
          %s298 = smul.addr %s293, 6
          %s299 = sadd.s32 %s294, %s298
          %s300 = smul.addr %s299, 128
          %s301 = scalar_lea.hbm %s2, %s300
          %s302 = sshll.u32 %s292, 4
          %s303 = int_to_ptr.vmem [resolvable:$true] %s302
          %308 = dma.hbm_to_vmem [thread:$0]  %s301, 8192, %s303, %s289, 768, 256, 16
        $region32: #{tpu_custom_call.1} parent=23 // pred_fallthru
          _
        // Predicated region
        $region33: #{tpu_custom_call.1} parent=23 // pred_check
          %p309 = pneg %p143
        $region34: #{tpu_custom_call.1} parent=23 // pred_check_branch
          %311 = sbr.rel (%p309) target = $region36
        $region35: #{tpu_custom_call.1} parent=23 // pred_region
          %s312 = sand.u32 %s25, 1
          %s313 = scalar_lea.sflag [#allocation9], %s312
          %s314 = sand.u32 %s133, 1
          %s315 = smul.addr %s314, 512
          %s316 = scalar_lea.vmem [#allocation10], %s315
          %s317 = smul.u32 32, %s32
          %s318 = smul.u32 2, %s33
          %s320 = ssub.s32 8192, 8192
          %321 = vsyncadd %s313, %s320
          %s322 = smul.addr %s317, 6
          %s323 = sadd.s32 %s318, %s322
          %s324 = smul.addr %s323, 128
          %s325 = scalar_lea.hbm %s3, %s324
          %s326 = sshll.u32 %s316, 4
          %s327 = int_to_ptr.vmem [resolvable:$true] %s326
          %332 = dma.hbm_to_vmem [thread:$0]  %s325, 8192, %s327, %s313, 768, 256, 16
        $region36: #{tpu_custom_call.1} parent=23 // pred_fallthru
          _
        // Predicated region
        $region37: #{tpu_custom_call.1} parent=23 // pred_check
          %p333 = pneg %p169
        $region38: #{tpu_custom_call.1} parent=23 // pred_check_branch
          %335 = sbr.rel (%p333) target = $region40
        $region39: #{tpu_custom_call.1} parent=23 // pred_region
          %s336 = sand.u32 %s25, 1
          %s337 = scalar_lea.sflag [#allocation12], %s336
          %s338 = sand.u32 %s159, 1
          %s339 = smul.addr %s338, 256
          %s340 = scalar_lea.vmem [#allocation11], %s339
          %s341 = smul.u32 32, %s33
          %s343 = ssub.s32 4096, 4096
          %344 = vsyncadd %s337, %s343
          %s345 = smul.addr %s341, 128
          %s346 = scalar_lea.hbm %s4, %s345
          %s347 = sshll.u32 %s340, 4
          %s348 = int_to_ptr.vmem [resolvable:$true] %s347
          %353 = dma.hbm_to_vmem [thread:$0]  %s346, 4096, %s348, %s337, 128, 128, 8
        $region40: #{tpu_custom_call.1} parent=23 // pred_fallthru
          _
      $region24: #{tpu_custom_call.1} parent=5 // pred_fallthru
        _
      %p354 = scmp.le.s32.totalorder 1, %s25
      %p355 = scmp.lt.s32.totalorder %s25, 28
      %p356 = pnand %p354, %p355
      %p357 = pneg %p356
      // Predicated region
      $region41: #{tpu_custom_call.1} parent=5 // pred_check
        _
      $region42: #{tpu_custom_call.1} parent=5 // pred_check_branch
        %359 = sbr.rel (%p356) target = $region44
      $region43: #{tpu_custom_call.1} parent=5 // pred_region
        %s360 = ssub.s32 %s25, 1
        // Predicated region
        $region45: #{tpu_custom_call.1} parent=43 // pred_check
          %p361 = pneg %p65
        $region46: #{tpu_custom_call.1} parent=43 // pred_check_branch
          %363 = sbr.rel (%p361) target = $region48
        $region47: #{tpu_custom_call.1} parent=43 // pred_region
          %364 = dma.done [#allocation6], 16
        $region48: #{tpu_custom_call.1} parent=43 // pred_fallthru
          _
        %s365 = sand.u32 %s80, 1
        %s366 = scalar_lea.sflag [#allocation4], %s365
        %s367 = sand.u32 %s80, 1
        %s368 = smul.addr %s367, 512
        %s369 = scalar_lea.vmem [#allocation7], %s368
        // Predicated region
        $region49: #{tpu_custom_call.1} parent=43 // pred_check
          %p370 = pneg %p93
        $region50: #{tpu_custom_call.1} parent=43 // pred_check_branch
          %372 = sbr.rel (%p370) target = $region52
        $region51: #{tpu_custom_call.1} parent=43 // pred_region
          %373 = dma.done %s366, 8192
        $region52: #{tpu_custom_call.1} parent=43 // pred_fallthru
          _
        %s374 = sand.u32 %s30, 1
        %s375 = scalar_lea.sflag [#allocation9], %s374
        %s376 = sand.u32 %s108, 1
        %s377 = smul.addr %s376, 512
        %s378 = scalar_lea.vmem [#allocation8], %s377
        // Predicated region
        $region53: #{tpu_custom_call.1} parent=43 // pred_check
          %p379 = pneg %p121
        $region54: #{tpu_custom_call.1} parent=43 // pred_check_branch
          %381 = sbr.rel (%p379) target = $region56
        $region55: #{tpu_custom_call.1} parent=43 // pred_region
          %382 = dma.done %s375, 8192
        $region56: #{tpu_custom_call.1} parent=43 // pred_fallthru
          _
        %s383 = sand.u32 %s30, 1
        %s384 = scalar_lea.sflag [#allocation9], %s383
        %s385 = sand.u32 %s136, 1
        %s386 = smul.addr %s385, 512
        %s387 = scalar_lea.vmem [#allocation10], %s386
        // Predicated region
        $region57: #{tpu_custom_call.1} parent=43 // pred_check
          %p388 = pneg %p149
        $region58: #{tpu_custom_call.1} parent=43 // pred_check_branch
          %390 = sbr.rel (%p388) target = $region60
        $region59: #{tpu_custom_call.1} parent=43 // pred_region
          %391 = dma.done %s384, 8192
        $region60: #{tpu_custom_call.1} parent=43 // pred_fallthru
          _
        %s392 = sand.u32 %s30, 1
        %s393 = scalar_lea.sflag [#allocation12], %s392
        %s394 = sand.u32 %s162, 1
        %s395 = smul.addr %s394, 256
        %s396 = scalar_lea.vmem [#allocation11], %s395
        // Predicated region
        $region61: #{tpu_custom_call.1} parent=43 // pred_check
          %p397 = pneg %p175
        $region62: #{tpu_custom_call.1} parent=43 // pred_check_branch
          %399 = sbr.rel (%p397) target = $region64
        $region63: #{tpu_custom_call.1} parent=43 // pred_region
          %400 = dma.done %s393, 4096
        $region64: #{tpu_custom_call.1} parent=43 // pred_fallthru
          _
        // Predicated region
        $region65: #{tpu_custom_call.1} parent=43 // pred_check
          %p401 = pneg %p196
        $region66: #{tpu_custom_call.1} parent=43 // pred_check_branch
          %403 = sbr.rel (%p401) target = $region68
        $region67: #{tpu_custom_call.1} parent=43 // pred_region
          %404 = dma.done [#allocation12], 16
        $region68: #{tpu_custom_call.1} parent=43 // pred_fallthru
          _
        %405 = sfence
        %p406 = pneg %p65
        %p407 = pneg %p62
        %s408 = sand.u32 %s80, 1
        %s409 = scalar_lea.sflag [#allocation4], %s408
        %s410 = sand.u32 %s80, 1
        %s411 = smul.addr %s410, 512
        %s412 = scalar_lea.vmem [#allocation7], %s411
        %p413 = pneg %p93
        %p414 = pneg %p90
        %s415 = sand.u32 %s30, 1
        %s416 = scalar_lea.sflag [#allocation9], %s415
        %s417 = sand.u32 %s108, 1
        %s418 = smul.addr %s417, 512
        %s419 = scalar_lea.vmem [#allocation8], %s418
        %p420 = pneg %p121
        %p421 = pneg %p118
        %s422 = sand.u32 %s30, 1
        %s423 = scalar_lea.sflag [#allocation9], %s422
        %s424 = sand.u32 %s136, 1
        %s425 = smul.addr %s424, 512
        %s426 = scalar_lea.vmem [#allocation10], %s425
        %p427 = pneg %p149
        %p428 = pneg %p146
        %s429 = sand.u32 %s30, 1
        %s430 = scalar_lea.sflag [#allocation12], %s429
        %s431 = sand.u32 %s162, 1
        %s432 = smul.addr %s431, 256
        %s433 = scalar_lea.vmem [#allocation11], %s432
        %p434 = pneg %p175
        %p435 = pneg %p172
        %p436 = pneg %p196
        %p437 = pneg %p193
        %p438 = pneg %p222
        %p439 = pneg %p219
        %s440 = sand.u32 %s209, 1
        %s441 = scalar_lea.sflag [#allocation5], %s440
        %s442 = sand.u32 %s209, 1
        %s443 = smul.addr %s442, 256
        %s444 = scalar_lea.vmem [#allocation14], %s443
        %s445 = smul.u32 32, %s35
        %s446 = smul.u32 2, %s37
        %s447 = smul.u32 32, %s37
        %s448 = smul.u32 2, %s36
        %s449 = smul.u32 32, %s35
        %s450 = smul.u32 2, %s36
        %s451 = smul.u32 32, %s36
        %s452 = smul.u32 32, %s35
        %p453 = scmp.eq.s32.totalorder %s36, 0
        %p454 = scmp.eq.s32.totalorder %s37, 0
        %p455 = pnand %p453, %p454
        %p456 = pneg %p455
        // Predicated region
        $region69: #{tpu_custom_call.1} parent=43 // pred_check
          _
        $region70: #{tpu_custom_call.1} parent=43 // pred_check_branch
          %458 = sbr.rel (%p455) target = $region72
        $region71: #{tpu_custom_call.1} parent=43 // pred_region
          %v459 = vld [vmem:[#allocation13] sm:$0x1]
          %v461 = vlaneseq
          %v462 = vshrl.u32 %v461, 7
          %v463 = vsub.s32 0, %v462
          %v464 = vrot.slane %v459, %v463
          %466 = vst [vmem:[%s444] sm:$0xff] %v464
          %467 = vst [vmem:[%s444 + $0x8] sm:$0xff] %v464
          %468 = vst [vmem:[%s444 + $0x10] sm:$0xff] %v464
          %469 = vst [vmem:[%s444 + $0x18] sm:$0xff] %v464
          %470 = vst [vmem:[%s444 + $0x20] sm:$0xff] %v464
          %471 = vst [vmem:[%s444 + $0x28] sm:$0xff] %v464
          %472 = vst [vmem:[%s444 + $0x30] sm:$0xff] %v464
          %473 = vst [vmem:[%s444 + $0x38] sm:$0xff] %v464
          %474 = vst [vmem:[%s444 + $0x40] sm:$0xff] %v464
          %475 = vst [vmem:[%s444 + $0x48] sm:$0xff] %v464
          %476 = vst [vmem:[%s444 + $0x50] sm:$0xff] %v464
          %477 = vst [vmem:[%s444 + $0x58] sm:$0xff] %v464
          %478 = vst [vmem:[%s444 + $0x60] sm:$0xff] %v464
          %479 = vst [vmem:[%s444 + $0x68] sm:$0xff] %v464
          %480 = vst [vmem:[%s444 + $0x70] sm:$0xff] %v464
          %481 = vst [vmem:[%s444 + $0x78] sm:$0xff] %v464
          %482 = vst [vmem:[%s444 + $0x80] sm:$0xff] %v464
          %483 = vst [vmem:[%s444 + $0x88] sm:$0xff] %v464
          %484 = vst [vmem:[%s444 + $0x90] sm:$0xff] %v464
          %485 = vst [vmem:[%s444 + $0x98] sm:$0xff] %v464
          %486 = vst [vmem:[%s444 + $0xa0] sm:$0xff] %v464
          %487 = vst [vmem:[%s444 + $0xa8] sm:$0xff] %v464
          %488 = vst [vmem:[%s444 + $0xb0] sm:$0xff] %v464
          %489 = vst [vmem:[%s444 + $0xb8] sm:$0xff] %v464
          %490 = vst [vmem:[%s444 + $0xc0] sm:$0xff] %v464
          %491 = vst [vmem:[%s444 + $0xc8] sm:$0xff] %v464
          %492 = vst [vmem:[%s444 + $0xd0] sm:$0xff] %v464
          %493 = vst [vmem:[%s444 + $0xd8] sm:$0xff] %v464
          %494 = vst [vmem:[%s444 + $0xe0] sm:$0xff] %v464
          %495 = vst [vmem:[%s444 + $0xe8] sm:$0xff] %v464
          %496 = vst [vmem:[%s444 + $0xf0] sm:$0xff] %v464
          %497 = vst [vmem:[%s444 + $0xf8] sm:$0xff] %v464
        $region72: #{tpu_custom_call.1} parent=43 // pred_fallthru
          _
        // Predicated region
        $region73: #{tpu_custom_call.1} parent=43 // pred_check
          %p498 = pneg %p454
        $region74: #{tpu_custom_call.1} parent=43 // pred_check_branch
          %500 = sbr.rel (%p498) target = $region76
        $region75: #{tpu_custom_call.1} parent=43 // pred_region
          %501 = vst [vmem:[#allocation2] sm:$0xff] 0.0
          %502 = vst [vmem:[#allocation2 + $0x8] sm:$0xff] 0.0
          %503 = vst [vmem:[#allocation2 + $0x10] sm:$0xff] 0.0
          %504 = vst [vmem:[#allocation2 + $0x18] sm:$0xff] 0.0
          %505 = vst [vmem:[#allocation2 + $0x20] sm:$0xff] 0.0
          %506 = vst [vmem:[#allocation2 + $0x28] sm:$0xff] 0.0
          %507 = vst [vmem:[#allocation2 + $0x30] sm:$0xff] 0.0
          %508 = vst [vmem:[#allocation2 + $0x38] sm:$0xff] 0.0
          %509 = vst [vmem:[#allocation2 + $0x40] sm:$0xff] 0.0
          %510 = vst [vmem:[#allocation2 + $0x48] sm:$0xff] 0.0
          %511 = vst [vmem:[#allocation2 + $0x50] sm:$0xff] 0.0
          %512 = vst [vmem:[#allocation2 + $0x58] sm:$0xff] 0.0
          %513 = vst [vmem:[#allocation2 + $0x60] sm:$0xff] 0.0
          %514 = vst [vmem:[#allocation2 + $0x68] sm:$0xff] 0.0
          %515 = vst [vmem:[#allocation2 + $0x70] sm:$0xff] 0.0
          %516 = vst [vmem:[#allocation2 + $0x78] sm:$0xff] 0.0
          %517 = vst [vmem:[#allocation2 + $0x80] sm:$0xff] 0.0
          %518 = vst [vmem:[#allocation2 + $0x88] sm:$0xff] 0.0
          %519 = vst [vmem:[#allocation2 + $0x90] sm:$0xff] 0.0
          %520 = vst [vmem:[#allocation2 + $0x98] sm:$0xff] 0.0
          %521 = vst [vmem:[#allocation2 + $0xa0] sm:$0xff] 0.0
          %522 = vst [vmem:[#allocation2 + $0xa8] sm:$0xff] 0.0
          %523 = vst [vmem:[#allocation2 + $0xb0] sm:$0xff] 0.0
          %524 = vst [vmem:[#allocation2 + $0xb8] sm:$0xff] 0.0
          %525 = vst [vmem:[#allocation2 + $0xc0] sm:$0xff] 0.0
          %526 = vst [vmem:[#allocation2 + $0xc8] sm:$0xff] 0.0
          %527 = vst [vmem:[#allocation2 + $0xd0] sm:$0xff] 0.0
          %528 = vst [vmem:[#allocation2 + $0xd8] sm:$0xff] 0.0
          %529 = vst [vmem:[#allocation2 + $0xe0] sm:$0xff] 0.0
          %530 = vst [vmem:[#allocation2 + $0xe8] sm:$0xff] 0.0
          %531 = vst [vmem:[#allocation2 + $0xf0] sm:$0xff] 0.0
          %532 = vst [vmem:[#allocation2 + $0xf8] sm:$0xff] 0.0
          %533 = vst [vmem:[#allocation2 + $0x100] sm:$0xff] 0.0
          %534 = vst [vmem:[#allocation2 + $0x108] sm:$0xff] 0.0
          %535 = vst [vmem:[#allocation2 + $0x110] sm:$0xff] 0.0
          %536 = vst [vmem:[#allocation2 + $0x118] sm:$0xff] 0.0
          %537 = vst [vmem:[#allocation2 + $0x120] sm:$0xff] 0.0
          %538 = vst [vmem:[#allocation2 + $0x128] sm:$0xff] 0.0
          %539 = vst [vmem:[#allocation2 + $0x130] sm:$0xff] 0.0
          %540 = vst [vmem:[#allocation2 + $0x138] sm:$0xff] 0.0
          %541 = vst [vmem:[#allocation2 + $0x140] sm:$0xff] 0.0
          %542 = vst [vmem:[#allocation2 + $0x148] sm:$0xff] 0.0
          %543 = vst [vmem:[#allocation2 + $0x150] sm:$0xff] 0.0
          %544 = vst [vmem:[#allocation2 + $0x158] sm:$0xff] 0.0
          %545 = vst [vmem:[#allocation2 + $0x160] sm:$0xff] 0.0
          %546 = vst [vmem:[#allocation2 + $0x168] sm:$0xff] 0.0
          %547 = vst [vmem:[#allocation2 + $0x170] sm:$0xff] 0.0
          %548 = vst [vmem:[#allocation2 + $0x178] sm:$0xff] 0.0
          %549 = vst [vmem:[#allocation2 + $0x180] sm:$0xff] 0.0
          %550 = vst [vmem:[#allocation2 + $0x188] sm:$0xff] 0.0
          %551 = vst [vmem:[#allocation2 + $0x190] sm:$0xff] 0.0
          %552 = vst [vmem:[#allocation2 + $0x198] sm:$0xff] 0.0
          %553 = vst [vmem:[#allocation2 + $0x1a0] sm:$0xff] 0.0
          %554 = vst [vmem:[#allocation2 + $0x1a8] sm:$0xff] 0.0
          %555 = vst [vmem:[#allocation2 + $0x1b0] sm:$0xff] 0.0
          %556 = vst [vmem:[#allocation2 + $0x1b8] sm:$0xff] 0.0
          %557 = vst [vmem:[#allocation2 + $0x1c0] sm:$0xff] 0.0
          %558 = vst [vmem:[#allocation2 + $0x1c8] sm:$0xff] 0.0
          %559 = vst [vmem:[#allocation2 + $0x1d0] sm:$0xff] 0.0
          %560 = vst [vmem:[#allocation2 + $0x1d8] sm:$0xff] 0.0
          %561 = vst [vmem:[#allocation2 + $0x1e0] sm:$0xff] 0.0
          %562 = vst [vmem:[#allocation2 + $0x1e8] sm:$0xff] 0.0
          %563 = vst [vmem:[#allocation2 + $0x1f0] sm:$0xff] 0.0
          %564 = vst [vmem:[#allocation2 + $0x1f8] sm:$0xff] 0.0
        $region76: #{tpu_custom_call.1} parent=43 // pred_fallthru
          _
        %v565 = vld [vmem:[#allocation2] sm:$0xff]
        %v566 = vld [vmem:[#allocation2 + $0x8] sm:$0xff]
        %v567 = vld [vmem:[#allocation2 + $0x10] sm:$0xff]
        %v568 = vld [vmem:[#allocation2 + $0x18] sm:$0xff]
        %v569 = vld [vmem:[#allocation2 + $0x20] sm:$0xff]
        %v570 = vld [vmem:[#allocation2 + $0x28] sm:$0xff]
        %v571 = vld [vmem:[#allocation2 + $0x30] sm:$0xff]
        %v572 = vld [vmem:[#allocation2 + $0x38] sm:$0xff]
        %v573 = vld [vmem:[#allocation2 + $0x40] sm:$0xff]
        %v574 = vld [vmem:[#allocation2 + $0x48] sm:$0xff]
        %v575 = vld [vmem:[#allocation2 + $0x50] sm:$0xff]
        %v576 = vld [vmem:[#allocation2 + $0x58] sm:$0xff]
        %v577 = vld [vmem:[#allocation2 + $0x60] sm:$0xff]
        %v578 = vld [vmem:[#allocation2 + $0x68] sm:$0xff]
        %v579 = vld [vmem:[#allocation2 + $0x70] sm:$0xff]
        %v580 = vld [vmem:[#allocation2 + $0x78] sm:$0xff]
        %v581 = vld [vmem:[#allocation2 + $0x80] sm:$0xff]
        %v582 = vld [vmem:[#allocation2 + $0x88] sm:$0xff]
        %v583 = vld [vmem:[#allocation2 + $0x90] sm:$0xff]
        %v584 = vld [vmem:[#allocation2 + $0x98] sm:$0xff]
        %v585 = vld [vmem:[#allocation2 + $0xa0] sm:$0xff]
        %v586 = vld [vmem:[#allocation2 + $0xa8] sm:$0xff]
        %v587 = vld [vmem:[#allocation2 + $0xb0] sm:$0xff]
        %v588 = vld [vmem:[#allocation2 + $0xb8] sm:$0xff]
        %v589 = vld [vmem:[#allocation2 + $0xc0] sm:$0xff]
        %v590 = vld [vmem:[#allocation2 + $0xc8] sm:$0xff]
        %v591 = vld [vmem:[#allocation2 + $0xd0] sm:$0xff]
        %v592 = vld [vmem:[#allocation2 + $0xd8] sm:$0xff]
        %v593 = vld [vmem:[#allocation2 + $0xe0] sm:$0xff]
        %v594 = vld [vmem:[#allocation2 + $0xe8] sm:$0xff]
        %v595 = vld [vmem:[#allocation2 + $0xf0] sm:$0xff]
        %v596 = vld [vmem:[#allocation2 + $0xf8] sm:$0xff]
        %v597 = vld [vmem:[#allocation2 + $0x100] sm:$0xff]
        %v598 = vld [vmem:[#allocation2 + $0x108] sm:$0xff]
        %v599 = vld [vmem:[#allocation2 + $0x110] sm:$0xff]
        %v600 = vld [vmem:[#allocation2 + $0x118] sm:$0xff]
        %v601 = vld [vmem:[#allocation2 + $0x120] sm:$0xff]
        %v602 = vld [vmem:[#allocation2 + $0x128] sm:$0xff]
        %v603 = vld [vmem:[#allocation2 + $0x130] sm:$0xff]
        %v604 = vld [vmem:[#allocation2 + $0x138] sm:$0xff]
        %v605 = vld [vmem:[#allocation2 + $0x140] sm:$0xff]
        %v606 = vld [vmem:[#allocation2 + $0x148] sm:$0xff]
        %v607 = vld [vmem:[#allocation2 + $0x150] sm:$0xff]
        %v608 = vld [vmem:[#allocation2 + $0x158] sm:$0xff]
        %v609 = vld [vmem:[#allocation2 + $0x160] sm:$0xff]
        %v610 = vld [vmem:[#allocation2 + $0x168] sm:$0xff]
        %v611 = vld [vmem:[#allocation2 + $0x170] sm:$0xff]
        %v612 = vld [vmem:[#allocation2 + $0x178] sm:$0xff]
        %v613 = vld [vmem:[#allocation2 + $0x180] sm:$0xff]
        %v614 = vld [vmem:[#allocation2 + $0x188] sm:$0xff]
        %v615 = vld [vmem:[#allocation2 + $0x190] sm:$0xff]
        %v616 = vld [vmem:[#allocation2 + $0x198] sm:$0xff]
        %v617 = vld [vmem:[#allocation2 + $0x1a0] sm:$0xff]
        %v618 = vld [vmem:[#allocation2 + $0x1a8] sm:$0xff]
        %v619 = vld [vmem:[#allocation2 + $0x1b0] sm:$0xff]
        %v620 = vld [vmem:[#allocation2 + $0x1b8] sm:$0xff]
        %v621 = vld [vmem:[#allocation2 + $0x1c0] sm:$0xff]
        %v622 = vld [vmem:[#allocation2 + $0x1c8] sm:$0xff]
        %v623 = vld [vmem:[#allocation2 + $0x1d0] sm:$0xff]
        %v624 = vld [vmem:[#allocation2 + $0x1d8] sm:$0xff]
        %v625 = vld [vmem:[#allocation2 + $0x1e0] sm:$0xff]
        %v626 = vld [vmem:[#allocation2 + $0x1e8] sm:$0xff]
        %v627 = vld [vmem:[#allocation2 + $0x1f0] sm:$0xff]
        %v628 = vld [vmem:[#allocation2 + $0x1f8] sm:$0xff]
        %v629 = vld [vmem:[%s369] sm:$0xff]
        %v630 = vld [vmem:[%s369 + $0x8] sm:$0xff]
        %v631 = vld [vmem:[%s369 + $0x10] sm:$0xff]
        %v632 = vld [vmem:[%s369 + $0x18] sm:$0xff]
        %v633 = vld [vmem:[%s369 + $0x20] sm:$0xff]
        %v634 = vld [vmem:[%s369 + $0x28] sm:$0xff]
        %v635 = vld [vmem:[%s369 + $0x30] sm:$0xff]
        %v636 = vld [vmem:[%s369 + $0x38] sm:$0xff]
        %v637 = vld [vmem:[%s369 + $0x40] sm:$0xff]
        %v638 = vld [vmem:[%s369 + $0x48] sm:$0xff]
        %v639 = vld [vmem:[%s369 + $0x50] sm:$0xff]
        %v640 = vld [vmem:[%s369 + $0x58] sm:$0xff]
        %v641 = vld [vmem:[%s369 + $0x60] sm:$0xff]
        %v642 = vld [vmem:[%s369 + $0x68] sm:$0xff]
        %v643 = vld [vmem:[%s369 + $0x70] sm:$0xff]
        %v644 = vld [vmem:[%s369 + $0x78] sm:$0xff]
        %v645 = vld [vmem:[%s369 + $0x80] sm:$0xff]
        %v646 = vld [vmem:[%s369 + $0x88] sm:$0xff]
        %v647 = vld [vmem:[%s369 + $0x90] sm:$0xff]
        %v648 = vld [vmem:[%s369 + $0x98] sm:$0xff]
        %v649 = vld [vmem:[%s369 + $0xa0] sm:$0xff]
        %v650 = vld [vmem:[%s369 + $0xa8] sm:$0xff]
        %v651 = vld [vmem:[%s369 + $0xb0] sm:$0xff]
        %v652 = vld [vmem:[%s369 + $0xb8] sm:$0xff]
        %v653 = vld [vmem:[%s369 + $0xc0] sm:$0xff]
        %v654 = vld [vmem:[%s369 + $0xc8] sm:$0xff]
        %v655 = vld [vmem:[%s369 + $0xd0] sm:$0xff]
        %v656 = vld [vmem:[%s369 + $0xd8] sm:$0xff]
        %v657 = vld [vmem:[%s369 + $0xe0] sm:$0xff]
        %v658 = vld [vmem:[%s369 + $0xe8] sm:$0xff]
        %v659 = vld [vmem:[%s369 + $0xf0] sm:$0xff]
        %v660 = vld [vmem:[%s369 + $0xf8] sm:$0xff]
        %v661 = vld [vmem:[%s369 + $0x100] sm:$0xff]
        %v662 = vld [vmem:[%s369 + $0x108] sm:$0xff]
        %v663 = vld [vmem:[%s369 + $0x110] sm:$0xff]
        %v664 = vld [vmem:[%s369 + $0x118] sm:$0xff]
        %v665 = vld [vmem:[%s369 + $0x120] sm:$0xff]
        %v666 = vld [vmem:[%s369 + $0x128] sm:$0xff]
        %v667 = vld [vmem:[%s369 + $0x130] sm:$0xff]
        %v668 = vld [vmem:[%s369 + $0x138] sm:$0xff]
        %v669 = vld [vmem:[%s369 + $0x140] sm:$0xff]
        %v670 = vld [vmem:[%s369 + $0x148] sm:$0xff]
        %v671 = vld [vmem:[%s369 + $0x150] sm:$0xff]
        %v672 = vld [vmem:[%s369 + $0x158] sm:$0xff]
        %v673 = vld [vmem:[%s369 + $0x160] sm:$0xff]
        %v674 = vld [vmem:[%s369 + $0x168] sm:$0xff]
        %v675 = vld [vmem:[%s369 + $0x170] sm:$0xff]
        %v676 = vld [vmem:[%s369 + $0x178] sm:$0xff]
        %v677 = vld [vmem:[%s369 + $0x180] sm:$0xff]
        %v678 = vld [vmem:[%s369 + $0x188] sm:$0xff]
        %v679 = vld [vmem:[%s369 + $0x190] sm:$0xff]
        %v680 = vld [vmem:[%s369 + $0x198] sm:$0xff]
        %v681 = vld [vmem:[%s369 + $0x1a0] sm:$0xff]
        %v682 = vld [vmem:[%s369 + $0x1a8] sm:$0xff]
        %v683 = vld [vmem:[%s369 + $0x1b0] sm:$0xff]
        %v684 = vld [vmem:[%s369 + $0x1b8] sm:$0xff]
        %v685 = vld [vmem:[%s369 + $0x1c0] sm:$0xff]
        %v686 = vld [vmem:[%s369 + $0x1c8] sm:$0xff]
        %v687 = vld [vmem:[%s369 + $0x1d0] sm:$0xff]
        %v688 = vld [vmem:[%s369 + $0x1d8] sm:$0xff]
        %v689 = vld [vmem:[%s369 + $0x1e0] sm:$0xff]
        %v690 = vld [vmem:[%s369 + $0x1e8] sm:$0xff]
        %v691 = vld [vmem:[%s369 + $0x1f0] sm:$0xff]
        %v692 = vld [vmem:[%s369 + $0x1f8] sm:$0xff]
        %v693 = vld [vmem:[%s378] sm:$0xff]
        %v694 = vld [vmem:[%s378 + $0x8] sm:$0xff]
        %v695 = vld [vmem:[%s378 + $0x10] sm:$0xff]
        %v696 = vld [vmem:[%s378 + $0x18] sm:$0xff]
        %v697 = vld [vmem:[%s378 + $0x20] sm:$0xff]
        %v698 = vld [vmem:[%s378 + $0x28] sm:$0xff]
        %v699 = vld [vmem:[%s378 + $0x30] sm:$0xff]
        %v700 = vld [vmem:[%s378 + $0x38] sm:$0xff]
        %v701 = vld [vmem:[%s378 + $0x40] sm:$0xff]
        %v702 = vld [vmem:[%s378 + $0x48] sm:$0xff]
        %v703 = vld [vmem:[%s378 + $0x50] sm:$0xff]
        %v704 = vld [vmem:[%s378 + $0x58] sm:$0xff]
        %v705 = vld [vmem:[%s378 + $0x60] sm:$0xff]
        %v706 = vld [vmem:[%s378 + $0x68] sm:$0xff]
        %v707 = vld [vmem:[%s378 + $0x70] sm:$0xff]
        %v708 = vld [vmem:[%s378 + $0x78] sm:$0xff]
        %v709 = vld [vmem:[%s378 + $0x80] sm:$0xff]
        %v710 = vld [vmem:[%s378 + $0x88] sm:$0xff]
        %v711 = vld [vmem:[%s378 + $0x90] sm:$0xff]
        %v712 = vld [vmem:[%s378 + $0x98] sm:$0xff]
        %v713 = vld [vmem:[%s378 + $0xa0] sm:$0xff]
        %v714 = vld [vmem:[%s378 + $0xa8] sm:$0xff]
        %v715 = vld [vmem:[%s378 + $0xb0] sm:$0xff]
        %v716 = vld [vmem:[%s378 + $0xb8] sm:$0xff]
        %v717 = vld [vmem:[%s378 + $0xc0] sm:$0xff]
        %v718 = vld [vmem:[%s378 + $0xc8] sm:$0xff]
        %v719 = vld [vmem:[%s378 + $0xd0] sm:$0xff]
        %v720 = vld [vmem:[%s378 + $0xd8] sm:$0xff]
        %v721 = vld [vmem:[%s378 + $0xe0] sm:$0xff]
        %v722 = vld [vmem:[%s378 + $0xe8] sm:$0xff]
        %v723 = vld [vmem:[%s378 + $0xf0] sm:$0xff]
        %v724 = vld [vmem:[%s378 + $0xf8] sm:$0xff]
        %v725 = vld [vmem:[%s378 + $0x100] sm:$0xff]
        %v726 = vld [vmem:[%s378 + $0x108] sm:$0xff]
        %v727 = vld [vmem:[%s378 + $0x110] sm:$0xff]
        %v728 = vld [vmem:[%s378 + $0x118] sm:$0xff]
        %v729 = vld [vmem:[%s378 + $0x120] sm:$0xff]
        %v730 = vld [vmem:[%s378 + $0x128] sm:$0xff]
        %v731 = vld [vmem:[%s378 + $0x130] sm:$0xff]
        %v732 = vld [vmem:[%s378 + $0x138] sm:$0xff]
        %v733 = vld [vmem:[%s378 + $0x140] sm:$0xff]
        %v734 = vld [vmem:[%s378 + $0x148] sm:$0xff]
        %v735 = vld [vmem:[%s378 + $0x150] sm:$0xff]
        %v736 = vld [vmem:[%s378 + $0x158] sm:$0xff]
        %v737 = vld [vmem:[%s378 + $0x160] sm:$0xff]
        %v738 = vld [vmem:[%s378 + $0x168] sm:$0xff]
        %v739 = vld [vmem:[%s378 + $0x170] sm:$0xff]
        %v740 = vld [vmem:[%s378 + $0x178] sm:$0xff]
        %v741 = vld [vmem:[%s378 + $0x180] sm:$0xff]
        %v742 = vld [vmem:[%s378 + $0x188] sm:$0xff]
        %v743 = vld [vmem:[%s378 + $0x190] sm:$0xff]
        %v744 = vld [vmem:[%s378 + $0x198] sm:$0xff]
        %v745 = vld [vmem:[%s378 + $0x1a0] sm:$0xff]
        %v746 = vld [vmem:[%s378 + $0x1a8] sm:$0xff]
        %v747 = vld [vmem:[%s378 + $0x1b0] sm:$0xff]
        %v748 = vld [vmem:[%s378 + $0x1b8] sm:$0xff]
        %v749 = vld [vmem:[%s378 + $0x1c0] sm:$0xff]
        %v750 = vld [vmem:[%s378 + $0x1c8] sm:$0xff]
        %v751 = vld [vmem:[%s378 + $0x1d0] sm:$0xff]
        %v752 = vld [vmem:[%s378 + $0x1d8] sm:$0xff]
        %v753 = vld [vmem:[%s378 + $0x1e0] sm:$0xff]
        %v754 = vld [vmem:[%s378 + $0x1e8] sm:$0xff]
        %v755 = vld [vmem:[%s378 + $0x1f0] sm:$0xff]
        %v756 = vld [vmem:[%s378 + $0x1f8] sm:$0xff]
        %v757 = vand.u32 %v724, 4294901760
        %758 = vmatprep.subr.mxu0 %v757
        %v759 = vand.u32 %v723, 4294901760
        %760 = vmatpush1.msra.mxu0 %v759
        %v761 = vand.u32 %v722, 4294901760
        %762 = vmatprep.subr.mxu0 %v761
        %v763 = vand.u32 %v721, 4294901760
        %764 = vmatpush1.msra.mxu0 %v763
        %v765 = vand.u32 %v720, 4294901760
        %766 = vmatprep.subr.mxu0 %v765
        %v767 = vand.u32 %v719, 4294901760
        %768 = vmatpush1.msra.mxu0 %v767
        %v769 = vand.u32 %v718, 4294901760
        %770 = vmatprep.subr.mxu0 %v769
        %v771 = vand.u32 %v717, 4294901760
        %772 = vmatpush1.msra.mxu0 %v771
        %v773 = vand.u32 %v716, 4294901760
        %774 = vmatprep.subr.mxu0 %v773
        %v775 = vand.u32 %v715, 4294901760
        %776 = vmatpush1.msra.mxu0 %v775
        %v777 = vand.u32 %v714, 4294901760
        %778 = vmatprep.subr.mxu0 %v777
        %v779 = vand.u32 %v713, 4294901760
        %780 = vmatpush1.msra.mxu0 %v779
        %v781 = vand.u32 %v712, 4294901760
        %782 = vmatprep.subr.mxu0 %v781
        %v783 = vand.u32 %v711, 4294901760
        %784 = vmatpush1.msra.mxu0 %v783
        %v785 = vand.u32 %v710, 4294901760
        %786 = vmatprep.subr.mxu0 %v785
        %v787 = vand.u32 %v709, 4294901760
        %788 = vmatpush1.msra.mxu0 %v787
        %v789 = vand.u32 %v708, 4294901760
        %790 = vmatprep.subr.mxu0 %v789
        %v791 = vand.u32 %v707, 4294901760
        %792 = vmatpush1.msra.mxu0 %v791
        %v793 = vand.u32 %v706, 4294901760
        %794 = vmatprep.subr.mxu0 %v793
        %v795 = vand.u32 %v705, 4294901760
        %796 = vmatpush1.msra.mxu0 %v795
        %v797 = vand.u32 %v704, 4294901760
        %798 = vmatprep.subr.mxu0 %v797
        %v799 = vand.u32 %v703, 4294901760
        %800 = vmatpush1.msra.mxu0 %v799
        %v801 = vand.u32 %v702, 4294901760
        %802 = vmatprep.subr.mxu0 %v801
        %v803 = vand.u32 %v701, 4294901760
        %804 = vmatpush1.msra.mxu0 %v803
        %v805 = vand.u32 %v700, 4294901760
        %806 = vmatprep.subr.mxu0 %v805
        %v807 = vand.u32 %v699, 4294901760
        %808 = vmatpush1.msra.mxu0 %v807
        %v809 = vand.u32 %v698, 4294901760
        %810 = vmatprep.subr.mxu0 %v809
        %v811 = vand.u32 %v697, 4294901760
        %812 = vmatpush1.msra.mxu0 %v811
        %v813 = vand.u32 %v696, 4294901760
        %814 = vmatprep.subr.mxu0 %v813
        %v815 = vand.u32 %v695, 4294901760
        %816 = vmatpush1.msra.mxu0 %v815
        %v817 = vand.u32 %v694, 4294901760
        %818 = vmatprep.subr.mxu0 %v817
        %v819 = vand.u32 %v693, 4294901760
        %820 = vmatpush1.msra.mxu0 %v819
        %v821 = vand.u32 %v756, 4294901760
        %822 = vmatprep.subr.mxu0 %v821
        %v823 = vand.u32 %v755, 4294901760
        %824 = vmatpush2.msra.mxu0 %v823
        %v825 = vand.u32 %v754, 4294901760
        %826 = vmatprep.subr.mxu0 %v825
        %v827 = vand.u32 %v753, 4294901760
        %828 = vmatpush2.msra.mxu0 %v827
        %v829 = vand.u32 %v752, 4294901760
        %830 = vmatprep.subr.mxu0 %v829
        %v831 = vand.u32 %v751, 4294901760
        %832 = vmatpush2.msra.mxu0 %v831
        %v833 = vand.u32 %v750, 4294901760
        %834 = vmatprep.subr.mxu0 %v833
        %v835 = vand.u32 %v749, 4294901760
        %836 = vmatpush2.msra.mxu0 %v835
        %v837 = vand.u32 %v748, 4294901760
        %838 = vmatprep.subr.mxu0 %v837
        %v839 = vand.u32 %v747, 4294901760
        %840 = vmatpush2.msra.mxu0 %v839
        %v841 = vand.u32 %v746, 4294901760
        %842 = vmatprep.subr.mxu0 %v841
        %v843 = vand.u32 %v745, 4294901760
        %844 = vmatpush2.msra.mxu0 %v843
        %v845 = vand.u32 %v744, 4294901760
        %846 = vmatprep.subr.mxu0 %v845
        %v847 = vand.u32 %v743, 4294901760
        %848 = vmatpush2.msra.mxu0 %v847
        %v849 = vand.u32 %v742, 4294901760
        %850 = vmatprep.subr.mxu0 %v849
        %v851 = vand.u32 %v741, 4294901760
        %852 = vmatpush2.msra.mxu0 %v851
        %v853 = vand.u32 %v740, 4294901760
        %854 = vmatprep.subr.mxu0 %v853
        %v855 = vand.u32 %v739, 4294901760
        %856 = vmatpush2.msra.mxu0 %v855
        %v857 = vand.u32 %v738, 4294901760
        %858 = vmatprep.subr.mxu0 %v857
        %v859 = vand.u32 %v737, 4294901760
        %860 = vmatpush2.msra.mxu0 %v859
        %v861 = vand.u32 %v736, 4294901760
        %862 = vmatprep.subr.mxu0 %v861
        %v863 = vand.u32 %v735, 4294901760
        %864 = vmatpush2.msra.mxu0 %v863
        %v865 = vand.u32 %v734, 4294901760
        %866 = vmatprep.subr.mxu0 %v865
        %v867 = vand.u32 %v733, 4294901760
        %868 = vmatpush2.msra.mxu0 %v867
        %v869 = vand.u32 %v732, 4294901760
        %870 = vmatprep.subr.mxu0 %v869
        %v871 = vand.u32 %v731, 4294901760
        %872 = vmatpush2.msra.mxu0 %v871
        %v873 = vand.u32 %v730, 4294901760
        %874 = vmatprep.subr.mxu0 %v873
        %v875 = vand.u32 %v729, 4294901760
        %876 = vmatpush2.msra.mxu0 %v875
        %v877 = vand.u32 %v728, 4294901760
        %878 = vmatprep.subr.mxu0 %v877
        %v879 = vand.u32 %v727, 4294901760
        %880 = vmatpush2.msra.mxu0 %v879
        %v881 = vand.u32 %v726, 4294901760
        %882 = vmatprep.subr.mxu0 %v881
        %v883 = vand.u32 %v725, 4294901760
        %884 = vmatpush2.msra.mxu0 %v883
        %v885 = vand.u32 %v630, 4294901760
        %v886 = vsub.f32 %v630, %v885
        %v887 = vand.u32 %v886, 4294901760
        %v888 = vsub.f32 %v886, %v887
        %v889 = vand.u32 %v888, 4294901760
        %890 = vmatprep.mubr.f32.mxu0 %v889
        %v891 = vand.u32 %v629, 4294901760
        %v892 = vsub.f32 %v629, %v891
        %v893 = vand.u32 %v892, 4294901760
        %v894 = vsub.f32 %v892, %v893
        %v895 = vand.u32 %v894, 4294901760
        %896 = vmatmul.mubr.f32.gmra.mxu0 %v895
        %v897 = vpop.f32.mrf.mxu0
        %v898 = vadd.f32 0.0, %v897
        %v899 = vpop.f32.mrf.mxu0
        %v900 = vadd.f32 0.0, %v899
        %v901 = vand.u32 %v632, 4294901760
        %v902 = vsub.f32 %v632, %v901
        %v903 = vand.u32 %v902, 4294901760
        %v904 = vsub.f32 %v902, %v903
        %v905 = vand.u32 %v904, 4294901760
        %906 = vmatprep.mubr.f32.mxu0 %v905
        %v907 = vand.u32 %v631, 4294901760
        %v908 = vsub.f32 %v631, %v907
        %v909 = vand.u32 %v908, 4294901760
        %v910 = vsub.f32 %v908, %v909
        %v911 = vand.u32 %v910, 4294901760
        %912 = vmatmul.mubr.f32.gmra.mxu0 %v911
        %v913 = vpop.f32.mrf.mxu0
        %v914 = vadd.f32 0.0, %v913
        %v915 = vpop.f32.mrf.mxu0
        %v916 = vadd.f32 0.0, %v915
        %v917 = vand.u32 %v634, 4294901760
        %v918 = vsub.f32 %v634, %v917
        %v919 = vand.u32 %v918, 4294901760
        %v920 = vsub.f32 %v918, %v919
        %v921 = vand.u32 %v920, 4294901760
        %922 = vmatprep.mubr.f32.mxu0 %v921
        %v923 = vand.u32 %v633, 4294901760
        %v924 = vsub.f32 %v633, %v923
        %v925 = vand.u32 %v924, 4294901760
        %v926 = vsub.f32 %v924, %v925
        %v927 = vand.u32 %v926, 4294901760
        %928 = vmatmul.mubr.f32.gmra.mxu0 %v927
        %v929 = vpop.f32.mrf.mxu0
        %v930 = vadd.f32 0.0, %v929
        %v931 = vpop.f32.mrf.mxu0
        %v932 = vadd.f32 0.0, %v931
        %v933 = vand.u32 %v636, 4294901760
        %v934 = vsub.f32 %v636, %v933
        %v935 = vand.u32 %v934, 4294901760
        %v936 = vsub.f32 %v934, %v935
        %v937 = vand.u32 %v936, 4294901760
        %938 = vmatprep.mubr.f32.mxu0 %v937
        %v939 = vand.u32 %v635, 4294901760
        %v940 = vsub.f32 %v635, %v939
        %v941 = vand.u32 %v940, 4294901760
        %v942 = vsub.f32 %v940, %v941
        %v943 = vand.u32 %v942, 4294901760
        %944 = vmatmul.mubr.f32.gmra.mxu0 %v943
        %v945 = vpop.f32.mrf.mxu0
        %v946 = vadd.f32 0.0, %v945
        %v947 = vpop.f32.mrf.mxu0
        %v948 = vadd.f32 0.0, %v947
        %v949 = vand.u32 %v638, 4294901760
        %v950 = vsub.f32 %v638, %v949
        %v951 = vand.u32 %v950, 4294901760
        %v952 = vsub.f32 %v950, %v951
        %v953 = vand.u32 %v952, 4294901760
        %954 = vmatprep.mubr.f32.mxu0 %v953
        %v955 = vand.u32 %v637, 4294901760
        %v956 = vsub.f32 %v637, %v955
        %v957 = vand.u32 %v956, 4294901760
        %v958 = vsub.f32 %v956, %v957
        %v959 = vand.u32 %v958, 4294901760
        %960 = vmatmul.mubr.f32.gmra.mxu0 %v959
        %v961 = vpop.f32.mrf.mxu0
        %v962 = vadd.f32 0.0, %v961
        %v963 = vpop.f32.mrf.mxu0
        %v964 = vadd.f32 0.0, %v963
        %v965 = vand.u32 %v640, 4294901760
        %v966 = vsub.f32 %v640, %v965
        %v967 = vand.u32 %v966, 4294901760
        %v968 = vsub.f32 %v966, %v967
        %v969 = vand.u32 %v968, 4294901760
        %970 = vmatprep.mubr.f32.mxu0 %v969
        %v971 = vand.u32 %v639, 4294901760
        %v972 = vsub.f32 %v639, %v971
        %v973 = vand.u32 %v972, 4294901760
        %v974 = vsub.f32 %v972, %v973
        %v975 = vand.u32 %v974, 4294901760
        %976 = vmatmul.mubr.f32.gmra.mxu0 %v975
        %v977 = vpop.f32.mrf.mxu0
        %v978 = vadd.f32 0.0, %v977
        %v979 = vpop.f32.mrf.mxu0
        %v980 = vadd.f32 0.0, %v979
        %v981 = vand.u32 %v642, 4294901760
        %v982 = vsub.f32 %v642, %v981
        %v983 = vand.u32 %v982, 4294901760
        %v984 = vsub.f32 %v982, %v983
        %v985 = vand.u32 %v984, 4294901760
        %986 = vmatprep.mubr.f32.mxu0 %v985
        %v987 = vand.u32 %v641, 4294901760
        %v988 = vsub.f32 %v641, %v987
        %v989 = vand.u32 %v988, 4294901760
        %v990 = vsub.f32 %v988, %v989
        %v991 = vand.u32 %v990, 4294901760
        %992 = vmatmul.mubr.f32.gmra.mxu0 %v991
        %v993 = vpop.f32.mrf.mxu0
        %v994 = vadd.f32 0.0, %v993
        %v995 = vpop.f32.mrf.mxu0
        %v996 = vadd.f32 0.0, %v995
        %v997 = vand.u32 %v644, 4294901760
        %v998 = vsub.f32 %v644, %v997
        %v999 = vand.u32 %v998, 4294901760
        %v1000 = vsub.f32 %v998, %v999
        %v1001 = vand.u32 %v1000, 4294901760
        %1002 = vmatprep.mubr.f32.mxu0 %v1001
        %v1003 = vand.u32 %v643, 4294901760
        %v1004 = vsub.f32 %v643, %v1003
        %v1005 = vand.u32 %v1004, 4294901760
        %v1006 = vsub.f32 %v1004, %v1005
        %v1007 = vand.u32 %v1006, 4294901760
        %1008 = vmatmul.mubr.f32.gmra.mxu0 %v1007
        %v1009 = vpop.f32.mrf.mxu0
        %v1010 = vadd.f32 0.0, %v1009
        %v1011 = vpop.f32.mrf.mxu0
        %v1012 = vadd.f32 0.0, %v1011
        %v1013 = vand.u32 %v646, 4294901760
        %v1014 = vsub.f32 %v646, %v1013
        %v1015 = vand.u32 %v1014, 4294901760
        %v1016 = vsub.f32 %v1014, %v1015
        %v1017 = vand.u32 %v1016, 4294901760
        %1018 = vmatprep.mubr.f32.mxu0 %v1017
        %v1019 = vand.u32 %v645, 4294901760
        %v1020 = vsub.f32 %v645, %v1019
        %v1021 = vand.u32 %v1020, 4294901760
        %v1022 = vsub.f32 %v1020, %v1021
        %v1023 = vand.u32 %v1022, 4294901760
        %1024 = vmatmul.mubr.f32.gmra.mxu0 %v1023
        %v1025 = vpop.f32.mrf.mxu0
        %v1026 = vadd.f32 0.0, %v1025
        %v1027 = vpop.f32.mrf.mxu0
        %v1028 = vadd.f32 0.0, %v1027
        %v1029 = vand.u32 %v648, 4294901760
        %v1030 = vsub.f32 %v648, %v1029
        %v1031 = vand.u32 %v1030, 4294901760
        %v1032 = vsub.f32 %v1030, %v1031
        %v1033 = vand.u32 %v1032, 4294901760
        %1034 = vmatprep.mubr.f32.mxu0 %v1033
        %v1035 = vand.u32 %v647, 4294901760
        %v1036 = vsub.f32 %v647, %v1035
        %v1037 = vand.u32 %v1036, 4294901760
        %v1038 = vsub.f32 %v1036, %v1037
        %v1039 = vand.u32 %v1038, 4294901760
        %1040 = vmatmul.mubr.f32.gmra.mxu0 %v1039
        %v1041 = vpop.f32.mrf.mxu0
        %v1042 = vadd.f32 0.0, %v1041
        %v1043 = vpop.f32.mrf.mxu0
        %v1044 = vadd.f32 0.0, %v1043
        %v1045 = vand.u32 %v650, 4294901760
        %v1046 = vsub.f32 %v650, %v1045
        %v1047 = vand.u32 %v1046, 4294901760
        %v1048 = vsub.f32 %v1046, %v1047
        %v1049 = vand.u32 %v1048, 4294901760
        %1050 = vmatprep.mubr.f32.mxu0 %v1049
        %v1051 = vand.u32 %v649, 4294901760
        %v1052 = vsub.f32 %v649, %v1051
        %v1053 = vand.u32 %v1052, 4294901760
        %v1054 = vsub.f32 %v1052, %v1053
        %v1055 = vand.u32 %v1054, 4294901760
        %1056 = vmatmul.mubr.f32.gmra.mxu0 %v1055
        %v1057 = vpop.f32.mrf.mxu0
        %v1058 = vadd.f32 0.0, %v1057
        %v1059 = vpop.f32.mrf.mxu0
        %v1060 = vadd.f32 0.0, %v1059
        %v1061 = vand.u32 %v652, 4294901760
        %v1062 = vsub.f32 %v652, %v1061
        %v1063 = vand.u32 %v1062, 4294901760
        %v1064 = vsub.f32 %v1062, %v1063
        %v1065 = vand.u32 %v1064, 4294901760
        %1066 = vmatprep.mubr.f32.mxu0 %v1065
        %v1067 = vand.u32 %v651, 4294901760
        %v1068 = vsub.f32 %v651, %v1067
        %v1069 = vand.u32 %v1068, 4294901760
        %v1070 = vsub.f32 %v1068, %v1069
        %v1071 = vand.u32 %v1070, 4294901760
        %1072 = vmatmul.mubr.f32.gmra.mxu0 %v1071
        %v1073 = vpop.f32.mrf.mxu0
        %v1074 = vadd.f32 0.0, %v1073
        %v1075 = vpop.f32.mrf.mxu0
        %v1076 = vadd.f32 0.0, %v1075
        %v1077 = vand.u32 %v654, 4294901760
        %v1078 = vsub.f32 %v654, %v1077
        %v1079 = vand.u32 %v1078, 4294901760
        %v1080 = vsub.f32 %v1078, %v1079
        %v1081 = vand.u32 %v1080, 4294901760
        %1082 = vmatprep.mubr.f32.mxu0 %v1081
        %v1083 = vand.u32 %v653, 4294901760
        %v1084 = vsub.f32 %v653, %v1083
        %v1085 = vand.u32 %v1084, 4294901760
        %v1086 = vsub.f32 %v1084, %v1085
        %v1087 = vand.u32 %v1086, 4294901760
        %1088 = vmatmul.mubr.f32.gmra.mxu0 %v1087
        %v1089 = vpop.f32.mrf.mxu0
        %v1090 = vadd.f32 0.0, %v1089
        %v1091 = vpop.f32.mrf.mxu0
        %v1092 = vadd.f32 0.0, %v1091
        %v1093 = vand.u32 %v656, 4294901760
        %v1094 = vsub.f32 %v656, %v1093
        %v1095 = vand.u32 %v1094, 4294901760
        %v1096 = vsub.f32 %v1094, %v1095
        %v1097 = vand.u32 %v1096, 4294901760
        %1098 = vmatprep.mubr.f32.mxu0 %v1097
        %v1099 = vand.u32 %v655, 4294901760
        %v1100 = vsub.f32 %v655, %v1099
        %v1101 = vand.u32 %v1100, 4294901760
        %v1102 = vsub.f32 %v1100, %v1101
        %v1103 = vand.u32 %v1102, 4294901760
        %1104 = vmatmul.mubr.f32.gmra.mxu0 %v1103
        %v1105 = vpop.f32.mrf.mxu0
        %v1106 = vadd.f32 0.0, %v1105
        %v1107 = vpop.f32.mrf.mxu0
        %v1108 = vadd.f32 0.0, %v1107
        %v1109 = vand.u32 %v658, 4294901760
        %v1110 = vsub.f32 %v658, %v1109
        %v1111 = vand.u32 %v1110, 4294901760
        %v1112 = vsub.f32 %v1110, %v1111
        %v1113 = vand.u32 %v1112, 4294901760
        %1114 = vmatprep.mubr.f32.mxu0 %v1113
        %v1115 = vand.u32 %v657, 4294901760
        %v1116 = vsub.f32 %v657, %v1115
        %v1117 = vand.u32 %v1116, 4294901760
        %v1118 = vsub.f32 %v1116, %v1117
        %v1119 = vand.u32 %v1118, 4294901760
        %1120 = vmatmul.mubr.f32.gmra.mxu0 %v1119
        %v1121 = vpop.f32.mrf.mxu0
        %v1122 = vadd.f32 0.0, %v1121
        %v1123 = vpop.f32.mrf.mxu0
        %v1124 = vadd.f32 0.0, %v1123
        %v1125 = vand.u32 %v660, 4294901760
        %v1126 = vsub.f32 %v660, %v1125
        %v1127 = vand.u32 %v1126, 4294901760
        %v1128 = vsub.f32 %v1126, %v1127
        %v1129 = vand.u32 %v1128, 4294901760
        %1130 = vmatprep.mubr.f32.mxu0 %v1129
        %v1131 = vand.u32 %v659, 4294901760
        %v1132 = vsub.f32 %v659, %v1131
        %v1133 = vand.u32 %v1132, 4294901760
        %v1134 = vsub.f32 %v1132, %v1133
        %v1135 = vand.u32 %v1134, 4294901760
        %1136 = vmatmul.mubr.f32.gmra.mxu0 %v1135
        %v1137 = vpop.f32.mrf.mxu0
        %v1138 = vadd.f32 0.0, %v1137
        %v1139 = vpop.f32.mrf.mxu0
        %v1140 = vadd.f32 0.0, %v1139
        %v1141 = vand.u32 %v662, 4294901760
        %v1142 = vsub.f32 %v662, %v1141
        %v1143 = vand.u32 %v1142, 4294901760
        %v1144 = vsub.f32 %v1142, %v1143
        %v1145 = vand.u32 %v1144, 4294901760
        %1146 = vmatprep.mubr.f32.mxu0 %v1145
        %v1147 = vand.u32 %v661, 4294901760
        %v1148 = vsub.f32 %v661, %v1147
        %v1149 = vand.u32 %v1148, 4294901760
        %v1150 = vsub.f32 %v1148, %v1149
        %v1151 = vand.u32 %v1150, 4294901760
        %1152 = vmatmul.mubr.f32.gmra.mxu0 %v1151
        %v1153 = vpop.f32.mrf.mxu0
        %v1154 = vadd.f32 0.0, %v1153
        %v1155 = vpop.f32.mrf.mxu0
        %v1156 = vadd.f32 0.0, %v1155
        %v1157 = vand.u32 %v664, 4294901760
        %v1158 = vsub.f32 %v664, %v1157
        %v1159 = vand.u32 %v1158, 4294901760
        %v1160 = vsub.f32 %v1158, %v1159
        %v1161 = vand.u32 %v1160, 4294901760
        %1162 = vmatprep.mubr.f32.mxu0 %v1161
        %v1163 = vand.u32 %v663, 4294901760
        %v1164 = vsub.f32 %v663, %v1163
        %v1165 = vand.u32 %v1164, 4294901760
        %v1166 = vsub.f32 %v1164, %v1165
        %v1167 = vand.u32 %v1166, 4294901760
        %1168 = vmatmul.mubr.f32.gmra.mxu0 %v1167
        %v1169 = vpop.f32.mrf.mxu0
        %v1170 = vadd.f32 0.0, %v1169
        %v1171 = vpop.f32.mrf.mxu0
        %v1172 = vadd.f32 0.0, %v1171
        %v1173 = vand.u32 %v666, 4294901760
        %v1174 = vsub.f32 %v666, %v1173
        %v1175 = vand.u32 %v1174, 4294901760
        %v1176 = vsub.f32 %v1174, %v1175
        %v1177 = vand.u32 %v1176, 4294901760
        %1178 = vmatprep.mubr.f32.mxu0 %v1177
        %v1179 = vand.u32 %v665, 4294901760
        %v1180 = vsub.f32 %v665, %v1179
        %v1181 = vand.u32 %v1180, 4294901760
        %v1182 = vsub.f32 %v1180, %v1181
        %v1183 = vand.u32 %v1182, 4294901760
        %1184 = vmatmul.mubr.f32.gmra.mxu0 %v1183
        %v1185 = vpop.f32.mrf.mxu0
        %v1186 = vadd.f32 0.0, %v1185
        %v1187 = vpop.f32.mrf.mxu0
        %v1188 = vadd.f32 0.0, %v1187
        %v1189 = vand.u32 %v668, 4294901760
        %v1190 = vsub.f32 %v668, %v1189
        %v1191 = vand.u32 %v1190, 4294901760
        %v1192 = vsub.f32 %v1190, %v1191
        %v1193 = vand.u32 %v1192, 4294901760
        %1194 = vmatprep.mubr.f32.mxu0 %v1193
        %v1195 = vand.u32 %v667, 4294901760
        %v1196 = vsub.f32 %v667, %v1195
        %v1197 = vand.u32 %v1196, 4294901760
        %v1198 = vsub.f32 %v1196, %v1197
        %v1199 = vand.u32 %v1198, 4294901760
        %1200 = vmatmul.mubr.f32.gmra.mxu0 %v1199
        %v1201 = vpop.f32.mrf.mxu0
        %v1202 = vadd.f32 0.0, %v1201
        %v1203 = vpop.f32.mrf.mxu0
        %v1204 = vadd.f32 0.0, %v1203
        %v1205 = vand.u32 %v670, 4294901760
        %v1206 = vsub.f32 %v670, %v1205
        %v1207 = vand.u32 %v1206, 4294901760
        %v1208 = vsub.f32 %v1206, %v1207
        %v1209 = vand.u32 %v1208, 4294901760
        %1210 = vmatprep.mubr.f32.mxu0 %v1209
        %v1211 = vand.u32 %v669, 4294901760
        %v1212 = vsub.f32 %v669, %v1211
        %v1213 = vand.u32 %v1212, 4294901760
        %v1214 = vsub.f32 %v1212, %v1213
        %v1215 = vand.u32 %v1214, 4294901760
        %1216 = vmatmul.mubr.f32.gmra.mxu0 %v1215
        %v1217 = vpop.f32.mrf.mxu0
        %v1218 = vadd.f32 0.0, %v1217
        %v1219 = vpop.f32.mrf.mxu0
        %v1220 = vadd.f32 0.0, %v1219
        %v1221 = vand.u32 %v672, 4294901760
        %v1222 = vsub.f32 %v672, %v1221
        %v1223 = vand.u32 %v1222, 4294901760
        %v1224 = vsub.f32 %v1222, %v1223
        %v1225 = vand.u32 %v1224, 4294901760
        %1226 = vmatprep.mubr.f32.mxu0 %v1225
        %v1227 = vand.u32 %v671, 4294901760
        %v1228 = vsub.f32 %v671, %v1227
        %v1229 = vand.u32 %v1228, 4294901760
        %v1230 = vsub.f32 %v1228, %v1229
        %v1231 = vand.u32 %v1230, 4294901760
        %1232 = vmatmul.mubr.f32.gmra.mxu0 %v1231
        %v1233 = vpop.f32.mrf.mxu0
        %v1234 = vadd.f32 0.0, %v1233
        %v1235 = vpop.f32.mrf.mxu0
        %v1236 = vadd.f32 0.0, %v1235
        %v1237 = vand.u32 %v674, 4294901760
        %v1238 = vsub.f32 %v674, %v1237
        %v1239 = vand.u32 %v1238, 4294901760
        %v1240 = vsub.f32 %v1238, %v1239
        %v1241 = vand.u32 %v1240, 4294901760
        %1242 = vmatprep.mubr.f32.mxu0 %v1241
        %v1243 = vand.u32 %v673, 4294901760
        %v1244 = vsub.f32 %v673, %v1243
        %v1245 = vand.u32 %v1244, 4294901760
        %v1246 = vsub.f32 %v1244, %v1245
        %v1247 = vand.u32 %v1246, 4294901760
        %1248 = vmatmul.mubr.f32.gmra.mxu0 %v1247
        %v1249 = vpop.f32.mrf.mxu0
        %v1250 = vadd.f32 0.0, %v1249
        %v1251 = vpop.f32.mrf.mxu0
        %v1252 = vadd.f32 0.0, %v1251
        %v1253 = vand.u32 %v676, 4294901760
        %v1254 = vsub.f32 %v676, %v1253
        %v1255 = vand.u32 %v1254, 4294901760
        %v1256 = vsub.f32 %v1254, %v1255
        %v1257 = vand.u32 %v1256, 4294901760
        %1258 = vmatprep.mubr.f32.mxu0 %v1257
        %v1259 = vand.u32 %v675, 4294901760
        %v1260 = vsub.f32 %v675, %v1259
        %v1261 = vand.u32 %v1260, 4294901760
        %v1262 = vsub.f32 %v1260, %v1261
        %v1263 = vand.u32 %v1262, 4294901760
        %1264 = vmatmul.mubr.f32.gmra.mxu0 %v1263
        %v1265 = vpop.f32.mrf.mxu0
        %v1266 = vadd.f32 0.0, %v1265
        %v1267 = vpop.f32.mrf.mxu0
        %v1268 = vadd.f32 0.0, %v1267
        %v1269 = vand.u32 %v678, 4294901760
        %v1270 = vsub.f32 %v678, %v1269
        %v1271 = vand.u32 %v1270, 4294901760
        %v1272 = vsub.f32 %v1270, %v1271
        %v1273 = vand.u32 %v1272, 4294901760
        %1274 = vmatprep.mubr.f32.mxu0 %v1273
        %v1275 = vand.u32 %v677, 4294901760
        %v1276 = vsub.f32 %v677, %v1275
        %v1277 = vand.u32 %v1276, 4294901760
        %v1278 = vsub.f32 %v1276, %v1277
        %v1279 = vand.u32 %v1278, 4294901760
        %1280 = vmatmul.mubr.f32.gmra.mxu0 %v1279
        %v1281 = vpop.f32.mrf.mxu0
        %v1282 = vadd.f32 0.0, %v1281
        %v1283 = vpop.f32.mrf.mxu0
        %v1284 = vadd.f32 0.0, %v1283
        %v1285 = vand.u32 %v680, 4294901760
        %v1286 = vsub.f32 %v680, %v1285
        %v1287 = vand.u32 %v1286, 4294901760
        %v1288 = vsub.f32 %v1286, %v1287
        %v1289 = vand.u32 %v1288, 4294901760
        %1290 = vmatprep.mubr.f32.mxu0 %v1289
        %v1291 = vand.u32 %v679, 4294901760
        %v1292 = vsub.f32 %v679, %v1291
        %v1293 = vand.u32 %v1292, 4294901760
        %v1294 = vsub.f32 %v1292, %v1293
        %v1295 = vand.u32 %v1294, 4294901760
        %1296 = vmatmul.mubr.f32.gmra.mxu0 %v1295
        %v1297 = vpop.f32.mrf.mxu0
        %v1298 = vadd.f32 0.0, %v1297
        %v1299 = vpop.f32.mrf.mxu0
        %v1300 = vadd.f32 0.0, %v1299
        %v1301 = vand.u32 %v682, 4294901760
        %v1302 = vsub.f32 %v682, %v1301
        %v1303 = vand.u32 %v1302, 4294901760
        %v1304 = vsub.f32 %v1302, %v1303
        %v1305 = vand.u32 %v1304, 4294901760
        %1306 = vmatprep.mubr.f32.mxu0 %v1305
        %v1307 = vand.u32 %v681, 4294901760
        %v1308 = vsub.f32 %v681, %v1307
        %v1309 = vand.u32 %v1308, 4294901760
        %v1310 = vsub.f32 %v1308, %v1309
        %v1311 = vand.u32 %v1310, 4294901760
        %1312 = vmatmul.mubr.f32.gmra.mxu0 %v1311
        %v1313 = vpop.f32.mrf.mxu0
        %v1314 = vadd.f32 0.0, %v1313
        %v1315 = vpop.f32.mrf.mxu0
        %v1316 = vadd.f32 0.0, %v1315
        %v1317 = vand.u32 %v684, 4294901760
        %v1318 = vsub.f32 %v684, %v1317
        %v1319 = vand.u32 %v1318, 4294901760
        %v1320 = vsub.f32 %v1318, %v1319
        %v1321 = vand.u32 %v1320, 4294901760
        %1322 = vmatprep.mubr.f32.mxu0 %v1321
        %v1323 = vand.u32 %v683, 4294901760
        %v1324 = vsub.f32 %v683, %v1323
        %v1325 = vand.u32 %v1324, 4294901760
        %v1326 = vsub.f32 %v1324, %v1325
        %v1327 = vand.u32 %v1326, 4294901760
        %1328 = vmatmul.mubr.f32.gmra.mxu0 %v1327
        %v1329 = vpop.f32.mrf.mxu0
        %v1330 = vadd.f32 0.0, %v1329
        %v1331 = vpop.f32.mrf.mxu0
        %v1332 = vadd.f32 0.0, %v1331
        %v1333 = vand.u32 %v686, 4294901760
        %v1334 = vsub.f32 %v686, %v1333
        %v1335 = vand.u32 %v1334, 4294901760
        %v1336 = vsub.f32 %v1334, %v1335
        %v1337 = vand.u32 %v1336, 4294901760
        %1338 = vmatprep.mubr.f32.mxu0 %v1337
        %v1339 = vand.u32 %v685, 4294901760
        %v1340 = vsub.f32 %v685, %v1339
        %v1341 = vand.u32 %v1340, 4294901760
        %v1342 = vsub.f32 %v1340, %v1341
        %v1343 = vand.u32 %v1342, 4294901760
        %1344 = vmatmul.mubr.f32.gmra.mxu0 %v1343
        %v1345 = vpop.f32.mrf.mxu0
        %v1346 = vadd.f32 0.0, %v1345
        %v1347 = vpop.f32.mrf.mxu0
        %v1348 = vadd.f32 0.0, %v1347
        %v1349 = vand.u32 %v688, 4294901760
        %v1350 = vsub.f32 %v688, %v1349
        %v1351 = vand.u32 %v1350, 4294901760
        %v1352 = vsub.f32 %v1350, %v1351
        %v1353 = vand.u32 %v1352, 4294901760
        %1354 = vmatprep.mubr.f32.mxu0 %v1353
        %v1355 = vand.u32 %v687, 4294901760
        %v1356 = vsub.f32 %v687, %v1355
        %v1357 = vand.u32 %v1356, 4294901760
        %v1358 = vsub.f32 %v1356, %v1357
        %v1359 = vand.u32 %v1358, 4294901760
        %1360 = vmatmul.mubr.f32.gmra.mxu0 %v1359
        %v1361 = vpop.f32.mrf.mxu0
        %v1362 = vadd.f32 0.0, %v1361
        %v1363 = vpop.f32.mrf.mxu0
        %v1364 = vadd.f32 0.0, %v1363
        %v1365 = vand.u32 %v690, 4294901760
        %v1366 = vsub.f32 %v690, %v1365
        %v1367 = vand.u32 %v1366, 4294901760
        %v1368 = vsub.f32 %v1366, %v1367
        %v1369 = vand.u32 %v1368, 4294901760
        %1370 = vmatprep.mubr.f32.mxu0 %v1369
        %v1371 = vand.u32 %v689, 4294901760
        %v1372 = vsub.f32 %v689, %v1371
        %v1373 = vand.u32 %v1372, 4294901760
        %v1374 = vsub.f32 %v1372, %v1373
        %v1375 = vand.u32 %v1374, 4294901760
        %1376 = vmatmul.mubr.f32.gmra.mxu0 %v1375
        %v1377 = vpop.f32.mrf.mxu0
        %v1378 = vadd.f32 0.0, %v1377
        %v1379 = vpop.f32.mrf.mxu0
        %v1380 = vadd.f32 0.0, %v1379
        %v1381 = vand.u32 %v692, 4294901760
        %v1382 = vsub.f32 %v692, %v1381
        %v1383 = vand.u32 %v1382, 4294901760
        %v1384 = vsub.f32 %v1382, %v1383
        %v1385 = vand.u32 %v1384, 4294901760
        %1386 = vmatprep.mubr.f32.mxu0 %v1385
        %v1387 = vand.u32 %v691, 4294901760
        %v1388 = vsub.f32 %v691, %v1387
        %v1389 = vand.u32 %v1388, 4294901760
        %v1390 = vsub.f32 %v1388, %v1389
        %v1391 = vand.u32 %v1390, 4294901760
        %1392 = vmatmul.mubr.f32.gmra.mxu0 %v1391
        %v1393 = vpop.f32.mrf.mxu0
        %v1394 = vadd.f32 0.0, %v1393
        %v1395 = vpop.f32.mrf.mxu0
        %v1396 = vadd.f32 0.0, %v1395
        %1397 = vdwg.mxu0
        %v1398 = vand.u32 %v724, 4294901760
        %v1399 = vsub.f32 %v724, %v1398
        %v1400 = vand.u32 %v1399, 4294901760
        %v1401 = vsub.f32 %v1399, %v1400
        %v1402 = vand.u32 %v1401, 4294901760
        %1403 = vmatprep.subr.mxu0 %v1402
        %v1404 = vand.u32 %v723, 4294901760
        %v1405 = vsub.f32 %v723, %v1404
        %v1406 = vand.u32 %v1405, 4294901760
        %v1407 = vsub.f32 %v1405, %v1406
        %v1408 = vand.u32 %v1407, 4294901760
        %1409 = vmatpush1.msra.mxu0 %v1408
        %v1410 = vand.u32 %v722, 4294901760
        %v1411 = vsub.f32 %v722, %v1410
        %v1412 = vand.u32 %v1411, 4294901760
        %v1413 = vsub.f32 %v1411, %v1412
        %v1414 = vand.u32 %v1413, 4294901760
        %1415 = vmatprep.subr.mxu0 %v1414
        %v1416 = vand.u32 %v721, 4294901760
        %v1417 = vsub.f32 %v721, %v1416
        %v1418 = vand.u32 %v1417, 4294901760
        %v1419 = vsub.f32 %v1417, %v1418
        %v1420 = vand.u32 %v1419, 4294901760
        %1421 = vmatpush1.msra.mxu0 %v1420
        %v1422 = vand.u32 %v720, 4294901760
        %v1423 = vsub.f32 %v720, %v1422
        %v1424 = vand.u32 %v1423, 4294901760
        %v1425 = vsub.f32 %v1423, %v1424
        %v1426 = vand.u32 %v1425, 4294901760
        %1427 = vmatprep.subr.mxu0 %v1426
        %v1428 = vand.u32 %v719, 4294901760
        %v1429 = vsub.f32 %v719, %v1428
        %v1430 = vand.u32 %v1429, 4294901760
        %v1431 = vsub.f32 %v1429, %v1430
        %v1432 = vand.u32 %v1431, 4294901760
        %1433 = vmatpush1.msra.mxu0 %v1432
        %v1434 = vand.u32 %v718, 4294901760
        %v1435 = vsub.f32 %v718, %v1434
        %v1436 = vand.u32 %v1435, 4294901760
        %v1437 = vsub.f32 %v1435, %v1436
        %v1438 = vand.u32 %v1437, 4294901760
        %1439 = vmatprep.subr.mxu0 %v1438
        %v1440 = vand.u32 %v717, 4294901760
        %v1441 = vsub.f32 %v717, %v1440
        %v1442 = vand.u32 %v1441, 4294901760
        %v1443 = vsub.f32 %v1441, %v1442
        %v1444 = vand.u32 %v1443, 4294901760
        %1445 = vmatpush1.msra.mxu0 %v1444
        %v1446 = vand.u32 %v716, 4294901760
        %v1447 = vsub.f32 %v716, %v1446
        %v1448 = vand.u32 %v1447, 4294901760
        %v1449 = vsub.f32 %v1447, %v1448
        %v1450 = vand.u32 %v1449, 4294901760
        %1451 = vmatprep.subr.mxu0 %v1450
        %v1452 = vand.u32 %v715, 4294901760
        %v1453 = vsub.f32 %v715, %v1452
        %v1454 = vand.u32 %v1453, 4294901760
        %v1455 = vsub.f32 %v1453, %v1454
        %v1456 = vand.u32 %v1455, 4294901760
        %1457 = vmatpush1.msra.mxu0 %v1456
        %v1458 = vand.u32 %v714, 4294901760
        %v1459 = vsub.f32 %v714, %v1458
        %v1460 = vand.u32 %v1459, 4294901760
        %v1461 = vsub.f32 %v1459, %v1460
        %v1462 = vand.u32 %v1461, 4294901760
        %1463 = vmatprep.subr.mxu0 %v1462
        %v1464 = vand.u32 %v713, 4294901760
        %v1465 = vsub.f32 %v713, %v1464
        %v1466 = vand.u32 %v1465, 4294901760
        %v1467 = vsub.f32 %v1465, %v1466
        %v1468 = vand.u32 %v1467, 4294901760
        %1469 = vmatpush1.msra.mxu0 %v1468
        %v1470 = vand.u32 %v712, 4294901760
        %v1471 = vsub.f32 %v712, %v1470
        %v1472 = vand.u32 %v1471, 4294901760
        %v1473 = vsub.f32 %v1471, %v1472
        %v1474 = vand.u32 %v1473, 4294901760
        %1475 = vmatprep.subr.mxu0 %v1474
        %v1476 = vand.u32 %v711, 4294901760
        %v1477 = vsub.f32 %v711, %v1476
        %v1478 = vand.u32 %v1477, 4294901760
        %v1479 = vsub.f32 %v1477, %v1478
        %v1480 = vand.u32 %v1479, 4294901760
        %1481 = vmatpush1.msra.mxu0 %v1480
        %v1482 = vand.u32 %v710, 4294901760
        %v1483 = vsub.f32 %v710, %v1482
        %v1484 = vand.u32 %v1483, 4294901760
        %v1485 = vsub.f32 %v1483, %v1484
        %v1486 = vand.u32 %v1485, 4294901760
        %1487 = vmatprep.subr.mxu0 %v1486
        %v1488 = vand.u32 %v709, 4294901760
        %v1489 = vsub.f32 %v709, %v1488
        %v1490 = vand.u32 %v1489, 4294901760
        %v1491 = vsub.f32 %v1489, %v1490
        %v1492 = vand.u32 %v1491, 4294901760
        %1493 = vmatpush1.msra.mxu0 %v1492
        %v1494 = vand.u32 %v708, 4294901760
        %v1495 = vsub.f32 %v708, %v1494
        %v1496 = vand.u32 %v1495, 4294901760
        %v1497 = vsub.f32 %v1495, %v1496
        %v1498 = vand.u32 %v1497, 4294901760
        %1499 = vmatprep.subr.mxu0 %v1498
        %v1500 = vand.u32 %v707, 4294901760
        %v1501 = vsub.f32 %v707, %v1500
        %v1502 = vand.u32 %v1501, 4294901760
        %v1503 = vsub.f32 %v1501, %v1502
        %v1504 = vand.u32 %v1503, 4294901760
        %1505 = vmatpush1.msra.mxu0 %v1504
        %v1506 = vand.u32 %v706, 4294901760
        %v1507 = vsub.f32 %v706, %v1506
        %v1508 = vand.u32 %v1507, 4294901760
        %v1509 = vsub.f32 %v1507, %v1508
        %v1510 = vand.u32 %v1509, 4294901760
        %1511 = vmatprep.subr.mxu0 %v1510
        %v1512 = vand.u32 %v705, 4294901760
        %v1513 = vsub.f32 %v705, %v1512
        %v1514 = vand.u32 %v1513, 4294901760
        %v1515 = vsub.f32 %v1513, %v1514
        %v1516 = vand.u32 %v1515, 4294901760
        %1517 = vmatpush1.msra.mxu0 %v1516
        %v1518 = vand.u32 %v704, 4294901760
        %v1519 = vsub.f32 %v704, %v1518
        %v1520 = vand.u32 %v1519, 4294901760
        %v1521 = vsub.f32 %v1519, %v1520
        %v1522 = vand.u32 %v1521, 4294901760
        %1523 = vmatprep.subr.mxu0 %v1522
        %v1524 = vand.u32 %v703, 4294901760
        %v1525 = vsub.f32 %v703, %v1524
        %v1526 = vand.u32 %v1525, 4294901760
        %v1527 = vsub.f32 %v1525, %v1526
        %v1528 = vand.u32 %v1527, 4294901760
        %1529 = vmatpush1.msra.mxu0 %v1528
        %v1530 = vand.u32 %v702, 4294901760
        %v1531 = vsub.f32 %v702, %v1530
        %v1532 = vand.u32 %v1531, 4294901760
        %v1533 = vsub.f32 %v1531, %v1532
        %v1534 = vand.u32 %v1533, 4294901760
        %1535 = vmatprep.subr.mxu0 %v1534
        %v1536 = vand.u32 %v701, 4294901760
        %v1537 = vsub.f32 %v701, %v1536
        %v1538 = vand.u32 %v1537, 4294901760
        %v1539 = vsub.f32 %v1537, %v1538
        %v1540 = vand.u32 %v1539, 4294901760
        %1541 = vmatpush1.msra.mxu0 %v1540
        %v1542 = vand.u32 %v700, 4294901760
        %v1543 = vsub.f32 %v700, %v1542
        %v1544 = vand.u32 %v1543, 4294901760
        %v1545 = vsub.f32 %v1543, %v1544
        %v1546 = vand.u32 %v1545, 4294901760
        %1547 = vmatprep.subr.mxu0 %v1546
        %v1548 = vand.u32 %v699, 4294901760
        %v1549 = vsub.f32 %v699, %v1548
        %v1550 = vand.u32 %v1549, 4294901760
        %v1551 = vsub.f32 %v1549, %v1550
        %v1552 = vand.u32 %v1551, 4294901760
        %1553 = vmatpush1.msra.mxu0 %v1552
        %v1554 = vand.u32 %v698, 4294901760
        %v1555 = vsub.f32 %v698, %v1554
        %v1556 = vand.u32 %v1555, 4294901760
        %v1557 = vsub.f32 %v1555, %v1556
        %v1558 = vand.u32 %v1557, 4294901760
        %1559 = vmatprep.subr.mxu0 %v1558
        %v1560 = vand.u32 %v697, 4294901760
        %v1561 = vsub.f32 %v697, %v1560
        %v1562 = vand.u32 %v1561, 4294901760
        %v1563 = vsub.f32 %v1561, %v1562
        %v1564 = vand.u32 %v1563, 4294901760
        %1565 = vmatpush1.msra.mxu0 %v1564
        %v1566 = vand.u32 %v696, 4294901760
        %v1567 = vsub.f32 %v696, %v1566
        %v1568 = vand.u32 %v1567, 4294901760
        %v1569 = vsub.f32 %v1567, %v1568
        %v1570 = vand.u32 %v1569, 4294901760
        %1571 = vmatprep.subr.mxu0 %v1570
        %v1572 = vand.u32 %v695, 4294901760
        %v1573 = vsub.f32 %v695, %v1572
        %v1574 = vand.u32 %v1573, 4294901760
        %v1575 = vsub.f32 %v1573, %v1574
        %v1576 = vand.u32 %v1575, 4294901760
        %1577 = vmatpush1.msra.mxu0 %v1576
        %v1578 = vand.u32 %v694, 4294901760
        %v1579 = vsub.f32 %v694, %v1578
        %v1580 = vand.u32 %v1579, 4294901760
        %v1581 = vsub.f32 %v1579, %v1580
        %v1582 = vand.u32 %v1581, 4294901760
        %1583 = vmatprep.subr.mxu0 %v1582
        %v1584 = vand.u32 %v693, 4294901760
        %v1585 = vsub.f32 %v693, %v1584
        %v1586 = vand.u32 %v1585, 4294901760
        %v1587 = vsub.f32 %v1585, %v1586
        %v1588 = vand.u32 %v1587, 4294901760
        %1589 = vmatpush1.msra.mxu0 %v1588
        %v1590 = vand.u32 %v756, 4294901760
        %v1591 = vsub.f32 %v756, %v1590
        %v1592 = vand.u32 %v1591, 4294901760
        %v1593 = vsub.f32 %v1591, %v1592
        %v1594 = vand.u32 %v1593, 4294901760
        %1595 = vmatprep.subr.mxu0 %v1594
        %v1596 = vand.u32 %v755, 4294901760
        %v1597 = vsub.f32 %v755, %v1596
        %v1598 = vand.u32 %v1597, 4294901760
        %v1599 = vsub.f32 %v1597, %v1598
        %v1600 = vand.u32 %v1599, 4294901760
        %1601 = vmatpush2.msra.mxu0 %v1600
        %v1602 = vand.u32 %v754, 4294901760
        %v1603 = vsub.f32 %v754, %v1602
        %v1604 = vand.u32 %v1603, 4294901760
        %v1605 = vsub.f32 %v1603, %v1604
        %v1606 = vand.u32 %v1605, 4294901760
        %1607 = vmatprep.subr.mxu0 %v1606
        %v1608 = vand.u32 %v753, 4294901760
        %v1609 = vsub.f32 %v753, %v1608
        %v1610 = vand.u32 %v1609, 4294901760
        %v1611 = vsub.f32 %v1609, %v1610
        %v1612 = vand.u32 %v1611, 4294901760
        %1613 = vmatpush2.msra.mxu0 %v1612
        %v1614 = vand.u32 %v752, 4294901760
        %v1615 = vsub.f32 %v752, %v1614
        %v1616 = vand.u32 %v1615, 4294901760
        %v1617 = vsub.f32 %v1615, %v1616
        %v1618 = vand.u32 %v1617, 4294901760
        %1619 = vmatprep.subr.mxu0 %v1618
        %v1620 = vand.u32 %v751, 4294901760
        %v1621 = vsub.f32 %v751, %v1620
        %v1622 = vand.u32 %v1621, 4294901760
        %v1623 = vsub.f32 %v1621, %v1622
        %v1624 = vand.u32 %v1623, 4294901760
        %1625 = vmatpush2.msra.mxu0 %v1624
        %v1626 = vand.u32 %v750, 4294901760
        %v1627 = vsub.f32 %v750, %v1626
        %v1628 = vand.u32 %v1627, 4294901760
        %v1629 = vsub.f32 %v1627, %v1628
        %v1630 = vand.u32 %v1629, 4294901760
        %1631 = vmatprep.subr.mxu0 %v1630
        %v1632 = vand.u32 %v749, 4294901760
        %v1633 = vsub.f32 %v749, %v1632
        %v1634 = vand.u32 %v1633, 4294901760
        %v1635 = vsub.f32 %v1633, %v1634
        %v1636 = vand.u32 %v1635, 4294901760
        %1637 = vmatpush2.msra.mxu0 %v1636
        %v1638 = vand.u32 %v748, 4294901760
        %v1639 = vsub.f32 %v748, %v1638
        %v1640 = vand.u32 %v1639, 4294901760
        %v1641 = vsub.f32 %v1639, %v1640
        %v1642 = vand.u32 %v1641, 4294901760
        %1643 = vmatprep.subr.mxu0 %v1642
        %v1644 = vand.u32 %v747, 4294901760
        %v1645 = vsub.f32 %v747, %v1644
        %v1646 = vand.u32 %v1645, 4294901760
        %v1647 = vsub.f32 %v1645, %v1646
        %v1648 = vand.u32 %v1647, 4294901760
        %1649 = vmatpush2.msra.mxu0 %v1648
        %v1650 = vand.u32 %v746, 4294901760
        %v1651 = vsub.f32 %v746, %v1650
        %v1652 = vand.u32 %v1651, 4294901760
        %v1653 = vsub.f32 %v1651, %v1652
        %v1654 = vand.u32 %v1653, 4294901760
        %1655 = vmatprep.subr.mxu0 %v1654
        %v1656 = vand.u32 %v745, 4294901760
        %v1657 = vsub.f32 %v745, %v1656
        %v1658 = vand.u32 %v1657, 4294901760
        %v1659 = vsub.f32 %v1657, %v1658
        %v1660 = vand.u32 %v1659, 4294901760
        %1661 = vmatpush2.msra.mxu0 %v1660
        %v1662 = vand.u32 %v744, 4294901760
        %v1663 = vsub.f32 %v744, %v1662
        %v1664 = vand.u32 %v1663, 4294901760
        %v1665 = vsub.f32 %v1663, %v1664
        %v1666 = vand.u32 %v1665, 4294901760
        %1667 = vmatprep.subr.mxu0 %v1666
        %v1668 = vand.u32 %v743, 4294901760
        %v1669 = vsub.f32 %v743, %v1668
        %v1670 = vand.u32 %v1669, 4294901760
        %v1671 = vsub.f32 %v1669, %v1670
        %v1672 = vand.u32 %v1671, 4294901760
        %1673 = vmatpush2.msra.mxu0 %v1672
        %v1674 = vand.u32 %v742, 4294901760
        %v1675 = vsub.f32 %v742, %v1674
        %v1676 = vand.u32 %v1675, 4294901760
        %v1677 = vsub.f32 %v1675, %v1676
        %v1678 = vand.u32 %v1677, 4294901760
        %1679 = vmatprep.subr.mxu0 %v1678
        %v1680 = vand.u32 %v741, 4294901760
        %v1681 = vsub.f32 %v741, %v1680
        %v1682 = vand.u32 %v1681, 4294901760
        %v1683 = vsub.f32 %v1681, %v1682
        %v1684 = vand.u32 %v1683, 4294901760
        %1685 = vmatpush2.msra.mxu0 %v1684
        %v1686 = vand.u32 %v740, 4294901760
        %v1687 = vsub.f32 %v740, %v1686
        %v1688 = vand.u32 %v1687, 4294901760
        %v1689 = vsub.f32 %v1687, %v1688
        %v1690 = vand.u32 %v1689, 4294901760
        %1691 = vmatprep.subr.mxu0 %v1690
        %v1692 = vand.u32 %v739, 4294901760
        %v1693 = vsub.f32 %v739, %v1692
        %v1694 = vand.u32 %v1693, 4294901760
        %v1695 = vsub.f32 %v1693, %v1694
        %v1696 = vand.u32 %v1695, 4294901760
        %1697 = vmatpush2.msra.mxu0 %v1696
        %v1698 = vand.u32 %v738, 4294901760
        %v1699 = vsub.f32 %v738, %v1698
        %v1700 = vand.u32 %v1699, 4294901760
        %v1701 = vsub.f32 %v1699, %v1700
        %v1702 = vand.u32 %v1701, 4294901760
        %1703 = vmatprep.subr.mxu0 %v1702
        %v1704 = vand.u32 %v737, 4294901760
        %v1705 = vsub.f32 %v737, %v1704
        %v1706 = vand.u32 %v1705, 4294901760
        %v1707 = vsub.f32 %v1705, %v1706
        %v1708 = vand.u32 %v1707, 4294901760
        %1709 = vmatpush2.msra.mxu0 %v1708
        %v1710 = vand.u32 %v736, 4294901760
        %v1711 = vsub.f32 %v736, %v1710
        %v1712 = vand.u32 %v1711, 4294901760
        %v1713 = vsub.f32 %v1711, %v1712
        %v1714 = vand.u32 %v1713, 4294901760
        %1715 = vmatprep.subr.mxu0 %v1714
        %v1716 = vand.u32 %v735, 4294901760
        %v1717 = vsub.f32 %v735, %v1716
        %v1718 = vand.u32 %v1717, 4294901760
        %v1719 = vsub.f32 %v1717, %v1718
        %v1720 = vand.u32 %v1719, 4294901760
        %1721 = vmatpush2.msra.mxu0 %v1720
        %v1722 = vand.u32 %v734, 4294901760
        %v1723 = vsub.f32 %v734, %v1722
        %v1724 = vand.u32 %v1723, 4294901760
        %v1725 = vsub.f32 %v1723, %v1724
        %v1726 = vand.u32 %v1725, 4294901760
        %1727 = vmatprep.subr.mxu0 %v1726
        %v1728 = vand.u32 %v733, 4294901760
        %v1729 = vsub.f32 %v733, %v1728
        %v1730 = vand.u32 %v1729, 4294901760
        %v1731 = vsub.f32 %v1729, %v1730
        %v1732 = vand.u32 %v1731, 4294901760
        %1733 = vmatpush2.msra.mxu0 %v1732
        %v1734 = vand.u32 %v732, 4294901760
        %v1735 = vsub.f32 %v732, %v1734
        %v1736 = vand.u32 %v1735, 4294901760
        %v1737 = vsub.f32 %v1735, %v1736
        %v1738 = vand.u32 %v1737, 4294901760
        %1739 = vmatprep.subr.mxu0 %v1738
        %v1740 = vand.u32 %v731, 4294901760
        %v1741 = vsub.f32 %v731, %v1740
        %v1742 = vand.u32 %v1741, 4294901760
        %v1743 = vsub.f32 %v1741, %v1742
        %v1744 = vand.u32 %v1743, 4294901760
        %1745 = vmatpush2.msra.mxu0 %v1744
        %v1746 = vand.u32 %v730, 4294901760
        %v1747 = vsub.f32 %v730, %v1746
        %v1748 = vand.u32 %v1747, 4294901760
        %v1749 = vsub.f32 %v1747, %v1748
        %v1750 = vand.u32 %v1749, 4294901760
        %1751 = vmatprep.subr.mxu0 %v1750
        %v1752 = vand.u32 %v729, 4294901760
        %v1753 = vsub.f32 %v729, %v1752
        %v1754 = vand.u32 %v1753, 4294901760
        %v1755 = vsub.f32 %v1753, %v1754
        %v1756 = vand.u32 %v1755, 4294901760
        %1757 = vmatpush2.msra.mxu0 %v1756
        %v1758 = vand.u32 %v728, 4294901760
        %v1759 = vsub.f32 %v728, %v1758
        %v1760 = vand.u32 %v1759, 4294901760
        %v1761 = vsub.f32 %v1759, %v1760
        %v1762 = vand.u32 %v1761, 4294901760
        %1763 = vmatprep.subr.mxu0 %v1762
        %v1764 = vand.u32 %v727, 4294901760
        %v1765 = vsub.f32 %v727, %v1764
        %v1766 = vand.u32 %v1765, 4294901760
        %v1767 = vsub.f32 %v1765, %v1766
        %v1768 = vand.u32 %v1767, 4294901760
        %1769 = vmatpush2.msra.mxu0 %v1768
        %v1770 = vand.u32 %v726, 4294901760
        %v1771 = vsub.f32 %v726, %v1770
        %v1772 = vand.u32 %v1771, 4294901760
        %v1773 = vsub.f32 %v1771, %v1772
        %v1774 = vand.u32 %v1773, 4294901760
        %1775 = vmatprep.subr.mxu0 %v1774
        %v1776 = vand.u32 %v725, 4294901760
        %v1777 = vsub.f32 %v725, %v1776
        %v1778 = vand.u32 %v1777, 4294901760
        %v1779 = vsub.f32 %v1777, %v1778
        %v1780 = vand.u32 %v1779, 4294901760
        %1781 = vmatpush2.msra.mxu0 %v1780
        %v1782 = vand.u32 %v630, 4294901760
        %1783 = vmatprep.mubr.f32.mxu0 %v1782
        %v1784 = vand.u32 %v629, 4294901760
        %1785 = vmatmul.mubr.f32.gmra.mxu0 %v1784
        %v1786 = vpop.f32.mrf.mxu0
        %v1787 = vadd.f32 %v898, %v1786
        %v1788 = vpop.f32.mrf.mxu0
        %v1789 = vadd.f32 %v900, %v1788
        %v1790 = vand.u32 %v632, 4294901760
        %1791 = vmatprep.mubr.f32.mxu0 %v1790
        %v1792 = vand.u32 %v631, 4294901760
        %1793 = vmatmul.mubr.f32.gmra.mxu0 %v1792
        %v1794 = vpop.f32.mrf.mxu0
        %v1795 = vadd.f32 %v914, %v1794
        %v1796 = vpop.f32.mrf.mxu0
        %v1797 = vadd.f32 %v916, %v1796
        %v1798 = vand.u32 %v634, 4294901760
        %1799 = vmatprep.mubr.f32.mxu0 %v1798
        %v1800 = vand.u32 %v633, 4294901760
        %1801 = vmatmul.mubr.f32.gmra.mxu0 %v1800
        %v1802 = vpop.f32.mrf.mxu0
        %v1803 = vadd.f32 %v930, %v1802
        %v1804 = vpop.f32.mrf.mxu0
        %v1805 = vadd.f32 %v932, %v1804
        %v1806 = vand.u32 %v636, 4294901760
        %1807 = vmatprep.mubr.f32.mxu0 %v1806
        %v1808 = vand.u32 %v635, 4294901760
        %1809 = vmatmul.mubr.f32.gmra.mxu0 %v1808
        %v1810 = vpop.f32.mrf.mxu0
        %v1811 = vadd.f32 %v946, %v1810
        %v1812 = vpop.f32.mrf.mxu0
        %v1813 = vadd.f32 %v948, %v1812
        %v1814 = vand.u32 %v638, 4294901760
        %1815 = vmatprep.mubr.f32.mxu0 %v1814
        %v1816 = vand.u32 %v637, 4294901760
        %1817 = vmatmul.mubr.f32.gmra.mxu0 %v1816
        %v1818 = vpop.f32.mrf.mxu0
        %v1819 = vadd.f32 %v962, %v1818
        %v1820 = vpop.f32.mrf.mxu0
        %v1821 = vadd.f32 %v964, %v1820
        %v1822 = vand.u32 %v640, 4294901760
        %1823 = vmatprep.mubr.f32.mxu0 %v1822
        %v1824 = vand.u32 %v639, 4294901760
        %1825 = vmatmul.mubr.f32.gmra.mxu0 %v1824
        %v1826 = vpop.f32.mrf.mxu0
        %v1827 = vadd.f32 %v978, %v1826
        %v1828 = vpop.f32.mrf.mxu0
        %v1829 = vadd.f32 %v980, %v1828
        %v1830 = vand.u32 %v642, 4294901760
        %1831 = vmatprep.mubr.f32.mxu0 %v1830
        %v1832 = vand.u32 %v641, 4294901760
        %1833 = vmatmul.mubr.f32.gmra.mxu0 %v1832
        %v1834 = vpop.f32.mrf.mxu0
        %v1835 = vadd.f32 %v994, %v1834
        %v1836 = vpop.f32.mrf.mxu0
        %v1837 = vadd.f32 %v996, %v1836
        %v1838 = vand.u32 %v644, 4294901760
        %1839 = vmatprep.mubr.f32.mxu0 %v1838
        %v1840 = vand.u32 %v643, 4294901760
        %1841 = vmatmul.mubr.f32.gmra.mxu0 %v1840
        %v1842 = vpop.f32.mrf.mxu0
        %v1843 = vadd.f32 %v1010, %v1842
        %v1844 = vpop.f32.mrf.mxu0
        %v1845 = vadd.f32 %v1012, %v1844
        %v1846 = vand.u32 %v646, 4294901760
        %1847 = vmatprep.mubr.f32.mxu0 %v1846
        %v1848 = vand.u32 %v645, 4294901760
        %1849 = vmatmul.mubr.f32.gmra.mxu0 %v1848
        %v1850 = vpop.f32.mrf.mxu0
        %v1851 = vadd.f32 %v1026, %v1850
        %v1852 = vpop.f32.mrf.mxu0
        %v1853 = vadd.f32 %v1028, %v1852
        %v1854 = vand.u32 %v648, 4294901760
        %1855 = vmatprep.mubr.f32.mxu0 %v1854
        %v1856 = vand.u32 %v647, 4294901760
        %1857 = vmatmul.mubr.f32.gmra.mxu0 %v1856
        %v1858 = vpop.f32.mrf.mxu0
        %v1859 = vadd.f32 %v1042, %v1858
        %v1860 = vpop.f32.mrf.mxu0
        %v1861 = vadd.f32 %v1044, %v1860
        %v1862 = vand.u32 %v650, 4294901760
        %1863 = vmatprep.mubr.f32.mxu0 %v1862
        %v1864 = vand.u32 %v649, 4294901760
        %1865 = vmatmul.mubr.f32.gmra.mxu0 %v1864
        %v1866 = vpop.f32.mrf.mxu0
        %v1867 = vadd.f32 %v1058, %v1866
        %v1868 = vpop.f32.mrf.mxu0
        %v1869 = vadd.f32 %v1060, %v1868
        %v1870 = vand.u32 %v652, 4294901760
        %1871 = vmatprep.mubr.f32.mxu0 %v1870
        %v1872 = vand.u32 %v651, 4294901760
        %1873 = vmatmul.mubr.f32.gmra.mxu0 %v1872
        %v1874 = vpop.f32.mrf.mxu0
        %v1875 = vadd.f32 %v1074, %v1874
        %v1876 = vpop.f32.mrf.mxu0
        %v1877 = vadd.f32 %v1076, %v1876
        %v1878 = vand.u32 %v654, 4294901760
        %1879 = vmatprep.mubr.f32.mxu0 %v1878
        %v1880 = vand.u32 %v653, 4294901760
        %1881 = vmatmul.mubr.f32.gmra.mxu0 %v1880
        %v1882 = vpop.f32.mrf.mxu0
        %v1883 = vadd.f32 %v1090, %v1882
        %v1884 = vpop.f32.mrf.mxu0
        %v1885 = vadd.f32 %v1092, %v1884
        %v1886 = vand.u32 %v656, 4294901760
        %1887 = vmatprep.mubr.f32.mxu0 %v1886
        %v1888 = vand.u32 %v655, 4294901760
        %1889 = vmatmul.mubr.f32.gmra.mxu0 %v1888
        %v1890 = vpop.f32.mrf.mxu0
        %v1891 = vadd.f32 %v1106, %v1890
        %v1892 = vpop.f32.mrf.mxu0
        %v1893 = vadd.f32 %v1108, %v1892
        %v1894 = vand.u32 %v658, 4294901760
        %1895 = vmatprep.mubr.f32.mxu0 %v1894
        %v1896 = vand.u32 %v657, 4294901760
        %1897 = vmatmul.mubr.f32.gmra.mxu0 %v1896
        %v1898 = vpop.f32.mrf.mxu0
        %v1899 = vadd.f32 %v1122, %v1898
        %v1900 = vpop.f32.mrf.mxu0
        %v1901 = vadd.f32 %v1124, %v1900
        %v1902 = vand.u32 %v660, 4294901760
        %1903 = vmatprep.mubr.f32.mxu0 %v1902
        %v1904 = vand.u32 %v659, 4294901760
        %1905 = vmatmul.mubr.f32.gmra.mxu0 %v1904
        %v1906 = vpop.f32.mrf.mxu0
        %v1907 = vadd.f32 %v1138, %v1906
        %v1908 = vpop.f32.mrf.mxu0
        %v1909 = vadd.f32 %v1140, %v1908
        %v1910 = vand.u32 %v662, 4294901760
        %1911 = vmatprep.mubr.f32.mxu0 %v1910
        %v1912 = vand.u32 %v661, 4294901760
        %1913 = vmatmul.mubr.f32.gmra.mxu0 %v1912
        %v1914 = vpop.f32.mrf.mxu0
        %v1915 = vadd.f32 %v1154, %v1914
        %v1916 = vpop.f32.mrf.mxu0
        %v1917 = vadd.f32 %v1156, %v1916
        %v1918 = vand.u32 %v664, 4294901760
        %1919 = vmatprep.mubr.f32.mxu0 %v1918
        %v1920 = vand.u32 %v663, 4294901760
        %1921 = vmatmul.mubr.f32.gmra.mxu0 %v1920
        %v1922 = vpop.f32.mrf.mxu0
        %v1923 = vadd.f32 %v1170, %v1922
        %v1924 = vpop.f32.mrf.mxu0
        %v1925 = vadd.f32 %v1172, %v1924
        %v1926 = vand.u32 %v666, 4294901760
        %1927 = vmatprep.mubr.f32.mxu0 %v1926
        %v1928 = vand.u32 %v665, 4294901760
        %1929 = vmatmul.mubr.f32.gmra.mxu0 %v1928
        %v1930 = vpop.f32.mrf.mxu0
        %v1931 = vadd.f32 %v1186, %v1930
        %v1932 = vpop.f32.mrf.mxu0
        %v1933 = vadd.f32 %v1188, %v1932
        %v1934 = vand.u32 %v668, 4294901760
        %1935 = vmatprep.mubr.f32.mxu0 %v1934
        %v1936 = vand.u32 %v667, 4294901760
        %1937 = vmatmul.mubr.f32.gmra.mxu0 %v1936
        %v1938 = vpop.f32.mrf.mxu0
        %v1939 = vadd.f32 %v1202, %v1938
        %v1940 = vpop.f32.mrf.mxu0
        %v1941 = vadd.f32 %v1204, %v1940
        %v1942 = vand.u32 %v670, 4294901760
        %1943 = vmatprep.mubr.f32.mxu0 %v1942
        %v1944 = vand.u32 %v669, 4294901760
        %1945 = vmatmul.mubr.f32.gmra.mxu0 %v1944
        %v1946 = vpop.f32.mrf.mxu0
        %v1947 = vadd.f32 %v1218, %v1946
        %v1948 = vpop.f32.mrf.mxu0
        %v1949 = vadd.f32 %v1220, %v1948
        %v1950 = vand.u32 %v672, 4294901760
        %1951 = vmatprep.mubr.f32.mxu0 %v1950
        %v1952 = vand.u32 %v671, 4294901760
        %1953 = vmatmul.mubr.f32.gmra.mxu0 %v1952
        %v1954 = vpop.f32.mrf.mxu0
        %v1955 = vadd.f32 %v1234, %v1954
        %v1956 = vpop.f32.mrf.mxu0
        %v1957 = vadd.f32 %v1236, %v1956
        %v1958 = vand.u32 %v674, 4294901760
        %1959 = vmatprep.mubr.f32.mxu0 %v1958
        %v1960 = vand.u32 %v673, 4294901760
        %1961 = vmatmul.mubr.f32.gmra.mxu0 %v1960
        %v1962 = vpop.f32.mrf.mxu0
        %v1963 = vadd.f32 %v1250, %v1962
        %v1964 = vpop.f32.mrf.mxu0
        %v1965 = vadd.f32 %v1252, %v1964
        %v1966 = vand.u32 %v676, 4294901760
        %1967 = vmatprep.mubr.f32.mxu0 %v1966
        %v1968 = vand.u32 %v675, 4294901760
        %1969 = vmatmul.mubr.f32.gmra.mxu0 %v1968
        %v1970 = vpop.f32.mrf.mxu0
        %v1971 = vadd.f32 %v1266, %v1970
        %v1972 = vpop.f32.mrf.mxu0
        %v1973 = vadd.f32 %v1268, %v1972
        %v1974 = vand.u32 %v678, 4294901760
        %1975 = vmatprep.mubr.f32.mxu0 %v1974
        %v1976 = vand.u32 %v677, 4294901760
        %1977 = vmatmul.mubr.f32.gmra.mxu0 %v1976
        %v1978 = vpop.f32.mrf.mxu0
        %v1979 = vadd.f32 %v1282, %v1978
        %v1980 = vpop.f32.mrf.mxu0
        %v1981 = vadd.f32 %v1284, %v1980
        %v1982 = vand.u32 %v680, 4294901760
        %1983 = vmatprep.mubr.f32.mxu0 %v1982
        %v1984 = vand.u32 %v679, 4294901760
        %1985 = vmatmul.mubr.f32.gmra.mxu0 %v1984
        %v1986 = vpop.f32.mrf.mxu0
        %v1987 = vadd.f32 %v1298, %v1986
        %v1988 = vpop.f32.mrf.mxu0
        %v1989 = vadd.f32 %v1300, %v1988
        %v1990 = vand.u32 %v682, 4294901760
        %1991 = vmatprep.mubr.f32.mxu0 %v1990
        %v1992 = vand.u32 %v681, 4294901760
        %1993 = vmatmul.mubr.f32.gmra.mxu0 %v1992
        %v1994 = vpop.f32.mrf.mxu0
        %v1995 = vadd.f32 %v1314, %v1994
        %v1996 = vpop.f32.mrf.mxu0
        %v1997 = vadd.f32 %v1316, %v1996
        %v1998 = vand.u32 %v684, 4294901760
        %1999 = vmatprep.mubr.f32.mxu0 %v1998
        %v2000 = vand.u32 %v683, 4294901760
        %2001 = vmatmul.mubr.f32.gmra.mxu0 %v2000
        %v2002 = vpop.f32.mrf.mxu0
        %v2003 = vadd.f32 %v1330, %v2002
        %v2004 = vpop.f32.mrf.mxu0
        %v2005 = vadd.f32 %v1332, %v2004
        %v2006 = vand.u32 %v686, 4294901760
        %2007 = vmatprep.mubr.f32.mxu0 %v2006
        %v2008 = vand.u32 %v685, 4294901760
        %2009 = vmatmul.mubr.f32.gmra.mxu0 %v2008
        %v2010 = vpop.f32.mrf.mxu0
        %v2011 = vadd.f32 %v1346, %v2010
        %v2012 = vpop.f32.mrf.mxu0
        %v2013 = vadd.f32 %v1348, %v2012
        %v2014 = vand.u32 %v688, 4294901760
        %2015 = vmatprep.mubr.f32.mxu0 %v2014
        %v2016 = vand.u32 %v687, 4294901760
        %2017 = vmatmul.mubr.f32.gmra.mxu0 %v2016
        %v2018 = vpop.f32.mrf.mxu0
        %v2019 = vadd.f32 %v1362, %v2018
        %v2020 = vpop.f32.mrf.mxu0
        %v2021 = vadd.f32 %v1364, %v2020
        %v2022 = vand.u32 %v690, 4294901760
        %2023 = vmatprep.mubr.f32.mxu0 %v2022
        %v2024 = vand.u32 %v689, 4294901760
        %2025 = vmatmul.mubr.f32.gmra.mxu0 %v2024
        %v2026 = vpop.f32.mrf.mxu0
        %v2027 = vadd.f32 %v1378, %v2026
        %v2028 = vpop.f32.mrf.mxu0
        %v2029 = vadd.f32 %v1380, %v2028
        %v2030 = vand.u32 %v692, 4294901760
        %2031 = vmatprep.mubr.f32.mxu0 %v2030
        %v2032 = vand.u32 %v691, 4294901760
        %2033 = vmatmul.mubr.f32.gmra.mxu0 %v2032
        %v2034 = vpop.f32.mrf.mxu0
        %v2035 = vadd.f32 %v1394, %v2034
        %v2036 = vpop.f32.mrf.mxu0
        %v2037 = vadd.f32 %v1396, %v2036
        %2038 = vdwg.mxu0
        %v2039 = vand.u32 %v724, 4294901760
        %v2040 = vsub.f32 %v724, %v2039
        %2041 = vmatprep.subr.mxu0 %v2040
        %v2042 = vand.u32 %v723, 4294901760
        %v2043 = vsub.f32 %v723, %v2042
        %2044 = vmatpush1.msra.mxu0 %v2043
        %v2045 = vand.u32 %v722, 4294901760
        %v2046 = vsub.f32 %v722, %v2045
        %2047 = vmatprep.subr.mxu0 %v2046
        %v2048 = vand.u32 %v721, 4294901760
        %v2049 = vsub.f32 %v721, %v2048
        %2050 = vmatpush1.msra.mxu0 %v2049
        %v2051 = vand.u32 %v720, 4294901760
        %v2052 = vsub.f32 %v720, %v2051
        %2053 = vmatprep.subr.mxu0 %v2052
        %v2054 = vand.u32 %v719, 4294901760
        %v2055 = vsub.f32 %v719, %v2054
        %2056 = vmatpush1.msra.mxu0 %v2055
        %v2057 = vand.u32 %v718, 4294901760
        %v2058 = vsub.f32 %v718, %v2057
        %2059 = vmatprep.subr.mxu0 %v2058
        %v2060 = vand.u32 %v717, 4294901760
        %v2061 = vsub.f32 %v717, %v2060
        %2062 = vmatpush1.msra.mxu0 %v2061
        %v2063 = vand.u32 %v716, 4294901760
        %v2064 = vsub.f32 %v716, %v2063
        %2065 = vmatprep.subr.mxu0 %v2064
        %v2066 = vand.u32 %v715, 4294901760
        %v2067 = vsub.f32 %v715, %v2066
        %2068 = vmatpush1.msra.mxu0 %v2067
        %v2069 = vand.u32 %v714, 4294901760
        %v2070 = vsub.f32 %v714, %v2069
        %2071 = vmatprep.subr.mxu0 %v2070
        %v2072 = vand.u32 %v713, 4294901760
        %v2073 = vsub.f32 %v713, %v2072
        %2074 = vmatpush1.msra.mxu0 %v2073
        %v2075 = vand.u32 %v712, 4294901760
        %v2076 = vsub.f32 %v712, %v2075
        %2077 = vmatprep.subr.mxu0 %v2076
        %v2078 = vand.u32 %v711, 4294901760
        %v2079 = vsub.f32 %v711, %v2078
        %2080 = vmatpush1.msra.mxu0 %v2079
        %v2081 = vand.u32 %v710, 4294901760
        %v2082 = vsub.f32 %v710, %v2081
        %2083 = vmatprep.subr.mxu0 %v2082
        %v2084 = vand.u32 %v709, 4294901760
        %v2085 = vsub.f32 %v709, %v2084
        %2086 = vmatpush1.msra.mxu0 %v2085
        %v2087 = vand.u32 %v708, 4294901760
        %v2088 = vsub.f32 %v708, %v2087
        %2089 = vmatprep.subr.mxu0 %v2088
        %v2090 = vand.u32 %v707, 4294901760
        %v2091 = vsub.f32 %v707, %v2090
        %2092 = vmatpush1.msra.mxu0 %v2091
        %v2093 = vand.u32 %v706, 4294901760
        %v2094 = vsub.f32 %v706, %v2093
        %2095 = vmatprep.subr.mxu0 %v2094
        %v2096 = vand.u32 %v705, 4294901760
        %v2097 = vsub.f32 %v705, %v2096
        %2098 = vmatpush1.msra.mxu0 %v2097
        %v2099 = vand.u32 %v704, 4294901760
        %v2100 = vsub.f32 %v704, %v2099
        %2101 = vmatprep.subr.mxu0 %v2100
        %v2102 = vand.u32 %v703, 4294901760
        %v2103 = vsub.f32 %v703, %v2102
        %2104 = vmatpush1.msra.mxu0 %v2103
        %v2105 = vand.u32 %v702, 4294901760
        %v2106 = vsub.f32 %v702, %v2105
        %2107 = vmatprep.subr.mxu0 %v2106
        %v2108 = vand.u32 %v701, 4294901760
        %v2109 = vsub.f32 %v701, %v2108
        %2110 = vmatpush1.msra.mxu0 %v2109
        %v2111 = vand.u32 %v700, 4294901760
        %v2112 = vsub.f32 %v700, %v2111
        %2113 = vmatprep.subr.mxu0 %v2112
        %v2114 = vand.u32 %v699, 4294901760
        %v2115 = vsub.f32 %v699, %v2114
        %2116 = vmatpush1.msra.mxu0 %v2115
        %v2117 = vand.u32 %v698, 4294901760
        %v2118 = vsub.f32 %v698, %v2117
        %2119 = vmatprep.subr.mxu0 %v2118
        %v2120 = vand.u32 %v697, 4294901760
        %v2121 = vsub.f32 %v697, %v2120
        %2122 = vmatpush1.msra.mxu0 %v2121
        %v2123 = vand.u32 %v696, 4294901760
        %v2124 = vsub.f32 %v696, %v2123
        %2125 = vmatprep.subr.mxu0 %v2124
        %v2126 = vand.u32 %v695, 4294901760
        %v2127 = vsub.f32 %v695, %v2126
        %2128 = vmatpush1.msra.mxu0 %v2127
        %v2129 = vand.u32 %v694, 4294901760
        %v2130 = vsub.f32 %v694, %v2129
        %2131 = vmatprep.subr.mxu0 %v2130
        %v2132 = vand.u32 %v693, 4294901760
        %v2133 = vsub.f32 %v693, %v2132
        %2134 = vmatpush1.msra.mxu0 %v2133
        %v2135 = vand.u32 %v756, 4294901760
        %v2136 = vsub.f32 %v756, %v2135
        %2137 = vmatprep.subr.mxu0 %v2136
        %v2138 = vand.u32 %v755, 4294901760
        %v2139 = vsub.f32 %v755, %v2138
        %2140 = vmatpush2.msra.mxu0 %v2139
        %v2141 = vand.u32 %v754, 4294901760
        %v2142 = vsub.f32 %v754, %v2141
        %2143 = vmatprep.subr.mxu0 %v2142
        %v2144 = vand.u32 %v753, 4294901760
        %v2145 = vsub.f32 %v753, %v2144
        %2146 = vmatpush2.msra.mxu0 %v2145
        %v2147 = vand.u32 %v752, 4294901760
        %v2148 = vsub.f32 %v752, %v2147
        %2149 = vmatprep.subr.mxu0 %v2148
        %v2150 = vand.u32 %v751, 4294901760
        %v2151 = vsub.f32 %v751, %v2150
        %2152 = vmatpush2.msra.mxu0 %v2151
        %v2153 = vand.u32 %v750, 4294901760
        %v2154 = vsub.f32 %v750, %v2153
        %2155 = vmatprep.subr.mxu0 %v2154
        %v2156 = vand.u32 %v749, 4294901760
        %v2157 = vsub.f32 %v749, %v2156
        %2158 = vmatpush2.msra.mxu0 %v2157
        %v2159 = vand.u32 %v748, 4294901760
        %v2160 = vsub.f32 %v748, %v2159
        %2161 = vmatprep.subr.mxu0 %v2160
        %v2162 = vand.u32 %v747, 4294901760
        %v2163 = vsub.f32 %v747, %v2162
        %2164 = vmatpush2.msra.mxu0 %v2163
        %v2165 = vand.u32 %v746, 4294901760
        %v2166 = vsub.f32 %v746, %v2165
        %2167 = vmatprep.subr.mxu0 %v2166
        %v2168 = vand.u32 %v745, 4294901760
        %v2169 = vsub.f32 %v745, %v2168
        %2170 = vmatpush2.msra.mxu0 %v2169
        %v2171 = vand.u32 %v744, 4294901760
        %v2172 = vsub.f32 %v744, %v2171
        %2173 = vmatprep.subr.mxu0 %v2172
        %v2174 = vand.u32 %v743, 4294901760
        %v2175 = vsub.f32 %v743, %v2174
        %2176 = vmatpush2.msra.mxu0 %v2175
        %v2177 = vand.u32 %v742, 4294901760
        %v2178 = vsub.f32 %v742, %v2177
        %2179 = vmatprep.subr.mxu0 %v2178
        %v2180 = vand.u32 %v741, 4294901760
        %v2181 = vsub.f32 %v741, %v2180
        %2182 = vmatpush2.msra.mxu0 %v2181
        %v2183 = vand.u32 %v740, 4294901760
        %v2184 = vsub.f32 %v740, %v2183
        %2185 = vmatprep.subr.mxu0 %v2184
        %v2186 = vand.u32 %v739, 4294901760
        %v2187 = vsub.f32 %v739, %v2186
        %2188 = vmatpush2.msra.mxu0 %v2187
        %v2189 = vand.u32 %v738, 4294901760
        %v2190 = vsub.f32 %v738, %v2189
        %2191 = vmatprep.subr.mxu0 %v2190
        %v2192 = vand.u32 %v737, 4294901760
        %v2193 = vsub.f32 %v737, %v2192
        %2194 = vmatpush2.msra.mxu0 %v2193
        %v2195 = vand.u32 %v736, 4294901760
        %v2196 = vsub.f32 %v736, %v2195
        %2197 = vmatprep.subr.mxu0 %v2196
        %v2198 = vand.u32 %v735, 4294901760
        %v2199 = vsub.f32 %v735, %v2198
        %2200 = vmatpush2.msra.mxu0 %v2199
        %v2201 = vand.u32 %v734, 4294901760
        %v2202 = vsub.f32 %v734, %v2201
        %2203 = vmatprep.subr.mxu0 %v2202
        %v2204 = vand.u32 %v733, 4294901760
        %v2205 = vsub.f32 %v733, %v2204
        %2206 = vmatpush2.msra.mxu0 %v2205
        %v2207 = vand.u32 %v732, 4294901760
        %v2208 = vsub.f32 %v732, %v2207
        %2209 = vmatprep.subr.mxu0 %v2208
        %v2210 = vand.u32 %v731, 4294901760
        %v2211 = vsub.f32 %v731, %v2210
        %2212 = vmatpush2.msra.mxu0 %v2211
        %v2213 = vand.u32 %v730, 4294901760
        %v2214 = vsub.f32 %v730, %v2213
        %2215 = vmatprep.subr.mxu0 %v2214
        %v2216 = vand.u32 %v729, 4294901760
        %v2217 = vsub.f32 %v729, %v2216
        %2218 = vmatpush2.msra.mxu0 %v2217
        %v2219 = vand.u32 %v728, 4294901760
        %v2220 = vsub.f32 %v728, %v2219
        %2221 = vmatprep.subr.mxu0 %v2220
        %v2222 = vand.u32 %v727, 4294901760
        %v2223 = vsub.f32 %v727, %v2222
        %2224 = vmatpush2.msra.mxu0 %v2223
        %v2225 = vand.u32 %v726, 4294901760
        %v2226 = vsub.f32 %v726, %v2225
        %2227 = vmatprep.subr.mxu0 %v2226
        %v2228 = vand.u32 %v725, 4294901760
        %v2229 = vsub.f32 %v725, %v2228
        %2230 = vmatpush2.msra.mxu0 %v2229
        %v2231 = vand.u32 %v630, 4294901760
        %v2232 = vsub.f32 %v630, %v2231
        %2233 = vmatprep.mubr.f32.mxu0 %v2232
        %v2234 = vand.u32 %v629, 4294901760
        %v2235 = vsub.f32 %v629, %v2234
        %2236 = vmatmul.mubr.f32.gmra.mxu0 %v2235
        %v2237 = vpop.f32.mrf.mxu0
        %v2238 = vadd.f32 %v1787, %v2237
        %v2239 = vpop.f32.mrf.mxu0
        %v2240 = vadd.f32 %v1789, %v2239
        %v2241 = vand.u32 %v632, 4294901760
        %v2242 = vsub.f32 %v632, %v2241
        %2243 = vmatprep.mubr.f32.mxu0 %v2242
        %v2244 = vand.u32 %v631, 4294901760
        %v2245 = vsub.f32 %v631, %v2244
        %2246 = vmatmul.mubr.f32.gmra.mxu0 %v2245
        %v2247 = vpop.f32.mrf.mxu0
        %v2248 = vadd.f32 %v1795, %v2247
        %v2249 = vpop.f32.mrf.mxu0
        %v2250 = vadd.f32 %v1797, %v2249
        %v2251 = vand.u32 %v634, 4294901760
        %v2252 = vsub.f32 %v634, %v2251
        %2253 = vmatprep.mubr.f32.mxu0 %v2252
        %v2254 = vand.u32 %v633, 4294901760
        %v2255 = vsub.f32 %v633, %v2254
        %2256 = vmatmul.mubr.f32.gmra.mxu0 %v2255
        %v2257 = vpop.f32.mrf.mxu0
        %v2258 = vadd.f32 %v1803, %v2257
        %v2259 = vpop.f32.mrf.mxu0
        %v2260 = vadd.f32 %v1805, %v2259
        %v2261 = vand.u32 %v636, 4294901760
        %v2262 = vsub.f32 %v636, %v2261
        %2263 = vmatprep.mubr.f32.mxu0 %v2262
        %v2264 = vand.u32 %v635, 4294901760
        %v2265 = vsub.f32 %v635, %v2264
        %2266 = vmatmul.mubr.f32.gmra.mxu0 %v2265
        %v2267 = vpop.f32.mrf.mxu0
        %v2268 = vadd.f32 %v1811, %v2267
        %v2269 = vpop.f32.mrf.mxu0
        %v2270 = vadd.f32 %v1813, %v2269
        %v2271 = vand.u32 %v638, 4294901760
        %v2272 = vsub.f32 %v638, %v2271
        %2273 = vmatprep.mubr.f32.mxu0 %v2272
        %v2274 = vand.u32 %v637, 4294901760
        %v2275 = vsub.f32 %v637, %v2274
        %2276 = vmatmul.mubr.f32.gmra.mxu0 %v2275
        %v2277 = vpop.f32.mrf.mxu0
        %v2278 = vadd.f32 %v1819, %v2277
        %v2279 = vpop.f32.mrf.mxu0
        %v2280 = vadd.f32 %v1821, %v2279
        %v2281 = vand.u32 %v640, 4294901760
        %v2282 = vsub.f32 %v640, %v2281
        %2283 = vmatprep.mubr.f32.mxu0 %v2282
        %v2284 = vand.u32 %v639, 4294901760
        %v2285 = vsub.f32 %v639, %v2284
        %2286 = vmatmul.mubr.f32.gmra.mxu0 %v2285
        %v2287 = vpop.f32.mrf.mxu0
        %v2288 = vadd.f32 %v1827, %v2287
        %v2289 = vpop.f32.mrf.mxu0
        %v2290 = vadd.f32 %v1829, %v2289
        %v2291 = vand.u32 %v642, 4294901760
        %v2292 = vsub.f32 %v642, %v2291
        %2293 = vmatprep.mubr.f32.mxu0 %v2292
        %v2294 = vand.u32 %v641, 4294901760
        %v2295 = vsub.f32 %v641, %v2294
        %2296 = vmatmul.mubr.f32.gmra.mxu0 %v2295
        %v2297 = vpop.f32.mrf.mxu0
        %v2298 = vadd.f32 %v1835, %v2297
        %v2299 = vpop.f32.mrf.mxu0
        %v2300 = vadd.f32 %v1837, %v2299
        %v2301 = vand.u32 %v644, 4294901760
        %v2302 = vsub.f32 %v644, %v2301
        %2303 = vmatprep.mubr.f32.mxu0 %v2302
        %v2304 = vand.u32 %v643, 4294901760
        %v2305 = vsub.f32 %v643, %v2304
        %2306 = vmatmul.mubr.f32.gmra.mxu0 %v2305
        %v2307 = vpop.f32.mrf.mxu0
        %v2308 = vadd.f32 %v1843, %v2307
        %v2309 = vpop.f32.mrf.mxu0
        %v2310 = vadd.f32 %v1845, %v2309
        %v2311 = vand.u32 %v646, 4294901760
        %v2312 = vsub.f32 %v646, %v2311
        %2313 = vmatprep.mubr.f32.mxu0 %v2312
        %v2314 = vand.u32 %v645, 4294901760
        %v2315 = vsub.f32 %v645, %v2314
        %2316 = vmatmul.mubr.f32.gmra.mxu0 %v2315
        %v2317 = vpop.f32.mrf.mxu0
        %v2318 = vadd.f32 %v1851, %v2317
        %v2319 = vpop.f32.mrf.mxu0
        %v2320 = vadd.f32 %v1853, %v2319
        %v2321 = vand.u32 %v648, 4294901760
        %v2322 = vsub.f32 %v648, %v2321
        %2323 = vmatprep.mubr.f32.mxu0 %v2322
        %v2324 = vand.u32 %v647, 4294901760
        %v2325 = vsub.f32 %v647, %v2324
        %2326 = vmatmul.mubr.f32.gmra.mxu0 %v2325
        %v2327 = vpop.f32.mrf.mxu0
        %v2328 = vadd.f32 %v1859, %v2327
        %v2329 = vpop.f32.mrf.mxu0
        %v2330 = vadd.f32 %v1861, %v2329
        %v2331 = vand.u32 %v650, 4294901760
        %v2332 = vsub.f32 %v650, %v2331
        %2333 = vmatprep.mubr.f32.mxu0 %v2332
        %v2334 = vand.u32 %v649, 4294901760
        %v2335 = vsub.f32 %v649, %v2334
        %2336 = vmatmul.mubr.f32.gmra.mxu0 %v2335
        %v2337 = vpop.f32.mrf.mxu0
        %v2338 = vadd.f32 %v1867, %v2337
        %v2339 = vpop.f32.mrf.mxu0
        %v2340 = vadd.f32 %v1869, %v2339
        %v2341 = vand.u32 %v652, 4294901760
        %v2342 = vsub.f32 %v652, %v2341
        %2343 = vmatprep.mubr.f32.mxu0 %v2342
        %v2344 = vand.u32 %v651, 4294901760
        %v2345 = vsub.f32 %v651, %v2344
        %2346 = vmatmul.mubr.f32.gmra.mxu0 %v2345
        %v2347 = vpop.f32.mrf.mxu0
        %v2348 = vadd.f32 %v1875, %v2347
        %v2349 = vpop.f32.mrf.mxu0
        %v2350 = vadd.f32 %v1877, %v2349
        %v2351 = vand.u32 %v654, 4294901760
        %v2352 = vsub.f32 %v654, %v2351
        %2353 = vmatprep.mubr.f32.mxu0 %v2352
        %v2354 = vand.u32 %v653, 4294901760
        %v2355 = vsub.f32 %v653, %v2354
        %2356 = vmatmul.mubr.f32.gmra.mxu0 %v2355
        %v2357 = vpop.f32.mrf.mxu0
        %v2358 = vadd.f32 %v1883, %v2357
        %v2359 = vpop.f32.mrf.mxu0
        %v2360 = vadd.f32 %v1885, %v2359
        %v2361 = vand.u32 %v656, 4294901760
        %v2362 = vsub.f32 %v656, %v2361
        %2363 = vmatprep.mubr.f32.mxu0 %v2362
        %v2364 = vand.u32 %v655, 4294901760
        %v2365 = vsub.f32 %v655, %v2364
        %2366 = vmatmul.mubr.f32.gmra.mxu0 %v2365
        %v2367 = vpop.f32.mrf.mxu0
        %v2368 = vadd.f32 %v1891, %v2367
        %v2369 = vpop.f32.mrf.mxu0
        %v2370 = vadd.f32 %v1893, %v2369
        %v2371 = vand.u32 %v658, 4294901760
        %v2372 = vsub.f32 %v658, %v2371
        %2373 = vmatprep.mubr.f32.mxu0 %v2372
        %v2374 = vand.u32 %v657, 4294901760
        %v2375 = vsub.f32 %v657, %v2374
        %2376 = vmatmul.mubr.f32.gmra.mxu0 %v2375
        %v2377 = vpop.f32.mrf.mxu0
        %v2378 = vadd.f32 %v1899, %v2377
        %v2379 = vpop.f32.mrf.mxu0
        %v2380 = vadd.f32 %v1901, %v2379
        %v2381 = vand.u32 %v660, 4294901760
        %v2382 = vsub.f32 %v660, %v2381
        %2383 = vmatprep.mubr.f32.mxu0 %v2382
        %v2384 = vand.u32 %v659, 4294901760
        %v2385 = vsub.f32 %v659, %v2384
        %2386 = vmatmul.mubr.f32.gmra.mxu0 %v2385
        %v2387 = vpop.f32.mrf.mxu0
        %v2388 = vadd.f32 %v1907, %v2387
        %v2389 = vpop.f32.mrf.mxu0
        %v2390 = vadd.f32 %v1909, %v2389
        %v2391 = vand.u32 %v662, 4294901760
        %v2392 = vsub.f32 %v662, %v2391
        %2393 = vmatprep.mubr.f32.mxu0 %v2392
        %v2394 = vand.u32 %v661, 4294901760
        %v2395 = vsub.f32 %v661, %v2394
        %2396 = vmatmul.mubr.f32.gmra.mxu0 %v2395
        %v2397 = vpop.f32.mrf.mxu0
        %v2398 = vadd.f32 %v1915, %v2397
        %v2399 = vpop.f32.mrf.mxu0
        %v2400 = vadd.f32 %v1917, %v2399
        %v2401 = vand.u32 %v664, 4294901760
        %v2402 = vsub.f32 %v664, %v2401
        %2403 = vmatprep.mubr.f32.mxu0 %v2402
        %v2404 = vand.u32 %v663, 4294901760
        %v2405 = vsub.f32 %v663, %v2404
        %2406 = vmatmul.mubr.f32.gmra.mxu0 %v2405
        %v2407 = vpop.f32.mrf.mxu0
        %v2408 = vadd.f32 %v1923, %v2407
        %v2409 = vpop.f32.mrf.mxu0
        %v2410 = vadd.f32 %v1925, %v2409
        %v2411 = vand.u32 %v666, 4294901760
        %v2412 = vsub.f32 %v666, %v2411
        %2413 = vmatprep.mubr.f32.mxu0 %v2412
        %v2414 = vand.u32 %v665, 4294901760
        %v2415 = vsub.f32 %v665, %v2414
        %2416 = vmatmul.mubr.f32.gmra.mxu0 %v2415
        %v2417 = vpop.f32.mrf.mxu0
        %v2418 = vadd.f32 %v1931, %v2417
        %v2419 = vpop.f32.mrf.mxu0
        %v2420 = vadd.f32 %v1933, %v2419
        %v2421 = vand.u32 %v668, 4294901760
        %v2422 = vsub.f32 %v668, %v2421
        %2423 = vmatprep.mubr.f32.mxu0 %v2422
        %v2424 = vand.u32 %v667, 4294901760
        %v2425 = vsub.f32 %v667, %v2424
        %2426 = vmatmul.mubr.f32.gmra.mxu0 %v2425
        %v2427 = vpop.f32.mrf.mxu0
        %v2428 = vadd.f32 %v1939, %v2427
        %v2429 = vpop.f32.mrf.mxu0
        %v2430 = vadd.f32 %v1941, %v2429
        %v2431 = vand.u32 %v670, 4294901760
        %v2432 = vsub.f32 %v670, %v2431
        %2433 = vmatprep.mubr.f32.mxu0 %v2432
        %v2434 = vand.u32 %v669, 4294901760
        %v2435 = vsub.f32 %v669, %v2434
        %2436 = vmatmul.mubr.f32.gmra.mxu0 %v2435
        %v2437 = vpop.f32.mrf.mxu0
        %v2438 = vadd.f32 %v1947, %v2437
        %v2439 = vpop.f32.mrf.mxu0
        %v2440 = vadd.f32 %v1949, %v2439
        %v2441 = vand.u32 %v672, 4294901760
        %v2442 = vsub.f32 %v672, %v2441
        %2443 = vmatprep.mubr.f32.mxu0 %v2442
        %v2444 = vand.u32 %v671, 4294901760
        %v2445 = vsub.f32 %v671, %v2444
        %2446 = vmatmul.mubr.f32.gmra.mxu0 %v2445
        %v2447 = vpop.f32.mrf.mxu0
        %v2448 = vadd.f32 %v1955, %v2447
        %v2449 = vpop.f32.mrf.mxu0
        %v2450 = vadd.f32 %v1957, %v2449
        %v2451 = vand.u32 %v674, 4294901760
        %v2452 = vsub.f32 %v674, %v2451
        %2453 = vmatprep.mubr.f32.mxu0 %v2452
        %v2454 = vand.u32 %v673, 4294901760
        %v2455 = vsub.f32 %v673, %v2454
        %2456 = vmatmul.mubr.f32.gmra.mxu0 %v2455
        %v2457 = vpop.f32.mrf.mxu0
        %v2458 = vadd.f32 %v1963, %v2457
        %v2459 = vpop.f32.mrf.mxu0
        %v2460 = vadd.f32 %v1965, %v2459
        %v2461 = vand.u32 %v676, 4294901760
        %v2462 = vsub.f32 %v676, %v2461
        %2463 = vmatprep.mubr.f32.mxu0 %v2462
        %v2464 = vand.u32 %v675, 4294901760
        %v2465 = vsub.f32 %v675, %v2464
        %2466 = vmatmul.mubr.f32.gmra.mxu0 %v2465
        %v2467 = vpop.f32.mrf.mxu0
        %v2468 = vadd.f32 %v1971, %v2467
        %v2469 = vpop.f32.mrf.mxu0
        %v2470 = vadd.f32 %v1973, %v2469
        %v2471 = vand.u32 %v678, 4294901760
        %v2472 = vsub.f32 %v678, %v2471
        %2473 = vmatprep.mubr.f32.mxu0 %v2472
        %v2474 = vand.u32 %v677, 4294901760
        %v2475 = vsub.f32 %v677, %v2474
        %2476 = vmatmul.mubr.f32.gmra.mxu0 %v2475
        %v2477 = vpop.f32.mrf.mxu0
        %v2478 = vadd.f32 %v1979, %v2477
        %v2479 = vpop.f32.mrf.mxu0
        %v2480 = vadd.f32 %v1981, %v2479
        %v2481 = vand.u32 %v680, 4294901760
        %v2482 = vsub.f32 %v680, %v2481
        %2483 = vmatprep.mubr.f32.mxu0 %v2482
        %v2484 = vand.u32 %v679, 4294901760
        %v2485 = vsub.f32 %v679, %v2484
        %2486 = vmatmul.mubr.f32.gmra.mxu0 %v2485
        %v2487 = vpop.f32.mrf.mxu0
        %v2488 = vadd.f32 %v1987, %v2487
        %v2489 = vpop.f32.mrf.mxu0
        %v2490 = vadd.f32 %v1989, %v2489
        %v2491 = vand.u32 %v682, 4294901760
        %v2492 = vsub.f32 %v682, %v2491
        %2493 = vmatprep.mubr.f32.mxu0 %v2492
        %v2494 = vand.u32 %v681, 4294901760
        %v2495 = vsub.f32 %v681, %v2494
        %2496 = vmatmul.mubr.f32.gmra.mxu0 %v2495
        %v2497 = vpop.f32.mrf.mxu0
        %v2498 = vadd.f32 %v1995, %v2497
        %v2499 = vpop.f32.mrf.mxu0
        %v2500 = vadd.f32 %v1997, %v2499
        %v2501 = vand.u32 %v684, 4294901760
        %v2502 = vsub.f32 %v684, %v2501
        %2503 = vmatprep.mubr.f32.mxu0 %v2502
        %v2504 = vand.u32 %v683, 4294901760
        %v2505 = vsub.f32 %v683, %v2504
        %2506 = vmatmul.mubr.f32.gmra.mxu0 %v2505
        %v2507 = vpop.f32.mrf.mxu0
        %v2508 = vadd.f32 %v2003, %v2507
        %v2509 = vpop.f32.mrf.mxu0
        %v2510 = vadd.f32 %v2005, %v2509
        %v2511 = vand.u32 %v686, 4294901760
        %v2512 = vsub.f32 %v686, %v2511
        %2513 = vmatprep.mubr.f32.mxu0 %v2512
        %v2514 = vand.u32 %v685, 4294901760
        %v2515 = vsub.f32 %v685, %v2514
        %2516 = vmatmul.mubr.f32.gmra.mxu0 %v2515
        %v2517 = vpop.f32.mrf.mxu0
        %v2518 = vadd.f32 %v2011, %v2517
        %v2519 = vpop.f32.mrf.mxu0
        %v2520 = vadd.f32 %v2013, %v2519
        %v2521 = vand.u32 %v688, 4294901760
        %v2522 = vsub.f32 %v688, %v2521
        %2523 = vmatprep.mubr.f32.mxu0 %v2522
        %v2524 = vand.u32 %v687, 4294901760
        %v2525 = vsub.f32 %v687, %v2524
        %2526 = vmatmul.mubr.f32.gmra.mxu0 %v2525
        %v2527 = vpop.f32.mrf.mxu0
        %v2528 = vadd.f32 %v2019, %v2527
        %v2529 = vpop.f32.mrf.mxu0
        %v2530 = vadd.f32 %v2021, %v2529
        %v2531 = vand.u32 %v690, 4294901760
        %v2532 = vsub.f32 %v690, %v2531
        %2533 = vmatprep.mubr.f32.mxu0 %v2532
        %v2534 = vand.u32 %v689, 4294901760
        %v2535 = vsub.f32 %v689, %v2534
        %2536 = vmatmul.mubr.f32.gmra.mxu0 %v2535
        %v2537 = vpop.f32.mrf.mxu0
        %v2538 = vadd.f32 %v2027, %v2537
        %v2539 = vpop.f32.mrf.mxu0
        %v2540 = vadd.f32 %v2029, %v2539
        %v2541 = vand.u32 %v692, 4294901760
        %v2542 = vsub.f32 %v692, %v2541
        %2543 = vmatprep.mubr.f32.mxu0 %v2542
        %v2544 = vand.u32 %v691, 4294901760
        %v2545 = vsub.f32 %v691, %v2544
        %2546 = vmatmul.mubr.f32.gmra.mxu0 %v2545
        %v2547 = vpop.f32.mrf.mxu0
        %v2548 = vadd.f32 %v2035, %v2547
        %v2549 = vpop.f32.mrf.mxu0
        %v2550 = vadd.f32 %v2037, %v2549
        %2551 = vdwg.mxu0
        %v2552 = vand.u32 %v724, 4294901760
        %2553 = vmatprep.subr.mxu0 %v2552
        %v2554 = vand.u32 %v723, 4294901760
        %2555 = vmatpush1.msra.mxu0 %v2554
        %v2556 = vand.u32 %v722, 4294901760
        %2557 = vmatprep.subr.mxu0 %v2556
        %v2558 = vand.u32 %v721, 4294901760
        %2559 = vmatpush1.msra.mxu0 %v2558
        %v2560 = vand.u32 %v720, 4294901760
        %2561 = vmatprep.subr.mxu0 %v2560
        %v2562 = vand.u32 %v719, 4294901760
        %2563 = vmatpush1.msra.mxu0 %v2562
        %v2564 = vand.u32 %v718, 4294901760
        %2565 = vmatprep.subr.mxu0 %v2564
        %v2566 = vand.u32 %v717, 4294901760
        %2567 = vmatpush1.msra.mxu0 %v2566
        %v2568 = vand.u32 %v716, 4294901760
        %2569 = vmatprep.subr.mxu0 %v2568
        %v2570 = vand.u32 %v715, 4294901760
        %2571 = vmatpush1.msra.mxu0 %v2570
        %v2572 = vand.u32 %v714, 4294901760
        %2573 = vmatprep.subr.mxu0 %v2572
        %v2574 = vand.u32 %v713, 4294901760
        %2575 = vmatpush1.msra.mxu0 %v2574
        %v2576 = vand.u32 %v712, 4294901760
        %2577 = vmatprep.subr.mxu0 %v2576
        %v2578 = vand.u32 %v711, 4294901760
        %2579 = vmatpush1.msra.mxu0 %v2578
        %v2580 = vand.u32 %v710, 4294901760
        %2581 = vmatprep.subr.mxu0 %v2580
        %v2582 = vand.u32 %v709, 4294901760
        %2583 = vmatpush1.msra.mxu0 %v2582
        %v2584 = vand.u32 %v708, 4294901760
        %2585 = vmatprep.subr.mxu0 %v2584
        %v2586 = vand.u32 %v707, 4294901760
        %2587 = vmatpush1.msra.mxu0 %v2586
        %v2588 = vand.u32 %v706, 4294901760
        %2589 = vmatprep.subr.mxu0 %v2588
        %v2590 = vand.u32 %v705, 4294901760
        %2591 = vmatpush1.msra.mxu0 %v2590
        %v2592 = vand.u32 %v704, 4294901760
        %2593 = vmatprep.subr.mxu0 %v2592
        %v2594 = vand.u32 %v703, 4294901760
        %2595 = vmatpush1.msra.mxu0 %v2594
        %v2596 = vand.u32 %v702, 4294901760
        %2597 = vmatprep.subr.mxu0 %v2596
        %v2598 = vand.u32 %v701, 4294901760
        %2599 = vmatpush1.msra.mxu0 %v2598
        %v2600 = vand.u32 %v700, 4294901760
        %2601 = vmatprep.subr.mxu0 %v2600
        %v2602 = vand.u32 %v699, 4294901760
        %2603 = vmatpush1.msra.mxu0 %v2602
        %v2604 = vand.u32 %v698, 4294901760
        %2605 = vmatprep.subr.mxu0 %v2604
        %v2606 = vand.u32 %v697, 4294901760
        %2607 = vmatpush1.msra.mxu0 %v2606
        %v2608 = vand.u32 %v696, 4294901760
        %2609 = vmatprep.subr.mxu0 %v2608
        %v2610 = vand.u32 %v695, 4294901760
        %2611 = vmatpush1.msra.mxu0 %v2610
        %v2612 = vand.u32 %v694, 4294901760
        %2613 = vmatprep.subr.mxu0 %v2612
        %v2614 = vand.u32 %v693, 4294901760
        %2615 = vmatpush1.msra.mxu0 %v2614
        %v2616 = vand.u32 %v756, 4294901760
        %2617 = vmatprep.subr.mxu0 %v2616
        %v2618 = vand.u32 %v755, 4294901760
        %2619 = vmatpush2.msra.mxu0 %v2618
        %v2620 = vand.u32 %v754, 4294901760
        %2621 = vmatprep.subr.mxu0 %v2620
        %v2622 = vand.u32 %v753, 4294901760
        %2623 = vmatpush2.msra.mxu0 %v2622
        %v2624 = vand.u32 %v752, 4294901760
        %2625 = vmatprep.subr.mxu0 %v2624
        %v2626 = vand.u32 %v751, 4294901760
        %2627 = vmatpush2.msra.mxu0 %v2626
        %v2628 = vand.u32 %v750, 4294901760
        %2629 = vmatprep.subr.mxu0 %v2628
        %v2630 = vand.u32 %v749, 4294901760
        %2631 = vmatpush2.msra.mxu0 %v2630
        %v2632 = vand.u32 %v748, 4294901760
        %2633 = vmatprep.subr.mxu0 %v2632
        %v2634 = vand.u32 %v747, 4294901760
        %2635 = vmatpush2.msra.mxu0 %v2634
        %v2636 = vand.u32 %v746, 4294901760
        %2637 = vmatprep.subr.mxu0 %v2636
        %v2638 = vand.u32 %v745, 4294901760
        %2639 = vmatpush2.msra.mxu0 %v2638
        %v2640 = vand.u32 %v744, 4294901760
        %2641 = vmatprep.subr.mxu0 %v2640
        %v2642 = vand.u32 %v743, 4294901760
        %2643 = vmatpush2.msra.mxu0 %v2642
        %v2644 = vand.u32 %v742, 4294901760
        %2645 = vmatprep.subr.mxu0 %v2644
        %v2646 = vand.u32 %v741, 4294901760
        %2647 = vmatpush2.msra.mxu0 %v2646
        %v2648 = vand.u32 %v740, 4294901760
        %2649 = vmatprep.subr.mxu0 %v2648
        %v2650 = vand.u32 %v739, 4294901760
        %2651 = vmatpush2.msra.mxu0 %v2650
        %v2652 = vand.u32 %v738, 4294901760
        %2653 = vmatprep.subr.mxu0 %v2652
        %v2654 = vand.u32 %v737, 4294901760
        %2655 = vmatpush2.msra.mxu0 %v2654
        %v2656 = vand.u32 %v736, 4294901760
        %2657 = vmatprep.subr.mxu0 %v2656
        %v2658 = vand.u32 %v735, 4294901760
        %2659 = vmatpush2.msra.mxu0 %v2658
        %v2660 = vand.u32 %v734, 4294901760
        %2661 = vmatprep.subr.mxu0 %v2660
        %v2662 = vand.u32 %v733, 4294901760
        %2663 = vmatpush2.msra.mxu0 %v2662
        %v2664 = vand.u32 %v732, 4294901760
        %2665 = vmatprep.subr.mxu0 %v2664
        %v2666 = vand.u32 %v731, 4294901760
        %2667 = vmatpush2.msra.mxu0 %v2666
        %v2668 = vand.u32 %v730, 4294901760
        %2669 = vmatprep.subr.mxu0 %v2668
        %v2670 = vand.u32 %v729, 4294901760
        %2671 = vmatpush2.msra.mxu0 %v2670
        %v2672 = vand.u32 %v728, 4294901760
        %2673 = vmatprep.subr.mxu0 %v2672
        %v2674 = vand.u32 %v727, 4294901760
        %2675 = vmatpush2.msra.mxu0 %v2674
        %v2676 = vand.u32 %v726, 4294901760
        %2677 = vmatprep.subr.mxu0 %v2676
        %v2678 = vand.u32 %v725, 4294901760
        %2679 = vmatpush2.msra.mxu0 %v2678
        %v2680 = vand.u32 %v630, 4294901760
        %v2681 = vsub.f32 %v630, %v2680
        %v2682 = vand.u32 %v2681, 4294901760
        %2683 = vmatprep.mubr.f32.mxu0 %v2682
        %v2684 = vand.u32 %v629, 4294901760
        %v2685 = vsub.f32 %v629, %v2684
        %v2686 = vand.u32 %v2685, 4294901760
        %2687 = vmatmul.mubr.f32.gmra.mxu0 %v2686
        %v2688 = vpop.f32.mrf.mxu0
        %v2689 = vadd.f32 %v2238, %v2688
        %v2690 = vpop.f32.mrf.mxu0
        %v2691 = vadd.f32 %v2240, %v2690
        %v2692 = vand.u32 %v632, 4294901760
        %v2693 = vsub.f32 %v632, %v2692
        %v2694 = vand.u32 %v2693, 4294901760
        %2695 = vmatprep.mubr.f32.mxu0 %v2694
        %v2696 = vand.u32 %v631, 4294901760
        %v2697 = vsub.f32 %v631, %v2696
        %v2698 = vand.u32 %v2697, 4294901760
        %2699 = vmatmul.mubr.f32.gmra.mxu0 %v2698
        %v2700 = vpop.f32.mrf.mxu0
        %v2701 = vadd.f32 %v2248, %v2700
        %v2702 = vpop.f32.mrf.mxu0
        %v2703 = vadd.f32 %v2250, %v2702
        %v2704 = vand.u32 %v634, 4294901760
        %v2705 = vsub.f32 %v634, %v2704
        %v2706 = vand.u32 %v2705, 4294901760
        %2707 = vmatprep.mubr.f32.mxu0 %v2706
        %v2708 = vand.u32 %v633, 4294901760
        %v2709 = vsub.f32 %v633, %v2708
        %v2710 = vand.u32 %v2709, 4294901760
        %2711 = vmatmul.mubr.f32.gmra.mxu0 %v2710
        %v2712 = vpop.f32.mrf.mxu0
        %v2713 = vadd.f32 %v2258, %v2712
        %v2714 = vpop.f32.mrf.mxu0
        %v2715 = vadd.f32 %v2260, %v2714
        %v2716 = vand.u32 %v636, 4294901760
        %v2717 = vsub.f32 %v636, %v2716
        %v2718 = vand.u32 %v2717, 4294901760
        %2719 = vmatprep.mubr.f32.mxu0 %v2718
        %v2720 = vand.u32 %v635, 4294901760
        %v2721 = vsub.f32 %v635, %v2720
        %v2722 = vand.u32 %v2721, 4294901760
        %2723 = vmatmul.mubr.f32.gmra.mxu0 %v2722
        %v2724 = vpop.f32.mrf.mxu0
        %v2725 = vadd.f32 %v2268, %v2724
        %v2726 = vpop.f32.mrf.mxu0
        %v2727 = vadd.f32 %v2270, %v2726
        %v2728 = vand.u32 %v638, 4294901760
        %v2729 = vsub.f32 %v638, %v2728
        %v2730 = vand.u32 %v2729, 4294901760
        %2731 = vmatprep.mubr.f32.mxu0 %v2730
        %v2732 = vand.u32 %v637, 4294901760
        %v2733 = vsub.f32 %v637, %v2732
        %v2734 = vand.u32 %v2733, 4294901760
        %2735 = vmatmul.mubr.f32.gmra.mxu0 %v2734
        %v2736 = vpop.f32.mrf.mxu0
        %v2737 = vadd.f32 %v2278, %v2736
        %v2738 = vpop.f32.mrf.mxu0
        %v2739 = vadd.f32 %v2280, %v2738
        %v2740 = vand.u32 %v640, 4294901760
        %v2741 = vsub.f32 %v640, %v2740
        %v2742 = vand.u32 %v2741, 4294901760
        %2743 = vmatprep.mubr.f32.mxu0 %v2742
        %v2744 = vand.u32 %v639, 4294901760
        %v2745 = vsub.f32 %v639, %v2744
        %v2746 = vand.u32 %v2745, 4294901760
        %2747 = vmatmul.mubr.f32.gmra.mxu0 %v2746
        %v2748 = vpop.f32.mrf.mxu0
        %v2749 = vadd.f32 %v2288, %v2748
        %v2750 = vpop.f32.mrf.mxu0
        %v2751 = vadd.f32 %v2290, %v2750
        %v2752 = vand.u32 %v642, 4294901760
        %v2753 = vsub.f32 %v642, %v2752
        %v2754 = vand.u32 %v2753, 4294901760
        %2755 = vmatprep.mubr.f32.mxu0 %v2754
        %v2756 = vand.u32 %v641, 4294901760
        %v2757 = vsub.f32 %v641, %v2756
        %v2758 = vand.u32 %v2757, 4294901760
        %2759 = vmatmul.mubr.f32.gmra.mxu0 %v2758
        %v2760 = vpop.f32.mrf.mxu0
        %v2761 = vadd.f32 %v2298, %v2760
        %v2762 = vpop.f32.mrf.mxu0
        %v2763 = vadd.f32 %v2300, %v2762
        %v2764 = vand.u32 %v644, 4294901760
        %v2765 = vsub.f32 %v644, %v2764
        %v2766 = vand.u32 %v2765, 4294901760
        %2767 = vmatprep.mubr.f32.mxu0 %v2766
        %v2768 = vand.u32 %v643, 4294901760
        %v2769 = vsub.f32 %v643, %v2768
        %v2770 = vand.u32 %v2769, 4294901760
        %2771 = vmatmul.mubr.f32.gmra.mxu0 %v2770
        %v2772 = vpop.f32.mrf.mxu0
        %v2773 = vadd.f32 %v2308, %v2772
        %v2774 = vpop.f32.mrf.mxu0
        %v2775 = vadd.f32 %v2310, %v2774
        %v2776 = vand.u32 %v646, 4294901760
        %v2777 = vsub.f32 %v646, %v2776
        %v2778 = vand.u32 %v2777, 4294901760
        %2779 = vmatprep.mubr.f32.mxu0 %v2778
        %v2780 = vand.u32 %v645, 4294901760
        %v2781 = vsub.f32 %v645, %v2780
        %v2782 = vand.u32 %v2781, 4294901760
        %2783 = vmatmul.mubr.f32.gmra.mxu0 %v2782
        %v2784 = vpop.f32.mrf.mxu0
        %v2785 = vadd.f32 %v2318, %v2784
        %v2786 = vpop.f32.mrf.mxu0
        %v2787 = vadd.f32 %v2320, %v2786
        %v2788 = vand.u32 %v648, 4294901760
        %v2789 = vsub.f32 %v648, %v2788
        %v2790 = vand.u32 %v2789, 4294901760
        %2791 = vmatprep.mubr.f32.mxu0 %v2790
        %v2792 = vand.u32 %v647, 4294901760
        %v2793 = vsub.f32 %v647, %v2792
        %v2794 = vand.u32 %v2793, 4294901760
        %2795 = vmatmul.mubr.f32.gmra.mxu0 %v2794
        %v2796 = vpop.f32.mrf.mxu0
        %v2797 = vadd.f32 %v2328, %v2796
        %v2798 = vpop.f32.mrf.mxu0
        %v2799 = vadd.f32 %v2330, %v2798
        %v2800 = vand.u32 %v650, 4294901760
        %v2801 = vsub.f32 %v650, %v2800
        %v2802 = vand.u32 %v2801, 4294901760
        %2803 = vmatprep.mubr.f32.mxu0 %v2802
        %v2804 = vand.u32 %v649, 4294901760
        %v2805 = vsub.f32 %v649, %v2804
        %v2806 = vand.u32 %v2805, 4294901760
        %2807 = vmatmul.mubr.f32.gmra.mxu0 %v2806
        %v2808 = vpop.f32.mrf.mxu0
        %v2809 = vadd.f32 %v2338, %v2808
        %v2810 = vpop.f32.mrf.mxu0
        %v2811 = vadd.f32 %v2340, %v2810
        %v2812 = vand.u32 %v652, 4294901760
        %v2813 = vsub.f32 %v652, %v2812
        %v2814 = vand.u32 %v2813, 4294901760
        %2815 = vmatprep.mubr.f32.mxu0 %v2814
        %v2816 = vand.u32 %v651, 4294901760
        %v2817 = vsub.f32 %v651, %v2816
        %v2818 = vand.u32 %v2817, 4294901760
        %2819 = vmatmul.mubr.f32.gmra.mxu0 %v2818
        %v2820 = vpop.f32.mrf.mxu0
        %v2821 = vadd.f32 %v2348, %v2820
        %v2822 = vpop.f32.mrf.mxu0
        %v2823 = vadd.f32 %v2350, %v2822
        %v2824 = vand.u32 %v654, 4294901760
        %v2825 = vsub.f32 %v654, %v2824
        %v2826 = vand.u32 %v2825, 4294901760
        %2827 = vmatprep.mubr.f32.mxu0 %v2826
        %v2828 = vand.u32 %v653, 4294901760
        %v2829 = vsub.f32 %v653, %v2828
        %v2830 = vand.u32 %v2829, 4294901760
        %2831 = vmatmul.mubr.f32.gmra.mxu0 %v2830
        %v2832 = vpop.f32.mrf.mxu0
        %v2833 = vadd.f32 %v2358, %v2832
        %v2834 = vpop.f32.mrf.mxu0
        %v2835 = vadd.f32 %v2360, %v2834
        %v2836 = vand.u32 %v656, 4294901760
        %v2837 = vsub.f32 %v656, %v2836
        %v2838 = vand.u32 %v2837, 4294901760
        %2839 = vmatprep.mubr.f32.mxu0 %v2838
        %v2840 = vand.u32 %v655, 4294901760
        %v2841 = vsub.f32 %v655, %v2840
        %v2842 = vand.u32 %v2841, 4294901760
        %2843 = vmatmul.mubr.f32.gmra.mxu0 %v2842
        %v2844 = vpop.f32.mrf.mxu0
        %v2845 = vadd.f32 %v2368, %v2844
        %v2846 = vpop.f32.mrf.mxu0
        %v2847 = vadd.f32 %v2370, %v2846
        %v2848 = vand.u32 %v658, 4294901760
        %v2849 = vsub.f32 %v658, %v2848
        %v2850 = vand.u32 %v2849, 4294901760
        %2851 = vmatprep.mubr.f32.mxu0 %v2850
        %v2852 = vand.u32 %v657, 4294901760
        %v2853 = vsub.f32 %v657, %v2852
        %v2854 = vand.u32 %v2853, 4294901760
        %2855 = vmatmul.mubr.f32.gmra.mxu0 %v2854
        %v2856 = vpop.f32.mrf.mxu0
        %v2857 = vadd.f32 %v2378, %v2856
        %v2858 = vpop.f32.mrf.mxu0
        %v2859 = vadd.f32 %v2380, %v2858
        %v2860 = vand.u32 %v660, 4294901760
        %v2861 = vsub.f32 %v660, %v2860
        %v2862 = vand.u32 %v2861, 4294901760
        %2863 = vmatprep.mubr.f32.mxu0 %v2862
        %v2864 = vand.u32 %v659, 4294901760
        %v2865 = vsub.f32 %v659, %v2864
        %v2866 = vand.u32 %v2865, 4294901760
        %2867 = vmatmul.mubr.f32.gmra.mxu0 %v2866
        %v2868 = vpop.f32.mrf.mxu0
        %v2869 = vadd.f32 %v2388, %v2868
        %v2870 = vpop.f32.mrf.mxu0
        %v2871 = vadd.f32 %v2390, %v2870
        %v2872 = vand.u32 %v662, 4294901760
        %v2873 = vsub.f32 %v662, %v2872
        %v2874 = vand.u32 %v2873, 4294901760
        %2875 = vmatprep.mubr.f32.mxu0 %v2874
        %v2876 = vand.u32 %v661, 4294901760
        %v2877 = vsub.f32 %v661, %v2876
        %v2878 = vand.u32 %v2877, 4294901760
        %2879 = vmatmul.mubr.f32.gmra.mxu0 %v2878
        %v2880 = vpop.f32.mrf.mxu0
        %v2881 = vadd.f32 %v2398, %v2880
        %v2882 = vpop.f32.mrf.mxu0
        %v2883 = vadd.f32 %v2400, %v2882
        %v2884 = vand.u32 %v664, 4294901760
        %v2885 = vsub.f32 %v664, %v2884
        %v2886 = vand.u32 %v2885, 4294901760
        %2887 = vmatprep.mubr.f32.mxu0 %v2886
        %v2888 = vand.u32 %v663, 4294901760
        %v2889 = vsub.f32 %v663, %v2888
        %v2890 = vand.u32 %v2889, 4294901760
        %2891 = vmatmul.mubr.f32.gmra.mxu0 %v2890
        %v2892 = vpop.f32.mrf.mxu0
        %v2893 = vadd.f32 %v2408, %v2892
        %v2894 = vpop.f32.mrf.mxu0
        %v2895 = vadd.f32 %v2410, %v2894
        %v2896 = vand.u32 %v666, 4294901760
        %v2897 = vsub.f32 %v666, %v2896
        %v2898 = vand.u32 %v2897, 4294901760
        %2899 = vmatprep.mubr.f32.mxu0 %v2898
        %v2900 = vand.u32 %v665, 4294901760
        %v2901 = vsub.f32 %v665, %v2900
        %v2902 = vand.u32 %v2901, 4294901760
        %2903 = vmatmul.mubr.f32.gmra.mxu0 %v2902
        %v2904 = vpop.f32.mrf.mxu0
        %v2905 = vadd.f32 %v2418, %v2904
        %v2906 = vpop.f32.mrf.mxu0
        %v2907 = vadd.f32 %v2420, %v2906
        %v2908 = vand.u32 %v668, 4294901760
        %v2909 = vsub.f32 %v668, %v2908
        %v2910 = vand.u32 %v2909, 4294901760
        %2911 = vmatprep.mubr.f32.mxu0 %v2910
        %v2912 = vand.u32 %v667, 4294901760
        %v2913 = vsub.f32 %v667, %v2912
        %v2914 = vand.u32 %v2913, 4294901760
        %2915 = vmatmul.mubr.f32.gmra.mxu0 %v2914
        %v2916 = vpop.f32.mrf.mxu0
        %v2917 = vadd.f32 %v2428, %v2916
        %v2918 = vpop.f32.mrf.mxu0
        %v2919 = vadd.f32 %v2430, %v2918
        %v2920 = vand.u32 %v670, 4294901760
        %v2921 = vsub.f32 %v670, %v2920
        %v2922 = vand.u32 %v2921, 4294901760
        %2923 = vmatprep.mubr.f32.mxu0 %v2922
        %v2924 = vand.u32 %v669, 4294901760
        %v2925 = vsub.f32 %v669, %v2924
        %v2926 = vand.u32 %v2925, 4294901760
        %2927 = vmatmul.mubr.f32.gmra.mxu0 %v2926
        %v2928 = vpop.f32.mrf.mxu0
        %v2929 = vadd.f32 %v2438, %v2928
        %v2930 = vpop.f32.mrf.mxu0
        %v2931 = vadd.f32 %v2440, %v2930
        %v2932 = vand.u32 %v672, 4294901760
        %v2933 = vsub.f32 %v672, %v2932
        %v2934 = vand.u32 %v2933, 4294901760
        %2935 = vmatprep.mubr.f32.mxu0 %v2934
        %v2936 = vand.u32 %v671, 4294901760
        %v2937 = vsub.f32 %v671, %v2936
        %v2938 = vand.u32 %v2937, 4294901760
        %2939 = vmatmul.mubr.f32.gmra.mxu0 %v2938
        %v2940 = vpop.f32.mrf.mxu0
        %v2941 = vadd.f32 %v2448, %v2940
        %v2942 = vpop.f32.mrf.mxu0
        %v2943 = vadd.f32 %v2450, %v2942
        %v2944 = vand.u32 %v674, 4294901760
        %v2945 = vsub.f32 %v674, %v2944
        %v2946 = vand.u32 %v2945, 4294901760
        %2947 = vmatprep.mubr.f32.mxu0 %v2946
        %v2948 = vand.u32 %v673, 4294901760
        %v2949 = vsub.f32 %v673, %v2948
        %v2950 = vand.u32 %v2949, 4294901760
        %2951 = vmatmul.mubr.f32.gmra.mxu0 %v2950
        %v2952 = vpop.f32.mrf.mxu0
        %v2953 = vadd.f32 %v2458, %v2952
        %v2954 = vpop.f32.mrf.mxu0
        %v2955 = vadd.f32 %v2460, %v2954
        %v2956 = vand.u32 %v676, 4294901760
        %v2957 = vsub.f32 %v676, %v2956
        %v2958 = vand.u32 %v2957, 4294901760
        %2959 = vmatprep.mubr.f32.mxu0 %v2958
        %v2960 = vand.u32 %v675, 4294901760
        %v2961 = vsub.f32 %v675, %v2960
        %v2962 = vand.u32 %v2961, 4294901760
        %2963 = vmatmul.mubr.f32.gmra.mxu0 %v2962
        %v2964 = vpop.f32.mrf.mxu0
        %v2965 = vadd.f32 %v2468, %v2964
        %v2966 = vpop.f32.mrf.mxu0
        %v2967 = vadd.f32 %v2470, %v2966
        %v2968 = vand.u32 %v678, 4294901760
        %v2969 = vsub.f32 %v678, %v2968
        %v2970 = vand.u32 %v2969, 4294901760
        %2971 = vmatprep.mubr.f32.mxu0 %v2970
        %v2972 = vand.u32 %v677, 4294901760
        %v2973 = vsub.f32 %v677, %v2972
        %v2974 = vand.u32 %v2973, 4294901760
        %2975 = vmatmul.mubr.f32.gmra.mxu0 %v2974
        %v2976 = vpop.f32.mrf.mxu0
        %v2977 = vadd.f32 %v2478, %v2976
        %v2978 = vpop.f32.mrf.mxu0
        %v2979 = vadd.f32 %v2480, %v2978
        %v2980 = vand.u32 %v680, 4294901760
        %v2981 = vsub.f32 %v680, %v2980
        %v2982 = vand.u32 %v2981, 4294901760
        %2983 = vmatprep.mubr.f32.mxu0 %v2982
        %v2984 = vand.u32 %v679, 4294901760
        %v2985 = vsub.f32 %v679, %v2984
        %v2986 = vand.u32 %v2985, 4294901760
        %2987 = vmatmul.mubr.f32.gmra.mxu0 %v2986
        %v2988 = vpop.f32.mrf.mxu0
        %v2989 = vadd.f32 %v2488, %v2988
        %v2990 = vpop.f32.mrf.mxu0
        %v2991 = vadd.f32 %v2490, %v2990
        %v2992 = vand.u32 %v682, 4294901760
        %v2993 = vsub.f32 %v682, %v2992
        %v2994 = vand.u32 %v2993, 4294901760
        %2995 = vmatprep.mubr.f32.mxu0 %v2994
        %v2996 = vand.u32 %v681, 4294901760
        %v2997 = vsub.f32 %v681, %v2996
        %v2998 = vand.u32 %v2997, 4294901760
        %2999 = vmatmul.mubr.f32.gmra.mxu0 %v2998
        %v3000 = vpop.f32.mrf.mxu0
        %v3001 = vadd.f32 %v2498, %v3000
        %v3002 = vpop.f32.mrf.mxu0
        %v3003 = vadd.f32 %v2500, %v3002
        %v3004 = vand.u32 %v684, 4294901760
        %v3005 = vsub.f32 %v684, %v3004
        %v3006 = vand.u32 %v3005, 4294901760
        %3007 = vmatprep.mubr.f32.mxu0 %v3006
        %v3008 = vand.u32 %v683, 4294901760
        %v3009 = vsub.f32 %v683, %v3008
        %v3010 = vand.u32 %v3009, 4294901760
        %3011 = vmatmul.mubr.f32.gmra.mxu0 %v3010
        %v3012 = vpop.f32.mrf.mxu0
        %v3013 = vadd.f32 %v2508, %v3012
        %v3014 = vpop.f32.mrf.mxu0
        %v3015 = vadd.f32 %v2510, %v3014
        %v3016 = vand.u32 %v686, 4294901760
        %v3017 = vsub.f32 %v686, %v3016
        %v3018 = vand.u32 %v3017, 4294901760
        %3019 = vmatprep.mubr.f32.mxu0 %v3018
        %v3020 = vand.u32 %v685, 4294901760
        %v3021 = vsub.f32 %v685, %v3020
        %v3022 = vand.u32 %v3021, 4294901760
        %3023 = vmatmul.mubr.f32.gmra.mxu0 %v3022
        %v3024 = vpop.f32.mrf.mxu0
        %v3025 = vadd.f32 %v2518, %v3024
        %v3026 = vpop.f32.mrf.mxu0
        %v3027 = vadd.f32 %v2520, %v3026
        %v3028 = vand.u32 %v688, 4294901760
        %v3029 = vsub.f32 %v688, %v3028
        %v3030 = vand.u32 %v3029, 4294901760
        %3031 = vmatprep.mubr.f32.mxu0 %v3030
        %v3032 = vand.u32 %v687, 4294901760
        %v3033 = vsub.f32 %v687, %v3032
        %v3034 = vand.u32 %v3033, 4294901760
        %3035 = vmatmul.mubr.f32.gmra.mxu0 %v3034
        %v3036 = vpop.f32.mrf.mxu0
        %v3037 = vadd.f32 %v2528, %v3036
        %v3038 = vpop.f32.mrf.mxu0
        %v3039 = vadd.f32 %v2530, %v3038
        %v3040 = vand.u32 %v690, 4294901760
        %v3041 = vsub.f32 %v690, %v3040
        %v3042 = vand.u32 %v3041, 4294901760
        %3043 = vmatprep.mubr.f32.mxu0 %v3042
        %v3044 = vand.u32 %v689, 4294901760
        %v3045 = vsub.f32 %v689, %v3044
        %v3046 = vand.u32 %v3045, 4294901760
        %3047 = vmatmul.mubr.f32.gmra.mxu0 %v3046
        %v3048 = vpop.f32.mrf.mxu0
        %v3049 = vadd.f32 %v2538, %v3048
        %v3050 = vpop.f32.mrf.mxu0
        %v3051 = vadd.f32 %v2540, %v3050
        %v3052 = vand.u32 %v692, 4294901760
        %v3053 = vsub.f32 %v692, %v3052
        %v3054 = vand.u32 %v3053, 4294901760
        %3055 = vmatprep.mubr.f32.mxu0 %v3054
        %v3056 = vand.u32 %v691, 4294901760
        %v3057 = vsub.f32 %v691, %v3056
        %v3058 = vand.u32 %v3057, 4294901760
        %3059 = vmatmul.mubr.f32.gmra.mxu0 %v3058
        %v3060 = vpop.f32.mrf.mxu0
        %v3061 = vadd.f32 %v2548, %v3060
        %v3062 = vpop.f32.mrf.mxu0
        %v3063 = vadd.f32 %v2550, %v3062
        %3064 = vdwg.mxu0
        %v3065 = vand.u32 %v724, 4294901760
        %v3066 = vsub.f32 %v724, %v3065
        %v3067 = vand.u32 %v3066, 4294901760
        %3068 = vmatprep.subr.mxu0 %v3067
        %v3069 = vand.u32 %v723, 4294901760
        %v3070 = vsub.f32 %v723, %v3069
        %v3071 = vand.u32 %v3070, 4294901760
        %3072 = vmatpush1.msra.mxu0 %v3071
        %v3073 = vand.u32 %v722, 4294901760
        %v3074 = vsub.f32 %v722, %v3073
        %v3075 = vand.u32 %v3074, 4294901760
        %3076 = vmatprep.subr.mxu0 %v3075
        %v3077 = vand.u32 %v721, 4294901760
        %v3078 = vsub.f32 %v721, %v3077
        %v3079 = vand.u32 %v3078, 4294901760
        %3080 = vmatpush1.msra.mxu0 %v3079
        %v3081 = vand.u32 %v720, 4294901760
        %v3082 = vsub.f32 %v720, %v3081
        %v3083 = vand.u32 %v3082, 4294901760
        %3084 = vmatprep.subr.mxu0 %v3083
        %v3085 = vand.u32 %v719, 4294901760
        %v3086 = vsub.f32 %v719, %v3085
        %v3087 = vand.u32 %v3086, 4294901760
        %3088 = vmatpush1.msra.mxu0 %v3087
        %v3089 = vand.u32 %v718, 4294901760
        %v3090 = vsub.f32 %v718, %v3089
        %v3091 = vand.u32 %v3090, 4294901760
        %3092 = vmatprep.subr.mxu0 %v3091
        %v3093 = vand.u32 %v717, 4294901760
        %v3094 = vsub.f32 %v717, %v3093
        %v3095 = vand.u32 %v3094, 4294901760
        %3096 = vmatpush1.msra.mxu0 %v3095
        %v3097 = vand.u32 %v716, 4294901760
        %v3098 = vsub.f32 %v716, %v3097
        %v3099 = vand.u32 %v3098, 4294901760
        %3100 = vmatprep.subr.mxu0 %v3099
        %v3101 = vand.u32 %v715, 4294901760
        %v3102 = vsub.f32 %v715, %v3101
        %v3103 = vand.u32 %v3102, 4294901760
        %3104 = vmatpush1.msra.mxu0 %v3103
        %v3105 = vand.u32 %v714, 4294901760
        %v3106 = vsub.f32 %v714, %v3105
        %v3107 = vand.u32 %v3106, 4294901760
        %3108 = vmatprep.subr.mxu0 %v3107
        %v3109 = vand.u32 %v713, 4294901760
        %v3110 = vsub.f32 %v713, %v3109
        %v3111 = vand.u32 %v3110, 4294901760
        %3112 = vmatpush1.msra.mxu0 %v3111
        %v3113 = vand.u32 %v712, 4294901760
        %v3114 = vsub.f32 %v712, %v3113
        %v3115 = vand.u32 %v3114, 4294901760
        %3116 = vmatprep.subr.mxu0 %v3115
        %v3117 = vand.u32 %v711, 4294901760
        %v3118 = vsub.f32 %v711, %v3117
        %v3119 = vand.u32 %v3118, 4294901760
        %3120 = vmatpush1.msra.mxu0 %v3119
        %v3121 = vand.u32 %v710, 4294901760
        %v3122 = vsub.f32 %v710, %v3121
        %v3123 = vand.u32 %v3122, 4294901760
        %3124 = vmatprep.subr.mxu0 %v3123
        %v3125 = vand.u32 %v709, 4294901760
        %v3126 = vsub.f32 %v709, %v3125
        %v3127 = vand.u32 %v3126, 4294901760
        %3128 = vmatpush1.msra.mxu0 %v3127
        %v3129 = vand.u32 %v708, 4294901760
        %v3130 = vsub.f32 %v708, %v3129
        %v3131 = vand.u32 %v3130, 4294901760
        %3132 = vmatprep.subr.mxu0 %v3131
        %v3133 = vand.u32 %v707, 4294901760
        %v3134 = vsub.f32 %v707, %v3133
        %v3135 = vand.u32 %v3134, 4294901760
        %3136 = vmatpush1.msra.mxu0 %v3135
        %v3137 = vand.u32 %v706, 4294901760
        %v3138 = vsub.f32 %v706, %v3137
        %v3139 = vand.u32 %v3138, 4294901760
        %3140 = vmatprep.subr.mxu0 %v3139
        %v3141 = vand.u32 %v705, 4294901760
        %v3142 = vsub.f32 %v705, %v3141
        %v3143 = vand.u32 %v3142, 4294901760
        %3144 = vmatpush1.msra.mxu0 %v3143
        %v3145 = vand.u32 %v704, 4294901760
        %v3146 = vsub.f32 %v704, %v3145
        %v3147 = vand.u32 %v3146, 4294901760
        %3148 = vmatprep.subr.mxu0 %v3147
        %v3149 = vand.u32 %v703, 4294901760
        %v3150 = vsub.f32 %v703, %v3149
        %v3151 = vand.u32 %v3150, 4294901760
        %3152 = vmatpush1.msra.mxu0 %v3151
        %v3153 = vand.u32 %v702, 4294901760
        %v3154 = vsub.f32 %v702, %v3153
        %v3155 = vand.u32 %v3154, 4294901760
        %3156 = vmatprep.subr.mxu0 %v3155
        %v3157 = vand.u32 %v701, 4294901760
        %v3158 = vsub.f32 %v701, %v3157
        %v3159 = vand.u32 %v3158, 4294901760
        %3160 = vmatpush1.msra.mxu0 %v3159
        %v3161 = vand.u32 %v700, 4294901760
        %v3162 = vsub.f32 %v700, %v3161
        %v3163 = vand.u32 %v3162, 4294901760
        %3164 = vmatprep.subr.mxu0 %v3163
        %v3165 = vand.u32 %v699, 4294901760
        %v3166 = vsub.f32 %v699, %v3165
        %v3167 = vand.u32 %v3166, 4294901760
        %3168 = vmatpush1.msra.mxu0 %v3167
        %v3169 = vand.u32 %v698, 4294901760
        %v3170 = vsub.f32 %v698, %v3169
        %v3171 = vand.u32 %v3170, 4294901760
        %3172 = vmatprep.subr.mxu0 %v3171
        %v3173 = vand.u32 %v697, 4294901760
        %v3174 = vsub.f32 %v697, %v3173
        %v3175 = vand.u32 %v3174, 4294901760
        %3176 = vmatpush1.msra.mxu0 %v3175
        %v3177 = vand.u32 %v696, 4294901760
        %v3178 = vsub.f32 %v696, %v3177
        %v3179 = vand.u32 %v3178, 4294901760
        %3180 = vmatprep.subr.mxu0 %v3179
        %v3181 = vand.u32 %v695, 4294901760
        %v3182 = vsub.f32 %v695, %v3181
        %v3183 = vand.u32 %v3182, 4294901760
        %3184 = vmatpush1.msra.mxu0 %v3183
        %v3185 = vand.u32 %v694, 4294901760
        %v3186 = vsub.f32 %v694, %v3185
        %v3187 = vand.u32 %v3186, 4294901760
        %3188 = vmatprep.subr.mxu0 %v3187
        %v3189 = vand.u32 %v693, 4294901760
        %v3190 = vsub.f32 %v693, %v3189
        %v3191 = vand.u32 %v3190, 4294901760
        %3192 = vmatpush1.msra.mxu0 %v3191
        %v3193 = vand.u32 %v756, 4294901760
        %v3194 = vsub.f32 %v756, %v3193
        %v3195 = vand.u32 %v3194, 4294901760
        %3196 = vmatprep.subr.mxu0 %v3195
        %v3197 = vand.u32 %v755, 4294901760
        %v3198 = vsub.f32 %v755, %v3197
        %v3199 = vand.u32 %v3198, 4294901760
        %3200 = vmatpush2.msra.mxu0 %v3199
        %v3201 = vand.u32 %v754, 4294901760
        %v3202 = vsub.f32 %v754, %v3201
        %v3203 = vand.u32 %v3202, 4294901760
        %3204 = vmatprep.subr.mxu0 %v3203
        %v3205 = vand.u32 %v753, 4294901760
        %v3206 = vsub.f32 %v753, %v3205
        %v3207 = vand.u32 %v3206, 4294901760
        %3208 = vmatpush2.msra.mxu0 %v3207
        %v3209 = vand.u32 %v752, 4294901760
        %v3210 = vsub.f32 %v752, %v3209
        %v3211 = vand.u32 %v3210, 4294901760
        %3212 = vmatprep.subr.mxu0 %v3211
        %v3213 = vand.u32 %v751, 4294901760
        %v3214 = vsub.f32 %v751, %v3213
        %v3215 = vand.u32 %v3214, 4294901760
        %3216 = vmatpush2.msra.mxu0 %v3215
        %v3217 = vand.u32 %v750, 4294901760
        %v3218 = vsub.f32 %v750, %v3217
        %v3219 = vand.u32 %v3218, 4294901760
        %3220 = vmatprep.subr.mxu0 %v3219
        %v3221 = vand.u32 %v749, 4294901760
        %v3222 = vsub.f32 %v749, %v3221
        %v3223 = vand.u32 %v3222, 4294901760
        %3224 = vmatpush2.msra.mxu0 %v3223
        %v3225 = vand.u32 %v748, 4294901760
        %v3226 = vsub.f32 %v748, %v3225
        %v3227 = vand.u32 %v3226, 4294901760
        %3228 = vmatprep.subr.mxu0 %v3227
        %v3229 = vand.u32 %v747, 4294901760
        %v3230 = vsub.f32 %v747, %v3229
        %v3231 = vand.u32 %v3230, 4294901760
        %3232 = vmatpush2.msra.mxu0 %v3231
        %v3233 = vand.u32 %v746, 4294901760
        %v3234 = vsub.f32 %v746, %v3233
        %v3235 = vand.u32 %v3234, 4294901760
        %3236 = vmatprep.subr.mxu0 %v3235
        %v3237 = vand.u32 %v745, 4294901760
        %v3238 = vsub.f32 %v745, %v3237
        %v3239 = vand.u32 %v3238, 4294901760
        %3240 = vmatpush2.msra.mxu0 %v3239
        %v3241 = vand.u32 %v744, 4294901760
        %v3242 = vsub.f32 %v744, %v3241
        %v3243 = vand.u32 %v3242, 4294901760
        %3244 = vmatprep.subr.mxu0 %v3243
        %v3245 = vand.u32 %v743, 4294901760
        %v3246 = vsub.f32 %v743, %v3245
        %v3247 = vand.u32 %v3246, 4294901760
        %3248 = vmatpush2.msra.mxu0 %v3247
        %v3249 = vand.u32 %v742, 4294901760
        %v3250 = vsub.f32 %v742, %v3249
        %v3251 = vand.u32 %v3250, 4294901760
        %3252 = vmatprep.subr.mxu0 %v3251
        %v3253 = vand.u32 %v741, 4294901760
        %v3254 = vsub.f32 %v741, %v3253
        %v3255 = vand.u32 %v3254, 4294901760
        %3256 = vmatpush2.msra.mxu0 %v3255
        %v3257 = vand.u32 %v740, 4294901760
        %v3258 = vsub.f32 %v740, %v3257
        %v3259 = vand.u32 %v3258, 4294901760
        %3260 = vmatprep.subr.mxu0 %v3259
        %v3261 = vand.u32 %v739, 4294901760
        %v3262 = vsub.f32 %v739, %v3261
        %v3263 = vand.u32 %v3262, 4294901760
        %3264 = vmatpush2.msra.mxu0 %v3263
        %v3265 = vand.u32 %v738, 4294901760
        %v3266 = vsub.f32 %v738, %v3265
        %v3267 = vand.u32 %v3266, 4294901760
        %3268 = vmatprep.subr.mxu0 %v3267
        %v3269 = vand.u32 %v737, 4294901760
        %v3270 = vsub.f32 %v737, %v3269
        %v3271 = vand.u32 %v3270, 4294901760
        %3272 = vmatpush2.msra.mxu0 %v3271
        %v3273 = vand.u32 %v736, 4294901760
        %v3274 = vsub.f32 %v736, %v3273
        %v3275 = vand.u32 %v3274, 4294901760
        %3276 = vmatprep.subr.mxu0 %v3275
        %v3277 = vand.u32 %v735, 4294901760
        %v3278 = vsub.f32 %v735, %v3277
        %v3279 = vand.u32 %v3278, 4294901760
        %3280 = vmatpush2.msra.mxu0 %v3279
        %v3281 = vand.u32 %v734, 4294901760
        %v3282 = vsub.f32 %v734, %v3281
        %v3283 = vand.u32 %v3282, 4294901760
        %3284 = vmatprep.subr.mxu0 %v3283
        %v3285 = vand.u32 %v733, 4294901760
        %v3286 = vsub.f32 %v733, %v3285
        %v3287 = vand.u32 %v3286, 4294901760
        %3288 = vmatpush2.msra.mxu0 %v3287
        %v3289 = vand.u32 %v732, 4294901760
        %v3290 = vsub.f32 %v732, %v3289
        %v3291 = vand.u32 %v3290, 4294901760
        %3292 = vmatprep.subr.mxu0 %v3291
        %v3293 = vand.u32 %v731, 4294901760
        %v3294 = vsub.f32 %v731, %v3293
        %v3295 = vand.u32 %v3294, 4294901760
        %3296 = vmatpush2.msra.mxu0 %v3295
        %v3297 = vand.u32 %v730, 4294901760
        %v3298 = vsub.f32 %v730, %v3297
        %v3299 = vand.u32 %v3298, 4294901760
        %3300 = vmatprep.subr.mxu0 %v3299
        %v3301 = vand.u32 %v729, 4294901760
        %v3302 = vsub.f32 %v729, %v3301
        %v3303 = vand.u32 %v3302, 4294901760
        %3304 = vmatpush2.msra.mxu0 %v3303
        %v3305 = vand.u32 %v728, 4294901760
        %v3306 = vsub.f32 %v728, %v3305
        %v3307 = vand.u32 %v3306, 4294901760
        %3308 = vmatprep.subr.mxu0 %v3307
        %v3309 = vand.u32 %v727, 4294901760
        %v3310 = vsub.f32 %v727, %v3309
        %v3311 = vand.u32 %v3310, 4294901760
        %3312 = vmatpush2.msra.mxu0 %v3311
        %v3313 = vand.u32 %v726, 4294901760
        %v3314 = vsub.f32 %v726, %v3313
        %v3315 = vand.u32 %v3314, 4294901760
        %3316 = vmatprep.subr.mxu0 %v3315
        %v3317 = vand.u32 %v725, 4294901760
        %v3318 = vsub.f32 %v725, %v3317
        %v3319 = vand.u32 %v3318, 4294901760
        %3320 = vmatpush2.msra.mxu0 %v3319
        %v3321 = vand.u32 %v630, 4294901760
        %3322 = vmatprep.mubr.f32.mxu0 %v3321
        %v3323 = vand.u32 %v629, 4294901760
        %3324 = vmatmul.mubr.f32.gmra.mxu0 %v3323
        %v3325 = vpop.f32.mrf.mxu0
        %v3326 = vadd.f32 %v2689, %v3325
        %v3327 = vpop.f32.mrf.mxu0
        %v3328 = vadd.f32 %v2691, %v3327
        %v3329 = vand.u32 %v632, 4294901760
        %3330 = vmatprep.mubr.f32.mxu0 %v3329
        %v3331 = vand.u32 %v631, 4294901760
        %3332 = vmatmul.mubr.f32.gmra.mxu0 %v3331
        %v3333 = vpop.f32.mrf.mxu0
        %v3334 = vadd.f32 %v2701, %v3333
        %v3335 = vpop.f32.mrf.mxu0
        %v3336 = vadd.f32 %v2703, %v3335
        %v3337 = vand.u32 %v634, 4294901760
        %3338 = vmatprep.mubr.f32.mxu0 %v3337
        %v3339 = vand.u32 %v633, 4294901760
        %3340 = vmatmul.mubr.f32.gmra.mxu0 %v3339
        %v3341 = vpop.f32.mrf.mxu0
        %v3342 = vadd.f32 %v2713, %v3341
        %v3343 = vpop.f32.mrf.mxu0
        %v3344 = vadd.f32 %v2715, %v3343
        %v3345 = vand.u32 %v636, 4294901760
        %3346 = vmatprep.mubr.f32.mxu0 %v3345
        %v3347 = vand.u32 %v635, 4294901760
        %3348 = vmatmul.mubr.f32.gmra.mxu0 %v3347
        %v3349 = vpop.f32.mrf.mxu0
        %v3350 = vadd.f32 %v2725, %v3349
        %v3351 = vpop.f32.mrf.mxu0
        %v3352 = vadd.f32 %v2727, %v3351
        %v3353 = vand.u32 %v638, 4294901760
        %3354 = vmatprep.mubr.f32.mxu0 %v3353
        %v3355 = vand.u32 %v637, 4294901760
        %3356 = vmatmul.mubr.f32.gmra.mxu0 %v3355
        %v3357 = vpop.f32.mrf.mxu0
        %v3358 = vadd.f32 %v2737, %v3357
        %v3359 = vpop.f32.mrf.mxu0
        %v3360 = vadd.f32 %v2739, %v3359
        %v3361 = vand.u32 %v640, 4294901760
        %3362 = vmatprep.mubr.f32.mxu0 %v3361
        %v3363 = vand.u32 %v639, 4294901760
        %3364 = vmatmul.mubr.f32.gmra.mxu0 %v3363
        %v3365 = vpop.f32.mrf.mxu0
        %v3366 = vadd.f32 %v2749, %v3365
        %v3367 = vpop.f32.mrf.mxu0
        %v3368 = vadd.f32 %v2751, %v3367
        %v3369 = vand.u32 %v642, 4294901760
        %3370 = vmatprep.mubr.f32.mxu0 %v3369
        %v3371 = vand.u32 %v641, 4294901760
        %3372 = vmatmul.mubr.f32.gmra.mxu0 %v3371
        %v3373 = vpop.f32.mrf.mxu0
        %v3374 = vadd.f32 %v2761, %v3373
        %v3375 = vpop.f32.mrf.mxu0
        %v3376 = vadd.f32 %v2763, %v3375
        %v3377 = vand.u32 %v644, 4294901760
        %3378 = vmatprep.mubr.f32.mxu0 %v3377
        %v3379 = vand.u32 %v643, 4294901760
        %3380 = vmatmul.mubr.f32.gmra.mxu0 %v3379
        %v3381 = vpop.f32.mrf.mxu0
        %v3382 = vadd.f32 %v2773, %v3381
        %v3383 = vpop.f32.mrf.mxu0
        %v3384 = vadd.f32 %v2775, %v3383
        %v3385 = vand.u32 %v646, 4294901760
        %3386 = vmatprep.mubr.f32.mxu0 %v3385
        %v3387 = vand.u32 %v645, 4294901760
        %3388 = vmatmul.mubr.f32.gmra.mxu0 %v3387
        %v3389 = vpop.f32.mrf.mxu0
        %v3390 = vadd.f32 %v2785, %v3389
        %v3391 = vpop.f32.mrf.mxu0
        %v3392 = vadd.f32 %v2787, %v3391
        %v3393 = vand.u32 %v648, 4294901760
        %3394 = vmatprep.mubr.f32.mxu0 %v3393
        %v3395 = vand.u32 %v647, 4294901760
        %3396 = vmatmul.mubr.f32.gmra.mxu0 %v3395
        %v3397 = vpop.f32.mrf.mxu0
        %v3398 = vadd.f32 %v2797, %v3397
        %v3399 = vpop.f32.mrf.mxu0
        %v3400 = vadd.f32 %v2799, %v3399
        %v3401 = vand.u32 %v650, 4294901760
        %3402 = vmatprep.mubr.f32.mxu0 %v3401
        %v3403 = vand.u32 %v649, 4294901760
        %3404 = vmatmul.mubr.f32.gmra.mxu0 %v3403
        %v3405 = vpop.f32.mrf.mxu0
        %v3406 = vadd.f32 %v2809, %v3405
        %v3407 = vpop.f32.mrf.mxu0
        %v3408 = vadd.f32 %v2811, %v3407
        %v3409 = vand.u32 %v652, 4294901760
        %3410 = vmatprep.mubr.f32.mxu0 %v3409
        %v3411 = vand.u32 %v651, 4294901760
        %3412 = vmatmul.mubr.f32.gmra.mxu0 %v3411
        %v3413 = vpop.f32.mrf.mxu0
        %v3414 = vadd.f32 %v2821, %v3413
        %v3415 = vpop.f32.mrf.mxu0
        %v3416 = vadd.f32 %v2823, %v3415
        %v3417 = vand.u32 %v654, 4294901760
        %3418 = vmatprep.mubr.f32.mxu0 %v3417
        %v3419 = vand.u32 %v653, 4294901760
        %3420 = vmatmul.mubr.f32.gmra.mxu0 %v3419
        %v3421 = vpop.f32.mrf.mxu0
        %v3422 = vadd.f32 %v2833, %v3421
        %v3423 = vpop.f32.mrf.mxu0
        %v3424 = vadd.f32 %v2835, %v3423
        %v3425 = vand.u32 %v656, 4294901760
        %3426 = vmatprep.mubr.f32.mxu0 %v3425
        %v3427 = vand.u32 %v655, 4294901760
        %3428 = vmatmul.mubr.f32.gmra.mxu0 %v3427
        %v3429 = vpop.f32.mrf.mxu0
        %v3430 = vadd.f32 %v2845, %v3429
        %v3431 = vpop.f32.mrf.mxu0
        %v3432 = vadd.f32 %v2847, %v3431
        %v3433 = vand.u32 %v658, 4294901760
        %3434 = vmatprep.mubr.f32.mxu0 %v3433
        %v3435 = vand.u32 %v657, 4294901760
        %3436 = vmatmul.mubr.f32.gmra.mxu0 %v3435
        %v3437 = vpop.f32.mrf.mxu0
        %v3438 = vadd.f32 %v2857, %v3437
        %v3439 = vpop.f32.mrf.mxu0
        %v3440 = vadd.f32 %v2859, %v3439
        %v3441 = vand.u32 %v660, 4294901760
        %3442 = vmatprep.mubr.f32.mxu0 %v3441
        %v3443 = vand.u32 %v659, 4294901760
        %3444 = vmatmul.mubr.f32.gmra.mxu0 %v3443
        %v3445 = vpop.f32.mrf.mxu0
        %v3446 = vadd.f32 %v2869, %v3445
        %v3447 = vpop.f32.mrf.mxu0
        %v3448 = vadd.f32 %v2871, %v3447
        %v3449 = vand.u32 %v662, 4294901760
        %3450 = vmatprep.mubr.f32.mxu0 %v3449
        %v3451 = vand.u32 %v661, 4294901760
        %3452 = vmatmul.mubr.f32.gmra.mxu0 %v3451
        %v3453 = vpop.f32.mrf.mxu0
        %v3454 = vadd.f32 %v2881, %v3453
        %v3455 = vpop.f32.mrf.mxu0
        %v3456 = vadd.f32 %v2883, %v3455
        %v3457 = vand.u32 %v664, 4294901760
        %3458 = vmatprep.mubr.f32.mxu0 %v3457
        %v3459 = vand.u32 %v663, 4294901760
        %3460 = vmatmul.mubr.f32.gmra.mxu0 %v3459
        %v3461 = vpop.f32.mrf.mxu0
        %v3462 = vadd.f32 %v2893, %v3461
        %v3463 = vpop.f32.mrf.mxu0
        %v3464 = vadd.f32 %v2895, %v3463
        %v3465 = vand.u32 %v666, 4294901760
        %3466 = vmatprep.mubr.f32.mxu0 %v3465
        %v3467 = vand.u32 %v665, 4294901760
        %3468 = vmatmul.mubr.f32.gmra.mxu0 %v3467
        %v3469 = vpop.f32.mrf.mxu0
        %v3470 = vadd.f32 %v2905, %v3469
        %v3471 = vpop.f32.mrf.mxu0
        %v3472 = vadd.f32 %v2907, %v3471
        %v3473 = vand.u32 %v668, 4294901760
        %3474 = vmatprep.mubr.f32.mxu0 %v3473
        %v3475 = vand.u32 %v667, 4294901760
        %3476 = vmatmul.mubr.f32.gmra.mxu0 %v3475
        %v3477 = vpop.f32.mrf.mxu0
        %v3478 = vadd.f32 %v2917, %v3477
        %v3479 = vpop.f32.mrf.mxu0
        %v3480 = vadd.f32 %v2919, %v3479
        %v3481 = vand.u32 %v670, 4294901760
        %3482 = vmatprep.mubr.f32.mxu0 %v3481
        %v3483 = vand.u32 %v669, 4294901760
        %3484 = vmatmul.mubr.f32.gmra.mxu0 %v3483
        %v3485 = vpop.f32.mrf.mxu0
        %v3486 = vadd.f32 %v2929, %v3485
        %v3487 = vpop.f32.mrf.mxu0
        %v3488 = vadd.f32 %v2931, %v3487
        %v3489 = vand.u32 %v672, 4294901760
        %3490 = vmatprep.mubr.f32.mxu0 %v3489
        %v3491 = vand.u32 %v671, 4294901760
        %3492 = vmatmul.mubr.f32.gmra.mxu0 %v3491
        %v3493 = vpop.f32.mrf.mxu0
        %v3494 = vadd.f32 %v2941, %v3493
        %v3495 = vpop.f32.mrf.mxu0
        %v3496 = vadd.f32 %v2943, %v3495
        %v3497 = vand.u32 %v674, 4294901760
        %3498 = vmatprep.mubr.f32.mxu0 %v3497
        %v3499 = vand.u32 %v673, 4294901760
        %3500 = vmatmul.mubr.f32.gmra.mxu0 %v3499
        %v3501 = vpop.f32.mrf.mxu0
        %v3502 = vadd.f32 %v2953, %v3501
        %v3503 = vpop.f32.mrf.mxu0
        %v3504 = vadd.f32 %v2955, %v3503
        %v3505 = vand.u32 %v676, 4294901760
        %3506 = vmatprep.mubr.f32.mxu0 %v3505
        %v3507 = vand.u32 %v675, 4294901760
        %3508 = vmatmul.mubr.f32.gmra.mxu0 %v3507
        %v3509 = vpop.f32.mrf.mxu0
        %v3510 = vadd.f32 %v2965, %v3509
        %v3511 = vpop.f32.mrf.mxu0
        %v3512 = vadd.f32 %v2967, %v3511
        %v3513 = vand.u32 %v678, 4294901760
        %3514 = vmatprep.mubr.f32.mxu0 %v3513
        %v3515 = vand.u32 %v677, 4294901760
        %3516 = vmatmul.mubr.f32.gmra.mxu0 %v3515
        %v3517 = vpop.f32.mrf.mxu0
        %v3518 = vadd.f32 %v2977, %v3517
        %v3519 = vpop.f32.mrf.mxu0
        %v3520 = vadd.f32 %v2979, %v3519
        %v3521 = vand.u32 %v680, 4294901760
        %3522 = vmatprep.mubr.f32.mxu0 %v3521
        %v3523 = vand.u32 %v679, 4294901760
        %3524 = vmatmul.mubr.f32.gmra.mxu0 %v3523
        %v3525 = vpop.f32.mrf.mxu0
        %v3526 = vadd.f32 %v2989, %v3525
        %v3527 = vpop.f32.mrf.mxu0
        %v3528 = vadd.f32 %v2991, %v3527
        %v3529 = vand.u32 %v682, 4294901760
        %3530 = vmatprep.mubr.f32.mxu0 %v3529
        %v3531 = vand.u32 %v681, 4294901760
        %3532 = vmatmul.mubr.f32.gmra.mxu0 %v3531
        %v3533 = vpop.f32.mrf.mxu0
        %v3534 = vadd.f32 %v3001, %v3533
        %v3535 = vpop.f32.mrf.mxu0
        %v3536 = vadd.f32 %v3003, %v3535
        %v3537 = vand.u32 %v684, 4294901760
        %3538 = vmatprep.mubr.f32.mxu0 %v3537
        %v3539 = vand.u32 %v683, 4294901760
        %3540 = vmatmul.mubr.f32.gmra.mxu0 %v3539
        %v3541 = vpop.f32.mrf.mxu0
        %v3542 = vadd.f32 %v3013, %v3541
        %v3543 = vpop.f32.mrf.mxu0
        %v3544 = vadd.f32 %v3015, %v3543
        %v3545 = vand.u32 %v686, 4294901760
        %3546 = vmatprep.mubr.f32.mxu0 %v3545
        %v3547 = vand.u32 %v685, 4294901760
        %3548 = vmatmul.mubr.f32.gmra.mxu0 %v3547
        %v3549 = vpop.f32.mrf.mxu0
        %v3550 = vadd.f32 %v3025, %v3549
        %v3551 = vpop.f32.mrf.mxu0
        %v3552 = vadd.f32 %v3027, %v3551
        %v3553 = vand.u32 %v688, 4294901760
        %3554 = vmatprep.mubr.f32.mxu0 %v3553
        %v3555 = vand.u32 %v687, 4294901760
        %3556 = vmatmul.mubr.f32.gmra.mxu0 %v3555
        %v3557 = vpop.f32.mrf.mxu0
        %v3558 = vadd.f32 %v3037, %v3557
        %v3559 = vpop.f32.mrf.mxu0
        %v3560 = vadd.f32 %v3039, %v3559
        %v3561 = vand.u32 %v690, 4294901760
        %3562 = vmatprep.mubr.f32.mxu0 %v3561
        %v3563 = vand.u32 %v689, 4294901760
        %3564 = vmatmul.mubr.f32.gmra.mxu0 %v3563
        %v3565 = vpop.f32.mrf.mxu0
        %v3566 = vadd.f32 %v3049, %v3565
        %v3567 = vpop.f32.mrf.mxu0
        %v3568 = vadd.f32 %v3051, %v3567
        %v3569 = vand.u32 %v692, 4294901760
        %3570 = vmatprep.mubr.f32.mxu0 %v3569
        %v3571 = vand.u32 %v691, 4294901760
        %3572 = vmatmul.mubr.f32.gmra.mxu0 %v3571
        %v3573 = vpop.f32.mrf.mxu0
        %v3574 = vadd.f32 %v3061, %v3573
        %v3575 = vpop.f32.mrf.mxu0
        %v3576 = vadd.f32 %v3063, %v3575
        %3577 = vdwg.mxu0
        %v3578 = vand.u32 %v724, 4294901760
        %3579 = vmatprep.subr.mxu0 %v3578
        %v3580 = vand.u32 %v723, 4294901760
        %3581 = vmatpush1.msra.mxu0 %v3580
        %v3582 = vand.u32 %v722, 4294901760
        %3583 = vmatprep.subr.mxu0 %v3582
        %v3584 = vand.u32 %v721, 4294901760
        %3585 = vmatpush1.msra.mxu0 %v3584
        %v3586 = vand.u32 %v720, 4294901760
        %3587 = vmatprep.subr.mxu0 %v3586
        %v3588 = vand.u32 %v719, 4294901760
        %3589 = vmatpush1.msra.mxu0 %v3588
        %v3590 = vand.u32 %v718, 4294901760
        %3591 = vmatprep.subr.mxu0 %v3590
        %v3592 = vand.u32 %v717, 4294901760
        %3593 = vmatpush1.msra.mxu0 %v3592
        %v3594 = vand.u32 %v716, 4294901760
        %3595 = vmatprep.subr.mxu0 %v3594
        %v3596 = vand.u32 %v715, 4294901760
        %3597 = vmatpush1.msra.mxu0 %v3596
        %v3598 = vand.u32 %v714, 4294901760
        %3599 = vmatprep.subr.mxu0 %v3598
        %v3600 = vand.u32 %v713, 4294901760
        %3601 = vmatpush1.msra.mxu0 %v3600
        %v3602 = vand.u32 %v712, 4294901760
        %3603 = vmatprep.subr.mxu0 %v3602
        %v3604 = vand.u32 %v711, 4294901760
        %3605 = vmatpush1.msra.mxu0 %v3604
        %v3606 = vand.u32 %v710, 4294901760
        %3607 = vmatprep.subr.mxu0 %v3606
        %v3608 = vand.u32 %v709, 4294901760
        %3609 = vmatpush1.msra.mxu0 %v3608
        %v3610 = vand.u32 %v708, 4294901760
        %3611 = vmatprep.subr.mxu0 %v3610
        %v3612 = vand.u32 %v707, 4294901760
        %3613 = vmatpush1.msra.mxu0 %v3612
        %v3614 = vand.u32 %v706, 4294901760
        %3615 = vmatprep.subr.mxu0 %v3614
        %v3616 = vand.u32 %v705, 4294901760
        %3617 = vmatpush1.msra.mxu0 %v3616
        %v3618 = vand.u32 %v704, 4294901760
        %3619 = vmatprep.subr.mxu0 %v3618
        %v3620 = vand.u32 %v703, 4294901760
        %3621 = vmatpush1.msra.mxu0 %v3620
        %v3622 = vand.u32 %v702, 4294901760
        %3623 = vmatprep.subr.mxu0 %v3622
        %v3624 = vand.u32 %v701, 4294901760
        %3625 = vmatpush1.msra.mxu0 %v3624
        %v3626 = vand.u32 %v700, 4294901760
        %3627 = vmatprep.subr.mxu0 %v3626
        %v3628 = vand.u32 %v699, 4294901760
        %3629 = vmatpush1.msra.mxu0 %v3628
        %v3630 = vand.u32 %v698, 4294901760
        %3631 = vmatprep.subr.mxu0 %v3630
        %v3632 = vand.u32 %v697, 4294901760
        %3633 = vmatpush1.msra.mxu0 %v3632
        %v3634 = vand.u32 %v696, 4294901760
        %3635 = vmatprep.subr.mxu0 %v3634
        %v3636 = vand.u32 %v695, 4294901760
        %3637 = vmatpush1.msra.mxu0 %v3636
        %v3638 = vand.u32 %v694, 4294901760
        %3639 = vmatprep.subr.mxu0 %v3638
        %v3640 = vand.u32 %v693, 4294901760
        %3641 = vmatpush1.msra.mxu0 %v3640
        %v3642 = vand.u32 %v756, 4294901760
        %3643 = vmatprep.subr.mxu0 %v3642
        %v3644 = vand.u32 %v755, 4294901760
        %3645 = vmatpush2.msra.mxu0 %v3644
        %v3646 = vand.u32 %v754, 4294901760
        %3647 = vmatprep.subr.mxu0 %v3646
        %v3648 = vand.u32 %v753, 4294901760
        %3649 = vmatpush2.msra.mxu0 %v3648
        %v3650 = vand.u32 %v752, 4294901760
        %3651 = vmatprep.subr.mxu0 %v3650
        %v3652 = vand.u32 %v751, 4294901760
        %3653 = vmatpush2.msra.mxu0 %v3652
        %v3654 = vand.u32 %v750, 4294901760
        %3655 = vmatprep.subr.mxu0 %v3654
        %v3656 = vand.u32 %v749, 4294901760
        %3657 = vmatpush2.msra.mxu0 %v3656
        %v3658 = vand.u32 %v748, 4294901760
        %3659 = vmatprep.subr.mxu0 %v3658
        %v3660 = vand.u32 %v747, 4294901760
        %3661 = vmatpush2.msra.mxu0 %v3660
        %v3662 = vand.u32 %v746, 4294901760
        %3663 = vmatprep.subr.mxu0 %v3662
        %v3664 = vand.u32 %v745, 4294901760
        %3665 = vmatpush2.msra.mxu0 %v3664
        %v3666 = vand.u32 %v744, 4294901760
        %3667 = vmatprep.subr.mxu0 %v3666
        %v3668 = vand.u32 %v743, 4294901760
        %3669 = vmatpush2.msra.mxu0 %v3668
        %v3670 = vand.u32 %v742, 4294901760
        %3671 = vmatprep.subr.mxu0 %v3670
        %v3672 = vand.u32 %v741, 4294901760
        %3673 = vmatpush2.msra.mxu0 %v3672
        %v3674 = vand.u32 %v740, 4294901760
        %3675 = vmatprep.subr.mxu0 %v3674
        %v3676 = vand.u32 %v739, 4294901760
        %3677 = vmatpush2.msra.mxu0 %v3676
        %v3678 = vand.u32 %v738, 4294901760
        %3679 = vmatprep.subr.mxu0 %v3678
        %v3680 = vand.u32 %v737, 4294901760
        %3681 = vmatpush2.msra.mxu0 %v3680
        %v3682 = vand.u32 %v736, 4294901760
        %3683 = vmatprep.subr.mxu0 %v3682
        %v3684 = vand.u32 %v735, 4294901760
        %3685 = vmatpush2.msra.mxu0 %v3684
        %v3686 = vand.u32 %v734, 4294901760
        %3687 = vmatprep.subr.mxu0 %v3686
        %v3688 = vand.u32 %v733, 4294901760
        %3689 = vmatpush2.msra.mxu0 %v3688
        %v3690 = vand.u32 %v732, 4294901760
        %3691 = vmatprep.subr.mxu0 %v3690
        %v3692 = vand.u32 %v731, 4294901760
        %3693 = vmatpush2.msra.mxu0 %v3692
        %v3694 = vand.u32 %v730, 4294901760
        %3695 = vmatprep.subr.mxu0 %v3694
        %v3696 = vand.u32 %v729, 4294901760
        %3697 = vmatpush2.msra.mxu0 %v3696
        %v3698 = vand.u32 %v728, 4294901760
        %3699 = vmatprep.subr.mxu0 %v3698
        %v3700 = vand.u32 %v727, 4294901760
        %3701 = vmatpush2.msra.mxu0 %v3700
        %v3702 = vand.u32 %v726, 4294901760
        %3703 = vmatprep.subr.mxu0 %v3702
        %v3704 = vand.u32 %v725, 4294901760
        %3705 = vmatpush2.msra.mxu0 %v3704
        %v3706 = vand.u32 %v630, 4294901760
        %3707 = vmatprep.mubr.f32.mxu0 %v3706
        %v3708 = vand.u32 %v629, 4294901760
        %3709 = vmatmul.mubr.f32.gmra.mxu0 %v3708
        %v3710 = vpop.f32.mrf.mxu0
        %v3711 = vadd.f32 %v3326, %v3710
        %v3712 = vpop.f32.mrf.mxu0
        %v3713 = vadd.f32 %v3328, %v3712
        %v3714 = vand.u32 %v632, 4294901760
        %3715 = vmatprep.mubr.f32.mxu0 %v3714
        %v3716 = vand.u32 %v631, 4294901760
        %3717 = vmatmul.mubr.f32.gmra.mxu0 %v3716
        %v3718 = vpop.f32.mrf.mxu0
        %v3719 = vadd.f32 %v3334, %v3718
        %v3720 = vpop.f32.mrf.mxu0
        %v3721 = vadd.f32 %v3336, %v3720
        %v3722 = vand.u32 %v634, 4294901760
        %3723 = vmatprep.mubr.f32.mxu0 %v3722
        %v3724 = vand.u32 %v633, 4294901760
        %3725 = vmatmul.mubr.f32.gmra.mxu0 %v3724
        %v3726 = vpop.f32.mrf.mxu0
        %v3727 = vadd.f32 %v3342, %v3726
        %v3728 = vpop.f32.mrf.mxu0
        %v3729 = vadd.f32 %v3344, %v3728
        %v3730 = vand.u32 %v636, 4294901760
        %3731 = vmatprep.mubr.f32.mxu0 %v3730
        %v3732 = vand.u32 %v635, 4294901760
        %3733 = vmatmul.mubr.f32.gmra.mxu0 %v3732
        %v3734 = vpop.f32.mrf.mxu0
        %v3735 = vadd.f32 %v3350, %v3734
        %v3736 = vpop.f32.mrf.mxu0
        %v3737 = vadd.f32 %v3352, %v3736
        %v3738 = vand.u32 %v638, 4294901760
        %3739 = vmatprep.mubr.f32.mxu0 %v3738
        %v3740 = vand.u32 %v637, 4294901760
        %3741 = vmatmul.mubr.f32.gmra.mxu0 %v3740
        %v3742 = vpop.f32.mrf.mxu0
        %v3743 = vadd.f32 %v3358, %v3742
        %v3744 = vpop.f32.mrf.mxu0
        %v3745 = vadd.f32 %v3360, %v3744
        %v3746 = vand.u32 %v640, 4294901760
        %3747 = vmatprep.mubr.f32.mxu0 %v3746
        %v3748 = vand.u32 %v639, 4294901760
        %3749 = vmatmul.mubr.f32.gmra.mxu0 %v3748
        %v3750 = vpop.f32.mrf.mxu0
        %v3751 = vadd.f32 %v3366, %v3750
        %v3752 = vpop.f32.mrf.mxu0
        %v3753 = vadd.f32 %v3368, %v3752
        %v3754 = vand.u32 %v642, 4294901760
        %3755 = vmatprep.mubr.f32.mxu0 %v3754
        %v3756 = vand.u32 %v641, 4294901760
        %3757 = vmatmul.mubr.f32.gmra.mxu0 %v3756
        %v3758 = vpop.f32.mrf.mxu0
        %v3759 = vadd.f32 %v3374, %v3758
        %v3760 = vpop.f32.mrf.mxu0
        %v3761 = vadd.f32 %v3376, %v3760
        %v3762 = vand.u32 %v644, 4294901760
        %3763 = vmatprep.mubr.f32.mxu0 %v3762
        %v3764 = vand.u32 %v643, 4294901760
        %3765 = vmatmul.mubr.f32.gmra.mxu0 %v3764
        %v3766 = vpop.f32.mrf.mxu0
        %v3767 = vadd.f32 %v3382, %v3766
        %v3768 = vpop.f32.mrf.mxu0
        %v3769 = vadd.f32 %v3384, %v3768
        %v3770 = vand.u32 %v646, 4294901760
        %3771 = vmatprep.mubr.f32.mxu0 %v3770
        %v3772 = vand.u32 %v645, 4294901760
        %3773 = vmatmul.mubr.f32.gmra.mxu0 %v3772
        %v3774 = vpop.f32.mrf.mxu0
        %v3775 = vadd.f32 %v3390, %v3774
        %v3776 = vpop.f32.mrf.mxu0
        %v3777 = vadd.f32 %v3392, %v3776
        %v3778 = vand.u32 %v648, 4294901760
        %3779 = vmatprep.mubr.f32.mxu0 %v3778
        %v3780 = vand.u32 %v647, 4294901760
        %3781 = vmatmul.mubr.f32.gmra.mxu0 %v3780
        %v3782 = vpop.f32.mrf.mxu0
        %v3783 = vadd.f32 %v3398, %v3782
        %v3784 = vpop.f32.mrf.mxu0
        %v3785 = vadd.f32 %v3400, %v3784
        %v3786 = vand.u32 %v650, 4294901760
        %3787 = vmatprep.mubr.f32.mxu0 %v3786
        %v3788 = vand.u32 %v649, 4294901760
        %3789 = vmatmul.mubr.f32.gmra.mxu0 %v3788
        %v3790 = vpop.f32.mrf.mxu0
        %v3791 = vadd.f32 %v3406, %v3790
        %v3792 = vpop.f32.mrf.mxu0
        %v3793 = vadd.f32 %v3408, %v3792
        %v3794 = vand.u32 %v652, 4294901760
        %3795 = vmatprep.mubr.f32.mxu0 %v3794
        %v3796 = vand.u32 %v651, 4294901760
        %3797 = vmatmul.mubr.f32.gmra.mxu0 %v3796
        %v3798 = vpop.f32.mrf.mxu0
        %v3799 = vadd.f32 %v3414, %v3798
        %v3800 = vpop.f32.mrf.mxu0
        %v3801 = vadd.f32 %v3416, %v3800
        %v3802 = vand.u32 %v654, 4294901760
        %3803 = vmatprep.mubr.f32.mxu0 %v3802
        %v3804 = vand.u32 %v653, 4294901760
        %3805 = vmatmul.mubr.f32.gmra.mxu0 %v3804
        %v3806 = vpop.f32.mrf.mxu0
        %v3807 = vadd.f32 %v3422, %v3806
        %v3808 = vpop.f32.mrf.mxu0
        %v3809 = vadd.f32 %v3424, %v3808
        %v3810 = vand.u32 %v656, 4294901760
        %3811 = vmatprep.mubr.f32.mxu0 %v3810
        %v3812 = vand.u32 %v655, 4294901760
        %3813 = vmatmul.mubr.f32.gmra.mxu0 %v3812
        %v3814 = vpop.f32.mrf.mxu0
        %v3815 = vadd.f32 %v3430, %v3814
        %v3816 = vpop.f32.mrf.mxu0
        %v3817 = vadd.f32 %v3432, %v3816
        %v3818 = vand.u32 %v658, 4294901760
        %3819 = vmatprep.mubr.f32.mxu0 %v3818
        %v3820 = vand.u32 %v657, 4294901760
        %3821 = vmatmul.mubr.f32.gmra.mxu0 %v3820
        %v3822 = vpop.f32.mrf.mxu0
        %v3823 = vadd.f32 %v3438, %v3822
        %v3824 = vpop.f32.mrf.mxu0
        %v3825 = vadd.f32 %v3440, %v3824
        %v3826 = vand.u32 %v660, 4294901760
        %3827 = vmatprep.mubr.f32.mxu0 %v3826
        %v3828 = vand.u32 %v659, 4294901760
        %3829 = vmatmul.mubr.f32.gmra.mxu0 %v3828
        %v3830 = vpop.f32.mrf.mxu0
        %v3831 = vadd.f32 %v3446, %v3830
        %v3832 = vpop.f32.mrf.mxu0
        %v3833 = vadd.f32 %v3448, %v3832
        %v3834 = vand.u32 %v662, 4294901760
        %3835 = vmatprep.mubr.f32.mxu0 %v3834
        %v3836 = vand.u32 %v661, 4294901760
        %3837 = vmatmul.mubr.f32.gmra.mxu0 %v3836
        %v3838 = vpop.f32.mrf.mxu0
        %v3839 = vadd.f32 %v3454, %v3838
        %v3840 = vpop.f32.mrf.mxu0
        %v3841 = vadd.f32 %v3456, %v3840
        %v3842 = vand.u32 %v664, 4294901760
        %3843 = vmatprep.mubr.f32.mxu0 %v3842
        %v3844 = vand.u32 %v663, 4294901760
        %3845 = vmatmul.mubr.f32.gmra.mxu0 %v3844
        %v3846 = vpop.f32.mrf.mxu0
        %v3847 = vadd.f32 %v3462, %v3846
        %v3848 = vpop.f32.mrf.mxu0
        %v3849 = vadd.f32 %v3464, %v3848
        %v3850 = vand.u32 %v666, 4294901760
        %3851 = vmatprep.mubr.f32.mxu0 %v3850
        %v3852 = vand.u32 %v665, 4294901760
        %3853 = vmatmul.mubr.f32.gmra.mxu0 %v3852
        %v3854 = vpop.f32.mrf.mxu0
        %v3855 = vadd.f32 %v3470, %v3854
        %v3856 = vpop.f32.mrf.mxu0
        %v3857 = vadd.f32 %v3472, %v3856
        %v3858 = vand.u32 %v668, 4294901760
        %3859 = vmatprep.mubr.f32.mxu0 %v3858
        %v3860 = vand.u32 %v667, 4294901760
        %3861 = vmatmul.mubr.f32.gmra.mxu0 %v3860
        %v3862 = vpop.f32.mrf.mxu0
        %v3863 = vadd.f32 %v3478, %v3862
        %v3864 = vpop.f32.mrf.mxu0
        %v3865 = vadd.f32 %v3480, %v3864
        %v3866 = vand.u32 %v670, 4294901760
        %3867 = vmatprep.mubr.f32.mxu0 %v3866
        %v3868 = vand.u32 %v669, 4294901760
        %3869 = vmatmul.mubr.f32.gmra.mxu0 %v3868
        %v3870 = vpop.f32.mrf.mxu0
        %v3871 = vadd.f32 %v3486, %v3870
        %v3872 = vpop.f32.mrf.mxu0
        %v3873 = vadd.f32 %v3488, %v3872
        %v3874 = vand.u32 %v672, 4294901760
        %3875 = vmatprep.mubr.f32.mxu0 %v3874
        %v3876 = vand.u32 %v671, 4294901760
        %3877 = vmatmul.mubr.f32.gmra.mxu0 %v3876
        %v3878 = vpop.f32.mrf.mxu0
        %v3879 = vadd.f32 %v3494, %v3878
        %v3880 = vpop.f32.mrf.mxu0
        %v3881 = vadd.f32 %v3496, %v3880
        %v3882 = vand.u32 %v674, 4294901760
        %3883 = vmatprep.mubr.f32.mxu0 %v3882
        %v3884 = vand.u32 %v673, 4294901760
        %3885 = vmatmul.mubr.f32.gmra.mxu0 %v3884
        %v3886 = vpop.f32.mrf.mxu0
        %v3887 = vadd.f32 %v3502, %v3886
        %v3888 = vpop.f32.mrf.mxu0
        %v3889 = vadd.f32 %v3504, %v3888
        %v3890 = vand.u32 %v676, 4294901760
        %3891 = vmatprep.mubr.f32.mxu0 %v3890
        %v3892 = vand.u32 %v675, 4294901760
        %3893 = vmatmul.mubr.f32.gmra.mxu0 %v3892
        %v3894 = vpop.f32.mrf.mxu0
        %v3895 = vadd.f32 %v3510, %v3894
        %v3896 = vpop.f32.mrf.mxu0
        %v3897 = vadd.f32 %v3512, %v3896
        %v3898 = vand.u32 %v678, 4294901760
        %3899 = vmatprep.mubr.f32.mxu0 %v3898
        %v3900 = vand.u32 %v677, 4294901760
        %3901 = vmatmul.mubr.f32.gmra.mxu0 %v3900
        %v3902 = vpop.f32.mrf.mxu0
        %v3903 = vadd.f32 %v3518, %v3902
        %v3904 = vpop.f32.mrf.mxu0
        %v3905 = vadd.f32 %v3520, %v3904
        %v3906 = vand.u32 %v680, 4294901760
        %3907 = vmatprep.mubr.f32.mxu0 %v3906
        %v3908 = vand.u32 %v679, 4294901760
        %3909 = vmatmul.mubr.f32.gmra.mxu0 %v3908
        %v3910 = vpop.f32.mrf.mxu0
        %v3911 = vadd.f32 %v3526, %v3910
        %v3912 = vpop.f32.mrf.mxu0
        %v3913 = vadd.f32 %v3528, %v3912
        %v3914 = vand.u32 %v682, 4294901760
        %3915 = vmatprep.mubr.f32.mxu0 %v3914
        %v3916 = vand.u32 %v681, 4294901760
        %3917 = vmatmul.mubr.f32.gmra.mxu0 %v3916
        %v3918 = vpop.f32.mrf.mxu0
        %v3919 = vadd.f32 %v3534, %v3918
        %v3920 = vpop.f32.mrf.mxu0
        %v3921 = vadd.f32 %v3536, %v3920
        %v3922 = vand.u32 %v684, 4294901760
        %3923 = vmatprep.mubr.f32.mxu0 %v3922
        %v3924 = vand.u32 %v683, 4294901760
        %3925 = vmatmul.mubr.f32.gmra.mxu0 %v3924
        %v3926 = vpop.f32.mrf.mxu0
        %v3927 = vadd.f32 %v3542, %v3926
        %v3928 = vpop.f32.mrf.mxu0
        %v3929 = vadd.f32 %v3544, %v3928
        %v3930 = vand.u32 %v686, 4294901760
        %3931 = vmatprep.mubr.f32.mxu0 %v3930
        %v3932 = vand.u32 %v685, 4294901760
        %3933 = vmatmul.mubr.f32.gmra.mxu0 %v3932
        %v3934 = vpop.f32.mrf.mxu0
        %v3935 = vadd.f32 %v3550, %v3934
        %v3936 = vpop.f32.mrf.mxu0
        %v3937 = vadd.f32 %v3552, %v3936
        %v3938 = vand.u32 %v688, 4294901760
        %3939 = vmatprep.mubr.f32.mxu0 %v3938
        %v3940 = vand.u32 %v687, 4294901760
        %3941 = vmatmul.mubr.f32.gmra.mxu0 %v3940
        %v3942 = vpop.f32.mrf.mxu0
        %v3943 = vadd.f32 %v3558, %v3942
        %v3944 = vpop.f32.mrf.mxu0
        %v3945 = vadd.f32 %v3560, %v3944
        %v3946 = vand.u32 %v690, 4294901760
        %3947 = vmatprep.mubr.f32.mxu0 %v3946
        %v3948 = vand.u32 %v689, 4294901760
        %3949 = vmatmul.mubr.f32.gmra.mxu0 %v3948
        %v3950 = vpop.f32.mrf.mxu0
        %v3951 = vadd.f32 %v3566, %v3950
        %v3952 = vpop.f32.mrf.mxu0
        %v3953 = vadd.f32 %v3568, %v3952
        %v3954 = vand.u32 %v692, 4294901760
        %3955 = vmatprep.mubr.f32.mxu0 %v3954
        %v3956 = vand.u32 %v691, 4294901760
        %3957 = vmatmul.mubr.f32.gmra.mxu0 %v3956
        %v3958 = vpop.f32.mrf.mxu0
        %v3959 = vadd.f32 %v3574, %v3958
        %v3960 = vpop.f32.mrf.mxu0
        %v3961 = vadd.f32 %v3576, %v3960
        %3962 = vdwg.mxu0
        %v3963 = vadd.f32 %v565, %v3711
        %v3964 = vadd.f32 %v566, %v3713
        %v3965 = vadd.f32 %v567, %v3719
        %v3966 = vadd.f32 %v568, %v3721
        %v3967 = vadd.f32 %v569, %v3727
        %v3968 = vadd.f32 %v570, %v3729
        %v3969 = vadd.f32 %v571, %v3735
        %v3970 = vadd.f32 %v572, %v3737
        %v3971 = vadd.f32 %v573, %v3743
        %v3972 = vadd.f32 %v574, %v3745
        %v3973 = vadd.f32 %v575, %v3751
        %v3974 = vadd.f32 %v576, %v3753
        %v3975 = vadd.f32 %v577, %v3759
        %v3976 = vadd.f32 %v578, %v3761
        %v3977 = vadd.f32 %v579, %v3767
        %v3978 = vadd.f32 %v580, %v3769
        %v3979 = vadd.f32 %v581, %v3775
        %v3980 = vadd.f32 %v582, %v3777
        %v3981 = vadd.f32 %v583, %v3783
        %v3982 = vadd.f32 %v584, %v3785
        %v3983 = vadd.f32 %v585, %v3791
        %v3984 = vadd.f32 %v586, %v3793
        %v3985 = vadd.f32 %v587, %v3799
        %v3986 = vadd.f32 %v588, %v3801
        %v3987 = vadd.f32 %v589, %v3807
        %v3988 = vadd.f32 %v590, %v3809
        %v3989 = vadd.f32 %v591, %v3815
        %v3990 = vadd.f32 %v592, %v3817
        %v3991 = vadd.f32 %v593, %v3823
        %v3992 = vadd.f32 %v594, %v3825
        %v3993 = vadd.f32 %v595, %v3831
        %v3994 = vadd.f32 %v596, %v3833
        %v3995 = vadd.f32 %v597, %v3839
        %v3996 = vadd.f32 %v598, %v3841
        %v3997 = vadd.f32 %v599, %v3847
        %v3998 = vadd.f32 %v600, %v3849
        %v3999 = vadd.f32 %v601, %v3855
        %v4000 = vadd.f32 %v602, %v3857
        %v4001 = vadd.f32 %v603, %v3863
        %v4002 = vadd.f32 %v604, %v3865
        %v4003 = vadd.f32 %v605, %v3871
        %v4004 = vadd.f32 %v606, %v3873
        %v4005 = vadd.f32 %v607, %v3879
        %v4006 = vadd.f32 %v608, %v3881
        %v4007 = vadd.f32 %v609, %v3887
        %v4008 = vadd.f32 %v610, %v3889
        %v4009 = vadd.f32 %v611, %v3895
        %v4010 = vadd.f32 %v612, %v3897
        %v4011 = vadd.f32 %v613, %v3903
        %v4012 = vadd.f32 %v614, %v3905
        %v4013 = vadd.f32 %v615, %v3911
        %v4014 = vadd.f32 %v616, %v3913
        %v4015 = vadd.f32 %v617, %v3919
        %v4016 = vadd.f32 %v618, %v3921
        %v4017 = vadd.f32 %v619, %v3927
        %v4018 = vadd.f32 %v620, %v3929
        %v4019 = vadd.f32 %v621, %v3935
        %v4020 = vadd.f32 %v622, %v3937
        %v4021 = vadd.f32 %v623, %v3943
        %v4022 = vadd.f32 %v624, %v3945
        %v4023 = vadd.f32 %v625, %v3951
        %v4024 = vadd.f32 %v626, %v3953
        %v4025 = vadd.f32 %v627, %v3959
        %v4026 = vadd.f32 %v628, %v3961
        %4027 = vst [vmem:[#allocation2] sm:$0xff] %v3963
        %4028 = vst [vmem:[#allocation2 + $0x8] sm:$0xff] %v3964
        %4029 = vst [vmem:[#allocation2 + $0x10] sm:$0xff] %v3965
        %4030 = vst [vmem:[#allocation2 + $0x18] sm:$0xff] %v3966
        %4031 = vst [vmem:[#allocation2 + $0x20] sm:$0xff] %v3967
        %4032 = vst [vmem:[#allocation2 + $0x28] sm:$0xff] %v3968
        %4033 = vst [vmem:[#allocation2 + $0x30] sm:$0xff] %v3969
        %4034 = vst [vmem:[#allocation2 + $0x38] sm:$0xff] %v3970
        %4035 = vst [vmem:[#allocation2 + $0x40] sm:$0xff] %v3971
        %4036 = vst [vmem:[#allocation2 + $0x48] sm:$0xff] %v3972
        %4037 = vst [vmem:[#allocation2 + $0x50] sm:$0xff] %v3973
        %4038 = vst [vmem:[#allocation2 + $0x58] sm:$0xff] %v3974
        %4039 = vst [vmem:[#allocation2 + $0x60] sm:$0xff] %v3975
        %4040 = vst [vmem:[#allocation2 + $0x68] sm:$0xff] %v3976
        %4041 = vst [vmem:[#allocation2 + $0x70] sm:$0xff] %v3977
        %4042 = vst [vmem:[#allocation2 + $0x78] sm:$0xff] %v3978
        %4043 = vst [vmem:[#allocation2 + $0x80] sm:$0xff] %v3979
        %4044 = vst [vmem:[#allocation2 + $0x88] sm:$0xff] %v3980
        %4045 = vst [vmem:[#allocation2 + $0x90] sm:$0xff] %v3981
        %4046 = vst [vmem:[#allocation2 + $0x98] sm:$0xff] %v3982
        %4047 = vst [vmem:[#allocation2 + $0xa0] sm:$0xff] %v3983
        %4048 = vst [vmem:[#allocation2 + $0xa8] sm:$0xff] %v3984
        %4049 = vst [vmem:[#allocation2 + $0xb0] sm:$0xff] %v3985
        %4050 = vst [vmem:[#allocation2 + $0xb8] sm:$0xff] %v3986
        %4051 = vst [vmem:[#allocation2 + $0xc0] sm:$0xff] %v3987
        %4052 = vst [vmem:[#allocation2 + $0xc8] sm:$0xff] %v3988
        %4053 = vst [vmem:[#allocation2 + $0xd0] sm:$0xff] %v3989
        %4054 = vst [vmem:[#allocation2 + $0xd8] sm:$0xff] %v3990
        %4055 = vst [vmem:[#allocation2 + $0xe0] sm:$0xff] %v3991
        %4056 = vst [vmem:[#allocation2 + $0xe8] sm:$0xff] %v3992
        %4057 = vst [vmem:[#allocation2 + $0xf0] sm:$0xff] %v3993
        %4058 = vst [vmem:[#allocation2 + $0xf8] sm:$0xff] %v3994
        %4059 = vst [vmem:[#allocation2 + $0x100] sm:$0xff] %v3995
        %4060 = vst [vmem:[#allocation2 + $0x108] sm:$0xff] %v3996
        %4061 = vst [vmem:[#allocation2 + $0x110] sm:$0xff] %v3997
        %4062 = vst [vmem:[#allocation2 + $0x118] sm:$0xff] %v3998
        %4063 = vst [vmem:[#allocation2 + $0x120] sm:$0xff] %v3999
        %4064 = vst [vmem:[#allocation2 + $0x128] sm:$0xff] %v4000
        %4065 = vst [vmem:[#allocation2 + $0x130] sm:$0xff] %v4001
        %4066 = vst [vmem:[#allocation2 + $0x138] sm:$0xff] %v4002
        %4067 = vst [vmem:[#allocation2 + $0x140] sm:$0xff] %v4003
        %4068 = vst [vmem:[#allocation2 + $0x148] sm:$0xff] %v4004
        %4069 = vst [vmem:[#allocation2 + $0x150] sm:$0xff] %v4005
        %4070 = vst [vmem:[#allocation2 + $0x158] sm:$0xff] %v4006
        %4071 = vst [vmem:[#allocation2 + $0x160] sm:$0xff] %v4007
        %4072 = vst [vmem:[#allocation2 + $0x168] sm:$0xff] %v4008
        %4073 = vst [vmem:[#allocation2 + $0x170] sm:$0xff] %v4009
        %4074 = vst [vmem:[#allocation2 + $0x178] sm:$0xff] %v4010
        %4075 = vst [vmem:[#allocation2 + $0x180] sm:$0xff] %v4011
        %4076 = vst [vmem:[#allocation2 + $0x188] sm:$0xff] %v4012
        %4077 = vst [vmem:[#allocation2 + $0x190] sm:$0xff] %v4013
        %4078 = vst [vmem:[#allocation2 + $0x198] sm:$0xff] %v4014
        %4079 = vst [vmem:[#allocation2 + $0x1a0] sm:$0xff] %v4015
        %4080 = vst [vmem:[#allocation2 + $0x1a8] sm:$0xff] %v4016
        %4081 = vst [vmem:[#allocation2 + $0x1b0] sm:$0xff] %v4017
        %4082 = vst [vmem:[#allocation2 + $0x1b8] sm:$0xff] %v4018
        %4083 = vst [vmem:[#allocation2 + $0x1c0] sm:$0xff] %v4019
        %4084 = vst [vmem:[#allocation2 + $0x1c8] sm:$0xff] %v4020
        %4085 = vst [vmem:[#allocation2 + $0x1d0] sm:$0xff] %v4021
        %4086 = vst [vmem:[#allocation2 + $0x1d8] sm:$0xff] %v4022
        %4087 = vst [vmem:[#allocation2 + $0x1e0] sm:$0xff] %v4023
        %4088 = vst [vmem:[#allocation2 + $0x1e8] sm:$0xff] %v4024
        %4089 = vst [vmem:[#allocation2 + $0x1f0] sm:$0xff] %v4025
        %4090 = vst [vmem:[#allocation2 + $0x1f8] sm:$0xff] %v4026
        %p4091 = scmp.eq.s32.totalorder %s37, 2
        // Predicated region
        $region77: #{tpu_custom_call.1} parent=43 // pred_check
          %p4092 = pneg %p4091
        $region78: #{tpu_custom_call.1} parent=43 // pred_check_branch
          %4094 = sbr.rel (%p4092) target = $region80
        $region79: #{tpu_custom_call.1} parent=43 // pred_region
          %s4095 = sld [smem:[#allocation3]]
          %s4096 = sld [smem:[#allocation3 + $0x1]]
          %v4097 = vld [vmem:[%s387] sm:$0xff]
          %v4098 = vld [vmem:[%s387 + $0x8] sm:$0xff]
          %v4099 = vld [vmem:[%s387 + $0x10] sm:$0xff]
          %v4100 = vld [vmem:[%s387 + $0x18] sm:$0xff]
          %v4101 = vld [vmem:[%s387 + $0x20] sm:$0xff]
          %v4102 = vld [vmem:[%s387 + $0x28] sm:$0xff]
          %v4103 = vld [vmem:[%s387 + $0x30] sm:$0xff]
          %v4104 = vld [vmem:[%s387 + $0x38] sm:$0xff]
          %v4105 = vld [vmem:[%s387 + $0x40] sm:$0xff]
          %v4106 = vld [vmem:[%s387 + $0x48] sm:$0xff]
          %v4107 = vld [vmem:[%s387 + $0x50] sm:$0xff]
          %v4108 = vld [vmem:[%s387 + $0x58] sm:$0xff]
          %v4109 = vld [vmem:[%s387 + $0x60] sm:$0xff]
          %v4110 = vld [vmem:[%s387 + $0x68] sm:$0xff]
          %v4111 = vld [vmem:[%s387 + $0x70] sm:$0xff]
          %v4112 = vld [vmem:[%s387 + $0x78] sm:$0xff]
          %v4113 = vld [vmem:[%s387 + $0x80] sm:$0xff]
          %v4114 = vld [vmem:[%s387 + $0x88] sm:$0xff]
          %v4115 = vld [vmem:[%s387 + $0x90] sm:$0xff]
          %v4116 = vld [vmem:[%s387 + $0x98] sm:$0xff]
          %v4117 = vld [vmem:[%s387 + $0xa0] sm:$0xff]
          %v4118 = vld [vmem:[%s387 + $0xa8] sm:$0xff]
          %v4119 = vld [vmem:[%s387 + $0xb0] sm:$0xff]
          %v4120 = vld [vmem:[%s387 + $0xb8] sm:$0xff]
          %v4121 = vld [vmem:[%s387 + $0xc0] sm:$0xff]
          %v4122 = vld [vmem:[%s387 + $0xc8] sm:$0xff]
          %v4123 = vld [vmem:[%s387 + $0xd0] sm:$0xff]
          %v4124 = vld [vmem:[%s387 + $0xd8] sm:$0xff]
          %v4125 = vld [vmem:[%s387 + $0xe0] sm:$0xff]
          %v4126 = vld [vmem:[%s387 + $0xe8] sm:$0xff]
          %v4127 = vld [vmem:[%s387 + $0xf0] sm:$0xff]
          %v4128 = vld [vmem:[%s387 + $0xf8] sm:$0xff]
          %v4129 = vld [vmem:[%s387 + $0x100] sm:$0xff]
          %v4130 = vld [vmem:[%s387 + $0x108] sm:$0xff]
          %v4131 = vld [vmem:[%s387 + $0x110] sm:$0xff]
          %v4132 = vld [vmem:[%s387 + $0x118] sm:$0xff]
          %v4133 = vld [vmem:[%s387 + $0x120] sm:$0xff]
          %v4134 = vld [vmem:[%s387 + $0x128] sm:$0xff]
          %v4135 = vld [vmem:[%s387 + $0x130] sm:$0xff]
          %v4136 = vld [vmem:[%s387 + $0x138] sm:$0xff]
          %v4137 = vld [vmem:[%s387 + $0x140] sm:$0xff]
          %v4138 = vld [vmem:[%s387 + $0x148] sm:$0xff]
          %v4139 = vld [vmem:[%s387 + $0x150] sm:$0xff]
          %v4140 = vld [vmem:[%s387 + $0x158] sm:$0xff]
          %v4141 = vld [vmem:[%s387 + $0x160] sm:$0xff]
          %v4142 = vld [vmem:[%s387 + $0x168] sm:$0xff]
          %v4143 = vld [vmem:[%s387 + $0x170] sm:$0xff]
          %v4144 = vld [vmem:[%s387 + $0x178] sm:$0xff]
          %v4145 = vld [vmem:[%s387 + $0x180] sm:$0xff]
          %v4146 = vld [vmem:[%s387 + $0x188] sm:$0xff]
          %v4147 = vld [vmem:[%s387 + $0x190] sm:$0xff]
          %v4148 = vld [vmem:[%s387 + $0x198] sm:$0xff]
          %v4149 = vld [vmem:[%s387 + $0x1a0] sm:$0xff]
          %v4150 = vld [vmem:[%s387 + $0x1a8] sm:$0xff]
          %v4151 = vld [vmem:[%s387 + $0x1b0] sm:$0xff]
          %v4152 = vld [vmem:[%s387 + $0x1b8] sm:$0xff]
          %v4153 = vld [vmem:[%s387 + $0x1c0] sm:$0xff]
          %v4154 = vld [vmem:[%s387 + $0x1c8] sm:$0xff]
          %v4155 = vld [vmem:[%s387 + $0x1d0] sm:$0xff]
          %v4156 = vld [vmem:[%s387 + $0x1d8] sm:$0xff]
          %v4157 = vld [vmem:[%s387 + $0x1e0] sm:$0xff]
          %v4158 = vld [vmem:[%s387 + $0x1e8] sm:$0xff]
          %v4159 = vld [vmem:[%s387 + $0x1f0] sm:$0xff]
          %v4160 = vld [vmem:[%s387 + $0x1f8] sm:$0xff]
          %v4161 = vld [vmem:[#allocation2] sm:$0xff]
          %v4162 = vld [vmem:[#allocation2 + $0x8] sm:$0xff]
          %v4163 = vld [vmem:[#allocation2 + $0x10] sm:$0xff]
          %v4164 = vld [vmem:[#allocation2 + $0x18] sm:$0xff]
          %v4165 = vld [vmem:[#allocation2 + $0x20] sm:$0xff]
          %v4166 = vld [vmem:[#allocation2 + $0x28] sm:$0xff]
          %v4167 = vld [vmem:[#allocation2 + $0x30] sm:$0xff]
          %v4168 = vld [vmem:[#allocation2 + $0x38] sm:$0xff]
          %v4169 = vld [vmem:[#allocation2 + $0x40] sm:$0xff]
          %v4170 = vld [vmem:[#allocation2 + $0x48] sm:$0xff]
          %v4171 = vld [vmem:[#allocation2 + $0x50] sm:$0xff]
          %v4172 = vld [vmem:[#allocation2 + $0x58] sm:$0xff]
          %v4173 = vld [vmem:[#allocation2 + $0x60] sm:$0xff]
          %v4174 = vld [vmem:[#allocation2 + $0x68] sm:$0xff]
          %v4175 = vld [vmem:[#allocation2 + $0x70] sm:$0xff]
          %v4176 = vld [vmem:[#allocation2 + $0x78] sm:$0xff]
          %v4177 = vld [vmem:[#allocation2 + $0x80] sm:$0xff]
          %v4178 = vld [vmem:[#allocation2 + $0x88] sm:$0xff]
          %v4179 = vld [vmem:[#allocation2 + $0x90] sm:$0xff]
          %v4180 = vld [vmem:[#allocation2 + $0x98] sm:$0xff]
          %v4181 = vld [vmem:[#allocation2 + $0xa0] sm:$0xff]
          %v4182 = vld [vmem:[#allocation2 + $0xa8] sm:$0xff]
          %v4183 = vld [vmem:[#allocation2 + $0xb0] sm:$0xff]
          %v4184 = vld [vmem:[#allocation2 + $0xb8] sm:$0xff]
          %v4185 = vld [vmem:[#allocation2 + $0xc0] sm:$0xff]
          %v4186 = vld [vmem:[#allocation2 + $0xc8] sm:$0xff]
          %v4187 = vld [vmem:[#allocation2 + $0xd0] sm:$0xff]
          %v4188 = vld [vmem:[#allocation2 + $0xd8] sm:$0xff]
          %v4189 = vld [vmem:[#allocation2 + $0xe0] sm:$0xff]
          %v4190 = vld [vmem:[#allocation2 + $0xe8] sm:$0xff]
          %v4191 = vld [vmem:[#allocation2 + $0xf0] sm:$0xff]
          %v4192 = vld [vmem:[#allocation2 + $0xf8] sm:$0xff]
          %v4193 = vld [vmem:[#allocation2 + $0x100] sm:$0xff]
          %v4194 = vld [vmem:[#allocation2 + $0x108] sm:$0xff]
          %v4195 = vld [vmem:[#allocation2 + $0x110] sm:$0xff]
          %v4196 = vld [vmem:[#allocation2 + $0x118] sm:$0xff]
          %v4197 = vld [vmem:[#allocation2 + $0x120] sm:$0xff]
          %v4198 = vld [vmem:[#allocation2 + $0x128] sm:$0xff]
          %v4199 = vld [vmem:[#allocation2 + $0x130] sm:$0xff]
          %v4200 = vld [vmem:[#allocation2 + $0x138] sm:$0xff]
          %v4201 = vld [vmem:[#allocation2 + $0x140] sm:$0xff]
          %v4202 = vld [vmem:[#allocation2 + $0x148] sm:$0xff]
          %v4203 = vld [vmem:[#allocation2 + $0x150] sm:$0xff]
          %v4204 = vld [vmem:[#allocation2 + $0x158] sm:$0xff]
          %v4205 = vld [vmem:[#allocation2 + $0x160] sm:$0xff]
          %v4206 = vld [vmem:[#allocation2 + $0x168] sm:$0xff]
          %v4207 = vld [vmem:[#allocation2 + $0x170] sm:$0xff]
          %v4208 = vld [vmem:[#allocation2 + $0x178] sm:$0xff]
          %v4209 = vld [vmem:[#allocation2 + $0x180] sm:$0xff]
          %v4210 = vld [vmem:[#allocation2 + $0x188] sm:$0xff]
          %v4211 = vld [vmem:[#allocation2 + $0x190] sm:$0xff]
          %v4212 = vld [vmem:[#allocation2 + $0x198] sm:$0xff]
          %v4213 = vld [vmem:[#allocation2 + $0x1a0] sm:$0xff]
          %v4214 = vld [vmem:[#allocation2 + $0x1a8] sm:$0xff]
          %v4215 = vld [vmem:[#allocation2 + $0x1b0] sm:$0xff]
          %v4216 = vld [vmem:[#allocation2 + $0x1b8] sm:$0xff]
          %v4217 = vld [vmem:[#allocation2 + $0x1c0] sm:$0xff]
          %v4218 = vld [vmem:[#allocation2 + $0x1c8] sm:$0xff]
          %v4219 = vld [vmem:[#allocation2 + $0x1d0] sm:$0xff]
          %v4220 = vld [vmem:[#allocation2 + $0x1d8] sm:$0xff]
          %v4221 = vld [vmem:[#allocation2 + $0x1e0] sm:$0xff]
          %v4222 = vld [vmem:[#allocation2 + $0x1e8] sm:$0xff]
          %v4223 = vld [vmem:[#allocation2 + $0x1f0] sm:$0xff]
          %v4224 = vld [vmem:[#allocation2 + $0x1f8] sm:$0xff]
          %v4225 = vstv %s4095
          %v4226 = vmul.f32 %v4225, %v4161
          %v4227 = vmul.f32 %v4225, %v4162
          %v4228 = vmul.f32 %v4225, %v4163
          %v4229 = vmul.f32 %v4225, %v4164
          %v4230 = vmul.f32 %v4225, %v4165
          %v4231 = vmul.f32 %v4225, %v4166
          %v4232 = vmul.f32 %v4225, %v4167
          %v4233 = vmul.f32 %v4225, %v4168
          %v4234 = vmul.f32 %v4225, %v4169
          %v4235 = vmul.f32 %v4225, %v4170
          %v4236 = vmul.f32 %v4225, %v4171
          %v4237 = vmul.f32 %v4225, %v4172
          %v4238 = vmul.f32 %v4225, %v4173
          %v4239 = vmul.f32 %v4225, %v4174
          %v4240 = vmul.f32 %v4225, %v4175
          %v4241 = vmul.f32 %v4225, %v4176
          %v4242 = vmul.f32 %v4225, %v4177
          %v4243 = vmul.f32 %v4225, %v4178
          %v4244 = vmul.f32 %v4225, %v4179
          %v4245 = vmul.f32 %v4225, %v4180
          %v4246 = vmul.f32 %v4225, %v4181
          %v4247 = vmul.f32 %v4225, %v4182
          %v4248 = vmul.f32 %v4225, %v4183
          %v4249 = vmul.f32 %v4225, %v4184
          %v4250 = vmul.f32 %v4225, %v4185
          %v4251 = vmul.f32 %v4225, %v4186
          %v4252 = vmul.f32 %v4225, %v4187
          %v4253 = vmul.f32 %v4225, %v4188
          %v4254 = vmul.f32 %v4225, %v4189
          %v4255 = vmul.f32 %v4225, %v4190
          %v4256 = vmul.f32 %v4225, %v4191
          %v4257 = vmul.f32 %v4225, %v4192
          %v4258 = vmul.f32 %v4225, %v4193
          %v4259 = vmul.f32 %v4225, %v4194
          %v4260 = vmul.f32 %v4225, %v4195
          %v4261 = vmul.f32 %v4225, %v4196
          %v4262 = vmul.f32 %v4225, %v4197
          %v4263 = vmul.f32 %v4225, %v4198
          %v4264 = vmul.f32 %v4225, %v4199
          %v4265 = vmul.f32 %v4225, %v4200
          %v4266 = vmul.f32 %v4225, %v4201
          %v4267 = vmul.f32 %v4225, %v4202
          %v4268 = vmul.f32 %v4225, %v4203
          %v4269 = vmul.f32 %v4225, %v4204
          %v4270 = vmul.f32 %v4225, %v4205
          %v4271 = vmul.f32 %v4225, %v4206
          %v4272 = vmul.f32 %v4225, %v4207
          %v4273 = vmul.f32 %v4225, %v4208
          %v4274 = vmul.f32 %v4225, %v4209
          %v4275 = vmul.f32 %v4225, %v4210
          %v4276 = vmul.f32 %v4225, %v4211
          %v4277 = vmul.f32 %v4225, %v4212
          %v4278 = vmul.f32 %v4225, %v4213
          %v4279 = vmul.f32 %v4225, %v4214
          %v4280 = vmul.f32 %v4225, %v4215
          %v4281 = vmul.f32 %v4225, %v4216
          %v4282 = vmul.f32 %v4225, %v4217
          %v4283 = vmul.f32 %v4225, %v4218
          %v4284 = vmul.f32 %v4225, %v4219
          %v4285 = vmul.f32 %v4225, %v4220
          %v4286 = vmul.f32 %v4225, %v4221
          %v4287 = vmul.f32 %v4225, %v4222
          %v4288 = vmul.f32 %v4225, %v4223
          %v4289 = vmul.f32 %v4225, %v4224
          %v4290 = vstv %s4096
          %v4291 = vadd.f32 %v4226, %v4290
          %v4292 = vadd.f32 %v4227, %v4290
          %v4293 = vadd.f32 %v4228, %v4290
          %v4294 = vadd.f32 %v4229, %v4290
          %v4295 = vadd.f32 %v4230, %v4290
          %v4296 = vadd.f32 %v4231, %v4290
          %v4297 = vadd.f32 %v4232, %v4290
          %v4298 = vadd.f32 %v4233, %v4290
          %v4299 = vadd.f32 %v4234, %v4290
          %v4300 = vadd.f32 %v4235, %v4290
          %v4301 = vadd.f32 %v4236, %v4290
          %v4302 = vadd.f32 %v4237, %v4290
          %v4303 = vadd.f32 %v4238, %v4290
          %v4304 = vadd.f32 %v4239, %v4290
          %v4305 = vadd.f32 %v4240, %v4290
          %v4306 = vadd.f32 %v4241, %v4290
          %v4307 = vadd.f32 %v4242, %v4290
          %v4308 = vadd.f32 %v4243, %v4290
          %v4309 = vadd.f32 %v4244, %v4290
          %v4310 = vadd.f32 %v4245, %v4290
          %v4311 = vadd.f32 %v4246, %v4290
          %v4312 = vadd.f32 %v4247, %v4290
          %v4313 = vadd.f32 %v4248, %v4290
          %v4314 = vadd.f32 %v4249, %v4290
          %v4315 = vadd.f32 %v4250, %v4290
          %v4316 = vadd.f32 %v4251, %v4290
          %v4317 = vadd.f32 %v4252, %v4290
          %v4318 = vadd.f32 %v4253, %v4290
          %v4319 = vadd.f32 %v4254, %v4290
          %v4320 = vadd.f32 %v4255, %v4290
          %v4321 = vadd.f32 %v4256, %v4290
          %v4322 = vadd.f32 %v4257, %v4290
          %v4323 = vadd.f32 %v4258, %v4290
          %v4324 = vadd.f32 %v4259, %v4290
          %v4325 = vadd.f32 %v4260, %v4290
          %v4326 = vadd.f32 %v4261, %v4290
          %v4327 = vadd.f32 %v4262, %v4290
          %v4328 = vadd.f32 %v4263, %v4290
          %v4329 = vadd.f32 %v4264, %v4290
          %v4330 = vadd.f32 %v4265, %v4290
          %v4331 = vadd.f32 %v4266, %v4290
          %v4332 = vadd.f32 %v4267, %v4290
          %v4333 = vadd.f32 %v4268, %v4290
          %v4334 = vadd.f32 %v4269, %v4290
          %v4335 = vadd.f32 %v4270, %v4290
          %v4336 = vadd.f32 %v4271, %v4290
          %v4337 = vadd.f32 %v4272, %v4290
          %v4338 = vadd.f32 %v4273, %v4290
          %v4339 = vadd.f32 %v4274, %v4290
          %v4340 = vadd.f32 %v4275, %v4290
          %v4341 = vadd.f32 %v4276, %v4290
          %v4342 = vadd.f32 %v4277, %v4290
          %v4343 = vadd.f32 %v4278, %v4290
          %v4344 = vadd.f32 %v4279, %v4290
          %v4345 = vadd.f32 %v4280, %v4290
          %v4346 = vadd.f32 %v4281, %v4290
          %v4347 = vadd.f32 %v4282, %v4290
          %v4348 = vadd.f32 %v4283, %v4290
          %v4349 = vadd.f32 %v4284, %v4290
          %v4350 = vadd.f32 %v4285, %v4290
          %v4351 = vadd.f32 %v4286, %v4290
          %v4352 = vadd.f32 %v4287, %v4290
          %v4353 = vadd.f32 %v4288, %v4290
          %v4354 = vadd.f32 %v4289, %v4290
          %v4355 = vmul.f32 %v4291, %v4097
          %v4356 = vmul.f32 %v4292, %v4098
          %v4357 = vmul.f32 %v4293, %v4099
          %v4358 = vmul.f32 %v4294, %v4100
          %v4359 = vmul.f32 %v4295, %v4101
          %v4360 = vmul.f32 %v4296, %v4102
          %v4361 = vmul.f32 %v4297, %v4103
          %v4362 = vmul.f32 %v4298, %v4104
          %v4363 = vmul.f32 %v4299, %v4105
          %v4364 = vmul.f32 %v4300, %v4106
          %v4365 = vmul.f32 %v4301, %v4107
          %v4366 = vmul.f32 %v4302, %v4108
          %v4367 = vmul.f32 %v4303, %v4109
          %v4368 = vmul.f32 %v4304, %v4110
          %v4369 = vmul.f32 %v4305, %v4111
          %v4370 = vmul.f32 %v4306, %v4112
          %v4371 = vmul.f32 %v4307, %v4113
          %v4372 = vmul.f32 %v4308, %v4114
          %v4373 = vmul.f32 %v4309, %v4115
          %v4374 = vmul.f32 %v4310, %v4116
          %v4375 = vmul.f32 %v4311, %v4117
          %v4376 = vmul.f32 %v4312, %v4118
          %v4377 = vmul.f32 %v4313, %v4119
          %v4378 = vmul.f32 %v4314, %v4120
          %v4379 = vmul.f32 %v4315, %v4121
          %v4380 = vmul.f32 %v4316, %v4122
          %v4381 = vmul.f32 %v4317, %v4123
          %v4382 = vmul.f32 %v4318, %v4124
          %v4383 = vmul.f32 %v4319, %v4125
          %v4384 = vmul.f32 %v4320, %v4126
          %v4385 = vmul.f32 %v4321, %v4127
          %v4386 = vmul.f32 %v4322, %v4128
          %v4387 = vmul.f32 %v4323, %v4129
          %v4388 = vmul.f32 %v4324, %v4130
          %v4389 = vmul.f32 %v4325, %v4131
          %v4390 = vmul.f32 %v4326, %v4132
          %v4391 = vmul.f32 %v4327, %v4133
          %v4392 = vmul.f32 %v4328, %v4134
          %v4393 = vmul.f32 %v4329, %v4135
          %v4394 = vmul.f32 %v4330, %v4136
          %v4395 = vmul.f32 %v4331, %v4137
          %v4396 = vmul.f32 %v4332, %v4138
          %v4397 = vmul.f32 %v4333, %v4139
          %v4398 = vmul.f32 %v4334, %v4140
          %v4399 = vmul.f32 %v4335, %v4141
          %v4400 = vmul.f32 %v4336, %v4142
          %v4401 = vmul.f32 %v4337, %v4143
          %v4402 = vmul.f32 %v4338, %v4144
          %v4403 = vmul.f32 %v4339, %v4145
          %v4404 = vmul.f32 %v4340, %v4146
          %v4405 = vmul.f32 %v4341, %v4147
          %v4406 = vmul.f32 %v4342, %v4148
          %v4407 = vmul.f32 %v4343, %v4149
          %v4408 = vmul.f32 %v4344, %v4150
          %v4409 = vmul.f32 %v4345, %v4151
          %v4410 = vmul.f32 %v4346, %v4152
          %v4411 = vmul.f32 %v4347, %v4153
          %v4412 = vmul.f32 %v4348, %v4154
          %v4413 = vmul.f32 %v4349, %v4155
          %v4414 = vmul.f32 %v4350, %v4156
          %v4415 = vmul.f32 %v4351, %v4157
          %v4416 = vmul.f32 %v4352, %v4158
          %v4417 = vmul.f32 %v4353, %v4159
          %v4418 = vmul.f32 %v4354, %v4160
          %v4419 = vlaneseq
          %v4420 = vshrl.u32 %v4419, 7
          %v4421 = vadd.s32 %v4420, 8
          %v4422 = vadd.s32 %v4420, 16
          %v4423 = vadd.s32 %v4420, 24
          %v4424 = vadd.s32 %v4420, 32
          %v4425 = vadd.s32 %v4420, 40
          %v4426 = vadd.s32 %v4420, 48
          %v4427 = vadd.s32 %v4420, 56
          %v4428 = vadd.s32 %v4420, 64
          %v4429 = vadd.s32 %v4420, 72
          %v4430 = vadd.s32 %v4420, 80
          %v4431 = vadd.s32 %v4420, 88
          %v4432 = vadd.s32 %v4420, 96
          %v4433 = vadd.s32 %v4420, 104
          %v4434 = vadd.s32 %v4420, 112
          %v4435 = vadd.s32 %v4420, 120
          %v4436 = vadd.s32 %v4420, 128
          %v4437 = vadd.s32 %v4420, 136
          %v4438 = vadd.s32 %v4420, 144
          %v4439 = vadd.s32 %v4420, 152
          %v4440 = vadd.s32 %v4420, 160
          %v4441 = vadd.s32 %v4420, 168
          %v4442 = vadd.s32 %v4420, 176
          %v4443 = vadd.s32 %v4420, 184
          %v4444 = vadd.s32 %v4420, 192
          %v4445 = vadd.s32 %v4420, 200
          %v4446 = vadd.s32 %v4420, 208
          %v4447 = vadd.s32 %v4420, 216
          %v4448 = vadd.s32 %v4420, 224
          %v4449 = vadd.s32 %v4420, 232
          %v4450 = vadd.s32 %v4420, 240
          %v4451 = vadd.s32 %v4420, 248
          %v4452 = vlaneseq
          %v4453 = vand.u32 %v4452, 127
          %v4454 = vadd.s32 %v4453, 128
          %p4455 = scmp.eq.s32.totalorder %s35, %s36
          %vm4456 = vcmp.eq.s32.totalorder %v4420, %v4453
          %vm4457 = vcmp.eq.s32.totalorder %v4420, %v4454
          %vm4458 = vcmp.eq.s32.totalorder %v4421, %v4453
          %vm4459 = vcmp.eq.s32.totalorder %v4421, %v4454
          %vm4460 = vcmp.eq.s32.totalorder %v4422, %v4453
          %vm4461 = vcmp.eq.s32.totalorder %v4422, %v4454
          %vm4462 = vcmp.eq.s32.totalorder %v4423, %v4453
          %vm4463 = vcmp.eq.s32.totalorder %v4423, %v4454
          %vm4464 = vcmp.eq.s32.totalorder %v4424, %v4453
          %vm4465 = vcmp.eq.s32.totalorder %v4424, %v4454
          %vm4466 = vcmp.eq.s32.totalorder %v4425, %v4453
          %vm4467 = vcmp.eq.s32.totalorder %v4425, %v4454
          %vm4468 = vcmp.eq.s32.totalorder %v4426, %v4453
          %vm4469 = vcmp.eq.s32.totalorder %v4426, %v4454
          %vm4470 = vcmp.eq.s32.totalorder %v4427, %v4453
          %vm4471 = vcmp.eq.s32.totalorder %v4427, %v4454
          %vm4472 = vcmp.eq.s32.totalorder %v4428, %v4453
          %vm4473 = vcmp.eq.s32.totalorder %v4428, %v4454
          %vm4474 = vcmp.eq.s32.totalorder %v4429, %v4453
          %vm4475 = vcmp.eq.s32.totalorder %v4429, %v4454
          %vm4476 = vcmp.eq.s32.totalorder %v4430, %v4453
          %vm4477 = vcmp.eq.s32.totalorder %v4430, %v4454
          %vm4478 = vcmp.eq.s32.totalorder %v4431, %v4453
          %vm4479 = vcmp.eq.s32.totalorder %v4431, %v4454
          %vm4480 = vcmp.eq.s32.totalorder %v4432, %v4453
          %vm4481 = vcmp.eq.s32.totalorder %v4432, %v4454
          %vm4482 = vcmp.eq.s32.totalorder %v4433, %v4453
          %vm4483 = vcmp.eq.s32.totalorder %v4433, %v4454
          %vm4484 = vcmp.eq.s32.totalorder %v4434, %v4453
          %vm4485 = vcmp.eq.s32.totalorder %v4434, %v4454
          %vm4486 = vcmp.eq.s32.totalorder %v4435, %v4453
          %vm4487 = vcmp.eq.s32.totalorder %v4435, %v4454
          %vm4488 = vcmp.eq.s32.totalorder %v4436, %v4453
          %vm4489 = vcmp.eq.s32.totalorder %v4436, %v4454
          %vm4490 = vcmp.eq.s32.totalorder %v4437, %v4453
          %vm4491 = vcmp.eq.s32.totalorder %v4437, %v4454
          %vm4492 = vcmp.eq.s32.totalorder %v4438, %v4453
          %vm4493 = vcmp.eq.s32.totalorder %v4438, %v4454
          %vm4494 = vcmp.eq.s32.totalorder %v4439, %v4453
          %vm4495 = vcmp.eq.s32.totalorder %v4439, %v4454
          %vm4496 = vcmp.eq.s32.totalorder %v4440, %v4453
          %vm4497 = vcmp.eq.s32.totalorder %v4440, %v4454
          %vm4498 = vcmp.eq.s32.totalorder %v4441, %v4453
          %vm4499 = vcmp.eq.s32.totalorder %v4441, %v4454
          %vm4500 = vcmp.eq.s32.totalorder %v4442, %v4453
          %vm4501 = vcmp.eq.s32.totalorder %v4442, %v4454
          %vm4502 = vcmp.eq.s32.totalorder %v4443, %v4453
          %vm4503 = vcmp.eq.s32.totalorder %v4443, %v4454
          %vm4504 = vcmp.eq.s32.totalorder %v4444, %v4453
          %vm4505 = vcmp.eq.s32.totalorder %v4444, %v4454
          %vm4506 = vcmp.eq.s32.totalorder %v4445, %v4453
          %vm4507 = vcmp.eq.s32.totalorder %v4445, %v4454
          %vm4508 = vcmp.eq.s32.totalorder %v4446, %v4453
          %vm4509 = vcmp.eq.s32.totalorder %v4446, %v4454
          %vm4510 = vcmp.eq.s32.totalorder %v4447, %v4453
          %vm4511 = vcmp.eq.s32.totalorder %v4447, %v4454
          %vm4512 = vcmp.eq.s32.totalorder %v4448, %v4453
          %vm4513 = vcmp.eq.s32.totalorder %v4448, %v4454
          %vm4514 = vcmp.eq.s32.totalorder %v4449, %v4453
          %vm4515 = vcmp.eq.s32.totalorder %v4449, %v4454
          %vm4516 = vcmp.eq.s32.totalorder %v4450, %v4453
          %vm4517 = vcmp.eq.s32.totalorder %v4450, %v4454
          %vm4518 = vcmp.eq.s32.totalorder %v4451, %v4453
          %vm4519 = vcmp.eq.s32.totalorder %v4451, %v4454
          %s4520 = scalar_select %p4455, 1, 0
          %v4521 = vstv %s4520
          %vm4522 = vcmp.eq.s32.totalorder %v4521, 1
          %vm4523 = vmand %vm4522, %vm4456
          %vm4524 = vmand %vm4522, %vm4457
          %vm4525 = vmand %vm4522, %vm4458
          %vm4526 = vmand %vm4522, %vm4459
          %vm4527 = vmand %vm4522, %vm4460
          %vm4528 = vmand %vm4522, %vm4461
          %vm4529 = vmand %vm4522, %vm4462
          %vm4530 = vmand %vm4522, %vm4463
          %vm4531 = vmand %vm4522, %vm4464
          %vm4532 = vmand %vm4522, %vm4465
          %vm4533 = vmand %vm4522, %vm4466
          %vm4534 = vmand %vm4522, %vm4467
          %vm4535 = vmand %vm4522, %vm4468
          %vm4536 = vmand %vm4522, %vm4469
          %vm4537 = vmand %vm4522, %vm4470
          %vm4538 = vmand %vm4522, %vm4471
          %vm4539 = vmand %vm4522, %vm4472
          %vm4540 = vmand %vm4522, %vm4473
          %vm4541 = vmand %vm4522, %vm4474
          %vm4542 = vmand %vm4522, %vm4475
          %vm4543 = vmand %vm4522, %vm4476
          %vm4544 = vmand %vm4522, %vm4477
          %vm4545 = vmand %vm4522, %vm4478
          %vm4546 = vmand %vm4522, %vm4479
          %vm4547 = vmand %vm4522, %vm4480
          %vm4548 = vmand %vm4522, %vm4481
          %vm4549 = vmand %vm4522, %vm4482
          %vm4550 = vmand %vm4522, %vm4483
          %vm4551 = vmand %vm4522, %vm4484
          %vm4552 = vmand %vm4522, %vm4485
          %vm4553 = vmand %vm4522, %vm4486
          %vm4554 = vmand %vm4522, %vm4487
          %vm4555 = vmand %vm4522, %vm4488
          %vm4556 = vmand %vm4522, %vm4489
          %vm4557 = vmand %vm4522, %vm4490
          %vm4558 = vmand %vm4522, %vm4491
          %vm4559 = vmand %vm4522, %vm4492
          %vm4560 = vmand %vm4522, %vm4493
          %vm4561 = vmand %vm4522, %vm4494
          %vm4562 = vmand %vm4522, %vm4495
          %vm4563 = vmand %vm4522, %vm4496
          %vm4564 = vmand %vm4522, %vm4497
          %vm4565 = vmand %vm4522, %vm4498
          %vm4566 = vmand %vm4522, %vm4499
          %vm4567 = vmand %vm4522, %vm4500
          %vm4568 = vmand %vm4522, %vm4501
          %vm4569 = vmand %vm4522, %vm4502
          %vm4570 = vmand %vm4522, %vm4503
          %vm4571 = vmand %vm4522, %vm4504
          %vm4572 = vmand %vm4522, %vm4505
          %vm4573 = vmand %vm4522, %vm4506
          %vm4574 = vmand %vm4522, %vm4507
          %vm4575 = vmand %vm4522, %vm4508
          %vm4576 = vmand %vm4522, %vm4509
          %vm4577 = vmand %vm4522, %vm4510
          %vm4578 = vmand %vm4522, %vm4511
          %vm4579 = vmand %vm4522, %vm4512
          %vm4580 = vmand %vm4522, %vm4513
          %vm4581 = vmand %vm4522, %vm4514
          %vm4582 = vmand %vm4522, %vm4515
          %vm4583 = vmand %vm4522, %vm4516
          %vm4584 = vmand %vm4522, %vm4517
          %vm4585 = vmand %vm4522, %vm4518
          %vm4586 = vmand %vm4522, %vm4519
          %v4587 = vsel %vm4523, %v4097, %v4355
          %v4588 = vsel %vm4524, %v4098, %v4356
          %v4589 = vsel %vm4525, %v4099, %v4357
          %v4590 = vsel %vm4526, %v4100, %v4358
          %v4591 = vsel %vm4527, %v4101, %v4359
          %v4592 = vsel %vm4528, %v4102, %v4360
          %v4593 = vsel %vm4529, %v4103, %v4361
          %v4594 = vsel %vm4530, %v4104, %v4362
          %v4595 = vsel %vm4531, %v4105, %v4363
          %v4596 = vsel %vm4532, %v4106, %v4364
          %v4597 = vsel %vm4533, %v4107, %v4365
          %v4598 = vsel %vm4534, %v4108, %v4366
          %v4599 = vsel %vm4535, %v4109, %v4367
          %v4600 = vsel %vm4536, %v4110, %v4368
          %v4601 = vsel %vm4537, %v4111, %v4369
          %v4602 = vsel %vm4538, %v4112, %v4370
          %v4603 = vsel %vm4539, %v4113, %v4371
          %v4604 = vsel %vm4540, %v4114, %v4372
          %v4605 = vsel %vm4541, %v4115, %v4373
          %v4606 = vsel %vm4542, %v4116, %v4374
          %v4607 = vsel %vm4543, %v4117, %v4375
          %v4608 = vsel %vm4544, %v4118, %v4376
          %v4609 = vsel %vm4545, %v4119, %v4377
          %v4610 = vsel %vm4546, %v4120, %v4378
          %v4611 = vsel %vm4547, %v4121, %v4379
          %v4612 = vsel %vm4548, %v4122, %v4380
          %v4613 = vsel %vm4549, %v4123, %v4381
          %v4614 = vsel %vm4550, %v4124, %v4382
          %v4615 = vsel %vm4551, %v4125, %v4383
          %v4616 = vsel %vm4552, %v4126, %v4384
          %v4617 = vsel %vm4553, %v4127, %v4385
          %v4618 = vsel %vm4554, %v4128, %v4386
          %v4619 = vsel %vm4555, %v4129, %v4387
          %v4620 = vsel %vm4556, %v4130, %v4388
          %v4621 = vsel %vm4557, %v4131, %v4389
          %v4622 = vsel %vm4558, %v4132, %v4390
          %v4623 = vsel %vm4559, %v4133, %v4391
          %v4624 = vsel %vm4560, %v4134, %v4392
          %v4625 = vsel %vm4561, %v4135, %v4393
          %v4626 = vsel %vm4562, %v4136, %v4394
          %v4627 = vsel %vm4563, %v4137, %v4395
          %v4628 = vsel %vm4564, %v4138, %v4396
          %v4629 = vsel %vm4565, %v4139, %v4397
          %v4630 = vsel %vm4566, %v4140, %v4398
          %v4631 = vsel %vm4567, %v4141, %v4399
          %v4632 = vsel %vm4568, %v4142, %v4400
          %v4633 = vsel %vm4569, %v4143, %v4401
          %v4634 = vsel %vm4570, %v4144, %v4402
          %v4635 = vsel %vm4571, %v4145, %v4403
          %v4636 = vsel %vm4572, %v4146, %v4404
          %v4637 = vsel %vm4573, %v4147, %v4405
          %v4638 = vsel %vm4574, %v4148, %v4406
          %v4639 = vsel %vm4575, %v4149, %v4407
          %v4640 = vsel %vm4576, %v4150, %v4408
          %v4641 = vsel %vm4577, %v4151, %v4409
          %v4642 = vsel %vm4578, %v4152, %v4410
          %v4643 = vsel %vm4579, %v4153, %v4411
          %v4644 = vsel %vm4580, %v4154, %v4412
          %v4645 = vsel %vm4581, %v4155, %v4413
          %v4646 = vsel %vm4582, %v4156, %v4414
          %v4647 = vsel %vm4583, %v4157, %v4415
          %v4648 = vsel %vm4584, %v4158, %v4416
          %v4649 = vsel %vm4585, %v4159, %v4417
          %v4650 = vsel %vm4586, %v4160, %v4418
          %v4651 = vld [vmem:[%s444] sm:$0xff]
          %v4652 = vld [vmem:[%s444 + $0x8] sm:$0xff]
          %v4653 = vld [vmem:[%s444 + $0x10] sm:$0xff]
          %v4654 = vld [vmem:[%s444 + $0x18] sm:$0xff]
          %v4655 = vld [vmem:[%s444 + $0x20] sm:$0xff]
          %v4656 = vld [vmem:[%s444 + $0x28] sm:$0xff]
          %v4657 = vld [vmem:[%s444 + $0x30] sm:$0xff]
          %v4658 = vld [vmem:[%s444 + $0x38] sm:$0xff]
          %v4659 = vld [vmem:[%s444 + $0x40] sm:$0xff]
          %v4660 = vld [vmem:[%s444 + $0x48] sm:$0xff]
          %v4661 = vld [vmem:[%s444 + $0x50] sm:$0xff]
          %v4662 = vld [vmem:[%s444 + $0x58] sm:$0xff]
          %v4663 = vld [vmem:[%s444 + $0x60] sm:$0xff]
          %v4664 = vld [vmem:[%s444 + $0x68] sm:$0xff]
          %v4665 = vld [vmem:[%s444 + $0x70] sm:$0xff]
          %v4666 = vld [vmem:[%s444 + $0x78] sm:$0xff]
          %v4667 = vld [vmem:[%s444 + $0x80] sm:$0xff]
          %v4668 = vld [vmem:[%s444 + $0x88] sm:$0xff]
          %v4669 = vld [vmem:[%s444 + $0x90] sm:$0xff]
          %v4670 = vld [vmem:[%s444 + $0x98] sm:$0xff]
          %v4671 = vld [vmem:[%s444 + $0xa0] sm:$0xff]
          %v4672 = vld [vmem:[%s444 + $0xa8] sm:$0xff]
          %v4673 = vld [vmem:[%s444 + $0xb0] sm:$0xff]
          %v4674 = vld [vmem:[%s444 + $0xb8] sm:$0xff]
          %v4675 = vld [vmem:[%s444 + $0xc0] sm:$0xff]
          %v4676 = vld [vmem:[%s444 + $0xc8] sm:$0xff]
          %v4677 = vld [vmem:[%s444 + $0xd0] sm:$0xff]
          %v4678 = vld [vmem:[%s444 + $0xd8] sm:$0xff]
          %v4679 = vld [vmem:[%s444 + $0xe0] sm:$0xff]
          %v4680 = vld [vmem:[%s444 + $0xe8] sm:$0xff]
          %v4681 = vld [vmem:[%s444 + $0xf0] sm:$0xff]
          %v4682 = vld [vmem:[%s444 + $0xf8] sm:$0xff]
          %v4683 = vld [vmem:[%s396] sm:$0xff]
          %v4684 = vld [vmem:[%s396 + $0x8] sm:$0xff]
          %v4685 = vld [vmem:[%s396 + $0x10] sm:$0xff]
          %v4686 = vld [vmem:[%s396 + $0x18] sm:$0xff]
          %v4687 = vld [vmem:[%s396 + $0x20] sm:$0xff]
          %v4688 = vld [vmem:[%s396 + $0x28] sm:$0xff]
          %v4689 = vld [vmem:[%s396 + $0x30] sm:$0xff]
          %v4690 = vld [vmem:[%s396 + $0x38] sm:$0xff]
          %v4691 = vld [vmem:[%s396 + $0x40] sm:$0xff]
          %v4692 = vld [vmem:[%s396 + $0x48] sm:$0xff]
          %v4693 = vld [vmem:[%s396 + $0x50] sm:$0xff]
          %v4694 = vld [vmem:[%s396 + $0x58] sm:$0xff]
          %v4695 = vld [vmem:[%s396 + $0x60] sm:$0xff]
          %v4696 = vld [vmem:[%s396 + $0x68] sm:$0xff]
          %v4697 = vld [vmem:[%s396 + $0x70] sm:$0xff]
          %v4698 = vld [vmem:[%s396 + $0x78] sm:$0xff]
          %v4699 = vld [vmem:[%s396 + $0x80] sm:$0xff]
          %v4700 = vld [vmem:[%s396 + $0x88] sm:$0xff]
          %v4701 = vld [vmem:[%s396 + $0x90] sm:$0xff]
          %v4702 = vld [vmem:[%s396 + $0x98] sm:$0xff]
          %v4703 = vld [vmem:[%s396 + $0xa0] sm:$0xff]
          %v4704 = vld [vmem:[%s396 + $0xa8] sm:$0xff]
          %v4705 = vld [vmem:[%s396 + $0xb0] sm:$0xff]
          %v4706 = vld [vmem:[%s396 + $0xb8] sm:$0xff]
          %v4707 = vld [vmem:[%s396 + $0xc0] sm:$0xff]
          %v4708 = vld [vmem:[%s396 + $0xc8] sm:$0xff]
          %v4709 = vld [vmem:[%s396 + $0xd0] sm:$0xff]
          %v4710 = vld [vmem:[%s396 + $0xd8] sm:$0xff]
          %v4711 = vld [vmem:[%s396 + $0xe0] sm:$0xff]
          %v4712 = vld [vmem:[%s396 + $0xe8] sm:$0xff]
          %v4713 = vld [vmem:[%s396 + $0xf0] sm:$0xff]
          %v4714 = vld [vmem:[%s396 + $0xf8] sm:$0xff]
          %4715 = vmatprep.subr.mxu0 0.0
          %v4716 = vand.u32 %v4698, 4294901760
          %4717 = vmatpush1.msra.mxu0 %v4716
          %4718 = vmatprep.subr.mxu0 0.0
          %v4719 = vand.u32 %v4697, 4294901760
          %4720 = vmatpush1.msra.mxu0 %v4719
          %4721 = vmatprep.subr.mxu0 0.0
          %v4722 = vand.u32 %v4696, 4294901760
          %4723 = vmatpush1.msra.mxu0 %v4722
          %4724 = vmatprep.subr.mxu0 0.0
          %v4725 = vand.u32 %v4695, 4294901760
          %4726 = vmatpush1.msra.mxu0 %v4725
          %4727 = vmatprep.subr.mxu0 0.0
          %v4728 = vand.u32 %v4694, 4294901760
          %4729 = vmatpush1.msra.mxu0 %v4728
          %4730 = vmatprep.subr.mxu0 0.0
          %v4731 = vand.u32 %v4693, 4294901760
          %4732 = vmatpush1.msra.mxu0 %v4731
          %4733 = vmatprep.subr.mxu0 0.0
          %v4734 = vand.u32 %v4692, 4294901760
          %4735 = vmatpush1.msra.mxu0 %v4734
          %4736 = vmatprep.subr.mxu0 0.0
          %v4737 = vand.u32 %v4691, 4294901760
          %4738 = vmatpush1.msra.mxu0 %v4737
          %4739 = vmatprep.subr.mxu0 0.0
          %v4740 = vand.u32 %v4690, 4294901760
          %4741 = vmatpush1.msra.mxu0 %v4740
          %4742 = vmatprep.subr.mxu0 0.0
          %v4743 = vand.u32 %v4689, 4294901760
          %4744 = vmatpush1.msra.mxu0 %v4743
          %4745 = vmatprep.subr.mxu0 0.0
          %v4746 = vand.u32 %v4688, 4294901760
          %4747 = vmatpush1.msra.mxu0 %v4746
          %4748 = vmatprep.subr.mxu0 0.0
          %v4749 = vand.u32 %v4687, 4294901760
          %4750 = vmatpush1.msra.mxu0 %v4749
          %4751 = vmatprep.subr.mxu0 0.0
          %v4752 = vand.u32 %v4686, 4294901760
          %4753 = vmatpush1.msra.mxu0 %v4752
          %4754 = vmatprep.subr.mxu0 0.0
          %v4755 = vand.u32 %v4685, 4294901760
          %4756 = vmatpush1.msra.mxu0 %v4755
          %4757 = vmatprep.subr.mxu0 0.0
          %v4758 = vand.u32 %v4684, 4294901760
          %4759 = vmatpush1.msra.mxu0 %v4758
          %4760 = vmatprep.subr.mxu0 0.0
          %v4761 = vand.u32 %v4683, 4294901760
          %4762 = vmatpush1.msra.mxu0 %v4761
          %4763 = vmatprep.subr.mxu0 0.0
          %v4764 = vand.u32 %v4714, 4294901760
          %4765 = vmatpush2.msra.mxu0 %v4764
          %4766 = vmatprep.subr.mxu0 0.0
          %v4767 = vand.u32 %v4713, 4294901760
          %4768 = vmatpush2.msra.mxu0 %v4767
          %4769 = vmatprep.subr.mxu0 0.0
          %v4770 = vand.u32 %v4712, 4294901760
          %4771 = vmatpush2.msra.mxu0 %v4770
          %4772 = vmatprep.subr.mxu0 0.0
          %v4773 = vand.u32 %v4711, 4294901760
          %4774 = vmatpush2.msra.mxu0 %v4773
          %4775 = vmatprep.subr.mxu0 0.0
          %v4776 = vand.u32 %v4710, 4294901760
          %4777 = vmatpush2.msra.mxu0 %v4776
          %4778 = vmatprep.subr.mxu0 0.0
          %v4779 = vand.u32 %v4709, 4294901760
          %4780 = vmatpush2.msra.mxu0 %v4779
          %4781 = vmatprep.subr.mxu0 0.0
          %v4782 = vand.u32 %v4708, 4294901760
          %4783 = vmatpush2.msra.mxu0 %v4782
          %4784 = vmatprep.subr.mxu0 0.0
          %v4785 = vand.u32 %v4707, 4294901760
          %4786 = vmatpush2.msra.mxu0 %v4785
          %4787 = vmatprep.subr.mxu0 0.0
          %v4788 = vand.u32 %v4706, 4294901760
          %4789 = vmatpush2.msra.mxu0 %v4788
          %4790 = vmatprep.subr.mxu0 0.0
          %v4791 = vand.u32 %v4705, 4294901760
          %4792 = vmatpush2.msra.mxu0 %v4791
          %4793 = vmatprep.subr.mxu0 0.0
          %v4794 = vand.u32 %v4704, 4294901760
          %4795 = vmatpush2.msra.mxu0 %v4794
          %4796 = vmatprep.subr.mxu0 0.0
          %v4797 = vand.u32 %v4703, 4294901760
          %4798 = vmatpush2.msra.mxu0 %v4797
          %4799 = vmatprep.subr.mxu0 0.0
          %v4800 = vand.u32 %v4702, 4294901760
          %4801 = vmatpush2.msra.mxu0 %v4800
          %4802 = vmatprep.subr.mxu0 0.0
          %v4803 = vand.u32 %v4701, 4294901760
          %4804 = vmatpush2.msra.mxu0 %v4803
          %4805 = vmatprep.subr.mxu0 0.0
          %v4806 = vand.u32 %v4700, 4294901760
          %4807 = vmatpush2.msra.mxu0 %v4806
          %4808 = vmatprep.subr.mxu0 0.0
          %v4809 = vand.u32 %v4699, 4294901760
          %4810 = vmatpush2.msra.mxu0 %v4809
          %v4811 = vand.u32 %v4588, 4294901760
          %v4812 = vsub.f32 %v4588, %v4811
          %v4813 = vand.u32 %v4812, 4294901760
          %v4814 = vsub.f32 %v4812, %v4813
          %v4815 = vand.u32 %v4814, 4294901760
          %4816 = vmatprep.mubr.f32.mxu0 %v4815
          %v4817 = vand.u32 %v4587, 4294901760
          %v4818 = vsub.f32 %v4587, %v4817
          %v4819 = vand.u32 %v4818, 4294901760
          %v4820 = vsub.f32 %v4818, %v4819
          %v4821 = vand.u32 %v4820, 4294901760
          %4822 = vmatmul.mubr.f32.gmra.mxu0 %v4821
          %v4823 = vpop.f32.mrf.mxu0
          %v4824 = vadd.f32 0.0, %v4823
          %v4825 = vpop.f32.mrf.mxu0
          %v4826 = vand.u32 %v4590, 4294901760
          %v4827 = vsub.f32 %v4590, %v4826
          %v4828 = vand.u32 %v4827, 4294901760
          %v4829 = vsub.f32 %v4827, %v4828
          %v4830 = vand.u32 %v4829, 4294901760
          %4831 = vmatprep.mubr.f32.mxu0 %v4830
          %v4832 = vand.u32 %v4589, 4294901760
          %v4833 = vsub.f32 %v4589, %v4832
          %v4834 = vand.u32 %v4833, 4294901760
          %v4835 = vsub.f32 %v4833, %v4834
          %v4836 = vand.u32 %v4835, 4294901760
          %4837 = vmatmul.mubr.f32.gmra.mxu0 %v4836
          %v4838 = vpop.f32.mrf.mxu0
          %v4839 = vadd.f32 0.0, %v4838
          %v4840 = vpop.f32.mrf.mxu0
          %v4841 = vand.u32 %v4592, 4294901760
          %v4842 = vsub.f32 %v4592, %v4841
          %v4843 = vand.u32 %v4842, 4294901760
          %v4844 = vsub.f32 %v4842, %v4843
          %v4845 = vand.u32 %v4844, 4294901760
          %4846 = vmatprep.mubr.f32.mxu0 %v4845
          %v4847 = vand.u32 %v4591, 4294901760
          %v4848 = vsub.f32 %v4591, %v4847
          %v4849 = vand.u32 %v4848, 4294901760
          %v4850 = vsub.f32 %v4848, %v4849
          %v4851 = vand.u32 %v4850, 4294901760
          %4852 = vmatmul.mubr.f32.gmra.mxu0 %v4851
          %v4853 = vpop.f32.mrf.mxu0
          %v4854 = vadd.f32 0.0, %v4853
          %v4855 = vpop.f32.mrf.mxu0
          %v4856 = vand.u32 %v4594, 4294901760
          %v4857 = vsub.f32 %v4594, %v4856
          %v4858 = vand.u32 %v4857, 4294901760
          %v4859 = vsub.f32 %v4857, %v4858
          %v4860 = vand.u32 %v4859, 4294901760
          %4861 = vmatprep.mubr.f32.mxu0 %v4860
          %v4862 = vand.u32 %v4593, 4294901760
          %v4863 = vsub.f32 %v4593, %v4862
          %v4864 = vand.u32 %v4863, 4294901760
          %v4865 = vsub.f32 %v4863, %v4864
          %v4866 = vand.u32 %v4865, 4294901760
          %4867 = vmatmul.mubr.f32.gmra.mxu0 %v4866
          %v4868 = vpop.f32.mrf.mxu0
          %v4869 = vadd.f32 0.0, %v4868
          %v4870 = vpop.f32.mrf.mxu0
          %v4871 = vand.u32 %v4596, 4294901760
          %v4872 = vsub.f32 %v4596, %v4871
          %v4873 = vand.u32 %v4872, 4294901760
          %v4874 = vsub.f32 %v4872, %v4873
          %v4875 = vand.u32 %v4874, 4294901760
          %4876 = vmatprep.mubr.f32.mxu0 %v4875
          %v4877 = vand.u32 %v4595, 4294901760
          %v4878 = vsub.f32 %v4595, %v4877
          %v4879 = vand.u32 %v4878, 4294901760
          %v4880 = vsub.f32 %v4878, %v4879
          %v4881 = vand.u32 %v4880, 4294901760
          %4882 = vmatmul.mubr.f32.gmra.mxu0 %v4881
          %v4883 = vpop.f32.mrf.mxu0
          %v4884 = vadd.f32 0.0, %v4883
          %v4885 = vpop.f32.mrf.mxu0
          %v4886 = vand.u32 %v4598, 4294901760
          %v4887 = vsub.f32 %v4598, %v4886
          %v4888 = vand.u32 %v4887, 4294901760
          %v4889 = vsub.f32 %v4887, %v4888
          %v4890 = vand.u32 %v4889, 4294901760
          %4891 = vmatprep.mubr.f32.mxu0 %v4890
          %v4892 = vand.u32 %v4597, 4294901760
          %v4893 = vsub.f32 %v4597, %v4892
          %v4894 = vand.u32 %v4893, 4294901760
          %v4895 = vsub.f32 %v4893, %v4894
          %v4896 = vand.u32 %v4895, 4294901760
          %4897 = vmatmul.mubr.f32.gmra.mxu0 %v4896
          %v4898 = vpop.f32.mrf.mxu0
          %v4899 = vadd.f32 0.0, %v4898
          %v4900 = vpop.f32.mrf.mxu0
          %v4901 = vand.u32 %v4600, 4294901760
          %v4902 = vsub.f32 %v4600, %v4901
          %v4903 = vand.u32 %v4902, 4294901760
          %v4904 = vsub.f32 %v4902, %v4903
          %v4905 = vand.u32 %v4904, 4294901760
          %4906 = vmatprep.mubr.f32.mxu0 %v4905
          %v4907 = vand.u32 %v4599, 4294901760
          %v4908 = vsub.f32 %v4599, %v4907
          %v4909 = vand.u32 %v4908, 4294901760
          %v4910 = vsub.f32 %v4908, %v4909
          %v4911 = vand.u32 %v4910, 4294901760
          %4912 = vmatmul.mubr.f32.gmra.mxu0 %v4911
          %v4913 = vpop.f32.mrf.mxu0
          %v4914 = vadd.f32 0.0, %v4913
          %v4915 = vpop.f32.mrf.mxu0
          %v4916 = vand.u32 %v4602, 4294901760
          %v4917 = vsub.f32 %v4602, %v4916
          %v4918 = vand.u32 %v4917, 4294901760
          %v4919 = vsub.f32 %v4917, %v4918
          %v4920 = vand.u32 %v4919, 4294901760
          %4921 = vmatprep.mubr.f32.mxu0 %v4920
          %v4922 = vand.u32 %v4601, 4294901760
          %v4923 = vsub.f32 %v4601, %v4922
          %v4924 = vand.u32 %v4923, 4294901760
          %v4925 = vsub.f32 %v4923, %v4924
          %v4926 = vand.u32 %v4925, 4294901760
          %4927 = vmatmul.mubr.f32.gmra.mxu0 %v4926
          %v4928 = vpop.f32.mrf.mxu0
          %v4929 = vadd.f32 0.0, %v4928
          %v4930 = vpop.f32.mrf.mxu0
          %v4931 = vand.u32 %v4604, 4294901760
          %v4932 = vsub.f32 %v4604, %v4931
          %v4933 = vand.u32 %v4932, 4294901760
          %v4934 = vsub.f32 %v4932, %v4933
          %v4935 = vand.u32 %v4934, 4294901760
          %4936 = vmatprep.mubr.f32.mxu0 %v4935
          %v4937 = vand.u32 %v4603, 4294901760
          %v4938 = vsub.f32 %v4603, %v4937
          %v4939 = vand.u32 %v4938, 4294901760
          %v4940 = vsub.f32 %v4938, %v4939
          %v4941 = vand.u32 %v4940, 4294901760
          %4942 = vmatmul.mubr.f32.gmra.mxu0 %v4941
          %v4943 = vpop.f32.mrf.mxu0
          %v4944 = vadd.f32 0.0, %v4943
          %v4945 = vpop.f32.mrf.mxu0
          %v4946 = vand.u32 %v4606, 4294901760
          %v4947 = vsub.f32 %v4606, %v4946
          %v4948 = vand.u32 %v4947, 4294901760
          %v4949 = vsub.f32 %v4947, %v4948
          %v4950 = vand.u32 %v4949, 4294901760
          %4951 = vmatprep.mubr.f32.mxu0 %v4950
          %v4952 = vand.u32 %v4605, 4294901760
          %v4953 = vsub.f32 %v4605, %v4952
          %v4954 = vand.u32 %v4953, 4294901760
          %v4955 = vsub.f32 %v4953, %v4954
          %v4956 = vand.u32 %v4955, 4294901760
          %4957 = vmatmul.mubr.f32.gmra.mxu0 %v4956
          %v4958 = vpop.f32.mrf.mxu0
          %v4959 = vadd.f32 0.0, %v4958
          %v4960 = vpop.f32.mrf.mxu0
          %v4961 = vand.u32 %v4608, 4294901760
          %v4962 = vsub.f32 %v4608, %v4961
          %v4963 = vand.u32 %v4962, 4294901760
          %v4964 = vsub.f32 %v4962, %v4963
          %v4965 = vand.u32 %v4964, 4294901760
          %4966 = vmatprep.mubr.f32.mxu0 %v4965
          %v4967 = vand.u32 %v4607, 4294901760
          %v4968 = vsub.f32 %v4607, %v4967
          %v4969 = vand.u32 %v4968, 4294901760
          %v4970 = vsub.f32 %v4968, %v4969
          %v4971 = vand.u32 %v4970, 4294901760
          %4972 = vmatmul.mubr.f32.gmra.mxu0 %v4971
          %v4973 = vpop.f32.mrf.mxu0
          %v4974 = vadd.f32 0.0, %v4973
          %v4975 = vpop.f32.mrf.mxu0
          %v4976 = vand.u32 %v4610, 4294901760
          %v4977 = vsub.f32 %v4610, %v4976
          %v4978 = vand.u32 %v4977, 4294901760
          %v4979 = vsub.f32 %v4977, %v4978
          %v4980 = vand.u32 %v4979, 4294901760
          %4981 = vmatprep.mubr.f32.mxu0 %v4980
          %v4982 = vand.u32 %v4609, 4294901760
          %v4983 = vsub.f32 %v4609, %v4982
          %v4984 = vand.u32 %v4983, 4294901760
          %v4985 = vsub.f32 %v4983, %v4984
          %v4986 = vand.u32 %v4985, 4294901760
          %4987 = vmatmul.mubr.f32.gmra.mxu0 %v4986
          %v4988 = vpop.f32.mrf.mxu0
          %v4989 = vadd.f32 0.0, %v4988
          %v4990 = vpop.f32.mrf.mxu0
          %v4991 = vand.u32 %v4612, 4294901760
          %v4992 = vsub.f32 %v4612, %v4991
          %v4993 = vand.u32 %v4992, 4294901760
          %v4994 = vsub.f32 %v4992, %v4993
          %v4995 = vand.u32 %v4994, 4294901760
          %4996 = vmatprep.mubr.f32.mxu0 %v4995
          %v4997 = vand.u32 %v4611, 4294901760
          %v4998 = vsub.f32 %v4611, %v4997
          %v4999 = vand.u32 %v4998, 4294901760
          %v5000 = vsub.f32 %v4998, %v4999
          %v5001 = vand.u32 %v5000, 4294901760
          %5002 = vmatmul.mubr.f32.gmra.mxu0 %v5001
          %v5003 = vpop.f32.mrf.mxu0
          %v5004 = vadd.f32 0.0, %v5003
          %v5005 = vpop.f32.mrf.mxu0
          %v5006 = vand.u32 %v4614, 4294901760
          %v5007 = vsub.f32 %v4614, %v5006
          %v5008 = vand.u32 %v5007, 4294901760
          %v5009 = vsub.f32 %v5007, %v5008
          %v5010 = vand.u32 %v5009, 4294901760
          %5011 = vmatprep.mubr.f32.mxu0 %v5010
          %v5012 = vand.u32 %v4613, 4294901760
          %v5013 = vsub.f32 %v4613, %v5012
          %v5014 = vand.u32 %v5013, 4294901760
          %v5015 = vsub.f32 %v5013, %v5014
          %v5016 = vand.u32 %v5015, 4294901760
          %5017 = vmatmul.mubr.f32.gmra.mxu0 %v5016
          %v5018 = vpop.f32.mrf.mxu0
          %v5019 = vadd.f32 0.0, %v5018
          %v5020 = vpop.f32.mrf.mxu0
          %v5021 = vand.u32 %v4616, 4294901760
          %v5022 = vsub.f32 %v4616, %v5021
          %v5023 = vand.u32 %v5022, 4294901760
          %v5024 = vsub.f32 %v5022, %v5023
          %v5025 = vand.u32 %v5024, 4294901760
          %5026 = vmatprep.mubr.f32.mxu0 %v5025
          %v5027 = vand.u32 %v4615, 4294901760
          %v5028 = vsub.f32 %v4615, %v5027
          %v5029 = vand.u32 %v5028, 4294901760
          %v5030 = vsub.f32 %v5028, %v5029
          %v5031 = vand.u32 %v5030, 4294901760
          %5032 = vmatmul.mubr.f32.gmra.mxu0 %v5031
          %v5033 = vpop.f32.mrf.mxu0
          %v5034 = vadd.f32 0.0, %v5033
          %v5035 = vpop.f32.mrf.mxu0
          %v5036 = vand.u32 %v4618, 4294901760
          %v5037 = vsub.f32 %v4618, %v5036
          %v5038 = vand.u32 %v5037, 4294901760
          %v5039 = vsub.f32 %v5037, %v5038
          %v5040 = vand.u32 %v5039, 4294901760
          %5041 = vmatprep.mubr.f32.mxu0 %v5040
          %v5042 = vand.u32 %v4617, 4294901760
          %v5043 = vsub.f32 %v4617, %v5042
          %v5044 = vand.u32 %v5043, 4294901760
          %v5045 = vsub.f32 %v5043, %v5044
          %v5046 = vand.u32 %v5045, 4294901760
          %5047 = vmatmul.mubr.f32.gmra.mxu0 %v5046
          %v5048 = vpop.f32.mrf.mxu0
          %v5049 = vadd.f32 0.0, %v5048
          %v5050 = vpop.f32.mrf.mxu0
          %v5051 = vand.u32 %v4620, 4294901760
          %v5052 = vsub.f32 %v4620, %v5051
          %v5053 = vand.u32 %v5052, 4294901760
          %v5054 = vsub.f32 %v5052, %v5053
          %v5055 = vand.u32 %v5054, 4294901760
          %5056 = vmatprep.mubr.f32.mxu0 %v5055
          %v5057 = vand.u32 %v4619, 4294901760
          %v5058 = vsub.f32 %v4619, %v5057
          %v5059 = vand.u32 %v5058, 4294901760
          %v5060 = vsub.f32 %v5058, %v5059
          %v5061 = vand.u32 %v5060, 4294901760
          %5062 = vmatmul.mubr.f32.gmra.mxu0 %v5061
          %v5063 = vpop.f32.mrf.mxu0
          %v5064 = vadd.f32 0.0, %v5063
          %v5065 = vpop.f32.mrf.mxu0
          %v5066 = vand.u32 %v4622, 4294901760
          %v5067 = vsub.f32 %v4622, %v5066
          %v5068 = vand.u32 %v5067, 4294901760
          %v5069 = vsub.f32 %v5067, %v5068
          %v5070 = vand.u32 %v5069, 4294901760
          %5071 = vmatprep.mubr.f32.mxu0 %v5070
          %v5072 = vand.u32 %v4621, 4294901760
          %v5073 = vsub.f32 %v4621, %v5072
          %v5074 = vand.u32 %v5073, 4294901760
          %v5075 = vsub.f32 %v5073, %v5074
          %v5076 = vand.u32 %v5075, 4294901760
          %5077 = vmatmul.mubr.f32.gmra.mxu0 %v5076
          %v5078 = vpop.f32.mrf.mxu0
          %v5079 = vadd.f32 0.0, %v5078
          %v5080 = vpop.f32.mrf.mxu0
          %v5081 = vand.u32 %v4624, 4294901760
          %v5082 = vsub.f32 %v4624, %v5081
          %v5083 = vand.u32 %v5082, 4294901760
          %v5084 = vsub.f32 %v5082, %v5083
          %v5085 = vand.u32 %v5084, 4294901760
          %5086 = vmatprep.mubr.f32.mxu0 %v5085
          %v5087 = vand.u32 %v4623, 4294901760
          %v5088 = vsub.f32 %v4623, %v5087
          %v5089 = vand.u32 %v5088, 4294901760
          %v5090 = vsub.f32 %v5088, %v5089
          %v5091 = vand.u32 %v5090, 4294901760
          %5092 = vmatmul.mubr.f32.gmra.mxu0 %v5091
          %v5093 = vpop.f32.mrf.mxu0
          %v5094 = vadd.f32 0.0, %v5093
          %v5095 = vpop.f32.mrf.mxu0
          %v5096 = vand.u32 %v4626, 4294901760
          %v5097 = vsub.f32 %v4626, %v5096
          %v5098 = vand.u32 %v5097, 4294901760
          %v5099 = vsub.f32 %v5097, %v5098
          %v5100 = vand.u32 %v5099, 4294901760
          %5101 = vmatprep.mubr.f32.mxu0 %v5100
          %v5102 = vand.u32 %v4625, 4294901760
          %v5103 = vsub.f32 %v4625, %v5102
          %v5104 = vand.u32 %v5103, 4294901760
          %v5105 = vsub.f32 %v5103, %v5104
          %v5106 = vand.u32 %v5105, 4294901760
          %5107 = vmatmul.mubr.f32.gmra.mxu0 %v5106
          %v5108 = vpop.f32.mrf.mxu0
          %v5109 = vadd.f32 0.0, %v5108
          %v5110 = vpop.f32.mrf.mxu0
          %v5111 = vand.u32 %v4628, 4294901760
          %v5112 = vsub.f32 %v4628, %v5111
          %v5113 = vand.u32 %v5112, 4294901760
          %v5114 = vsub.f32 %v5112, %v5113
          %v5115 = vand.u32 %v5114, 4294901760
          %5116 = vmatprep.mubr.f32.mxu0 %v5115
          %v5117 = vand.u32 %v4627, 4294901760
          %v5118 = vsub.f32 %v4627, %v5117
          %v5119 = vand.u32 %v5118, 4294901760
          %v5120 = vsub.f32 %v5118, %v5119
          %v5121 = vand.u32 %v5120, 4294901760
          %5122 = vmatmul.mubr.f32.gmra.mxu0 %v5121
          %v5123 = vpop.f32.mrf.mxu0
          %v5124 = vadd.f32 0.0, %v5123
          %v5125 = vpop.f32.mrf.mxu0
          %v5126 = vand.u32 %v4630, 4294901760
          %v5127 = vsub.f32 %v4630, %v5126
          %v5128 = vand.u32 %v5127, 4294901760
          %v5129 = vsub.f32 %v5127, %v5128
          %v5130 = vand.u32 %v5129, 4294901760
          %5131 = vmatprep.mubr.f32.mxu0 %v5130
          %v5132 = vand.u32 %v4629, 4294901760
          %v5133 = vsub.f32 %v4629, %v5132
          %v5134 = vand.u32 %v5133, 4294901760
          %v5135 = vsub.f32 %v5133, %v5134
          %v5136 = vand.u32 %v5135, 4294901760
          %5137 = vmatmul.mubr.f32.gmra.mxu0 %v5136
          %v5138 = vpop.f32.mrf.mxu0
          %v5139 = vadd.f32 0.0, %v5138
          %v5140 = vpop.f32.mrf.mxu0
          %v5141 = vand.u32 %v4632, 4294901760
          %v5142 = vsub.f32 %v4632, %v5141
          %v5143 = vand.u32 %v5142, 4294901760
          %v5144 = vsub.f32 %v5142, %v5143
          %v5145 = vand.u32 %v5144, 4294901760
          %5146 = vmatprep.mubr.f32.mxu0 %v5145
          %v5147 = vand.u32 %v4631, 4294901760
          %v5148 = vsub.f32 %v4631, %v5147
          %v5149 = vand.u32 %v5148, 4294901760
          %v5150 = vsub.f32 %v5148, %v5149
          %v5151 = vand.u32 %v5150, 4294901760
          %5152 = vmatmul.mubr.f32.gmra.mxu0 %v5151
          %v5153 = vpop.f32.mrf.mxu0
          %v5154 = vadd.f32 0.0, %v5153
          %v5155 = vpop.f32.mrf.mxu0
          %v5156 = vand.u32 %v4634, 4294901760
          %v5157 = vsub.f32 %v4634, %v5156
          %v5158 = vand.u32 %v5157, 4294901760
          %v5159 = vsub.f32 %v5157, %v5158
          %v5160 = vand.u32 %v5159, 4294901760
          %5161 = vmatprep.mubr.f32.mxu0 %v5160
          %v5162 = vand.u32 %v4633, 4294901760
          %v5163 = vsub.f32 %v4633, %v5162
          %v5164 = vand.u32 %v5163, 4294901760
          %v5165 = vsub.f32 %v5163, %v5164
          %v5166 = vand.u32 %v5165, 4294901760
          %5167 = vmatmul.mubr.f32.gmra.mxu0 %v5166
          %v5168 = vpop.f32.mrf.mxu0
          %v5169 = vadd.f32 0.0, %v5168
          %v5170 = vpop.f32.mrf.mxu0
          %v5171 = vand.u32 %v4636, 4294901760
          %v5172 = vsub.f32 %v4636, %v5171
          %v5173 = vand.u32 %v5172, 4294901760
          %v5174 = vsub.f32 %v5172, %v5173
          %v5175 = vand.u32 %v5174, 4294901760
          %5176 = vmatprep.mubr.f32.mxu0 %v5175
          %v5177 = vand.u32 %v4635, 4294901760
          %v5178 = vsub.f32 %v4635, %v5177
          %v5179 = vand.u32 %v5178, 4294901760
          %v5180 = vsub.f32 %v5178, %v5179
          %v5181 = vand.u32 %v5180, 4294901760
          %5182 = vmatmul.mubr.f32.gmra.mxu0 %v5181
          %v5183 = vpop.f32.mrf.mxu0
          %v5184 = vadd.f32 0.0, %v5183
          %v5185 = vpop.f32.mrf.mxu0
          %v5186 = vand.u32 %v4638, 4294901760
          %v5187 = vsub.f32 %v4638, %v5186
          %v5188 = vand.u32 %v5187, 4294901760
          %v5189 = vsub.f32 %v5187, %v5188
          %v5190 = vand.u32 %v5189, 4294901760
          %5191 = vmatprep.mubr.f32.mxu0 %v5190
          %v5192 = vand.u32 %v4637, 4294901760
          %v5193 = vsub.f32 %v4637, %v5192
          %v5194 = vand.u32 %v5193, 4294901760
          %v5195 = vsub.f32 %v5193, %v5194
          %v5196 = vand.u32 %v5195, 4294901760
          %5197 = vmatmul.mubr.f32.gmra.mxu0 %v5196
          %v5198 = vpop.f32.mrf.mxu0
          %v5199 = vadd.f32 0.0, %v5198
          %v5200 = vpop.f32.mrf.mxu0
          %v5201 = vand.u32 %v4640, 4294901760
          %v5202 = vsub.f32 %v4640, %v5201
          %v5203 = vand.u32 %v5202, 4294901760
          %v5204 = vsub.f32 %v5202, %v5203
          %v5205 = vand.u32 %v5204, 4294901760
          %5206 = vmatprep.mubr.f32.mxu0 %v5205
          %v5207 = vand.u32 %v4639, 4294901760
          %v5208 = vsub.f32 %v4639, %v5207
          %v5209 = vand.u32 %v5208, 4294901760
          %v5210 = vsub.f32 %v5208, %v5209
          %v5211 = vand.u32 %v5210, 4294901760
          %5212 = vmatmul.mubr.f32.gmra.mxu0 %v5211
          %v5213 = vpop.f32.mrf.mxu0
          %v5214 = vadd.f32 0.0, %v5213
          %v5215 = vpop.f32.mrf.mxu0
          %v5216 = vand.u32 %v4642, 4294901760
          %v5217 = vsub.f32 %v4642, %v5216
          %v5218 = vand.u32 %v5217, 4294901760
          %v5219 = vsub.f32 %v5217, %v5218
          %v5220 = vand.u32 %v5219, 4294901760
          %5221 = vmatprep.mubr.f32.mxu0 %v5220
          %v5222 = vand.u32 %v4641, 4294901760
          %v5223 = vsub.f32 %v4641, %v5222
          %v5224 = vand.u32 %v5223, 4294901760
          %v5225 = vsub.f32 %v5223, %v5224
          %v5226 = vand.u32 %v5225, 4294901760
          %5227 = vmatmul.mubr.f32.gmra.mxu0 %v5226
          %v5228 = vpop.f32.mrf.mxu0
          %v5229 = vadd.f32 0.0, %v5228
          %v5230 = vpop.f32.mrf.mxu0
          %v5231 = vand.u32 %v4644, 4294901760
          %v5232 = vsub.f32 %v4644, %v5231
          %v5233 = vand.u32 %v5232, 4294901760
          %v5234 = vsub.f32 %v5232, %v5233
          %v5235 = vand.u32 %v5234, 4294901760
          %5236 = vmatprep.mubr.f32.mxu0 %v5235
          %v5237 = vand.u32 %v4643, 4294901760
          %v5238 = vsub.f32 %v4643, %v5237
          %v5239 = vand.u32 %v5238, 4294901760
          %v5240 = vsub.f32 %v5238, %v5239
          %v5241 = vand.u32 %v5240, 4294901760
          %5242 = vmatmul.mubr.f32.gmra.mxu0 %v5241
          %v5243 = vpop.f32.mrf.mxu0
          %v5244 = vadd.f32 0.0, %v5243
          %v5245 = vpop.f32.mrf.mxu0
          %v5246 = vand.u32 %v4646, 4294901760
          %v5247 = vsub.f32 %v4646, %v5246
          %v5248 = vand.u32 %v5247, 4294901760
          %v5249 = vsub.f32 %v5247, %v5248
          %v5250 = vand.u32 %v5249, 4294901760
          %5251 = vmatprep.mubr.f32.mxu0 %v5250
          %v5252 = vand.u32 %v4645, 4294901760
          %v5253 = vsub.f32 %v4645, %v5252
          %v5254 = vand.u32 %v5253, 4294901760
          %v5255 = vsub.f32 %v5253, %v5254
          %v5256 = vand.u32 %v5255, 4294901760
          %5257 = vmatmul.mubr.f32.gmra.mxu0 %v5256
          %v5258 = vpop.f32.mrf.mxu0
          %v5259 = vadd.f32 0.0, %v5258
          %v5260 = vpop.f32.mrf.mxu0
          %v5261 = vand.u32 %v4648, 4294901760
          %v5262 = vsub.f32 %v4648, %v5261
          %v5263 = vand.u32 %v5262, 4294901760
          %v5264 = vsub.f32 %v5262, %v5263
          %v5265 = vand.u32 %v5264, 4294901760
          %5266 = vmatprep.mubr.f32.mxu0 %v5265
          %v5267 = vand.u32 %v4647, 4294901760
          %v5268 = vsub.f32 %v4647, %v5267
          %v5269 = vand.u32 %v5268, 4294901760
          %v5270 = vsub.f32 %v5268, %v5269
          %v5271 = vand.u32 %v5270, 4294901760
          %5272 = vmatmul.mubr.f32.gmra.mxu0 %v5271
          %v5273 = vpop.f32.mrf.mxu0
          %v5274 = vadd.f32 0.0, %v5273
          %v5275 = vpop.f32.mrf.mxu0
          %v5276 = vand.u32 %v4650, 4294901760
          %v5277 = vsub.f32 %v4650, %v5276
          %v5278 = vand.u32 %v5277, 4294901760
          %v5279 = vsub.f32 %v5277, %v5278
          %v5280 = vand.u32 %v5279, 4294901760
          %5281 = vmatprep.mubr.f32.mxu0 %v5280
          %v5282 = vand.u32 %v4649, 4294901760
          %v5283 = vsub.f32 %v4649, %v5282
          %v5284 = vand.u32 %v5283, 4294901760
          %v5285 = vsub.f32 %v5283, %v5284
          %v5286 = vand.u32 %v5285, 4294901760
          %5287 = vmatmul.mubr.f32.gmra.mxu0 %v5286
          %v5288 = vpop.f32.mrf.mxu0
          %v5289 = vadd.f32 0.0, %v5288
          %v5290 = vpop.f32.mrf.mxu0
          %5291 = vdwg.mxu0
          %5292 = vmatprep.subr.mxu0 0.0
          %v5293 = vand.u32 %v4698, 4294901760
          %v5294 = vsub.f32 %v4698, %v5293
          %v5295 = vand.u32 %v5294, 4294901760
          %v5296 = vsub.f32 %v5294, %v5295
          %v5297 = vand.u32 %v5296, 4294901760
          %5298 = vmatpush1.msra.mxu0 %v5297
          %5299 = vmatprep.subr.mxu0 0.0
          %v5300 = vand.u32 %v4697, 4294901760
          %v5301 = vsub.f32 %v4697, %v5300
          %v5302 = vand.u32 %v5301, 4294901760
          %v5303 = vsub.f32 %v5301, %v5302
          %v5304 = vand.u32 %v5303, 4294901760
          %5305 = vmatpush1.msra.mxu0 %v5304
          %5306 = vmatprep.subr.mxu0 0.0
          %v5307 = vand.u32 %v4696, 4294901760
          %v5308 = vsub.f32 %v4696, %v5307
          %v5309 = vand.u32 %v5308, 4294901760
          %v5310 = vsub.f32 %v5308, %v5309
          %v5311 = vand.u32 %v5310, 4294901760
          %5312 = vmatpush1.msra.mxu0 %v5311
          %5313 = vmatprep.subr.mxu0 0.0
          %v5314 = vand.u32 %v4695, 4294901760
          %v5315 = vsub.f32 %v4695, %v5314
          %v5316 = vand.u32 %v5315, 4294901760
          %v5317 = vsub.f32 %v5315, %v5316
          %v5318 = vand.u32 %v5317, 4294901760
          %5319 = vmatpush1.msra.mxu0 %v5318
          %5320 = vmatprep.subr.mxu0 0.0
          %v5321 = vand.u32 %v4694, 4294901760
          %v5322 = vsub.f32 %v4694, %v5321
          %v5323 = vand.u32 %v5322, 4294901760
          %v5324 = vsub.f32 %v5322, %v5323
          %v5325 = vand.u32 %v5324, 4294901760
          %5326 = vmatpush1.msra.mxu0 %v5325
          %5327 = vmatprep.subr.mxu0 0.0
          %v5328 = vand.u32 %v4693, 4294901760
          %v5329 = vsub.f32 %v4693, %v5328
          %v5330 = vand.u32 %v5329, 4294901760
          %v5331 = vsub.f32 %v5329, %v5330
          %v5332 = vand.u32 %v5331, 4294901760
          %5333 = vmatpush1.msra.mxu0 %v5332
          %5334 = vmatprep.subr.mxu0 0.0
          %v5335 = vand.u32 %v4692, 4294901760
          %v5336 = vsub.f32 %v4692, %v5335
          %v5337 = vand.u32 %v5336, 4294901760
          %v5338 = vsub.f32 %v5336, %v5337
          %v5339 = vand.u32 %v5338, 4294901760
          %5340 = vmatpush1.msra.mxu0 %v5339
          %5341 = vmatprep.subr.mxu0 0.0
          %v5342 = vand.u32 %v4691, 4294901760
          %v5343 = vsub.f32 %v4691, %v5342
          %v5344 = vand.u32 %v5343, 4294901760
          %v5345 = vsub.f32 %v5343, %v5344
          %v5346 = vand.u32 %v5345, 4294901760
          %5347 = vmatpush1.msra.mxu0 %v5346
          %5348 = vmatprep.subr.mxu0 0.0
          %v5349 = vand.u32 %v4690, 4294901760
          %v5350 = vsub.f32 %v4690, %v5349
          %v5351 = vand.u32 %v5350, 4294901760
          %v5352 = vsub.f32 %v5350, %v5351
          %v5353 = vand.u32 %v5352, 4294901760
          %5354 = vmatpush1.msra.mxu0 %v5353
          %5355 = vmatprep.subr.mxu0 0.0
          %v5356 = vand.u32 %v4689, 4294901760
          %v5357 = vsub.f32 %v4689, %v5356
          %v5358 = vand.u32 %v5357, 4294901760
          %v5359 = vsub.f32 %v5357, %v5358
          %v5360 = vand.u32 %v5359, 4294901760
          %5361 = vmatpush1.msra.mxu0 %v5360
          %5362 = vmatprep.subr.mxu0 0.0
          %v5363 = vand.u32 %v4688, 4294901760
          %v5364 = vsub.f32 %v4688, %v5363
          %v5365 = vand.u32 %v5364, 4294901760
          %v5366 = vsub.f32 %v5364, %v5365
          %v5367 = vand.u32 %v5366, 4294901760
          %5368 = vmatpush1.msra.mxu0 %v5367
          %5369 = vmatprep.subr.mxu0 0.0
          %v5370 = vand.u32 %v4687, 4294901760
          %v5371 = vsub.f32 %v4687, %v5370
          %v5372 = vand.u32 %v5371, 4294901760
          %v5373 = vsub.f32 %v5371, %v5372
          %v5374 = vand.u32 %v5373, 4294901760
          %5375 = vmatpush1.msra.mxu0 %v5374
          %5376 = vmatprep.subr.mxu0 0.0
          %v5377 = vand.u32 %v4686, 4294901760
          %v5378 = vsub.f32 %v4686, %v5377
          %v5379 = vand.u32 %v5378, 4294901760
          %v5380 = vsub.f32 %v5378, %v5379
          %v5381 = vand.u32 %v5380, 4294901760
          %5382 = vmatpush1.msra.mxu0 %v5381
          %5383 = vmatprep.subr.mxu0 0.0
          %v5384 = vand.u32 %v4685, 4294901760
          %v5385 = vsub.f32 %v4685, %v5384
          %v5386 = vand.u32 %v5385, 4294901760
          %v5387 = vsub.f32 %v5385, %v5386
          %v5388 = vand.u32 %v5387, 4294901760
          %5389 = vmatpush1.msra.mxu0 %v5388
          %5390 = vmatprep.subr.mxu0 0.0
          %v5391 = vand.u32 %v4684, 4294901760
          %v5392 = vsub.f32 %v4684, %v5391
          %v5393 = vand.u32 %v5392, 4294901760
          %v5394 = vsub.f32 %v5392, %v5393
          %v5395 = vand.u32 %v5394, 4294901760
          %5396 = vmatpush1.msra.mxu0 %v5395
          %5397 = vmatprep.subr.mxu0 0.0
          %v5398 = vand.u32 %v4683, 4294901760
          %v5399 = vsub.f32 %v4683, %v5398
          %v5400 = vand.u32 %v5399, 4294901760
          %v5401 = vsub.f32 %v5399, %v5400
          %v5402 = vand.u32 %v5401, 4294901760
          %5403 = vmatpush1.msra.mxu0 %v5402
          %5404 = vmatprep.subr.mxu0 0.0
          %v5405 = vand.u32 %v4714, 4294901760
          %v5406 = vsub.f32 %v4714, %v5405
          %v5407 = vand.u32 %v5406, 4294901760
          %v5408 = vsub.f32 %v5406, %v5407
          %v5409 = vand.u32 %v5408, 4294901760
          %5410 = vmatpush2.msra.mxu0 %v5409
          %5411 = vmatprep.subr.mxu0 0.0
          %v5412 = vand.u32 %v4713, 4294901760
          %v5413 = vsub.f32 %v4713, %v5412
          %v5414 = vand.u32 %v5413, 4294901760
          %v5415 = vsub.f32 %v5413, %v5414
          %v5416 = vand.u32 %v5415, 4294901760
          %5417 = vmatpush2.msra.mxu0 %v5416
          %5418 = vmatprep.subr.mxu0 0.0
          %v5419 = vand.u32 %v4712, 4294901760
          %v5420 = vsub.f32 %v4712, %v5419
          %v5421 = vand.u32 %v5420, 4294901760
          %v5422 = vsub.f32 %v5420, %v5421
          %v5423 = vand.u32 %v5422, 4294901760
          %5424 = vmatpush2.msra.mxu0 %v5423
          %5425 = vmatprep.subr.mxu0 0.0
          %v5426 = vand.u32 %v4711, 4294901760
          %v5427 = vsub.f32 %v4711, %v5426
          %v5428 = vand.u32 %v5427, 4294901760
          %v5429 = vsub.f32 %v5427, %v5428
          %v5430 = vand.u32 %v5429, 4294901760
          %5431 = vmatpush2.msra.mxu0 %v5430
          %5432 = vmatprep.subr.mxu0 0.0
          %v5433 = vand.u32 %v4710, 4294901760
          %v5434 = vsub.f32 %v4710, %v5433
          %v5435 = vand.u32 %v5434, 4294901760
          %v5436 = vsub.f32 %v5434, %v5435
          %v5437 = vand.u32 %v5436, 4294901760
          %5438 = vmatpush2.msra.mxu0 %v5437
          %5439 = vmatprep.subr.mxu0 0.0
          %v5440 = vand.u32 %v4709, 4294901760
          %v5441 = vsub.f32 %v4709, %v5440
          %v5442 = vand.u32 %v5441, 4294901760
          %v5443 = vsub.f32 %v5441, %v5442
          %v5444 = vand.u32 %v5443, 4294901760
          %5445 = vmatpush2.msra.mxu0 %v5444
          %5446 = vmatprep.subr.mxu0 0.0
          %v5447 = vand.u32 %v4708, 4294901760
          %v5448 = vsub.f32 %v4708, %v5447
          %v5449 = vand.u32 %v5448, 4294901760
          %v5450 = vsub.f32 %v5448, %v5449
          %v5451 = vand.u32 %v5450, 4294901760
          %5452 = vmatpush2.msra.mxu0 %v5451
          %5453 = vmatprep.subr.mxu0 0.0
          %v5454 = vand.u32 %v4707, 4294901760
          %v5455 = vsub.f32 %v4707, %v5454
          %v5456 = vand.u32 %v5455, 4294901760
          %v5457 = vsub.f32 %v5455, %v5456
          %v5458 = vand.u32 %v5457, 4294901760
          %5459 = vmatpush2.msra.mxu0 %v5458
          %5460 = vmatprep.subr.mxu0 0.0
          %v5461 = vand.u32 %v4706, 4294901760
          %v5462 = vsub.f32 %v4706, %v5461
          %v5463 = vand.u32 %v5462, 4294901760
          %v5464 = vsub.f32 %v5462, %v5463
          %v5465 = vand.u32 %v5464, 4294901760
          %5466 = vmatpush2.msra.mxu0 %v5465
          %5467 = vmatprep.subr.mxu0 0.0
          %v5468 = vand.u32 %v4705, 4294901760
          %v5469 = vsub.f32 %v4705, %v5468
          %v5470 = vand.u32 %v5469, 4294901760
          %v5471 = vsub.f32 %v5469, %v5470
          %v5472 = vand.u32 %v5471, 4294901760
          %5473 = vmatpush2.msra.mxu0 %v5472
          %5474 = vmatprep.subr.mxu0 0.0
          %v5475 = vand.u32 %v4704, 4294901760
          %v5476 = vsub.f32 %v4704, %v5475
          %v5477 = vand.u32 %v5476, 4294901760
          %v5478 = vsub.f32 %v5476, %v5477
          %v5479 = vand.u32 %v5478, 4294901760
          %5480 = vmatpush2.msra.mxu0 %v5479
          %5481 = vmatprep.subr.mxu0 0.0
          %v5482 = vand.u32 %v4703, 4294901760
          %v5483 = vsub.f32 %v4703, %v5482
          %v5484 = vand.u32 %v5483, 4294901760
          %v5485 = vsub.f32 %v5483, %v5484
          %v5486 = vand.u32 %v5485, 4294901760
          %5487 = vmatpush2.msra.mxu0 %v5486
          %5488 = vmatprep.subr.mxu0 0.0
          %v5489 = vand.u32 %v4702, 4294901760
          %v5490 = vsub.f32 %v4702, %v5489
          %v5491 = vand.u32 %v5490, 4294901760
          %v5492 = vsub.f32 %v5490, %v5491
          %v5493 = vand.u32 %v5492, 4294901760
          %5494 = vmatpush2.msra.mxu0 %v5493
          %5495 = vmatprep.subr.mxu0 0.0
          %v5496 = vand.u32 %v4701, 4294901760
          %v5497 = vsub.f32 %v4701, %v5496
          %v5498 = vand.u32 %v5497, 4294901760
          %v5499 = vsub.f32 %v5497, %v5498
          %v5500 = vand.u32 %v5499, 4294901760
          %5501 = vmatpush2.msra.mxu0 %v5500
          %5502 = vmatprep.subr.mxu0 0.0
          %v5503 = vand.u32 %v4700, 4294901760
          %v5504 = vsub.f32 %v4700, %v5503
          %v5505 = vand.u32 %v5504, 4294901760
          %v5506 = vsub.f32 %v5504, %v5505
          %v5507 = vand.u32 %v5506, 4294901760
          %5508 = vmatpush2.msra.mxu0 %v5507
          %5509 = vmatprep.subr.mxu0 0.0
          %v5510 = vand.u32 %v4699, 4294901760
          %v5511 = vsub.f32 %v4699, %v5510
          %v5512 = vand.u32 %v5511, 4294901760
          %v5513 = vsub.f32 %v5511, %v5512
          %v5514 = vand.u32 %v5513, 4294901760
          %5515 = vmatpush2.msra.mxu0 %v5514
          %v5516 = vand.u32 %v4588, 4294901760
          %5517 = vmatprep.mubr.f32.mxu0 %v5516
          %v5518 = vand.u32 %v4587, 4294901760
          %5519 = vmatmul.mubr.f32.gmra.mxu0 %v5518
          %v5520 = vpop.f32.mrf.mxu0
          %v5521 = vadd.f32 %v4824, %v5520
          %v5522 = vpop.f32.mrf.mxu0
          %v5523 = vand.u32 %v4590, 4294901760
          %5524 = vmatprep.mubr.f32.mxu0 %v5523
          %v5525 = vand.u32 %v4589, 4294901760
          %5526 = vmatmul.mubr.f32.gmra.mxu0 %v5525
          %v5527 = vpop.f32.mrf.mxu0
          %v5528 = vadd.f32 %v4839, %v5527
          %v5529 = vpop.f32.mrf.mxu0
          %v5530 = vand.u32 %v4592, 4294901760
          %5531 = vmatprep.mubr.f32.mxu0 %v5530
          %v5532 = vand.u32 %v4591, 4294901760
          %5533 = vmatmul.mubr.f32.gmra.mxu0 %v5532
          %v5534 = vpop.f32.mrf.mxu0
          %v5535 = vadd.f32 %v4854, %v5534
          %v5536 = vpop.f32.mrf.mxu0
          %v5537 = vand.u32 %v4594, 4294901760
          %5538 = vmatprep.mubr.f32.mxu0 %v5537
          %v5539 = vand.u32 %v4593, 4294901760
          %5540 = vmatmul.mubr.f32.gmra.mxu0 %v5539
          %v5541 = vpop.f32.mrf.mxu0
          %v5542 = vadd.f32 %v4869, %v5541
          %v5543 = vpop.f32.mrf.mxu0
          %v5544 = vand.u32 %v4596, 4294901760
          %5545 = vmatprep.mubr.f32.mxu0 %v5544
          %v5546 = vand.u32 %v4595, 4294901760
          %5547 = vmatmul.mubr.f32.gmra.mxu0 %v5546
          %v5548 = vpop.f32.mrf.mxu0
          %v5549 = vadd.f32 %v4884, %v5548
          %v5550 = vpop.f32.mrf.mxu0
          %v5551 = vand.u32 %v4598, 4294901760
          %5552 = vmatprep.mubr.f32.mxu0 %v5551
          %v5553 = vand.u32 %v4597, 4294901760
          %5554 = vmatmul.mubr.f32.gmra.mxu0 %v5553
          %v5555 = vpop.f32.mrf.mxu0
          %v5556 = vadd.f32 %v4899, %v5555
          %v5557 = vpop.f32.mrf.mxu0
          %v5558 = vand.u32 %v4600, 4294901760
          %5559 = vmatprep.mubr.f32.mxu0 %v5558
          %v5560 = vand.u32 %v4599, 4294901760
          %5561 = vmatmul.mubr.f32.gmra.mxu0 %v5560
          %v5562 = vpop.f32.mrf.mxu0
          %v5563 = vadd.f32 %v4914, %v5562
          %v5564 = vpop.f32.mrf.mxu0
          %v5565 = vand.u32 %v4602, 4294901760
          %5566 = vmatprep.mubr.f32.mxu0 %v5565
          %v5567 = vand.u32 %v4601, 4294901760
          %5568 = vmatmul.mubr.f32.gmra.mxu0 %v5567
          %v5569 = vpop.f32.mrf.mxu0
          %v5570 = vadd.f32 %v4929, %v5569
          %v5571 = vpop.f32.mrf.mxu0
          %v5572 = vand.u32 %v4604, 4294901760
          %5573 = vmatprep.mubr.f32.mxu0 %v5572
          %v5574 = vand.u32 %v4603, 4294901760
          %5575 = vmatmul.mubr.f32.gmra.mxu0 %v5574
          %v5576 = vpop.f32.mrf.mxu0
          %v5577 = vadd.f32 %v4944, %v5576
          %v5578 = vpop.f32.mrf.mxu0
          %v5579 = vand.u32 %v4606, 4294901760
          %5580 = vmatprep.mubr.f32.mxu0 %v5579
          %v5581 = vand.u32 %v4605, 4294901760
          %5582 = vmatmul.mubr.f32.gmra.mxu0 %v5581
          %v5583 = vpop.f32.mrf.mxu0
          %v5584 = vadd.f32 %v4959, %v5583
          %v5585 = vpop.f32.mrf.mxu0
          %v5586 = vand.u32 %v4608, 4294901760
          %5587 = vmatprep.mubr.f32.mxu0 %v5586
          %v5588 = vand.u32 %v4607, 4294901760
          %5589 = vmatmul.mubr.f32.gmra.mxu0 %v5588
          %v5590 = vpop.f32.mrf.mxu0
          %v5591 = vadd.f32 %v4974, %v5590
          %v5592 = vpop.f32.mrf.mxu0
          %v5593 = vand.u32 %v4610, 4294901760
          %5594 = vmatprep.mubr.f32.mxu0 %v5593
          %v5595 = vand.u32 %v4609, 4294901760
          %5596 = vmatmul.mubr.f32.gmra.mxu0 %v5595
          %v5597 = vpop.f32.mrf.mxu0
          %v5598 = vadd.f32 %v4989, %v5597
          %v5599 = vpop.f32.mrf.mxu0
          %v5600 = vand.u32 %v4612, 4294901760
          %5601 = vmatprep.mubr.f32.mxu0 %v5600
          %v5602 = vand.u32 %v4611, 4294901760
          %5603 = vmatmul.mubr.f32.gmra.mxu0 %v5602
          %v5604 = vpop.f32.mrf.mxu0
          %v5605 = vadd.f32 %v5004, %v5604
          %v5606 = vpop.f32.mrf.mxu0
          %v5607 = vand.u32 %v4614, 4294901760
          %5608 = vmatprep.mubr.f32.mxu0 %v5607
          %v5609 = vand.u32 %v4613, 4294901760
          %5610 = vmatmul.mubr.f32.gmra.mxu0 %v5609
          %v5611 = vpop.f32.mrf.mxu0
          %v5612 = vadd.f32 %v5019, %v5611
          %v5613 = vpop.f32.mrf.mxu0
          %v5614 = vand.u32 %v4616, 4294901760
          %5615 = vmatprep.mubr.f32.mxu0 %v5614
          %v5616 = vand.u32 %v4615, 4294901760
          %5617 = vmatmul.mubr.f32.gmra.mxu0 %v5616
          %v5618 = vpop.f32.mrf.mxu0
          %v5619 = vadd.f32 %v5034, %v5618
          %v5620 = vpop.f32.mrf.mxu0
          %v5621 = vand.u32 %v4618, 4294901760
          %5622 = vmatprep.mubr.f32.mxu0 %v5621
          %v5623 = vand.u32 %v4617, 4294901760
          %5624 = vmatmul.mubr.f32.gmra.mxu0 %v5623
          %v5625 = vpop.f32.mrf.mxu0
          %v5626 = vadd.f32 %v5049, %v5625
          %v5627 = vpop.f32.mrf.mxu0
          %v5628 = vand.u32 %v4620, 4294901760
          %5629 = vmatprep.mubr.f32.mxu0 %v5628
          %v5630 = vand.u32 %v4619, 4294901760
          %5631 = vmatmul.mubr.f32.gmra.mxu0 %v5630
          %v5632 = vpop.f32.mrf.mxu0
          %v5633 = vadd.f32 %v5064, %v5632
          %v5634 = vpop.f32.mrf.mxu0
          %v5635 = vand.u32 %v4622, 4294901760
          %5636 = vmatprep.mubr.f32.mxu0 %v5635
          %v5637 = vand.u32 %v4621, 4294901760
          %5638 = vmatmul.mubr.f32.gmra.mxu0 %v5637
          %v5639 = vpop.f32.mrf.mxu0
          %v5640 = vadd.f32 %v5079, %v5639
          %v5641 = vpop.f32.mrf.mxu0
          %v5642 = vand.u32 %v4624, 4294901760
          %5643 = vmatprep.mubr.f32.mxu0 %v5642
          %v5644 = vand.u32 %v4623, 4294901760
          %5645 = vmatmul.mubr.f32.gmra.mxu0 %v5644
          %v5646 = vpop.f32.mrf.mxu0
          %v5647 = vadd.f32 %v5094, %v5646
          %v5648 = vpop.f32.mrf.mxu0
          %v5649 = vand.u32 %v4626, 4294901760
          %5650 = vmatprep.mubr.f32.mxu0 %v5649
          %v5651 = vand.u32 %v4625, 4294901760
          %5652 = vmatmul.mubr.f32.gmra.mxu0 %v5651
          %v5653 = vpop.f32.mrf.mxu0
          %v5654 = vadd.f32 %v5109, %v5653
          %v5655 = vpop.f32.mrf.mxu0
          %v5656 = vand.u32 %v4628, 4294901760
          %5657 = vmatprep.mubr.f32.mxu0 %v5656
          %v5658 = vand.u32 %v4627, 4294901760
          %5659 = vmatmul.mubr.f32.gmra.mxu0 %v5658
          %v5660 = vpop.f32.mrf.mxu0
          %v5661 = vadd.f32 %v5124, %v5660
          %v5662 = vpop.f32.mrf.mxu0
          %v5663 = vand.u32 %v4630, 4294901760
          %5664 = vmatprep.mubr.f32.mxu0 %v5663
          %v5665 = vand.u32 %v4629, 4294901760
          %5666 = vmatmul.mubr.f32.gmra.mxu0 %v5665
          %v5667 = vpop.f32.mrf.mxu0
          %v5668 = vadd.f32 %v5139, %v5667
          %v5669 = vpop.f32.mrf.mxu0
          %v5670 = vand.u32 %v4632, 4294901760
          %5671 = vmatprep.mubr.f32.mxu0 %v5670
          %v5672 = vand.u32 %v4631, 4294901760
          %5673 = vmatmul.mubr.f32.gmra.mxu0 %v5672
          %v5674 = vpop.f32.mrf.mxu0
          %v5675 = vadd.f32 %v5154, %v5674
          %v5676 = vpop.f32.mrf.mxu0
          %v5677 = vand.u32 %v4634, 4294901760
          %5678 = vmatprep.mubr.f32.mxu0 %v5677
          %v5679 = vand.u32 %v4633, 4294901760
          %5680 = vmatmul.mubr.f32.gmra.mxu0 %v5679
          %v5681 = vpop.f32.mrf.mxu0
          %v5682 = vadd.f32 %v5169, %v5681
          %v5683 = vpop.f32.mrf.mxu0
          %v5684 = vand.u32 %v4636, 4294901760
          %5685 = vmatprep.mubr.f32.mxu0 %v5684
          %v5686 = vand.u32 %v4635, 4294901760
          %5687 = vmatmul.mubr.f32.gmra.mxu0 %v5686
          %v5688 = vpop.f32.mrf.mxu0
          %v5689 = vadd.f32 %v5184, %v5688
          %v5690 = vpop.f32.mrf.mxu0
          %v5691 = vand.u32 %v4638, 4294901760
          %5692 = vmatprep.mubr.f32.mxu0 %v5691
          %v5693 = vand.u32 %v4637, 4294901760
          %5694 = vmatmul.mubr.f32.gmra.mxu0 %v5693
          %v5695 = vpop.f32.mrf.mxu0
          %v5696 = vadd.f32 %v5199, %v5695
          %v5697 = vpop.f32.mrf.mxu0
          %v5698 = vand.u32 %v4640, 4294901760
          %5699 = vmatprep.mubr.f32.mxu0 %v5698
          %v5700 = vand.u32 %v4639, 4294901760
          %5701 = vmatmul.mubr.f32.gmra.mxu0 %v5700
          %v5702 = vpop.f32.mrf.mxu0
          %v5703 = vadd.f32 %v5214, %v5702
          %v5704 = vpop.f32.mrf.mxu0
          %v5705 = vand.u32 %v4642, 4294901760
          %5706 = vmatprep.mubr.f32.mxu0 %v5705
          %v5707 = vand.u32 %v4641, 4294901760
          %5708 = vmatmul.mubr.f32.gmra.mxu0 %v5707
          %v5709 = vpop.f32.mrf.mxu0
          %v5710 = vadd.f32 %v5229, %v5709
          %v5711 = vpop.f32.mrf.mxu0
          %v5712 = vand.u32 %v4644, 4294901760
          %5713 = vmatprep.mubr.f32.mxu0 %v5712
          %v5714 = vand.u32 %v4643, 4294901760
          %5715 = vmatmul.mubr.f32.gmra.mxu0 %v5714
          %v5716 = vpop.f32.mrf.mxu0
          %v5717 = vadd.f32 %v5244, %v5716
          %v5718 = vpop.f32.mrf.mxu0
          %v5719 = vand.u32 %v4646, 4294901760
          %5720 = vmatprep.mubr.f32.mxu0 %v5719
          %v5721 = vand.u32 %v4645, 4294901760
          %5722 = vmatmul.mubr.f32.gmra.mxu0 %v5721
          %v5723 = vpop.f32.mrf.mxu0
          %v5724 = vadd.f32 %v5259, %v5723
          %v5725 = vpop.f32.mrf.mxu0
          %v5726 = vand.u32 %v4648, 4294901760
          %5727 = vmatprep.mubr.f32.mxu0 %v5726
          %v5728 = vand.u32 %v4647, 4294901760
          %5729 = vmatmul.mubr.f32.gmra.mxu0 %v5728
          %v5730 = vpop.f32.mrf.mxu0
          %v5731 = vadd.f32 %v5274, %v5730
          %v5732 = vpop.f32.mrf.mxu0
          %v5733 = vand.u32 %v4650, 4294901760
          %5734 = vmatprep.mubr.f32.mxu0 %v5733
          %v5735 = vand.u32 %v4649, 4294901760
          %5736 = vmatmul.mubr.f32.gmra.mxu0 %v5735
          %v5737 = vpop.f32.mrf.mxu0
          %v5738 = vadd.f32 %v5289, %v5737
          %v5739 = vpop.f32.mrf.mxu0
          %5740 = vdwg.mxu0
          %5741 = vmatprep.subr.mxu0 0.0
          %v5742 = vand.u32 %v4698, 4294901760
          %v5743 = vsub.f32 %v4698, %v5742
          %5744 = vmatpush1.msra.mxu0 %v5743
          %5745 = vmatprep.subr.mxu0 0.0
          %v5746 = vand.u32 %v4697, 4294901760
          %v5747 = vsub.f32 %v4697, %v5746
          %5748 = vmatpush1.msra.mxu0 %v5747
          %5749 = vmatprep.subr.mxu0 0.0
          %v5750 = vand.u32 %v4696, 4294901760
          %v5751 = vsub.f32 %v4696, %v5750
          %5752 = vmatpush1.msra.mxu0 %v5751
          %5753 = vmatprep.subr.mxu0 0.0
          %v5754 = vand.u32 %v4695, 4294901760
          %v5755 = vsub.f32 %v4695, %v5754
          %5756 = vmatpush1.msra.mxu0 %v5755
          %5757 = vmatprep.subr.mxu0 0.0
          %v5758 = vand.u32 %v4694, 4294901760
          %v5759 = vsub.f32 %v4694, %v5758
          %5760 = vmatpush1.msra.mxu0 %v5759
          %5761 = vmatprep.subr.mxu0 0.0
          %v5762 = vand.u32 %v4693, 4294901760
          %v5763 = vsub.f32 %v4693, %v5762
          %5764 = vmatpush1.msra.mxu0 %v5763
          %5765 = vmatprep.subr.mxu0 0.0
          %v5766 = vand.u32 %v4692, 4294901760
          %v5767 = vsub.f32 %v4692, %v5766
          %5768 = vmatpush1.msra.mxu0 %v5767
          %5769 = vmatprep.subr.mxu0 0.0
          %v5770 = vand.u32 %v4691, 4294901760
          %v5771 = vsub.f32 %v4691, %v5770
          %5772 = vmatpush1.msra.mxu0 %v5771
          %5773 = vmatprep.subr.mxu0 0.0
          %v5774 = vand.u32 %v4690, 4294901760
          %v5775 = vsub.f32 %v4690, %v5774
          %5776 = vmatpush1.msra.mxu0 %v5775
          %5777 = vmatprep.subr.mxu0 0.0
          %v5778 = vand.u32 %v4689, 4294901760
          %v5779 = vsub.f32 %v4689, %v5778
          %5780 = vmatpush1.msra.mxu0 %v5779
          %5781 = vmatprep.subr.mxu0 0.0
          %v5782 = vand.u32 %v4688, 4294901760
          %v5783 = vsub.f32 %v4688, %v5782
          %5784 = vmatpush1.msra.mxu0 %v5783
          %5785 = vmatprep.subr.mxu0 0.0
          %v5786 = vand.u32 %v4687, 4294901760
          %v5787 = vsub.f32 %v4687, %v5786
          %5788 = vmatpush1.msra.mxu0 %v5787
          %5789 = vmatprep.subr.mxu0 0.0
          %v5790 = vand.u32 %v4686, 4294901760
          %v5791 = vsub.f32 %v4686, %v5790
          %5792 = vmatpush1.msra.mxu0 %v5791
          %5793 = vmatprep.subr.mxu0 0.0
          %v5794 = vand.u32 %v4685, 4294901760
          %v5795 = vsub.f32 %v4685, %v5794
          %5796 = vmatpush1.msra.mxu0 %v5795
          %5797 = vmatprep.subr.mxu0 0.0
          %v5798 = vand.u32 %v4684, 4294901760
          %v5799 = vsub.f32 %v4684, %v5798
          %5800 = vmatpush1.msra.mxu0 %v5799
          %5801 = vmatprep.subr.mxu0 0.0
          %v5802 = vand.u32 %v4683, 4294901760
          %v5803 = vsub.f32 %v4683, %v5802
          %5804 = vmatpush1.msra.mxu0 %v5803
          %5805 = vmatprep.subr.mxu0 0.0
          %v5806 = vand.u32 %v4714, 4294901760
          %v5807 = vsub.f32 %v4714, %v5806
          %5808 = vmatpush2.msra.mxu0 %v5807
          %5809 = vmatprep.subr.mxu0 0.0
          %v5810 = vand.u32 %v4713, 4294901760
          %v5811 = vsub.f32 %v4713, %v5810
          %5812 = vmatpush2.msra.mxu0 %v5811
          %5813 = vmatprep.subr.mxu0 0.0
          %v5814 = vand.u32 %v4712, 4294901760
          %v5815 = vsub.f32 %v4712, %v5814
          %5816 = vmatpush2.msra.mxu0 %v5815
          %5817 = vmatprep.subr.mxu0 0.0
          %v5818 = vand.u32 %v4711, 4294901760
          %v5819 = vsub.f32 %v4711, %v5818
          %5820 = vmatpush2.msra.mxu0 %v5819
          %5821 = vmatprep.subr.mxu0 0.0
          %v5822 = vand.u32 %v4710, 4294901760
          %v5823 = vsub.f32 %v4710, %v5822
          %5824 = vmatpush2.msra.mxu0 %v5823
          %5825 = vmatprep.subr.mxu0 0.0
          %v5826 = vand.u32 %v4709, 4294901760
          %v5827 = vsub.f32 %v4709, %v5826
          %5828 = vmatpush2.msra.mxu0 %v5827
          %5829 = vmatprep.subr.mxu0 0.0
          %v5830 = vand.u32 %v4708, 4294901760
          %v5831 = vsub.f32 %v4708, %v5830
          %5832 = vmatpush2.msra.mxu0 %v5831
          %5833 = vmatprep.subr.mxu0 0.0
          %v5834 = vand.u32 %v4707, 4294901760
          %v5835 = vsub.f32 %v4707, %v5834
          %5836 = vmatpush2.msra.mxu0 %v5835
          %5837 = vmatprep.subr.mxu0 0.0
          %v5838 = vand.u32 %v4706, 4294901760
          %v5839 = vsub.f32 %v4706, %v5838
          %5840 = vmatpush2.msra.mxu0 %v5839
          %5841 = vmatprep.subr.mxu0 0.0
          %v5842 = vand.u32 %v4705, 4294901760
          %v5843 = vsub.f32 %v4705, %v5842
          %5844 = vmatpush2.msra.mxu0 %v5843
          %5845 = vmatprep.subr.mxu0 0.0
          %v5846 = vand.u32 %v4704, 4294901760
          %v5847 = vsub.f32 %v4704, %v5846
          %5848 = vmatpush2.msra.mxu0 %v5847
          %5849 = vmatprep.subr.mxu0 0.0
          %v5850 = vand.u32 %v4703, 4294901760
          %v5851 = vsub.f32 %v4703, %v5850
          %5852 = vmatpush2.msra.mxu0 %v5851
          %5853 = vmatprep.subr.mxu0 0.0
          %v5854 = vand.u32 %v4702, 4294901760
          %v5855 = vsub.f32 %v4702, %v5854
          %5856 = vmatpush2.msra.mxu0 %v5855
          %5857 = vmatprep.subr.mxu0 0.0
          %v5858 = vand.u32 %v4701, 4294901760
          %v5859 = vsub.f32 %v4701, %v5858
          %5860 = vmatpush2.msra.mxu0 %v5859
          %5861 = vmatprep.subr.mxu0 0.0
          %v5862 = vand.u32 %v4700, 4294901760
          %v5863 = vsub.f32 %v4700, %v5862
          %5864 = vmatpush2.msra.mxu0 %v5863
          %5865 = vmatprep.subr.mxu0 0.0
          %v5866 = vand.u32 %v4699, 4294901760
          %v5867 = vsub.f32 %v4699, %v5866
          %5868 = vmatpush2.msra.mxu0 %v5867
          %v5869 = vand.u32 %v4588, 4294901760
          %v5870 = vsub.f32 %v4588, %v5869
          %5871 = vmatprep.mubr.f32.mxu0 %v5870
          %v5872 = vand.u32 %v4587, 4294901760
          %v5873 = vsub.f32 %v4587, %v5872
          %5874 = vmatmul.mubr.f32.gmra.mxu0 %v5873
          %v5875 = vpop.f32.mrf.mxu0
          %v5876 = vadd.f32 %v5521, %v5875
          %v5877 = vpop.f32.mrf.mxu0
          %v5878 = vand.u32 %v4590, 4294901760
          %v5879 = vsub.f32 %v4590, %v5878
          %5880 = vmatprep.mubr.f32.mxu0 %v5879
          %v5881 = vand.u32 %v4589, 4294901760
          %v5882 = vsub.f32 %v4589, %v5881
          %5883 = vmatmul.mubr.f32.gmra.mxu0 %v5882
          %v5884 = vpop.f32.mrf.mxu0
          %v5885 = vadd.f32 %v5528, %v5884
          %v5886 = vpop.f32.mrf.mxu0
          %v5887 = vand.u32 %v4592, 4294901760
          %v5888 = vsub.f32 %v4592, %v5887
          %5889 = vmatprep.mubr.f32.mxu0 %v5888
          %v5890 = vand.u32 %v4591, 4294901760
          %v5891 = vsub.f32 %v4591, %v5890
          %5892 = vmatmul.mubr.f32.gmra.mxu0 %v5891
          %v5893 = vpop.f32.mrf.mxu0
          %v5894 = vadd.f32 %v5535, %v5893
          %v5895 = vpop.f32.mrf.mxu0
          %v5896 = vand.u32 %v4594, 4294901760
          %v5897 = vsub.f32 %v4594, %v5896
          %5898 = vmatprep.mubr.f32.mxu0 %v5897
          %v5899 = vand.u32 %v4593, 4294901760
          %v5900 = vsub.f32 %v4593, %v5899
          %5901 = vmatmul.mubr.f32.gmra.mxu0 %v5900
          %v5902 = vpop.f32.mrf.mxu0
          %v5903 = vadd.f32 %v5542, %v5902
          %v5904 = vpop.f32.mrf.mxu0
          %v5905 = vand.u32 %v4596, 4294901760
          %v5906 = vsub.f32 %v4596, %v5905
          %5907 = vmatprep.mubr.f32.mxu0 %v5906
          %v5908 = vand.u32 %v4595, 4294901760
          %v5909 = vsub.f32 %v4595, %v5908
          %5910 = vmatmul.mubr.f32.gmra.mxu0 %v5909
          %v5911 = vpop.f32.mrf.mxu0
          %v5912 = vadd.f32 %v5549, %v5911
          %v5913 = vpop.f32.mrf.mxu0
          %v5914 = vand.u32 %v4598, 4294901760
          %v5915 = vsub.f32 %v4598, %v5914
          %5916 = vmatprep.mubr.f32.mxu0 %v5915
          %v5917 = vand.u32 %v4597, 4294901760
          %v5918 = vsub.f32 %v4597, %v5917
          %5919 = vmatmul.mubr.f32.gmra.mxu0 %v5918
          %v5920 = vpop.f32.mrf.mxu0
          %v5921 = vadd.f32 %v5556, %v5920
          %v5922 = vpop.f32.mrf.mxu0
          %v5923 = vand.u32 %v4600, 4294901760
          %v5924 = vsub.f32 %v4600, %v5923
          %5925 = vmatprep.mubr.f32.mxu0 %v5924
          %v5926 = vand.u32 %v4599, 4294901760
          %v5927 = vsub.f32 %v4599, %v5926
          %5928 = vmatmul.mubr.f32.gmra.mxu0 %v5927
          %v5929 = vpop.f32.mrf.mxu0
          %v5930 = vadd.f32 %v5563, %v5929
          %v5931 = vpop.f32.mrf.mxu0
          %v5932 = vand.u32 %v4602, 4294901760
          %v5933 = vsub.f32 %v4602, %v5932
          %5934 = vmatprep.mubr.f32.mxu0 %v5933
          %v5935 = vand.u32 %v4601, 4294901760
          %v5936 = vsub.f32 %v4601, %v5935
          %5937 = vmatmul.mubr.f32.gmra.mxu0 %v5936
          %v5938 = vpop.f32.mrf.mxu0
          %v5939 = vadd.f32 %v5570, %v5938
          %v5940 = vpop.f32.mrf.mxu0
          %v5941 = vand.u32 %v4604, 4294901760
          %v5942 = vsub.f32 %v4604, %v5941
          %5943 = vmatprep.mubr.f32.mxu0 %v5942
          %v5944 = vand.u32 %v4603, 4294901760
          %v5945 = vsub.f32 %v4603, %v5944
          %5946 = vmatmul.mubr.f32.gmra.mxu0 %v5945
          %v5947 = vpop.f32.mrf.mxu0
          %v5948 = vadd.f32 %v5577, %v5947
          %v5949 = vpop.f32.mrf.mxu0
          %v5950 = vand.u32 %v4606, 4294901760
          %v5951 = vsub.f32 %v4606, %v5950
          %5952 = vmatprep.mubr.f32.mxu0 %v5951
          %v5953 = vand.u32 %v4605, 4294901760
          %v5954 = vsub.f32 %v4605, %v5953
          %5955 = vmatmul.mubr.f32.gmra.mxu0 %v5954
          %v5956 = vpop.f32.mrf.mxu0
          %v5957 = vadd.f32 %v5584, %v5956
          %v5958 = vpop.f32.mrf.mxu0
          %v5959 = vand.u32 %v4608, 4294901760
          %v5960 = vsub.f32 %v4608, %v5959
          %5961 = vmatprep.mubr.f32.mxu0 %v5960
          %v5962 = vand.u32 %v4607, 4294901760
          %v5963 = vsub.f32 %v4607, %v5962
          %5964 = vmatmul.mubr.f32.gmra.mxu0 %v5963
          %v5965 = vpop.f32.mrf.mxu0
          %v5966 = vadd.f32 %v5591, %v5965
          %v5967 = vpop.f32.mrf.mxu0
          %v5968 = vand.u32 %v4610, 4294901760
          %v5969 = vsub.f32 %v4610, %v5968
          %5970 = vmatprep.mubr.f32.mxu0 %v5969
          %v5971 = vand.u32 %v4609, 4294901760
          %v5972 = vsub.f32 %v4609, %v5971
          %5973 = vmatmul.mubr.f32.gmra.mxu0 %v5972
          %v5974 = vpop.f32.mrf.mxu0
          %v5975 = vadd.f32 %v5598, %v5974
          %v5976 = vpop.f32.mrf.mxu0
          %v5977 = vand.u32 %v4612, 4294901760
          %v5978 = vsub.f32 %v4612, %v5977
          %5979 = vmatprep.mubr.f32.mxu0 %v5978
          %v5980 = vand.u32 %v4611, 4294901760
          %v5981 = vsub.f32 %v4611, %v5980
          %5982 = vmatmul.mubr.f32.gmra.mxu0 %v5981
          %v5983 = vpop.f32.mrf.mxu0
          %v5984 = vadd.f32 %v5605, %v5983
          %v5985 = vpop.f32.mrf.mxu0
          %v5986 = vand.u32 %v4614, 4294901760
          %v5987 = vsub.f32 %v4614, %v5986
          %5988 = vmatprep.mubr.f32.mxu0 %v5987
          %v5989 = vand.u32 %v4613, 4294901760
          %v5990 = vsub.f32 %v4613, %v5989
          %5991 = vmatmul.mubr.f32.gmra.mxu0 %v5990
          %v5992 = vpop.f32.mrf.mxu0
          %v5993 = vadd.f32 %v5612, %v5992
          %v5994 = vpop.f32.mrf.mxu0
          %v5995 = vand.u32 %v4616, 4294901760
          %v5996 = vsub.f32 %v4616, %v5995
          %5997 = vmatprep.mubr.f32.mxu0 %v5996
          %v5998 = vand.u32 %v4615, 4294901760
          %v5999 = vsub.f32 %v4615, %v5998
          %6000 = vmatmul.mubr.f32.gmra.mxu0 %v5999
          %v6001 = vpop.f32.mrf.mxu0
          %v6002 = vadd.f32 %v5619, %v6001
          %v6003 = vpop.f32.mrf.mxu0
          %v6004 = vand.u32 %v4618, 4294901760
          %v6005 = vsub.f32 %v4618, %v6004
          %6006 = vmatprep.mubr.f32.mxu0 %v6005
          %v6007 = vand.u32 %v4617, 4294901760
          %v6008 = vsub.f32 %v4617, %v6007
          %6009 = vmatmul.mubr.f32.gmra.mxu0 %v6008
          %v6010 = vpop.f32.mrf.mxu0
          %v6011 = vadd.f32 %v5626, %v6010
          %v6012 = vpop.f32.mrf.mxu0
          %v6013 = vand.u32 %v4620, 4294901760
          %v6014 = vsub.f32 %v4620, %v6013
          %6015 = vmatprep.mubr.f32.mxu0 %v6014
          %v6016 = vand.u32 %v4619, 4294901760
          %v6017 = vsub.f32 %v4619, %v6016
          %6018 = vmatmul.mubr.f32.gmra.mxu0 %v6017
          %v6019 = vpop.f32.mrf.mxu0
          %v6020 = vadd.f32 %v5633, %v6019
          %v6021 = vpop.f32.mrf.mxu0
          %v6022 = vand.u32 %v4622, 4294901760
          %v6023 = vsub.f32 %v4622, %v6022
          %6024 = vmatprep.mubr.f32.mxu0 %v6023
          %v6025 = vand.u32 %v4621, 4294901760
          %v6026 = vsub.f32 %v4621, %v6025
          %6027 = vmatmul.mubr.f32.gmra.mxu0 %v6026
          %v6028 = vpop.f32.mrf.mxu0
          %v6029 = vadd.f32 %v5640, %v6028
          %v6030 = vpop.f32.mrf.mxu0
          %v6031 = vand.u32 %v4624, 4294901760
          %v6032 = vsub.f32 %v4624, %v6031
          %6033 = vmatprep.mubr.f32.mxu0 %v6032
          %v6034 = vand.u32 %v4623, 4294901760
          %v6035 = vsub.f32 %v4623, %v6034
          %6036 = vmatmul.mubr.f32.gmra.mxu0 %v6035
          %v6037 = vpop.f32.mrf.mxu0
          %v6038 = vadd.f32 %v5647, %v6037
          %v6039 = vpop.f32.mrf.mxu0
          %v6040 = vand.u32 %v4626, 4294901760
          %v6041 = vsub.f32 %v4626, %v6040
          %6042 = vmatprep.mubr.f32.mxu0 %v6041
          %v6043 = vand.u32 %v4625, 4294901760
          %v6044 = vsub.f32 %v4625, %v6043
          %6045 = vmatmul.mubr.f32.gmra.mxu0 %v6044
          %v6046 = vpop.f32.mrf.mxu0
          %v6047 = vadd.f32 %v5654, %v6046
          %v6048 = vpop.f32.mrf.mxu0
          %v6049 = vand.u32 %v4628, 4294901760
          %v6050 = vsub.f32 %v4628, %v6049
          %6051 = vmatprep.mubr.f32.mxu0 %v6050
          %v6052 = vand.u32 %v4627, 4294901760
          %v6053 = vsub.f32 %v4627, %v6052
          %6054 = vmatmul.mubr.f32.gmra.mxu0 %v6053
          %v6055 = vpop.f32.mrf.mxu0
          %v6056 = vadd.f32 %v5661, %v6055
          %v6057 = vpop.f32.mrf.mxu0
          %v6058 = vand.u32 %v4630, 4294901760
          %v6059 = vsub.f32 %v4630, %v6058
          %6060 = vmatprep.mubr.f32.mxu0 %v6059
          %v6061 = vand.u32 %v4629, 4294901760
          %v6062 = vsub.f32 %v4629, %v6061
          %6063 = vmatmul.mubr.f32.gmra.mxu0 %v6062
          %v6064 = vpop.f32.mrf.mxu0
          %v6065 = vadd.f32 %v5668, %v6064
          %v6066 = vpop.f32.mrf.mxu0
          %v6067 = vand.u32 %v4632, 4294901760
          %v6068 = vsub.f32 %v4632, %v6067
          %6069 = vmatprep.mubr.f32.mxu0 %v6068
          %v6070 = vand.u32 %v4631, 4294901760
          %v6071 = vsub.f32 %v4631, %v6070
          %6072 = vmatmul.mubr.f32.gmra.mxu0 %v6071
          %v6073 = vpop.f32.mrf.mxu0
          %v6074 = vadd.f32 %v5675, %v6073
          %v6075 = vpop.f32.mrf.mxu0
          %v6076 = vand.u32 %v4634, 4294901760
          %v6077 = vsub.f32 %v4634, %v6076
          %6078 = vmatprep.mubr.f32.mxu0 %v6077
          %v6079 = vand.u32 %v4633, 4294901760
          %v6080 = vsub.f32 %v4633, %v6079
          %6081 = vmatmul.mubr.f32.gmra.mxu0 %v6080
          %v6082 = vpop.f32.mrf.mxu0
          %v6083 = vadd.f32 %v5682, %v6082
          %v6084 = vpop.f32.mrf.mxu0
          %v6085 = vand.u32 %v4636, 4294901760
          %v6086 = vsub.f32 %v4636, %v6085
          %6087 = vmatprep.mubr.f32.mxu0 %v6086
          %v6088 = vand.u32 %v4635, 4294901760
          %v6089 = vsub.f32 %v4635, %v6088
          %6090 = vmatmul.mubr.f32.gmra.mxu0 %v6089
          %v6091 = vpop.f32.mrf.mxu0
          %v6092 = vadd.f32 %v5689, %v6091
          %v6093 = vpop.f32.mrf.mxu0
          %v6094 = vand.u32 %v4638, 4294901760
          %v6095 = vsub.f32 %v4638, %v6094
          %6096 = vmatprep.mubr.f32.mxu0 %v6095
          %v6097 = vand.u32 %v4637, 4294901760
          %v6098 = vsub.f32 %v4637, %v6097
          %6099 = vmatmul.mubr.f32.gmra.mxu0 %v6098
          %v6100 = vpop.f32.mrf.mxu0
          %v6101 = vadd.f32 %v5696, %v6100
          %v6102 = vpop.f32.mrf.mxu0
          %v6103 = vand.u32 %v4640, 4294901760
          %v6104 = vsub.f32 %v4640, %v6103
          %6105 = vmatprep.mubr.f32.mxu0 %v6104
          %v6106 = vand.u32 %v4639, 4294901760
          %v6107 = vsub.f32 %v4639, %v6106
          %6108 = vmatmul.mubr.f32.gmra.mxu0 %v6107
          %v6109 = vpop.f32.mrf.mxu0
          %v6110 = vadd.f32 %v5703, %v6109
          %v6111 = vpop.f32.mrf.mxu0
          %v6112 = vand.u32 %v4642, 4294901760
          %v6113 = vsub.f32 %v4642, %v6112
          %6114 = vmatprep.mubr.f32.mxu0 %v6113
          %v6115 = vand.u32 %v4641, 4294901760
          %v6116 = vsub.f32 %v4641, %v6115
          %6117 = vmatmul.mubr.f32.gmra.mxu0 %v6116
          %v6118 = vpop.f32.mrf.mxu0
          %v6119 = vadd.f32 %v5710, %v6118
          %v6120 = vpop.f32.mrf.mxu0
          %v6121 = vand.u32 %v4644, 4294901760
          %v6122 = vsub.f32 %v4644, %v6121
          %6123 = vmatprep.mubr.f32.mxu0 %v6122
          %v6124 = vand.u32 %v4643, 4294901760
          %v6125 = vsub.f32 %v4643, %v6124
          %6126 = vmatmul.mubr.f32.gmra.mxu0 %v6125
          %v6127 = vpop.f32.mrf.mxu0
          %v6128 = vadd.f32 %v5717, %v6127
          %v6129 = vpop.f32.mrf.mxu0
          %v6130 = vand.u32 %v4646, 4294901760
          %v6131 = vsub.f32 %v4646, %v6130
          %6132 = vmatprep.mubr.f32.mxu0 %v6131
          %v6133 = vand.u32 %v4645, 4294901760
          %v6134 = vsub.f32 %v4645, %v6133
          %6135 = vmatmul.mubr.f32.gmra.mxu0 %v6134
          %v6136 = vpop.f32.mrf.mxu0
          %v6137 = vadd.f32 %v5724, %v6136
          %v6138 = vpop.f32.mrf.mxu0
          %v6139 = vand.u32 %v4648, 4294901760
          %v6140 = vsub.f32 %v4648, %v6139
          %6141 = vmatprep.mubr.f32.mxu0 %v6140
          %v6142 = vand.u32 %v4647, 4294901760
          %v6143 = vsub.f32 %v4647, %v6142
          %6144 = vmatmul.mubr.f32.gmra.mxu0 %v6143
          %v6145 = vpop.f32.mrf.mxu0
          %v6146 = vadd.f32 %v5731, %v6145
          %v6147 = vpop.f32.mrf.mxu0
          %v6148 = vand.u32 %v4650, 4294901760
          %v6149 = vsub.f32 %v4650, %v6148
          %6150 = vmatprep.mubr.f32.mxu0 %v6149
          %v6151 = vand.u32 %v4649, 4294901760
          %v6152 = vsub.f32 %v4649, %v6151
          %6153 = vmatmul.mubr.f32.gmra.mxu0 %v6152
          %v6154 = vpop.f32.mrf.mxu0
          %v6155 = vadd.f32 %v5738, %v6154
          %v6156 = vpop.f32.mrf.mxu0
          %6157 = vdwg.mxu0
          %6158 = vmatprep.subr.mxu0 0.0
          %v6159 = vand.u32 %v4698, 4294901760
          %6160 = vmatpush1.msra.mxu0 %v6159
          %6161 = vmatprep.subr.mxu0 0.0
          %v6162 = vand.u32 %v4697, 4294901760
          %6163 = vmatpush1.msra.mxu0 %v6162
          %6164 = vmatprep.subr.mxu0 0.0
          %v6165 = vand.u32 %v4696, 4294901760
          %6166 = vmatpush1.msra.mxu0 %v6165
          %6167 = vmatprep.subr.mxu0 0.0
          %v6168 = vand.u32 %v4695, 4294901760
          %6169 = vmatpush1.msra.mxu0 %v6168
          %6170 = vmatprep.subr.mxu0 0.0
          %v6171 = vand.u32 %v4694, 4294901760
          %6172 = vmatpush1.msra.mxu0 %v6171
          %6173 = vmatprep.subr.mxu0 0.0
          %v6174 = vand.u32 %v4693, 4294901760
          %6175 = vmatpush1.msra.mxu0 %v6174
          %6176 = vmatprep.subr.mxu0 0.0
          %v6177 = vand.u32 %v4692, 4294901760
          %6178 = vmatpush1.msra.mxu0 %v6177
          %6179 = vmatprep.subr.mxu0 0.0
          %v6180 = vand.u32 %v4691, 4294901760
          %6181 = vmatpush1.msra.mxu0 %v6180
          %6182 = vmatprep.subr.mxu0 0.0
          %v6183 = vand.u32 %v4690, 4294901760
          %6184 = vmatpush1.msra.mxu0 %v6183
          %6185 = vmatprep.subr.mxu0 0.0
          %v6186 = vand.u32 %v4689, 4294901760
          %6187 = vmatpush1.msra.mxu0 %v6186
          %6188 = vmatprep.subr.mxu0 0.0
          %v6189 = vand.u32 %v4688, 4294901760
          %6190 = vmatpush1.msra.mxu0 %v6189
          %6191 = vmatprep.subr.mxu0 0.0
          %v6192 = vand.u32 %v4687, 4294901760
          %6193 = vmatpush1.msra.mxu0 %v6192
          %6194 = vmatprep.subr.mxu0 0.0
          %v6195 = vand.u32 %v4686, 4294901760
          %6196 = vmatpush1.msra.mxu0 %v6195
          %6197 = vmatprep.subr.mxu0 0.0
          %v6198 = vand.u32 %v4685, 4294901760
          %6199 = vmatpush1.msra.mxu0 %v6198
          %6200 = vmatprep.subr.mxu0 0.0
          %v6201 = vand.u32 %v4684, 4294901760
          %6202 = vmatpush1.msra.mxu0 %v6201
          %6203 = vmatprep.subr.mxu0 0.0
          %v6204 = vand.u32 %v4683, 4294901760
          %6205 = vmatpush1.msra.mxu0 %v6204
          %6206 = vmatprep.subr.mxu0 0.0
          %v6207 = vand.u32 %v4714, 4294901760
          %6208 = vmatpush2.msra.mxu0 %v6207
          %6209 = vmatprep.subr.mxu0 0.0
          %v6210 = vand.u32 %v4713, 4294901760
          %6211 = vmatpush2.msra.mxu0 %v6210
          %6212 = vmatprep.subr.mxu0 0.0
          %v6213 = vand.u32 %v4712, 4294901760
          %6214 = vmatpush2.msra.mxu0 %v6213
          %6215 = vmatprep.subr.mxu0 0.0
          %v6216 = vand.u32 %v4711, 4294901760
          %6217 = vmatpush2.msra.mxu0 %v6216
          %6218 = vmatprep.subr.mxu0 0.0
          %v6219 = vand.u32 %v4710, 4294901760
          %6220 = vmatpush2.msra.mxu0 %v6219
          %6221 = vmatprep.subr.mxu0 0.0
          %v6222 = vand.u32 %v4709, 4294901760
          %6223 = vmatpush2.msra.mxu0 %v6222
          %6224 = vmatprep.subr.mxu0 0.0
          %v6225 = vand.u32 %v4708, 4294901760
          %6226 = vmatpush2.msra.mxu0 %v6225
          %6227 = vmatprep.subr.mxu0 0.0
          %v6228 = vand.u32 %v4707, 4294901760
          %6229 = vmatpush2.msra.mxu0 %v6228
          %6230 = vmatprep.subr.mxu0 0.0
          %v6231 = vand.u32 %v4706, 4294901760
          %6232 = vmatpush2.msra.mxu0 %v6231
          %6233 = vmatprep.subr.mxu0 0.0
          %v6234 = vand.u32 %v4705, 4294901760
          %6235 = vmatpush2.msra.mxu0 %v6234
          %6236 = vmatprep.subr.mxu0 0.0
          %v6237 = vand.u32 %v4704, 4294901760
          %6238 = vmatpush2.msra.mxu0 %v6237
          %6239 = vmatprep.subr.mxu0 0.0
          %v6240 = vand.u32 %v4703, 4294901760
          %6241 = vmatpush2.msra.mxu0 %v6240
          %6242 = vmatprep.subr.mxu0 0.0
          %v6243 = vand.u32 %v4702, 4294901760
          %6244 = vmatpush2.msra.mxu0 %v6243
          %6245 = vmatprep.subr.mxu0 0.0
          %v6246 = vand.u32 %v4701, 4294901760
          %6247 = vmatpush2.msra.mxu0 %v6246
          %6248 = vmatprep.subr.mxu0 0.0
          %v6249 = vand.u32 %v4700, 4294901760
          %6250 = vmatpush2.msra.mxu0 %v6249
          %6251 = vmatprep.subr.mxu0 0.0
          %v6252 = vand.u32 %v4699, 4294901760
          %6253 = vmatpush2.msra.mxu0 %v6252
          %v6254 = vand.u32 %v4588, 4294901760
          %v6255 = vsub.f32 %v4588, %v6254
          %v6256 = vand.u32 %v6255, 4294901760
          %6257 = vmatprep.mubr.f32.mxu0 %v6256
          %v6258 = vand.u32 %v4587, 4294901760
          %v6259 = vsub.f32 %v4587, %v6258
          %v6260 = vand.u32 %v6259, 4294901760
          %6261 = vmatmul.mubr.f32.gmra.mxu0 %v6260
          %v6262 = vpop.f32.mrf.mxu0
          %v6263 = vadd.f32 %v5876, %v6262
          %v6264 = vpop.f32.mrf.mxu0
          %v6265 = vand.u32 %v4590, 4294901760
          %v6266 = vsub.f32 %v4590, %v6265
          %v6267 = vand.u32 %v6266, 4294901760
          %6268 = vmatprep.mubr.f32.mxu0 %v6267
          %v6269 = vand.u32 %v4589, 4294901760
          %v6270 = vsub.f32 %v4589, %v6269
          %v6271 = vand.u32 %v6270, 4294901760
          %6272 = vmatmul.mubr.f32.gmra.mxu0 %v6271
          %v6273 = vpop.f32.mrf.mxu0
          %v6274 = vadd.f32 %v5885, %v6273
          %v6275 = vpop.f32.mrf.mxu0
          %v6276 = vand.u32 %v4592, 4294901760
          %v6277 = vsub.f32 %v4592, %v6276
          %v6278 = vand.u32 %v6277, 4294901760
          %6279 = vmatprep.mubr.f32.mxu0 %v6278
          %v6280 = vand.u32 %v4591, 4294901760
          %v6281 = vsub.f32 %v4591, %v6280
          %v6282 = vand.u32 %v6281, 4294901760
          %6283 = vmatmul.mubr.f32.gmra.mxu0 %v6282
          %v6284 = vpop.f32.mrf.mxu0
          %v6285 = vadd.f32 %v5894, %v6284
          %v6286 = vpop.f32.mrf.mxu0
          %v6287 = vand.u32 %v4594, 4294901760
          %v6288 = vsub.f32 %v4594, %v6287
          %v6289 = vand.u32 %v6288, 4294901760
          %6290 = vmatprep.mubr.f32.mxu0 %v6289
          %v6291 = vand.u32 %v4593, 4294901760
          %v6292 = vsub.f32 %v4593, %v6291
          %v6293 = vand.u32 %v6292, 4294901760
          %6294 = vmatmul.mubr.f32.gmra.mxu0 %v6293
          %v6295 = vpop.f32.mrf.mxu0
          %v6296 = vadd.f32 %v5903, %v6295
          %v6297 = vpop.f32.mrf.mxu0
          %v6298 = vand.u32 %v4596, 4294901760
          %v6299 = vsub.f32 %v4596, %v6298
          %v6300 = vand.u32 %v6299, 4294901760
          %6301 = vmatprep.mubr.f32.mxu0 %v6300
          %v6302 = vand.u32 %v4595, 4294901760
          %v6303 = vsub.f32 %v4595, %v6302
          %v6304 = vand.u32 %v6303, 4294901760
          %6305 = vmatmul.mubr.f32.gmra.mxu0 %v6304
          %v6306 = vpop.f32.mrf.mxu0
          %v6307 = vadd.f32 %v5912, %v6306
          %v6308 = vpop.f32.mrf.mxu0
          %v6309 = vand.u32 %v4598, 4294901760
          %v6310 = vsub.f32 %v4598, %v6309
          %v6311 = vand.u32 %v6310, 4294901760
          %6312 = vmatprep.mubr.f32.mxu0 %v6311
          %v6313 = vand.u32 %v4597, 4294901760
          %v6314 = vsub.f32 %v4597, %v6313
          %v6315 = vand.u32 %v6314, 4294901760
          %6316 = vmatmul.mubr.f32.gmra.mxu0 %v6315
          %v6317 = vpop.f32.mrf.mxu0
          %v6318 = vadd.f32 %v5921, %v6317
          %v6319 = vpop.f32.mrf.mxu0
          %v6320 = vand.u32 %v4600, 4294901760
          %v6321 = vsub.f32 %v4600, %v6320
          %v6322 = vand.u32 %v6321, 4294901760
          %6323 = vmatprep.mubr.f32.mxu0 %v6322
          %v6324 = vand.u32 %v4599, 4294901760
          %v6325 = vsub.f32 %v4599, %v6324
          %v6326 = vand.u32 %v6325, 4294901760
          %6327 = vmatmul.mubr.f32.gmra.mxu0 %v6326
          %v6328 = vpop.f32.mrf.mxu0
          %v6329 = vadd.f32 %v5930, %v6328
          %v6330 = vpop.f32.mrf.mxu0
          %v6331 = vand.u32 %v4602, 4294901760
          %v6332 = vsub.f32 %v4602, %v6331
          %v6333 = vand.u32 %v6332, 4294901760
          %6334 = vmatprep.mubr.f32.mxu0 %v6333
          %v6335 = vand.u32 %v4601, 4294901760
          %v6336 = vsub.f32 %v4601, %v6335
          %v6337 = vand.u32 %v6336, 4294901760
          %6338 = vmatmul.mubr.f32.gmra.mxu0 %v6337
          %v6339 = vpop.f32.mrf.mxu0
          %v6340 = vadd.f32 %v5939, %v6339
          %v6341 = vpop.f32.mrf.mxu0
          %v6342 = vand.u32 %v4604, 4294901760
          %v6343 = vsub.f32 %v4604, %v6342
          %v6344 = vand.u32 %v6343, 4294901760
          %6345 = vmatprep.mubr.f32.mxu0 %v6344
          %v6346 = vand.u32 %v4603, 4294901760
          %v6347 = vsub.f32 %v4603, %v6346
          %v6348 = vand.u32 %v6347, 4294901760
          %6349 = vmatmul.mubr.f32.gmra.mxu0 %v6348
          %v6350 = vpop.f32.mrf.mxu0
          %v6351 = vadd.f32 %v5948, %v6350
          %v6352 = vpop.f32.mrf.mxu0
          %v6353 = vand.u32 %v4606, 4294901760
          %v6354 = vsub.f32 %v4606, %v6353
          %v6355 = vand.u32 %v6354, 4294901760
          %6356 = vmatprep.mubr.f32.mxu0 %v6355
          %v6357 = vand.u32 %v4605, 4294901760
          %v6358 = vsub.f32 %v4605, %v6357
          %v6359 = vand.u32 %v6358, 4294901760
          %6360 = vmatmul.mubr.f32.gmra.mxu0 %v6359
          %v6361 = vpop.f32.mrf.mxu0
          %v6362 = vadd.f32 %v5957, %v6361
          %v6363 = vpop.f32.mrf.mxu0
          %v6364 = vand.u32 %v4608, 4294901760
          %v6365 = vsub.f32 %v4608, %v6364
          %v6366 = vand.u32 %v6365, 4294901760
          %6367 = vmatprep.mubr.f32.mxu0 %v6366
          %v6368 = vand.u32 %v4607, 4294901760
          %v6369 = vsub.f32 %v4607, %v6368
          %v6370 = vand.u32 %v6369, 4294901760
          %6371 = vmatmul.mubr.f32.gmra.mxu0 %v6370
          %v6372 = vpop.f32.mrf.mxu0
          %v6373 = vadd.f32 %v5966, %v6372
          %v6374 = vpop.f32.mrf.mxu0
          %v6375 = vand.u32 %v4610, 4294901760
          %v6376 = vsub.f32 %v4610, %v6375
          %v6377 = vand.u32 %v6376, 4294901760
          %6378 = vmatprep.mubr.f32.mxu0 %v6377
          %v6379 = vand.u32 %v4609, 4294901760
          %v6380 = vsub.f32 %v4609, %v6379
          %v6381 = vand.u32 %v6380, 4294901760
          %6382 = vmatmul.mubr.f32.gmra.mxu0 %v6381
          %v6383 = vpop.f32.mrf.mxu0
          %v6384 = vadd.f32 %v5975, %v6383
          %v6385 = vpop.f32.mrf.mxu0
          %v6386 = vand.u32 %v4612, 4294901760
          %v6387 = vsub.f32 %v4612, %v6386
          %v6388 = vand.u32 %v6387, 4294901760
          %6389 = vmatprep.mubr.f32.mxu0 %v6388
          %v6390 = vand.u32 %v4611, 4294901760
          %v6391 = vsub.f32 %v4611, %v6390
          %v6392 = vand.u32 %v6391, 4294901760
          %6393 = vmatmul.mubr.f32.gmra.mxu0 %v6392
          %v6394 = vpop.f32.mrf.mxu0
          %v6395 = vadd.f32 %v5984, %v6394
          %v6396 = vpop.f32.mrf.mxu0
          %v6397 = vand.u32 %v4614, 4294901760
          %v6398 = vsub.f32 %v4614, %v6397
          %v6399 = vand.u32 %v6398, 4294901760
          %6400 = vmatprep.mubr.f32.mxu0 %v6399
          %v6401 = vand.u32 %v4613, 4294901760
          %v6402 = vsub.f32 %v4613, %v6401
          %v6403 = vand.u32 %v6402, 4294901760
          %6404 = vmatmul.mubr.f32.gmra.mxu0 %v6403
          %v6405 = vpop.f32.mrf.mxu0
          %v6406 = vadd.f32 %v5993, %v6405
          %v6407 = vpop.f32.mrf.mxu0
          %v6408 = vand.u32 %v4616, 4294901760
          %v6409 = vsub.f32 %v4616, %v6408
          %v6410 = vand.u32 %v6409, 4294901760
          %6411 = vmatprep.mubr.f32.mxu0 %v6410
          %v6412 = vand.u32 %v4615, 4294901760
          %v6413 = vsub.f32 %v4615, %v6412
          %v6414 = vand.u32 %v6413, 4294901760
          %6415 = vmatmul.mubr.f32.gmra.mxu0 %v6414
          %v6416 = vpop.f32.mrf.mxu0
          %v6417 = vadd.f32 %v6002, %v6416
          %v6418 = vpop.f32.mrf.mxu0
          %v6419 = vand.u32 %v4618, 4294901760
          %v6420 = vsub.f32 %v4618, %v6419
          %v6421 = vand.u32 %v6420, 4294901760
          %6422 = vmatprep.mubr.f32.mxu0 %v6421
          %v6423 = vand.u32 %v4617, 4294901760
          %v6424 = vsub.f32 %v4617, %v6423
          %v6425 = vand.u32 %v6424, 4294901760
          %6426 = vmatmul.mubr.f32.gmra.mxu0 %v6425
          %v6427 = vpop.f32.mrf.mxu0
          %v6428 = vadd.f32 %v6011, %v6427
          %v6429 = vpop.f32.mrf.mxu0
          %v6430 = vand.u32 %v4620, 4294901760
          %v6431 = vsub.f32 %v4620, %v6430
          %v6432 = vand.u32 %v6431, 4294901760
          %6433 = vmatprep.mubr.f32.mxu0 %v6432
          %v6434 = vand.u32 %v4619, 4294901760
          %v6435 = vsub.f32 %v4619, %v6434
          %v6436 = vand.u32 %v6435, 4294901760
          %6437 = vmatmul.mubr.f32.gmra.mxu0 %v6436
          %v6438 = vpop.f32.mrf.mxu0
          %v6439 = vadd.f32 %v6020, %v6438
          %v6440 = vpop.f32.mrf.mxu0
          %v6441 = vand.u32 %v4622, 4294901760
          %v6442 = vsub.f32 %v4622, %v6441
          %v6443 = vand.u32 %v6442, 4294901760
          %6444 = vmatprep.mubr.f32.mxu0 %v6443
          %v6445 = vand.u32 %v4621, 4294901760
          %v6446 = vsub.f32 %v4621, %v6445
          %v6447 = vand.u32 %v6446, 4294901760
          %6448 = vmatmul.mubr.f32.gmra.mxu0 %v6447
          %v6449 = vpop.f32.mrf.mxu0
          %v6450 = vadd.f32 %v6029, %v6449
          %v6451 = vpop.f32.mrf.mxu0
          %v6452 = vand.u32 %v4624, 4294901760
          %v6453 = vsub.f32 %v4624, %v6452
          %v6454 = vand.u32 %v6453, 4294901760
          %6455 = vmatprep.mubr.f32.mxu0 %v6454
          %v6456 = vand.u32 %v4623, 4294901760
          %v6457 = vsub.f32 %v4623, %v6456
          %v6458 = vand.u32 %v6457, 4294901760
          %6459 = vmatmul.mubr.f32.gmra.mxu0 %v6458
          %v6460 = vpop.f32.mrf.mxu0
          %v6461 = vadd.f32 %v6038, %v6460
          %v6462 = vpop.f32.mrf.mxu0
          %v6463 = vand.u32 %v4626, 4294901760
          %v6464 = vsub.f32 %v4626, %v6463
          %v6465 = vand.u32 %v6464, 4294901760
          %6466 = vmatprep.mubr.f32.mxu0 %v6465
          %v6467 = vand.u32 %v4625, 4294901760
          %v6468 = vsub.f32 %v4625, %v6467
          %v6469 = vand.u32 %v6468, 4294901760
          %6470 = vmatmul.mubr.f32.gmra.mxu0 %v6469
          %v6471 = vpop.f32.mrf.mxu0
          %v6472 = vadd.f32 %v6047, %v6471
          %v6473 = vpop.f32.mrf.mxu0
          %v6474 = vand.u32 %v4628, 4294901760
          %v6475 = vsub.f32 %v4628, %v6474
          %v6476 = vand.u32 %v6475, 4294901760
          %6477 = vmatprep.mubr.f32.mxu0 %v6476
          %v6478 = vand.u32 %v4627, 4294901760
          %v6479 = vsub.f32 %v4627, %v6478
          %v6480 = vand.u32 %v6479, 4294901760
          %6481 = vmatmul.mubr.f32.gmra.mxu0 %v6480
          %v6482 = vpop.f32.mrf.mxu0
          %v6483 = vadd.f32 %v6056, %v6482
          %v6484 = vpop.f32.mrf.mxu0
          %v6485 = vand.u32 %v4630, 4294901760
          %v6486 = vsub.f32 %v4630, %v6485
          %v6487 = vand.u32 %v6486, 4294901760
          %6488 = vmatprep.mubr.f32.mxu0 %v6487
          %v6489 = vand.u32 %v4629, 4294901760
          %v6490 = vsub.f32 %v4629, %v6489
          %v6491 = vand.u32 %v6490, 4294901760
          %6492 = vmatmul.mubr.f32.gmra.mxu0 %v6491
          %v6493 = vpop.f32.mrf.mxu0
          %v6494 = vadd.f32 %v6065, %v6493
          %v6495 = vpop.f32.mrf.mxu0
          %v6496 = vand.u32 %v4632, 4294901760
          %v6497 = vsub.f32 %v4632, %v6496
          %v6498 = vand.u32 %v6497, 4294901760
          %6499 = vmatprep.mubr.f32.mxu0 %v6498
          %v6500 = vand.u32 %v4631, 4294901760
          %v6501 = vsub.f32 %v4631, %v6500
          %v6502 = vand.u32 %v6501, 4294901760
          %6503 = vmatmul.mubr.f32.gmra.mxu0 %v6502
          %v6504 = vpop.f32.mrf.mxu0
          %v6505 = vadd.f32 %v6074, %v6504
          %v6506 = vpop.f32.mrf.mxu0
          %v6507 = vand.u32 %v4634, 4294901760
          %v6508 = vsub.f32 %v4634, %v6507
          %v6509 = vand.u32 %v6508, 4294901760
          %6510 = vmatprep.mubr.f32.mxu0 %v6509
          %v6511 = vand.u32 %v4633, 4294901760
          %v6512 = vsub.f32 %v4633, %v6511
          %v6513 = vand.u32 %v6512, 4294901760
          %6514 = vmatmul.mubr.f32.gmra.mxu0 %v6513
          %v6515 = vpop.f32.mrf.mxu0
          %v6516 = vadd.f32 %v6083, %v6515
          %v6517 = vpop.f32.mrf.mxu0
          %v6518 = vand.u32 %v4636, 4294901760
          %v6519 = vsub.f32 %v4636, %v6518
          %v6520 = vand.u32 %v6519, 4294901760
          %6521 = vmatprep.mubr.f32.mxu0 %v6520
          %v6522 = vand.u32 %v4635, 4294901760
          %v6523 = vsub.f32 %v4635, %v6522
          %v6524 = vand.u32 %v6523, 4294901760
          %6525 = vmatmul.mubr.f32.gmra.mxu0 %v6524
          %v6526 = vpop.f32.mrf.mxu0
          %v6527 = vadd.f32 %v6092, %v6526
          %v6528 = vpop.f32.mrf.mxu0
          %v6529 = vand.u32 %v4638, 4294901760
          %v6530 = vsub.f32 %v4638, %v6529
          %v6531 = vand.u32 %v6530, 4294901760
          %6532 = vmatprep.mubr.f32.mxu0 %v6531
          %v6533 = vand.u32 %v4637, 4294901760
          %v6534 = vsub.f32 %v4637, %v6533
          %v6535 = vand.u32 %v6534, 4294901760
          %6536 = vmatmul.mubr.f32.gmra.mxu0 %v6535
          %v6537 = vpop.f32.mrf.mxu0
          %v6538 = vadd.f32 %v6101, %v6537
          %v6539 = vpop.f32.mrf.mxu0
          %v6540 = vand.u32 %v4640, 4294901760
          %v6541 = vsub.f32 %v4640, %v6540
          %v6542 = vand.u32 %v6541, 4294901760
          %6543 = vmatprep.mubr.f32.mxu0 %v6542
          %v6544 = vand.u32 %v4639, 4294901760
          %v6545 = vsub.f32 %v4639, %v6544
          %v6546 = vand.u32 %v6545, 4294901760
          %6547 = vmatmul.mubr.f32.gmra.mxu0 %v6546
          %v6548 = vpop.f32.mrf.mxu0
          %v6549 = vadd.f32 %v6110, %v6548
          %v6550 = vpop.f32.mrf.mxu0
          %v6551 = vand.u32 %v4642, 4294901760
          %v6552 = vsub.f32 %v4642, %v6551
          %v6553 = vand.u32 %v6552, 4294901760
          %6554 = vmatprep.mubr.f32.mxu0 %v6553
          %v6555 = vand.u32 %v4641, 4294901760
          %v6556 = vsub.f32 %v4641, %v6555
          %v6557 = vand.u32 %v6556, 4294901760
          %6558 = vmatmul.mubr.f32.gmra.mxu0 %v6557
          %v6559 = vpop.f32.mrf.mxu0
          %v6560 = vadd.f32 %v6119, %v6559
          %v6561 = vpop.f32.mrf.mxu0
          %v6562 = vand.u32 %v4644, 4294901760
          %v6563 = vsub.f32 %v4644, %v6562
          %v6564 = vand.u32 %v6563, 4294901760
          %6565 = vmatprep.mubr.f32.mxu0 %v6564
          %v6566 = vand.u32 %v4643, 4294901760
          %v6567 = vsub.f32 %v4643, %v6566
          %v6568 = vand.u32 %v6567, 4294901760
          %6569 = vmatmul.mubr.f32.gmra.mxu0 %v6568
          %v6570 = vpop.f32.mrf.mxu0
          %v6571 = vadd.f32 %v6128, %v6570
          %v6572 = vpop.f32.mrf.mxu0
          %v6573 = vand.u32 %v4646, 4294901760
          %v6574 = vsub.f32 %v4646, %v6573
          %v6575 = vand.u32 %v6574, 4294901760
          %6576 = vmatprep.mubr.f32.mxu0 %v6575
          %v6577 = vand.u32 %v4645, 4294901760
          %v6578 = vsub.f32 %v4645, %v6577
          %v6579 = vand.u32 %v6578, 4294901760
          %6580 = vmatmul.mubr.f32.gmra.mxu0 %v6579
          %v6581 = vpop.f32.mrf.mxu0
          %v6582 = vadd.f32 %v6137, %v6581
          %v6583 = vpop.f32.mrf.mxu0
          %v6584 = vand.u32 %v4648, 4294901760
          %v6585 = vsub.f32 %v4648, %v6584
          %v6586 = vand.u32 %v6585, 4294901760
          %6587 = vmatprep.mubr.f32.mxu0 %v6586
          %v6588 = vand.u32 %v4647, 4294901760
          %v6589 = vsub.f32 %v4647, %v6588
          %v6590 = vand.u32 %v6589, 4294901760
          %6591 = vmatmul.mubr.f32.gmra.mxu0 %v6590
          %v6592 = vpop.f32.mrf.mxu0
          %v6593 = vadd.f32 %v6146, %v6592
          %v6594 = vpop.f32.mrf.mxu0
          %v6595 = vand.u32 %v4650, 4294901760
          %v6596 = vsub.f32 %v4650, %v6595
          %v6597 = vand.u32 %v6596, 4294901760
          %6598 = vmatprep.mubr.f32.mxu0 %v6597
          %v6599 = vand.u32 %v4649, 4294901760
          %v6600 = vsub.f32 %v4649, %v6599
          %v6601 = vand.u32 %v6600, 4294901760
          %6602 = vmatmul.mubr.f32.gmra.mxu0 %v6601
          %v6603 = vpop.f32.mrf.mxu0
          %v6604 = vadd.f32 %v6155, %v6603
          %v6605 = vpop.f32.mrf.mxu0
          %6606 = vdwg.mxu0
          %6607 = vmatprep.subr.mxu0 0.0
          %v6608 = vand.u32 %v4698, 4294901760
          %v6609 = vsub.f32 %v4698, %v6608
          %v6610 = vand.u32 %v6609, 4294901760
          %6611 = vmatpush1.msra.mxu0 %v6610
          %6612 = vmatprep.subr.mxu0 0.0
          %v6613 = vand.u32 %v4697, 4294901760
          %v6614 = vsub.f32 %v4697, %v6613
          %v6615 = vand.u32 %v6614, 4294901760
          %6616 = vmatpush1.msra.mxu0 %v6615
          %6617 = vmatprep.subr.mxu0 0.0
          %v6618 = vand.u32 %v4696, 4294901760
          %v6619 = vsub.f32 %v4696, %v6618
          %v6620 = vand.u32 %v6619, 4294901760
          %6621 = vmatpush1.msra.mxu0 %v6620
          %6622 = vmatprep.subr.mxu0 0.0
          %v6623 = vand.u32 %v4695, 4294901760
          %v6624 = vsub.f32 %v4695, %v6623
          %v6625 = vand.u32 %v6624, 4294901760
          %6626 = vmatpush1.msra.mxu0 %v6625
          %6627 = vmatprep.subr.mxu0 0.0
          %v6628 = vand.u32 %v4694, 4294901760
          %v6629 = vsub.f32 %v4694, %v6628
          %v6630 = vand.u32 %v6629, 4294901760
          %6631 = vmatpush1.msra.mxu0 %v6630
          %6632 = vmatprep.subr.mxu0 0.0
          %v6633 = vand.u32 %v4693, 4294901760
          %v6634 = vsub.f32 %v4693, %v6633
          %v6635 = vand.u32 %v6634, 4294901760
          %6636 = vmatpush1.msra.mxu0 %v6635
          %6637 = vmatprep.subr.mxu0 0.0
          %v6638 = vand.u32 %v4692, 4294901760
          %v6639 = vsub.f32 %v4692, %v6638
          %v6640 = vand.u32 %v6639, 4294901760
          %6641 = vmatpush1.msra.mxu0 %v6640
          %6642 = vmatprep.subr.mxu0 0.0
          %v6643 = vand.u32 %v4691, 4294901760
          %v6644 = vsub.f32 %v4691, %v6643
          %v6645 = vand.u32 %v6644, 4294901760
          %6646 = vmatpush1.msra.mxu0 %v6645
          %6647 = vmatprep.subr.mxu0 0.0
          %v6648 = vand.u32 %v4690, 4294901760
          %v6649 = vsub.f32 %v4690, %v6648
          %v6650 = vand.u32 %v6649, 4294901760
          %6651 = vmatpush1.msra.mxu0 %v6650
          %6652 = vmatprep.subr.mxu0 0.0
          %v6653 = vand.u32 %v4689, 4294901760
          %v6654 = vsub.f32 %v4689, %v6653
          %v6655 = vand.u32 %v6654, 4294901760
          %6656 = vmatpush1.msra.mxu0 %v6655
          %6657 = vmatprep.subr.mxu0 0.0
          %v6658 = vand.u32 %v4688, 4294901760
          %v6659 = vsub.f32 %v4688, %v6658
          %v6660 = vand.u32 %v6659, 4294901760
          %6661 = vmatpush1.msra.mxu0 %v6660
          %6662 = vmatprep.subr.mxu0 0.0
          %v6663 = vand.u32 %v4687, 4294901760
          %v6664 = vsub.f32 %v4687, %v6663
          %v6665 = vand.u32 %v6664, 4294901760
          %6666 = vmatpush1.msra.mxu0 %v6665
          %6667 = vmatprep.subr.mxu0 0.0
          %v6668 = vand.u32 %v4686, 4294901760
          %v6669 = vsub.f32 %v4686, %v6668
          %v6670 = vand.u32 %v6669, 4294901760
          %6671 = vmatpush1.msra.mxu0 %v6670
          %6672 = vmatprep.subr.mxu0 0.0
          %v6673 = vand.u32 %v4685, 4294901760
          %v6674 = vsub.f32 %v4685, %v6673
          %v6675 = vand.u32 %v6674, 4294901760
          %6676 = vmatpush1.msra.mxu0 %v6675
          %6677 = vmatprep.subr.mxu0 0.0
          %v6678 = vand.u32 %v4684, 4294901760
          %v6679 = vsub.f32 %v4684, %v6678
          %v6680 = vand.u32 %v6679, 4294901760
          %6681 = vmatpush1.msra.mxu0 %v6680
          %6682 = vmatprep.subr.mxu0 0.0
          %v6683 = vand.u32 %v4683, 4294901760
          %v6684 = vsub.f32 %v4683, %v6683
          %v6685 = vand.u32 %v6684, 4294901760
          %6686 = vmatpush1.msra.mxu0 %v6685
          %6687 = vmatprep.subr.mxu0 0.0
          %v6688 = vand.u32 %v4714, 4294901760
          %v6689 = vsub.f32 %v4714, %v6688
          %v6690 = vand.u32 %v6689, 4294901760
          %6691 = vmatpush2.msra.mxu0 %v6690
          %6692 = vmatprep.subr.mxu0 0.0
          %v6693 = vand.u32 %v4713, 4294901760
          %v6694 = vsub.f32 %v4713, %v6693
          %v6695 = vand.u32 %v6694, 4294901760
          %6696 = vmatpush2.msra.mxu0 %v6695
          %6697 = vmatprep.subr.mxu0 0.0
          %v6698 = vand.u32 %v4712, 4294901760
          %v6699 = vsub.f32 %v4712, %v6698
          %v6700 = vand.u32 %v6699, 4294901760
          %6701 = vmatpush2.msra.mxu0 %v6700
          %6702 = vmatprep.subr.mxu0 0.0
          %v6703 = vand.u32 %v4711, 4294901760
          %v6704 = vsub.f32 %v4711, %v6703
          %v6705 = vand.u32 %v6704, 4294901760
          %6706 = vmatpush2.msra.mxu0 %v6705
          %6707 = vmatprep.subr.mxu0 0.0
          %v6708 = vand.u32 %v4710, 4294901760
          %v6709 = vsub.f32 %v4710, %v6708
          %v6710 = vand.u32 %v6709, 4294901760
          %6711 = vmatpush2.msra.mxu0 %v6710
          %6712 = vmatprep.subr.mxu0 0.0
          %v6713 = vand.u32 %v4709, 4294901760
          %v6714 = vsub.f32 %v4709, %v6713
          %v6715 = vand.u32 %v6714, 4294901760
          %6716 = vmatpush2.msra.mxu0 %v6715
          %6717 = vmatprep.subr.mxu0 0.0
          %v6718 = vand.u32 %v4708, 4294901760
          %v6719 = vsub.f32 %v4708, %v6718
          %v6720 = vand.u32 %v6719, 4294901760
          %6721 = vmatpush2.msra.mxu0 %v6720
          %6722 = vmatprep.subr.mxu0 0.0
          %v6723 = vand.u32 %v4707, 4294901760
          %v6724 = vsub.f32 %v4707, %v6723
          %v6725 = vand.u32 %v6724, 4294901760
          %6726 = vmatpush2.msra.mxu0 %v6725
          %6727 = vmatprep.subr.mxu0 0.0
          %v6728 = vand.u32 %v4706, 4294901760
          %v6729 = vsub.f32 %v4706, %v6728
          %v6730 = vand.u32 %v6729, 4294901760
          %6731 = vmatpush2.msra.mxu0 %v6730
          %6732 = vmatprep.subr.mxu0 0.0
          %v6733 = vand.u32 %v4705, 4294901760
          %v6734 = vsub.f32 %v4705, %v6733
          %v6735 = vand.u32 %v6734, 4294901760
          %6736 = vmatpush2.msra.mxu0 %v6735
          %6737 = vmatprep.subr.mxu0 0.0
          %v6738 = vand.u32 %v4704, 4294901760
          %v6739 = vsub.f32 %v4704, %v6738
          %v6740 = vand.u32 %v6739, 4294901760
          %6741 = vmatpush2.msra.mxu0 %v6740
          %6742 = vmatprep.subr.mxu0 0.0
          %v6743 = vand.u32 %v4703, 4294901760
          %v6744 = vsub.f32 %v4703, %v6743
          %v6745 = vand.u32 %v6744, 4294901760
          %6746 = vmatpush2.msra.mxu0 %v6745
          %6747 = vmatprep.subr.mxu0 0.0
          %v6748 = vand.u32 %v4702, 4294901760
          %v6749 = vsub.f32 %v4702, %v6748
          %v6750 = vand.u32 %v6749, 4294901760
          %6751 = vmatpush2.msra.mxu0 %v6750
          %6752 = vmatprep.subr.mxu0 0.0
          %v6753 = vand.u32 %v4701, 4294901760
          %v6754 = vsub.f32 %v4701, %v6753
          %v6755 = vand.u32 %v6754, 4294901760
          %6756 = vmatpush2.msra.mxu0 %v6755
          %6757 = vmatprep.subr.mxu0 0.0
          %v6758 = vand.u32 %v4700, 4294901760
          %v6759 = vsub.f32 %v4700, %v6758
          %v6760 = vand.u32 %v6759, 4294901760
          %6761 = vmatpush2.msra.mxu0 %v6760
          %6762 = vmatprep.subr.mxu0 0.0
          %v6763 = vand.u32 %v4699, 4294901760
          %v6764 = vsub.f32 %v4699, %v6763
          %v6765 = vand.u32 %v6764, 4294901760
          %6766 = vmatpush2.msra.mxu0 %v6765
          %v6767 = vand.u32 %v4588, 4294901760
          %6768 = vmatprep.mubr.f32.mxu0 %v6767
          %v6769 = vand.u32 %v4587, 4294901760
          %6770 = vmatmul.mubr.f32.gmra.mxu0 %v6769
          %v6771 = vpop.f32.mrf.mxu0
          %v6772 = vadd.f32 %v6263, %v6771
          %v6773 = vpop.f32.mrf.mxu0
          %v6774 = vand.u32 %v4590, 4294901760
          %6775 = vmatprep.mubr.f32.mxu0 %v6774
          %v6776 = vand.u32 %v4589, 4294901760
          %6777 = vmatmul.mubr.f32.gmra.mxu0 %v6776
          %v6778 = vpop.f32.mrf.mxu0
          %v6779 = vadd.f32 %v6274, %v6778
          %v6780 = vpop.f32.mrf.mxu0
          %v6781 = vand.u32 %v4592, 4294901760
          %6782 = vmatprep.mubr.f32.mxu0 %v6781
          %v6783 = vand.u32 %v4591, 4294901760
          %6784 = vmatmul.mubr.f32.gmra.mxu0 %v6783
          %v6785 = vpop.f32.mrf.mxu0
          %v6786 = vadd.f32 %v6285, %v6785
          %v6787 = vpop.f32.mrf.mxu0
          %v6788 = vand.u32 %v4594, 4294901760
          %6789 = vmatprep.mubr.f32.mxu0 %v6788
          %v6790 = vand.u32 %v4593, 4294901760
          %6791 = vmatmul.mubr.f32.gmra.mxu0 %v6790
          %v6792 = vpop.f32.mrf.mxu0
          %v6793 = vadd.f32 %v6296, %v6792
          %v6794 = vpop.f32.mrf.mxu0
          %v6795 = vand.u32 %v4596, 4294901760
          %6796 = vmatprep.mubr.f32.mxu0 %v6795
          %v6797 = vand.u32 %v4595, 4294901760
          %6798 = vmatmul.mubr.f32.gmra.mxu0 %v6797
          %v6799 = vpop.f32.mrf.mxu0
          %v6800 = vadd.f32 %v6307, %v6799
          %v6801 = vpop.f32.mrf.mxu0
          %v6802 = vand.u32 %v4598, 4294901760
          %6803 = vmatprep.mubr.f32.mxu0 %v6802
          %v6804 = vand.u32 %v4597, 4294901760
          %6805 = vmatmul.mubr.f32.gmra.mxu0 %v6804
          %v6806 = vpop.f32.mrf.mxu0
          %v6807 = vadd.f32 %v6318, %v6806
          %v6808 = vpop.f32.mrf.mxu0
          %v6809 = vand.u32 %v4600, 4294901760
          %6810 = vmatprep.mubr.f32.mxu0 %v6809
          %v6811 = vand.u32 %v4599, 4294901760
          %6812 = vmatmul.mubr.f32.gmra.mxu0 %v6811
          %v6813 = vpop.f32.mrf.mxu0
          %v6814 = vadd.f32 %v6329, %v6813
          %v6815 = vpop.f32.mrf.mxu0
          %v6816 = vand.u32 %v4602, 4294901760
          %6817 = vmatprep.mubr.f32.mxu0 %v6816
          %v6818 = vand.u32 %v4601, 4294901760
          %6819 = vmatmul.mubr.f32.gmra.mxu0 %v6818
          %v6820 = vpop.f32.mrf.mxu0
          %v6821 = vadd.f32 %v6340, %v6820
          %v6822 = vpop.f32.mrf.mxu0
          %v6823 = vand.u32 %v4604, 4294901760
          %6824 = vmatprep.mubr.f32.mxu0 %v6823
          %v6825 = vand.u32 %v4603, 4294901760
          %6826 = vmatmul.mubr.f32.gmra.mxu0 %v6825
          %v6827 = vpop.f32.mrf.mxu0
          %v6828 = vadd.f32 %v6351, %v6827
          %v6829 = vpop.f32.mrf.mxu0
          %v6830 = vand.u32 %v4606, 4294901760
          %6831 = vmatprep.mubr.f32.mxu0 %v6830
          %v6832 = vand.u32 %v4605, 4294901760
          %6833 = vmatmul.mubr.f32.gmra.mxu0 %v6832
          %v6834 = vpop.f32.mrf.mxu0
          %v6835 = vadd.f32 %v6362, %v6834
          %v6836 = vpop.f32.mrf.mxu0
          %v6837 = vand.u32 %v4608, 4294901760
          %6838 = vmatprep.mubr.f32.mxu0 %v6837
          %v6839 = vand.u32 %v4607, 4294901760
          %6840 = vmatmul.mubr.f32.gmra.mxu0 %v6839
          %v6841 = vpop.f32.mrf.mxu0
          %v6842 = vadd.f32 %v6373, %v6841
          %v6843 = vpop.f32.mrf.mxu0
          %v6844 = vand.u32 %v4610, 4294901760
          %6845 = vmatprep.mubr.f32.mxu0 %v6844
          %v6846 = vand.u32 %v4609, 4294901760
          %6847 = vmatmul.mubr.f32.gmra.mxu0 %v6846
          %v6848 = vpop.f32.mrf.mxu0
          %v6849 = vadd.f32 %v6384, %v6848
          %v6850 = vpop.f32.mrf.mxu0
          %v6851 = vand.u32 %v4612, 4294901760
          %6852 = vmatprep.mubr.f32.mxu0 %v6851
          %v6853 = vand.u32 %v4611, 4294901760
          %6854 = vmatmul.mubr.f32.gmra.mxu0 %v6853
          %v6855 = vpop.f32.mrf.mxu0
          %v6856 = vadd.f32 %v6395, %v6855
          %v6857 = vpop.f32.mrf.mxu0
          %v6858 = vand.u32 %v4614, 4294901760
          %6859 = vmatprep.mubr.f32.mxu0 %v6858
          %v6860 = vand.u32 %v4613, 4294901760
          %6861 = vmatmul.mubr.f32.gmra.mxu0 %v6860
          %v6862 = vpop.f32.mrf.mxu0
          %v6863 = vadd.f32 %v6406, %v6862
          %v6864 = vpop.f32.mrf.mxu0
          %v6865 = vand.u32 %v4616, 4294901760
          %6866 = vmatprep.mubr.f32.mxu0 %v6865
          %v6867 = vand.u32 %v4615, 4294901760
          %6868 = vmatmul.mubr.f32.gmra.mxu0 %v6867
          %v6869 = vpop.f32.mrf.mxu0
          %v6870 = vadd.f32 %v6417, %v6869
          %v6871 = vpop.f32.mrf.mxu0
          %v6872 = vand.u32 %v4618, 4294901760
          %6873 = vmatprep.mubr.f32.mxu0 %v6872
          %v6874 = vand.u32 %v4617, 4294901760
          %6875 = vmatmul.mubr.f32.gmra.mxu0 %v6874
          %v6876 = vpop.f32.mrf.mxu0
          %v6877 = vadd.f32 %v6428, %v6876
          %v6878 = vpop.f32.mrf.mxu0
          %v6879 = vand.u32 %v4620, 4294901760
          %6880 = vmatprep.mubr.f32.mxu0 %v6879
          %v6881 = vand.u32 %v4619, 4294901760
          %6882 = vmatmul.mubr.f32.gmra.mxu0 %v6881
          %v6883 = vpop.f32.mrf.mxu0
          %v6884 = vadd.f32 %v6439, %v6883
          %v6885 = vpop.f32.mrf.mxu0
          %v6886 = vand.u32 %v4622, 4294901760
          %6887 = vmatprep.mubr.f32.mxu0 %v6886
          %v6888 = vand.u32 %v4621, 4294901760
          %6889 = vmatmul.mubr.f32.gmra.mxu0 %v6888
          %v6890 = vpop.f32.mrf.mxu0
          %v6891 = vadd.f32 %v6450, %v6890
          %v6892 = vpop.f32.mrf.mxu0
          %v6893 = vand.u32 %v4624, 4294901760
          %6894 = vmatprep.mubr.f32.mxu0 %v6893
          %v6895 = vand.u32 %v4623, 4294901760
          %6896 = vmatmul.mubr.f32.gmra.mxu0 %v6895
          %v6897 = vpop.f32.mrf.mxu0
          %v6898 = vadd.f32 %v6461, %v6897
          %v6899 = vpop.f32.mrf.mxu0
          %v6900 = vand.u32 %v4626, 4294901760
          %6901 = vmatprep.mubr.f32.mxu0 %v6900
          %v6902 = vand.u32 %v4625, 4294901760
          %6903 = vmatmul.mubr.f32.gmra.mxu0 %v6902
          %v6904 = vpop.f32.mrf.mxu0
          %v6905 = vadd.f32 %v6472, %v6904
          %v6906 = vpop.f32.mrf.mxu0
          %v6907 = vand.u32 %v4628, 4294901760
          %6908 = vmatprep.mubr.f32.mxu0 %v6907
          %v6909 = vand.u32 %v4627, 4294901760
          %6910 = vmatmul.mubr.f32.gmra.mxu0 %v6909
          %v6911 = vpop.f32.mrf.mxu0
          %v6912 = vadd.f32 %v6483, %v6911
          %v6913 = vpop.f32.mrf.mxu0
          %v6914 = vand.u32 %v4630, 4294901760
          %6915 = vmatprep.mubr.f32.mxu0 %v6914
          %v6916 = vand.u32 %v4629, 4294901760
          %6917 = vmatmul.mubr.f32.gmra.mxu0 %v6916
          %v6918 = vpop.f32.mrf.mxu0
          %v6919 = vadd.f32 %v6494, %v6918
          %v6920 = vpop.f32.mrf.mxu0
          %v6921 = vand.u32 %v4632, 4294901760
          %6922 = vmatprep.mubr.f32.mxu0 %v6921
          %v6923 = vand.u32 %v4631, 4294901760
          %6924 = vmatmul.mubr.f32.gmra.mxu0 %v6923
          %v6925 = vpop.f32.mrf.mxu0
          %v6926 = vadd.f32 %v6505, %v6925
          %v6927 = vpop.f32.mrf.mxu0
          %v6928 = vand.u32 %v4634, 4294901760
          %6929 = vmatprep.mubr.f32.mxu0 %v6928
          %v6930 = vand.u32 %v4633, 4294901760
          %6931 = vmatmul.mubr.f32.gmra.mxu0 %v6930
          %v6932 = vpop.f32.mrf.mxu0
          %v6933 = vadd.f32 %v6516, %v6932
          %v6934 = vpop.f32.mrf.mxu0
          %v6935 = vand.u32 %v4636, 4294901760
          %6936 = vmatprep.mubr.f32.mxu0 %v6935
          %v6937 = vand.u32 %v4635, 4294901760
          %6938 = vmatmul.mubr.f32.gmra.mxu0 %v6937
          %v6939 = vpop.f32.mrf.mxu0
          %v6940 = vadd.f32 %v6527, %v6939
          %v6941 = vpop.f32.mrf.mxu0
          %v6942 = vand.u32 %v4638, 4294901760
          %6943 = vmatprep.mubr.f32.mxu0 %v6942
          %v6944 = vand.u32 %v4637, 4294901760
          %6945 = vmatmul.mubr.f32.gmra.mxu0 %v6944
          %v6946 = vpop.f32.mrf.mxu0
          %v6947 = vadd.f32 %v6538, %v6946
          %v6948 = vpop.f32.mrf.mxu0
          %v6949 = vand.u32 %v4640, 4294901760
          %6950 = vmatprep.mubr.f32.mxu0 %v6949
          %v6951 = vand.u32 %v4639, 4294901760
          %6952 = vmatmul.mubr.f32.gmra.mxu0 %v6951
          %v6953 = vpop.f32.mrf.mxu0
          %v6954 = vadd.f32 %v6549, %v6953
          %v6955 = vpop.f32.mrf.mxu0
          %v6956 = vand.u32 %v4642, 4294901760
          %6957 = vmatprep.mubr.f32.mxu0 %v6956
          %v6958 = vand.u32 %v4641, 4294901760
          %6959 = vmatmul.mubr.f32.gmra.mxu0 %v6958
          %v6960 = vpop.f32.mrf.mxu0
          %v6961 = vadd.f32 %v6560, %v6960
          %v6962 = vpop.f32.mrf.mxu0
          %v6963 = vand.u32 %v4644, 4294901760
          %6964 = vmatprep.mubr.f32.mxu0 %v6963
          %v6965 = vand.u32 %v4643, 4294901760
          %6966 = vmatmul.mubr.f32.gmra.mxu0 %v6965
          %v6967 = vpop.f32.mrf.mxu0
          %v6968 = vadd.f32 %v6571, %v6967
          %v6969 = vpop.f32.mrf.mxu0
          %v6970 = vand.u32 %v4646, 4294901760
          %6971 = vmatprep.mubr.f32.mxu0 %v6970
          %v6972 = vand.u32 %v4645, 4294901760
          %6973 = vmatmul.mubr.f32.gmra.mxu0 %v6972
          %v6974 = vpop.f32.mrf.mxu0
          %v6975 = vadd.f32 %v6582, %v6974
          %v6976 = vpop.f32.mrf.mxu0
          %v6977 = vand.u32 %v4648, 4294901760
          %6978 = vmatprep.mubr.f32.mxu0 %v6977
          %v6979 = vand.u32 %v4647, 4294901760
          %6980 = vmatmul.mubr.f32.gmra.mxu0 %v6979
          %v6981 = vpop.f32.mrf.mxu0
          %v6982 = vadd.f32 %v6593, %v6981
          %v6983 = vpop.f32.mrf.mxu0
          %v6984 = vand.u32 %v4650, 4294901760
          %6985 = vmatprep.mubr.f32.mxu0 %v6984
          %v6986 = vand.u32 %v4649, 4294901760
          %6987 = vmatmul.mubr.f32.gmra.mxu0 %v6986
          %v6988 = vpop.f32.mrf.mxu0
          %v6989 = vadd.f32 %v6604, %v6988
          %v6990 = vpop.f32.mrf.mxu0
          %6991 = vdwg.mxu0
          %6992 = vmatprep.subr.mxu0 0.0
          %v6993 = vand.u32 %v4698, 4294901760
          %6994 = vmatpush1.msra.mxu0 %v6993
          %6995 = vmatprep.subr.mxu0 0.0
          %v6996 = vand.u32 %v4697, 4294901760
          %6997 = vmatpush1.msra.mxu0 %v6996
          %6998 = vmatprep.subr.mxu0 0.0
          %v6999 = vand.u32 %v4696, 4294901760
          %7000 = vmatpush1.msra.mxu0 %v6999
          %7001 = vmatprep.subr.mxu0 0.0
          %v7002 = vand.u32 %v4695, 4294901760
          %7003 = vmatpush1.msra.mxu0 %v7002
          %7004 = vmatprep.subr.mxu0 0.0
          %v7005 = vand.u32 %v4694, 4294901760
          %7006 = vmatpush1.msra.mxu0 %v7005
          %7007 = vmatprep.subr.mxu0 0.0
          %v7008 = vand.u32 %v4693, 4294901760
          %7009 = vmatpush1.msra.mxu0 %v7008
          %7010 = vmatprep.subr.mxu0 0.0
          %v7011 = vand.u32 %v4692, 4294901760
          %7012 = vmatpush1.msra.mxu0 %v7011
          %7013 = vmatprep.subr.mxu0 0.0
          %v7014 = vand.u32 %v4691, 4294901760
          %7015 = vmatpush1.msra.mxu0 %v7014
          %7016 = vmatprep.subr.mxu0 0.0
          %v7017 = vand.u32 %v4690, 4294901760
          %7018 = vmatpush1.msra.mxu0 %v7017
          %7019 = vmatprep.subr.mxu0 0.0
          %v7020 = vand.u32 %v4689, 4294901760
          %7021 = vmatpush1.msra.mxu0 %v7020
          %7022 = vmatprep.subr.mxu0 0.0
          %v7023 = vand.u32 %v4688, 4294901760
          %7024 = vmatpush1.msra.mxu0 %v7023
          %7025 = vmatprep.subr.mxu0 0.0
          %v7026 = vand.u32 %v4687, 4294901760
          %7027 = vmatpush1.msra.mxu0 %v7026
          %7028 = vmatprep.subr.mxu0 0.0
          %v7029 = vand.u32 %v4686, 4294901760
          %7030 = vmatpush1.msra.mxu0 %v7029
          %7031 = vmatprep.subr.mxu0 0.0
          %v7032 = vand.u32 %v4685, 4294901760
          %7033 = vmatpush1.msra.mxu0 %v7032
          %7034 = vmatprep.subr.mxu0 0.0
          %v7035 = vand.u32 %v4684, 4294901760
          %7036 = vmatpush1.msra.mxu0 %v7035
          %7037 = vmatprep.subr.mxu0 0.0
          %v7038 = vand.u32 %v4683, 4294901760
          %7039 = vmatpush1.msra.mxu0 %v7038
          %7040 = vmatprep.subr.mxu0 0.0
          %v7041 = vand.u32 %v4714, 4294901760
          %7042 = vmatpush2.msra.mxu0 %v7041
          %7043 = vmatprep.subr.mxu0 0.0
          %v7044 = vand.u32 %v4713, 4294901760
          %7045 = vmatpush2.msra.mxu0 %v7044
          %7046 = vmatprep.subr.mxu0 0.0
          %v7047 = vand.u32 %v4712, 4294901760
          %7048 = vmatpush2.msra.mxu0 %v7047
          %7049 = vmatprep.subr.mxu0 0.0
          %v7050 = vand.u32 %v4711, 4294901760
          %7051 = vmatpush2.msra.mxu0 %v7050
          %7052 = vmatprep.subr.mxu0 0.0
          %v7053 = vand.u32 %v4710, 4294901760
          %7054 = vmatpush2.msra.mxu0 %v7053
          %7055 = vmatprep.subr.mxu0 0.0
          %v7056 = vand.u32 %v4709, 4294901760
          %7057 = vmatpush2.msra.mxu0 %v7056
          %7058 = vmatprep.subr.mxu0 0.0
          %v7059 = vand.u32 %v4708, 4294901760
          %7060 = vmatpush2.msra.mxu0 %v7059
          %7061 = vmatprep.subr.mxu0 0.0
          %v7062 = vand.u32 %v4707, 4294901760
          %7063 = vmatpush2.msra.mxu0 %v7062
          %7064 = vmatprep.subr.mxu0 0.0
          %v7065 = vand.u32 %v4706, 4294901760
          %7066 = vmatpush2.msra.mxu0 %v7065
          %7067 = vmatprep.subr.mxu0 0.0
          %v7068 = vand.u32 %v4705, 4294901760
          %7069 = vmatpush2.msra.mxu0 %v7068
          %7070 = vmatprep.subr.mxu0 0.0
          %v7071 = vand.u32 %v4704, 4294901760
          %7072 = vmatpush2.msra.mxu0 %v7071
          %7073 = vmatprep.subr.mxu0 0.0
          %v7074 = vand.u32 %v4703, 4294901760
          %7075 = vmatpush2.msra.mxu0 %v7074
          %7076 = vmatprep.subr.mxu0 0.0
          %v7077 = vand.u32 %v4702, 4294901760
          %7078 = vmatpush2.msra.mxu0 %v7077
          %7079 = vmatprep.subr.mxu0 0.0
          %v7080 = vand.u32 %v4701, 4294901760
          %7081 = vmatpush2.msra.mxu0 %v7080
          %7082 = vmatprep.subr.mxu0 0.0
          %v7083 = vand.u32 %v4700, 4294901760
          %7084 = vmatpush2.msra.mxu0 %v7083
          %7085 = vmatprep.subr.mxu0 0.0
          %v7086 = vand.u32 %v4699, 4294901760
          %7087 = vmatpush2.msra.mxu0 %v7086
          %v7088 = vand.u32 %v4588, 4294901760
          %7089 = vmatprep.mubr.f32.mxu0 %v7088
          %v7090 = vand.u32 %v4587, 4294901760
          %7091 = vmatmul.mubr.f32.gmra.mxu0 %v7090
          %v7092 = vpop.f32.mrf.mxu0
          %v7093 = vadd.f32 %v6772, %v7092
          %v7094 = vpop.f32.mrf.mxu0
          %v7095 = vand.u32 %v4590, 4294901760
          %7096 = vmatprep.mubr.f32.mxu0 %v7095
          %v7097 = vand.u32 %v4589, 4294901760
          %7098 = vmatmul.mubr.f32.gmra.mxu0 %v7097
          %v7099 = vpop.f32.mrf.mxu0
          %v7100 = vadd.f32 %v6779, %v7099
          %v7101 = vpop.f32.mrf.mxu0
          %v7102 = vand.u32 %v4592, 4294901760
          %7103 = vmatprep.mubr.f32.mxu0 %v7102
          %v7104 = vand.u32 %v4591, 4294901760
          %7105 = vmatmul.mubr.f32.gmra.mxu0 %v7104
          %v7106 = vpop.f32.mrf.mxu0
          %v7107 = vadd.f32 %v6786, %v7106
          %v7108 = vpop.f32.mrf.mxu0
          %v7109 = vand.u32 %v4594, 4294901760
          %7110 = vmatprep.mubr.f32.mxu0 %v7109
          %v7111 = vand.u32 %v4593, 4294901760
          %7112 = vmatmul.mubr.f32.gmra.mxu0 %v7111
          %v7113 = vpop.f32.mrf.mxu0
          %v7114 = vadd.f32 %v6793, %v7113
          %v7115 = vpop.f32.mrf.mxu0
          %v7116 = vand.u32 %v4596, 4294901760
          %7117 = vmatprep.mubr.f32.mxu0 %v7116
          %v7118 = vand.u32 %v4595, 4294901760
          %7119 = vmatmul.mubr.f32.gmra.mxu0 %v7118
          %v7120 = vpop.f32.mrf.mxu0
          %v7121 = vadd.f32 %v6800, %v7120
          %v7122 = vpop.f32.mrf.mxu0
          %v7123 = vand.u32 %v4598, 4294901760
          %7124 = vmatprep.mubr.f32.mxu0 %v7123
          %v7125 = vand.u32 %v4597, 4294901760
          %7126 = vmatmul.mubr.f32.gmra.mxu0 %v7125
          %v7127 = vpop.f32.mrf.mxu0
          %v7128 = vadd.f32 %v6807, %v7127
          %v7129 = vpop.f32.mrf.mxu0
          %v7130 = vand.u32 %v4600, 4294901760
          %7131 = vmatprep.mubr.f32.mxu0 %v7130
          %v7132 = vand.u32 %v4599, 4294901760
          %7133 = vmatmul.mubr.f32.gmra.mxu0 %v7132
          %v7134 = vpop.f32.mrf.mxu0
          %v7135 = vadd.f32 %v6814, %v7134
          %v7136 = vpop.f32.mrf.mxu0
          %v7137 = vand.u32 %v4602, 4294901760
          %7138 = vmatprep.mubr.f32.mxu0 %v7137
          %v7139 = vand.u32 %v4601, 4294901760
          %7140 = vmatmul.mubr.f32.gmra.mxu0 %v7139
          %v7141 = vpop.f32.mrf.mxu0
          %v7142 = vadd.f32 %v6821, %v7141
          %v7143 = vpop.f32.mrf.mxu0
          %v7144 = vand.u32 %v4604, 4294901760
          %7145 = vmatprep.mubr.f32.mxu0 %v7144
          %v7146 = vand.u32 %v4603, 4294901760
          %7147 = vmatmul.mubr.f32.gmra.mxu0 %v7146
          %v7148 = vpop.f32.mrf.mxu0
          %v7149 = vadd.f32 %v6828, %v7148
          %v7150 = vpop.f32.mrf.mxu0
          %v7151 = vand.u32 %v4606, 4294901760
          %7152 = vmatprep.mubr.f32.mxu0 %v7151
          %v7153 = vand.u32 %v4605, 4294901760
          %7154 = vmatmul.mubr.f32.gmra.mxu0 %v7153
          %v7155 = vpop.f32.mrf.mxu0
          %v7156 = vadd.f32 %v6835, %v7155
          %v7157 = vpop.f32.mrf.mxu0
          %v7158 = vand.u32 %v4608, 4294901760
          %7159 = vmatprep.mubr.f32.mxu0 %v7158
          %v7160 = vand.u32 %v4607, 4294901760
          %7161 = vmatmul.mubr.f32.gmra.mxu0 %v7160
          %v7162 = vpop.f32.mrf.mxu0
          %v7163 = vadd.f32 %v6842, %v7162
          %v7164 = vpop.f32.mrf.mxu0
          %v7165 = vand.u32 %v4610, 4294901760
          %7166 = vmatprep.mubr.f32.mxu0 %v7165
          %v7167 = vand.u32 %v4609, 4294901760
          %7168 = vmatmul.mubr.f32.gmra.mxu0 %v7167
          %v7169 = vpop.f32.mrf.mxu0
          %v7170 = vadd.f32 %v6849, %v7169
          %v7171 = vpop.f32.mrf.mxu0
          %v7172 = vand.u32 %v4612, 4294901760
          %7173 = vmatprep.mubr.f32.mxu0 %v7172
          %v7174 = vand.u32 %v4611, 4294901760
          %7175 = vmatmul.mubr.f32.gmra.mxu0 %v7174
          %v7176 = vpop.f32.mrf.mxu0
          %v7177 = vadd.f32 %v6856, %v7176
          %v7178 = vpop.f32.mrf.mxu0
          %v7179 = vand.u32 %v4614, 4294901760
          %7180 = vmatprep.mubr.f32.mxu0 %v7179
          %v7181 = vand.u32 %v4613, 4294901760
          %7182 = vmatmul.mubr.f32.gmra.mxu0 %v7181
          %v7183 = vpop.f32.mrf.mxu0
          %v7184 = vadd.f32 %v6863, %v7183
          %v7185 = vpop.f32.mrf.mxu0
          %v7186 = vand.u32 %v4616, 4294901760
          %7187 = vmatprep.mubr.f32.mxu0 %v7186
          %v7188 = vand.u32 %v4615, 4294901760
          %7189 = vmatmul.mubr.f32.gmra.mxu0 %v7188
          %v7190 = vpop.f32.mrf.mxu0
          %v7191 = vadd.f32 %v6870, %v7190
          %v7192 = vpop.f32.mrf.mxu0
          %v7193 = vand.u32 %v4618, 4294901760
          %7194 = vmatprep.mubr.f32.mxu0 %v7193
          %v7195 = vand.u32 %v4617, 4294901760
          %7196 = vmatmul.mubr.f32.gmra.mxu0 %v7195
          %v7197 = vpop.f32.mrf.mxu0
          %v7198 = vadd.f32 %v6877, %v7197
          %v7199 = vpop.f32.mrf.mxu0
          %v7200 = vand.u32 %v4620, 4294901760
          %7201 = vmatprep.mubr.f32.mxu0 %v7200
          %v7202 = vand.u32 %v4619, 4294901760
          %7203 = vmatmul.mubr.f32.gmra.mxu0 %v7202
          %v7204 = vpop.f32.mrf.mxu0
          %v7205 = vadd.f32 %v6884, %v7204
          %v7206 = vpop.f32.mrf.mxu0
          %v7207 = vand.u32 %v4622, 4294901760
          %7208 = vmatprep.mubr.f32.mxu0 %v7207
          %v7209 = vand.u32 %v4621, 4294901760
          %7210 = vmatmul.mubr.f32.gmra.mxu0 %v7209
          %v7211 = vpop.f32.mrf.mxu0
          %v7212 = vadd.f32 %v6891, %v7211
          %v7213 = vpop.f32.mrf.mxu0
          %v7214 = vand.u32 %v4624, 4294901760
          %7215 = vmatprep.mubr.f32.mxu0 %v7214
          %v7216 = vand.u32 %v4623, 4294901760
          %7217 = vmatmul.mubr.f32.gmra.mxu0 %v7216
          %v7218 = vpop.f32.mrf.mxu0
          %v7219 = vadd.f32 %v6898, %v7218
          %v7220 = vpop.f32.mrf.mxu0
          %v7221 = vand.u32 %v4626, 4294901760
          %7222 = vmatprep.mubr.f32.mxu0 %v7221
          %v7223 = vand.u32 %v4625, 4294901760
          %7224 = vmatmul.mubr.f32.gmra.mxu0 %v7223
          %v7225 = vpop.f32.mrf.mxu0
          %v7226 = vadd.f32 %v6905, %v7225
          %v7227 = vpop.f32.mrf.mxu0
          %v7228 = vand.u32 %v4628, 4294901760
          %7229 = vmatprep.mubr.f32.mxu0 %v7228
          %v7230 = vand.u32 %v4627, 4294901760
          %7231 = vmatmul.mubr.f32.gmra.mxu0 %v7230
          %v7232 = vpop.f32.mrf.mxu0
          %v7233 = vadd.f32 %v6912, %v7232
          %v7234 = vpop.f32.mrf.mxu0
          %v7235 = vand.u32 %v4630, 4294901760
          %7236 = vmatprep.mubr.f32.mxu0 %v7235
          %v7237 = vand.u32 %v4629, 4294901760
          %7238 = vmatmul.mubr.f32.gmra.mxu0 %v7237
          %v7239 = vpop.f32.mrf.mxu0
          %v7240 = vadd.f32 %v6919, %v7239
          %v7241 = vpop.f32.mrf.mxu0
          %v7242 = vand.u32 %v4632, 4294901760
          %7243 = vmatprep.mubr.f32.mxu0 %v7242
          %v7244 = vand.u32 %v4631, 4294901760
          %7245 = vmatmul.mubr.f32.gmra.mxu0 %v7244
          %v7246 = vpop.f32.mrf.mxu0
          %v7247 = vadd.f32 %v6926, %v7246
          %v7248 = vpop.f32.mrf.mxu0
          %v7249 = vand.u32 %v4634, 4294901760
          %7250 = vmatprep.mubr.f32.mxu0 %v7249
          %v7251 = vand.u32 %v4633, 4294901760
          %7252 = vmatmul.mubr.f32.gmra.mxu0 %v7251
          %v7253 = vpop.f32.mrf.mxu0
          %v7254 = vadd.f32 %v6933, %v7253
          %v7255 = vpop.f32.mrf.mxu0
          %v7256 = vand.u32 %v4636, 4294901760
          %7257 = vmatprep.mubr.f32.mxu0 %v7256
          %v7258 = vand.u32 %v4635, 4294901760
          %7259 = vmatmul.mubr.f32.gmra.mxu0 %v7258
          %v7260 = vpop.f32.mrf.mxu0
          %v7261 = vadd.f32 %v6940, %v7260
          %v7262 = vpop.f32.mrf.mxu0
          %v7263 = vand.u32 %v4638, 4294901760
          %7264 = vmatprep.mubr.f32.mxu0 %v7263
          %v7265 = vand.u32 %v4637, 4294901760
          %7266 = vmatmul.mubr.f32.gmra.mxu0 %v7265
          %v7267 = vpop.f32.mrf.mxu0
          %v7268 = vadd.f32 %v6947, %v7267
          %v7269 = vpop.f32.mrf.mxu0
          %v7270 = vand.u32 %v4640, 4294901760
          %7271 = vmatprep.mubr.f32.mxu0 %v7270
          %v7272 = vand.u32 %v4639, 4294901760
          %7273 = vmatmul.mubr.f32.gmra.mxu0 %v7272
          %v7274 = vpop.f32.mrf.mxu0
          %v7275 = vadd.f32 %v6954, %v7274
          %v7276 = vpop.f32.mrf.mxu0
          %v7277 = vand.u32 %v4642, 4294901760
          %7278 = vmatprep.mubr.f32.mxu0 %v7277
          %v7279 = vand.u32 %v4641, 4294901760
          %7280 = vmatmul.mubr.f32.gmra.mxu0 %v7279
          %v7281 = vpop.f32.mrf.mxu0
          %v7282 = vadd.f32 %v6961, %v7281
          %v7283 = vpop.f32.mrf.mxu0
          %v7284 = vand.u32 %v4644, 4294901760
          %7285 = vmatprep.mubr.f32.mxu0 %v7284
          %v7286 = vand.u32 %v4643, 4294901760
          %7287 = vmatmul.mubr.f32.gmra.mxu0 %v7286
          %v7288 = vpop.f32.mrf.mxu0
          %v7289 = vadd.f32 %v6968, %v7288
          %v7290 = vpop.f32.mrf.mxu0
          %v7291 = vand.u32 %v4646, 4294901760
          %7292 = vmatprep.mubr.f32.mxu0 %v7291
          %v7293 = vand.u32 %v4645, 4294901760
          %7294 = vmatmul.mubr.f32.gmra.mxu0 %v7293
          %v7295 = vpop.f32.mrf.mxu0
          %v7296 = vadd.f32 %v6975, %v7295
          %v7297 = vpop.f32.mrf.mxu0
          %v7298 = vand.u32 %v4648, 4294901760
          %7299 = vmatprep.mubr.f32.mxu0 %v7298
          %v7300 = vand.u32 %v4647, 4294901760
          %7301 = vmatmul.mubr.f32.gmra.mxu0 %v7300
          %v7302 = vpop.f32.mrf.mxu0
          %v7303 = vadd.f32 %v6982, %v7302
          %v7304 = vpop.f32.mrf.mxu0
          %v7305 = vand.u32 %v4650, 4294901760
          %7306 = vmatprep.mubr.f32.mxu0 %v7305
          %v7307 = vand.u32 %v4649, 4294901760
          %7308 = vmatmul.mubr.f32.gmra.mxu0 %v7307
          %v7309 = vpop.f32.mrf.mxu0
          %v7310 = vadd.f32 %v6989, %v7309
          %v7311 = vpop.f32.mrf.mxu0
          %7312 = vdwg.mxu0
          %v7313 = vadd.f32 %v4651, %v7093
          %v7314 = vadd.f32 %v4652, %v7100
          %v7315 = vadd.f32 %v4653, %v7107
          %v7316 = vadd.f32 %v4654, %v7114
          %v7317 = vadd.f32 %v4655, %v7121
          %v7318 = vadd.f32 %v4656, %v7128
          %v7319 = vadd.f32 %v4657, %v7135
          %v7320 = vadd.f32 %v4658, %v7142
          %v7321 = vadd.f32 %v4659, %v7149
          %v7322 = vadd.f32 %v4660, %v7156
          %v7323 = vadd.f32 %v4661, %v7163
          %v7324 = vadd.f32 %v4662, %v7170
          %v7325 = vadd.f32 %v4663, %v7177
          %v7326 = vadd.f32 %v4664, %v7184
          %v7327 = vadd.f32 %v4665, %v7191
          %v7328 = vadd.f32 %v4666, %v7198
          %v7329 = vadd.f32 %v4667, %v7205
          %v7330 = vadd.f32 %v4668, %v7212
          %v7331 = vadd.f32 %v4669, %v7219
          %v7332 = vadd.f32 %v4670, %v7226
          %v7333 = vadd.f32 %v4671, %v7233
          %v7334 = vadd.f32 %v4672, %v7240
          %v7335 = vadd.f32 %v4673, %v7247
          %v7336 = vadd.f32 %v4674, %v7254
          %v7337 = vadd.f32 %v4675, %v7261
          %v7338 = vadd.f32 %v4676, %v7268
          %v7339 = vadd.f32 %v4677, %v7275
          %v7340 = vadd.f32 %v4678, %v7282
          %v7341 = vadd.f32 %v4679, %v7289
          %v7342 = vadd.f32 %v4680, %v7296
          %v7343 = vadd.f32 %v4681, %v7303
          %v7344 = vadd.f32 %v4682, %v7310
          %7345 = vst [vmem:[%s444] sm:$0xff] %v7313
          %7346 = vst [vmem:[%s444 + $0x8] sm:$0xff] %v7314
          %7347 = vst [vmem:[%s444 + $0x10] sm:$0xff] %v7315
          %7348 = vst [vmem:[%s444 + $0x18] sm:$0xff] %v7316
          %7349 = vst [vmem:[%s444 + $0x20] sm:$0xff] %v7317
          %7350 = vst [vmem:[%s444 + $0x28] sm:$0xff] %v7318
          %7351 = vst [vmem:[%s444 + $0x30] sm:$0xff] %v7319
          %7352 = vst [vmem:[%s444 + $0x38] sm:$0xff] %v7320
          %7353 = vst [vmem:[%s444 + $0x40] sm:$0xff] %v7321
          %7354 = vst [vmem:[%s444 + $0x48] sm:$0xff] %v7322
          %7355 = vst [vmem:[%s444 + $0x50] sm:$0xff] %v7323
          %7356 = vst [vmem:[%s444 + $0x58] sm:$0xff] %v7324
          %7357 = vst [vmem:[%s444 + $0x60] sm:$0xff] %v7325
          %7358 = vst [vmem:[%s444 + $0x68] sm:$0xff] %v7326
          %7359 = vst [vmem:[%s444 + $0x70] sm:$0xff] %v7327
          %7360 = vst [vmem:[%s444 + $0x78] sm:$0xff] %v7328
          %7361 = vst [vmem:[%s444 + $0x80] sm:$0xff] %v7329
          %7362 = vst [vmem:[%s444 + $0x88] sm:$0xff] %v7330
          %7363 = vst [vmem:[%s444 + $0x90] sm:$0xff] %v7331
          %7364 = vst [vmem:[%s444 + $0x98] sm:$0xff] %v7332
          %7365 = vst [vmem:[%s444 + $0xa0] sm:$0xff] %v7333
          %7366 = vst [vmem:[%s444 + $0xa8] sm:$0xff] %v7334
          %7367 = vst [vmem:[%s444 + $0xb0] sm:$0xff] %v7335
          %7368 = vst [vmem:[%s444 + $0xb8] sm:$0xff] %v7336
          %7369 = vst [vmem:[%s444 + $0xc0] sm:$0xff] %v7337
          %7370 = vst [vmem:[%s444 + $0xc8] sm:$0xff] %v7338
          %7371 = vst [vmem:[%s444 + $0xd0] sm:$0xff] %v7339
          %7372 = vst [vmem:[%s444 + $0xd8] sm:$0xff] %v7340
          %7373 = vst [vmem:[%s444 + $0xe0] sm:$0xff] %v7341
          %7374 = vst [vmem:[%s444 + $0xe8] sm:$0xff] %v7342
          %7375 = vst [vmem:[%s444 + $0xf0] sm:$0xff] %v7343
          %7376 = vst [vmem:[%s444 + $0xf8] sm:$0xff] %v7344
        $region80: #{tpu_custom_call.1} parent=43 // pred_fallthru
          _
        %s7377 = sand.u32 %s209, 1
        %s7378 = scalar_lea.sflag [#allocation5], %s7377
        %s7379 = sand.u32 %s209, 1
        %s7380 = smul.addr %s7379, 256
        %s7381 = scalar_lea.vmem [#allocation14], %s7380
        // Predicated region
        $region81: #{tpu_custom_call.1} parent=43 // pred_check
          %p7382 = pneg %p219
        $region82: #{tpu_custom_call.1} parent=43 // pred_check_branch
          %7384 = sbr.rel (%p7382) target = $region84
        $region83: #{tpu_custom_call.1} parent=43 // pred_region
          %s7385 = smul.u32 32, %s35
          %s7387 = ssub.s32 4096, 4096
          %7388 = vsyncadd %s7378, %s7387
          %s7389 = smul.addr %s7385, 128
          %s7390 = scalar_lea.hbm %s6, %s7389
          %s7391 = sshll.u32 %s7381, 4
          %s7392 = int_to_ptr.vmem [resolvable:$true] %s7391
          %7397 = dma.vmem_to_hbm [thread:$0]  %s7392, 4096, %s7390, %s7378, 128, 128, 8
        $region84: #{tpu_custom_call.1} parent=43 // pred_fallthru
          _
      $region44: #{tpu_custom_call.1} parent=5 // pred_fallthru
        _
      %p7398 = scmp.le.s32.totalorder 2, %s25
      // Predicated region
      $region85: #{tpu_custom_call.1} parent=5 // pred_check
        %p7399 = pneg %p7398
      $region86: #{tpu_custom_call.1} parent=5 // pred_check_branch
        %7401 = sbr.rel (%p7399) target = $region88
      $region87: #{tpu_custom_call.1} parent=5 // pred_region
        %s7402 = ssub.s32 %s25, 2
        // Predicated region
        $region89: #{tpu_custom_call.1} parent=87 // pred_check
          %p7403 = pneg %p225
        $region90: #{tpu_custom_call.1} parent=87 // pred_check_branch
          %7405 = sbr.rel (%p7403) target = $region92
        $region91: #{tpu_custom_call.1} parent=87 // pred_region
          %s7406 = sand.u32 %s210, 1
          %s7407 = scalar_lea.sflag [#allocation5], %s7406
          %s7408 = sand.u32 %s210, 1
          %s7409 = smul.addr %s7408, 256
          %s7410 = scalar_lea.vmem [#allocation14], %s7409
          %7411 = dma.done %s7407, 4096
        $region92: #{tpu_custom_call.1} parent=87 // pred_fallthru
          _
      $region88: #{tpu_custom_call.1} parent=5 // pred_fallthru
        _
    $region6: #{tpu_custom_call.1} parent=1 // loop_footer
      %s29 = sadd.s32 1, %s25
    $region7: #{tpu_custom_call.1} parent=1 // loop_footer_branch
      %24 = sbr.rel target = $region3
    $region8: #{tpu_custom_call.1} parent=1 // loop_exit
      _
    %7412 = vsyncpa [#allocation4], 1
    %s7413 = scalar_lea.sflag [#allocation4], 1
    %7414 = vsyncpa %s7413, 1
    %7415 = vsyncpa [#allocation9], 1
    %s7416 = scalar_lea.sflag [#allocation9], 1
    %7417 = vsyncpa %s7416, 1
    %7418 = vsyncpa [#allocation12], 1
    %s7419 = scalar_lea.sflag [#allocation12], 1
    %7420 = vsyncpa %s7419, 1
    %7421 = vsyncpa [#allocation5], 1
    %s7422 = scalar_lea.sflag [#allocation5], 1
    %7423 = vsyncpa %s7422, 1
    %7424 = vsyncpa [#allocation6], 1
    %s7425 = scalar_lea.sflag [#allocation6], 1
    %7426 = vsyncpa %s7425, 1

</llo_original>
